<compile_context>
chip_gen: v5e
topology: v5e:2x2
jax: 0.10.0
libtpu: 0.0.40
codegen_flags: <defaults>
</compile_context>

<pallas_src>
import jax
import jax.numpy as jnp
import numpy as np
from jax import lax
from jax.experimental import pallas as pl
from jax.experimental.pallas import tpu as pltpu

EPS = 1e-5


def _residual_block_kernel(xpad_ref, w1_ref, s1_ref, b1_ref,
                           w2_ref, s2_ref, b2_ref, o_ref, pad2_ref):
    Bblk, Hp, Wp, C = xpad_ref.shape
    H = Hp - 2
    W = o_ref.shape[2]
    BH = Bblk * H
    Mp = BH * Wp

    def conv3x3(src_ref, w_ref, out_shift):
        """3x3 conv over full padded-width rows.

        Returns an (BH, Wp, C) f32 accumulator whose column w' holds the conv output for
        output column (w' - out_shift); columns outside that valid range hold garbage and are
        masked / sliced away by the caller.

        Row slabs are outer-dim ref slices (no relayout); the reshape to (Mp, C) is free because
        Wp is a multiple of the bf16 sublane tile (16); the kx offsets are applied with static
        sublane rolls on the grouped f32 partial sums (2 rolls per conv).
        """
        per_kx = [None, None, None]
        for ky in range(3):
            rows = src_ref[:, ky:ky + H, :, :].reshape(Mp, C)          # bf16, free reshape
            for kx in range(3):
                d = jnp.dot(rows, w_ref[ky * 3 + kx],
                            preferred_element_type=jnp.float32)
                per_kx[kx] = d if per_kx[kx] is None else per_kx[kx] + d
        acc = None
        for kx in range(3):
            a = per_kx[kx].reshape(BH, Wp, C)                          # free (Wp % 8 == 0)
            shift = (out_shift - kx) % Wp
            if shift:
                a = pltpu.roll(a, shift, axis=1)                       # XLU sublane rotate
            acc = a if acc is None else acc + a
        return acc

    # ---- conv1 + BN1 + ReLU ----------------------------------------------------------------
    # out_shift=1: the valid conv1 output for column w lands at accumulator column w+1, which is
    # exactly where the conv2 staging buffer (with its 1-column left halo) needs it.
    acc1 = conv3x3(xpad_ref, w1_ref, out_shift=1)
    h1 = jnp.maximum(acc1 * s1_ref[...] + b1_ref[...], 0.0)

    # Zero everything outside the valid interior columns [1, W]; this simultaneously kills the
    # roll garbage and bakes in the conv2 left/right zero halo (no strided halo-column stores).
    col = lax.broadcasted_iota(jnp.int32, (1, Wp, 1), 1)
    h1 = jnp.where((col >= 1) & (col <= W), h1, 0.0).astype(jnp.bfloat16)

    # ---- stage conv2 input: two zero halo rows + one full-width interior store --------------
    zrow = jnp.zeros((Bblk, 1, Wp, C), jnp.bfloat16)
    pad2_ref[:, 0:1, :, :] = zrow                      # per-step zeroing: megacore-safe
    pad2_ref[:, H + 1:H + 2, :, :] = zrow
    pad2_ref[:, 1:H + 1, :, :] = h1.reshape(Bblk, H, Wp, C)

    # ---- conv2 + BN2 + identity skip; single aligned slice + lane-dense-as-possible store ----
    acc2 = conv3x3(pad2_ref, w2_ref, out_shift=0)
    skip = xpad_ref[:, 1:H + 1, :, :].astype(jnp.float32).reshape(BH, Wp, C)
    skip = pltpu.roll(skip, (Wp - 1) % Wp, axis=1)     # align padded column w+1 -> output w
    out = acc2 * s2_ref[...] + b2_ref[...] + skip
    out = out[:, 0:W, :].astype(jnp.bfloat16)          # leading-column slice, tile-aligned
    o_ref[...] = out.reshape(Bblk, H, W, C)


def _fold_bn(bn):
    scale = bn["gamma"] / jnp.sqrt(bn["var"] + EPS)
    shift = bn["beta"] - bn["mean"] * scale
    return scale, shift


def _round_up(x, m):
    return ((x + m - 1) // m) * m


def _vmem_capacity_bytes():
    """Per-core VMEM capacity; conservative (v7x) fallback if the query is unavailable."""
    try:
        info = pltpu.get_tpu_info()
        cap = getattr(info, "vmem_capacity_bytes", None)
        if cap:
            return int(cap)
    except Exception:
        pass
    return 64 << 20


def _vmem_estimate(bblk, H, W, Hp, Wp, C):
    """Conservative per-step VMEM footprint: lane-padded blocks, double buffering, the staging
    scratch, and the live f32 accumulators/intermediates the kernel keeps around."""
    Cl = _round_up(C, 128)                    # lane padding (physical VMEM cost)
    Wl = _round_up(W, 16)                     # bf16 sublane tile on the output block
    in_blk = bblk * Hp * Wp * Cl * 2          # bf16 input block
    out_blk = bblk * H * Wl * Cl * 2          # bf16 output block
    w_blk = 2 * 9 * _round_up(C, 16) * Cl * 2  # both weight tensors
    scratch = bblk * Hp * Wp * Cl * 2         # conv2 staging scratch
    live = 4 * bblk * H * Wp * Cl * 4         # f32 accumulators / h1 / skip / out
    return 2 * in_blk + 2 * out_blk + 2 * w_blk + scratch + live + (1 << 20)


def _pick_bblk(B, H, W, Hp, Wp, C, budget):
    """Largest divisor of B that fits the VMEM budget, keeps >=2 grid steps (v7x megacore),
    and does not starve the pipeline of grid steps."""
    min_steps = 2 if B >= 2 else 1
    row_cap = max(1, 4096 // max(H * W, 1))
    best = 1
    for d in range(B, 0, -1):
        if B % d:
            continue
        if B // d < min_steps or d > row_cap:
            continue
        if _vmem_estimate(d, H, W, Hp, Wp, C) <= budget:
            best = d
            break
    return best


def residual_block_pallas(x_nchw, params, *, bblk=None):
    B, Cin, H, W = x_nchw.shape
    Cout = params["w1"].shape[0]
    C = Cout
    assert Cout >= Cin, "PyramidNet ResidualBlock assumes output_channels >= input_channels"

    s0, b0 = _fold_bn(params["bn0"])
    s1, b1 = _fold_bn(params["bn1"])
    s2, b2 = _fold_bn(params["bn2"])

    Hp = H + 2
    Wp = _round_up(W + 2, 16)   # multiple of the bf16 sublane tile -> free in-kernel reshapes

    # BN0 + layout transpose + spatial halo pad (right side widened to Wp) + channel zero-pad
    # (skip padding), all in one wrapper-side XLA prep op.
    x = jnp.transpose(x_nchw, (0, 2, 3, 1)).astype(jnp.float32)       # NHWC
    xbn = x * s0 + b0
    xpad = jnp.pad(xbn, ((0, 0), (1, 1), (1, Wp - W - 1), (0, C - Cin))).astype(jnp.bfloat16)

    # PyTorch conv weights (Cout, Cin, 3, 3) -> (9, C, C) bf16. conv1's input-channel dim is
    # zero-padded to Cout so the zero-padded input channels contribute nothing.
    w1 = jnp.transpose(params["w1"], (2, 3, 1, 0))                    # (3, 3, Cin, Cout)
    w1 = jnp.pad(w1, ((0, 0), (0, 0), (0, C - Cin), (0, 0))).reshape(9, C, C).astype(jnp.bfloat16)
    w2 = jnp.transpose(params["w2"], (2, 3, 1, 0)).reshape(9, C, C).astype(jnp.bfloat16)

    s1 = s1.reshape(1, C); b1 = b1.reshape(1, C)
    s2 = s2.reshape(1, C); b2 = b2.reshape(1, C)

    # Per-generation VMEM budgeting: never ask for more than ~85% of physical per-core VMEM
    # (v7x: 64 MiB -> ~54 MiB cap; v5e/v6e: 128 MiB -> 96 MiB cap), and always set the limit.
    cap = _vmem_capacity_bytes()
    hard_cap = min(int(cap * 0.85), 96 << 20)
    budget = int(hard_cap * 0.8)

    if bblk is None:
        bblk = _pick_bblk(B, H, W, Hp, Wp, C, budget)
    assert B % bblk == 0
    est = _vmem_estimate(bblk, H, W, Hp, Wp, C)
    vmem_limit = int(min(max(est * 2, 32 << 20), hard_cap))

    grid_spec = pltpu.PrefetchScalarGridSpec(
        num_scalar_prefetch=0,
        grid=(B // bblk,),
        in_specs=[
            pl.BlockSpec((bblk, Hp, Wp, C), lambda b: (b, 0, 0, 0)),
            pl.BlockSpec((9, C, C), lambda b: (0, 0, 0)),
            pl.BlockSpec((1, C), lambda b: (0, 0)),
            pl.BlockSpec((1, C), lambda b: (0, 0)),
            pl.BlockSpec((9, C, C), lambda b: (0, 0, 0)),
            pl.BlockSpec((1, C), lambda b: (0, 0)),
            pl.BlockSpec((1, C), lambda b: (0, 0)),
        ],
        out_specs=pl.BlockSpec((bblk, H, W, C), lambda b: (b, 0, 0, 0)),
        scratch_shapes=[pltpu.VMEM((bblk, Hp, Wp, C), jnp.bfloat16)],
    )

    y = pl.pallas_call(
        _residual_block_kernel,
        out_shape=jax.ShapeDtypeStruct((B, H, W, C), jnp.bfloat16),
        grid_spec=grid_spec,
        compiler_params=pltpu.CompilerParams(
            dimension_semantics=("parallel",),
            vmem_limit_bytes=vmem_limit),
    )(xpad, w1, s1, b1, w2, s2, b2)

    return jnp.transpose(y.astype(jnp.float32), (0, 3, 1, 2))         # back to NCHW


def residual_block_reference(x_nchw, params):
    """Pure-JAX reference (eval-mode BN), mirroring the kernel's bf16 matmul operands."""
    Cin = x_nchw.shape[1]
    Cout = params["w1"].shape[0]
    x = jnp.transpose(x_nchw, (0, 2, 3, 1)).astype(jnp.float32)
    s0, b0 = _fold_bn(params["bn0"])
    s1, b1 = _fold_bn(params["bn1"])
    s2, b2 = _fold_bn(params["bn2"])
    xbn16 = (x * s0 + b0).astype(jnp.bfloat16)                        # kernel input precision
    w1 = jnp.transpose(params["w1"], (2, 3, 1, 0)).astype(jnp.bfloat16)   # HWIO
    w2 = jnp.transpose(params["w2"], (2, 3, 1, 0)).astype(jnp.bfloat16)
    dn = ("NHWC", "HWIO", "NHWC")
    h = lax.conv_general_dilated(xbn16, w1, (1, 1), "SAME", dimension_numbers=dn,
                                 preferred_element_type=jnp.float32)
    h = jnp.maximum(h * s1 + b1, 0.0)
    h16 = h.astype(jnp.bfloat16)
    out = lax.conv_general_dilated(h16, w2, (1, 1), "SAME", dimension_numbers=dn,
                                   preferred_element_type=jnp.float32)
    out = out * s2 + b2
    skip = jnp.pad(xbn16.astype(jnp.float32), ((0, 0), (0, 0), (0, 0), (0, Cout - Cin)))
    return jnp.transpose(out + skip, (0, 3, 1, 2))


def init_params(key, cin, cout):
    ks = jax.random.split(key, 14)

    def bn(k1, k2, k3, k4, c):
        return dict(
            gamma=1.0 + 0.1 * jax.random.normal(k1, (c,), jnp.float32),
            beta=0.1 * jax.random.normal(k2, (c,), jnp.float32),
            mean=0.1 * jax.random.normal(k3, (c,), jnp.float32),
            var=jnp.abs(jax.random.normal(k4, (c,), jnp.float32)) + 0.5,
        )

    return dict(
        bn0=bn(ks[0], ks[1], ks[2], ks[3], cin),
        w1=0.2 * jax.random.normal(ks[4], (cout, cin, 3, 3), jnp.float32),
        bn1=bn(ks[5], ks[6], ks[7], ks[8], cout),
        w2=0.2 * jax.random.normal(ks[9], (cout, cout, 3, 3), jnp.float32),
        bn2=bn(ks[10], ks[11], ks[12], ks[13], cout),
    )


if __name__ == "__main__":
    key = jax.random.PRNGKey(0)
    kx, kp = jax.random.split(key)
    B, CIN, COUT, H, W = 2, 4, 8, 16, 16          # input_channels=4 -> output_channels=8
    x = jax.random.normal(kx, (B, CIN, H, W), jnp.float32)   # NCHW, as in PyTorch
    params = init_params(kp, CIN, COUT)

    y = jax.block_until_ready(residual_block_pallas(x, params))
    y_ref = jax.block_until_ready(residual_block_reference(x, params))
    assert y.shape == (B, COUT, H, W)
    np.testing.assert_allclose(np.asarray(y), np.asarray(y_ref), atol=5e-2, rtol=2e-2)
    print("KERNEL_OK")
</pallas_src>

<mosaic_0001>
module attributes {stable_mosaic.version = 11 : i64} {
  func.func @_residual_block_kernel(%arg0: i32, %arg1: memref<1x18x32x8xbf16, #tpu.memory_space<vmem>>, %arg2: memref<9x8x8xbf16, #tpu.memory_space<vmem>>, %arg3: memref<1x8xf32, #tpu.memory_space<vmem>>, %arg4: memref<1x8xf32, #tpu.memory_space<vmem>>, %arg5: memref<9x8x8xbf16, #tpu.memory_space<vmem>>, %arg6: memref<1x8xf32, #tpu.memory_space<vmem>>, %arg7: memref<1x8xf32, #tpu.memory_space<vmem>>, %arg8: memref<1x16x16x8xbf16, #tpu.memory_space<vmem>>, %arg9: memref<1x18x32x8xbf16, #tpu.memory_space<vmem>>) attributes {dimension_semantics = [#tpu.dimension_semantics<parallel>], iteration_bounds = array<i64: 2>, scalar_prefetch = 0 : i64, scratch_operands = 1 : i64, tpu.core_type = #tpu.core_type<tc>, window_params = [{transform_indices = @transform_0, window_bounds = array<i64: 1, 18, 32, 8>}, {pipeline_mode = #tpu.pipeline_mode<synchronous>, transform_indices = @transform_1, window_bounds = array<i64: 9, 8, 8>}, {pipeline_mode = #tpu.pipeline_mode<synchronous>, transform_indices = @transform_2, window_bounds = array<i64: 1, 8>}, {pipeline_mode = #tpu.pipeline_mode<synchronous>, transform_indices = @transform_3, window_bounds = array<i64: 1, 8>}, {pipeline_mode = #tpu.pipeline_mode<synchronous>, transform_indices = @transform_4, window_bounds = array<i64: 9, 8, 8>}, {pipeline_mode = #tpu.pipeline_mode<synchronous>, transform_indices = @transform_5, window_bounds = array<i64: 1, 8>}, {pipeline_mode = #tpu.pipeline_mode<synchronous>, transform_indices = @transform_6, window_bounds = array<i64: 1, 8>}, {transform_indices = @transform_7, window_bounds = array<i64: 1, 16, 16, 8>}]} {
    %c0 = arith.constant 0 : index
    %c0_0 = arith.constant 0 : index
    %c0_1 = arith.constant 0 : index
    %c0_2 = arith.constant 0 : index
    %0 = vector.load %arg1[%c0, %c0_0, %c0_1, %c0_2] : memref<1x18x32x8xbf16, #tpu.memory_space<vmem>>, vector<1x16x32x8xbf16>
    %1 = vector.shape_cast %0 : vector<1x16x32x8xbf16> to vector<512x8xbf16>
    %c0_3 = arith.constant 0 : index
    %c0_4 = arith.constant 0 : index
    %c0_5 = arith.constant 0 : index
    %2 = vector.load %arg2[%c0_3, %c0_4, %c0_5] : memref<9x8x8xbf16, #tpu.memory_space<vmem>>, vector<1x8x8xbf16>
    %3 = vector.shape_cast %2 : vector<1x8x8xbf16> to vector<8x8xbf16>
    %cst = arith.constant dense<0.000000e+00> : vector<512x8xf32>
    %4 = tpu.matmul %1, %3, %cst {dimension_numbers = #tpu.dot_dimension_numbers<[1], [0], [0], [1], [0, 0, 1, 1], [], []>} : vector<512x8xbf16>, vector<8x8xbf16>, vector<512x8xf32> -> vector<512x8xf32>
    %c1 = arith.constant 1 : index
    %c0_6 = arith.constant 0 : index
    %c0_7 = arith.constant 0 : index
    %5 = vector.load %arg2[%c1, %c0_6, %c0_7] : memref<9x8x8xbf16, #tpu.memory_space<vmem>>, vector<1x8x8xbf16>
    %6 = vector.shape_cast %5 : vector<1x8x8xbf16> to vector<8x8xbf16>
    %cst_8 = arith.constant dense<0.000000e+00> : vector<512x8xf32>
    %7 = tpu.matmul %1, %6, %cst_8 {dimension_numbers = #tpu.dot_dimension_numbers<[1], [0], [0], [1], [0, 0, 1, 1], [], []>} : vector<512x8xbf16>, vector<8x8xbf16>, vector<512x8xf32> -> vector<512x8xf32>
    %c2 = arith.constant 2 : index
    %c0_9 = arith.constant 0 : index
    %c0_10 = arith.constant 0 : index
    %8 = vector.load %arg2[%c2, %c0_9, %c0_10] : memref<9x8x8xbf16, #tpu.memory_space<vmem>>, vector<1x8x8xbf16>
    %9 = vector.shape_cast %8 : vector<1x8x8xbf16> to vector<8x8xbf16>
    %cst_11 = arith.constant dense<0.000000e+00> : vector<512x8xf32>
    %10 = tpu.matmul %1, %9, %cst_11 {dimension_numbers = #tpu.dot_dimension_numbers<[1], [0], [0], [1], [0, 0, 1, 1], [], []>} : vector<512x8xbf16>, vector<8x8xbf16>, vector<512x8xf32> -> vector<512x8xf32>
    %c0_12 = arith.constant 0 : index
    %c1_13 = arith.constant 1 : index
    %c0_14 = arith.constant 0 : index
    %c0_15 = arith.constant 0 : index
    %11 = vector.load %arg1[%c0_12, %c1_13, %c0_14, %c0_15] : memref<1x18x32x8xbf16, #tpu.memory_space<vmem>>, vector<1x16x32x8xbf16>
    %12 = vector.shape_cast %11 : vector<1x16x32x8xbf16> to vector<512x8xbf16>
    %c3 = arith.constant 3 : index
    %c0_16 = arith.constant 0 : index
    %c0_17 = arith.constant 0 : index
    %13 = vector.load %arg2[%c3, %c0_16, %c0_17] : memref<9x8x8xbf16, #tpu.memory_space<vmem>>, vector<1x8x8xbf16>
    %14 = vector.shape_cast %13 : vector<1x8x8xbf16> to vector<8x8xbf16>
    %cst_18 = arith.constant dense<0.000000e+00> : vector<512x8xf32>
    %15 = tpu.matmul %12, %14, %cst_18 {dimension_numbers = #tpu.dot_dimension_numbers<[1], [0], [0], [1], [0, 0, 1, 1], [], []>} : vector<512x8xbf16>, vector<8x8xbf16>, vector<512x8xf32> -> vector<512x8xf32>
    %16 = arith.addf %4, %15 : vector<512x8xf32>
    %c4 = arith.constant 4 : index
    %c0_19 = arith.constant 0 : index
    %c0_20 = arith.constant 0 : index
    %17 = vector.load %arg2[%c4, %c0_19, %c0_20] : memref<9x8x8xbf16, #tpu.memory_space<vmem>>, vector<1x8x8xbf16>
    %18 = vector.shape_cast %17 : vector<1x8x8xbf16> to vector<8x8xbf16>
    %cst_21 = arith.constant dense<0.000000e+00> : vector<512x8xf32>
    %19 = tpu.matmul %12, %18, %cst_21 {dimension_numbers = #tpu.dot_dimension_numbers<[1], [0], [0], [1], [0, 0, 1, 1], [], []>} : vector<512x8xbf16>, vector<8x8xbf16>, vector<512x8xf32> -> vector<512x8xf32>
    %20 = arith.addf %7, %19 : vector<512x8xf32>
    %c5 = arith.constant 5 : index
    %c0_22 = arith.constant 0 : index
    %c0_23 = arith.constant 0 : index
    %21 = vector.load %arg2[%c5, %c0_22, %c0_23] : memref<9x8x8xbf16, #tpu.memory_space<vmem>>, vector<1x8x8xbf16>
    %22 = vector.shape_cast %21 : vector<1x8x8xbf16> to vector<8x8xbf16>
    %cst_24 = arith.constant dense<0.000000e+00> : vector<512x8xf32>
    %23 = tpu.matmul %12, %22, %cst_24 {dimension_numbers = #tpu.dot_dimension_numbers<[1], [0], [0], [1], [0, 0, 1, 1], [], []>} : vector<512x8xbf16>, vector<8x8xbf16>, vector<512x8xf32> -> vector<512x8xf32>
    %24 = arith.addf %10, %23 : vector<512x8xf32>
    %c0_25 = arith.constant 0 : index
    %c2_26 = arith.constant 2 : index
    %c0_27 = arith.constant 0 : index
    %c0_28 = arith.constant 0 : index
    %25 = vector.load %arg1[%c0_25, %c2_26, %c0_27, %c0_28] : memref<1x18x32x8xbf16, #tpu.memory_space<vmem>>, vector<1x16x32x8xbf16>
    %26 = vector.shape_cast %25 : vector<1x16x32x8xbf16> to vector<512x8xbf16>
    %c6 = arith.constant 6 : index
    %c0_29 = arith.constant 0 : index
    %c0_30 = arith.constant 0 : index
    %27 = vector.load %arg2[%c6, %c0_29, %c0_30] : memref<9x8x8xbf16, #tpu.memory_space<vmem>>, vector<1x8x8xbf16>
    %28 = vector.shape_cast %27 : vector<1x8x8xbf16> to vector<8x8xbf16>
    %cst_31 = arith.constant dense<0.000000e+00> : vector<512x8xf32>
    %29 = tpu.matmul %26, %28, %cst_31 {dimension_numbers = #tpu.dot_dimension_numbers<[1], [0], [0], [1], [0, 0, 1, 1], [], []>} : vector<512x8xbf16>, vector<8x8xbf16>, vector<512x8xf32> -> vector<512x8xf32>
    %30 = arith.addf %16, %29 : vector<512x8xf32>
    %c7 = arith.constant 7 : index
    %c0_32 = arith.constant 0 : index
    %c0_33 = arith.constant 0 : index
    %31 = vector.load %arg2[%c7, %c0_32, %c0_33] : memref<9x8x8xbf16, #tpu.memory_space<vmem>>, vector<1x8x8xbf16>
    %32 = vector.shape_cast %31 : vector<1x8x8xbf16> to vector<8x8xbf16>
    %cst_34 = arith.constant dense<0.000000e+00> : vector<512x8xf32>
    %33 = tpu.matmul %26, %32, %cst_34 {dimension_numbers = #tpu.dot_dimension_numbers<[1], [0], [0], [1], [0, 0, 1, 1], [], []>} : vector<512x8xbf16>, vector<8x8xbf16>, vector<512x8xf32> -> vector<512x8xf32>
    %34 = arith.addf %20, %33 : vector<512x8xf32>
    %c8 = arith.constant 8 : index
    %c0_35 = arith.constant 0 : index
    %c0_36 = arith.constant 0 : index
    %35 = vector.load %arg2[%c8, %c0_35, %c0_36] : memref<9x8x8xbf16, #tpu.memory_space<vmem>>, vector<1x8x8xbf16>
    %36 = vector.shape_cast %35 : vector<1x8x8xbf16> to vector<8x8xbf16>
    %cst_37 = arith.constant dense<0.000000e+00> : vector<512x8xf32>
    %37 = tpu.matmul %26, %36, %cst_37 {dimension_numbers = #tpu.dot_dimension_numbers<[1], [0], [0], [1], [0, 0, 1, 1], [], []>} : vector<512x8xbf16>, vector<8x8xbf16>, vector<512x8xf32> -> vector<512x8xf32>
    %38 = arith.addf %24, %37 : vector<512x8xf32>
    %39 = vector.shape_cast %30 : vector<512x8xf32> to vector<16x32x8xf32>
    %c1_i32 = arith.constant 1 : i32
    %40 = tpu.dynamic_rotate %39 by %c1_i32 dim 1 : vector<16x32x8xf32>, i32 -> vector<16x32x8xf32>
    %41 = vector.shape_cast %34 : vector<512x8xf32> to vector<16x32x8xf32>
    %42 = arith.addf %40, %41 : vector<16x32x8xf32>
    %43 = vector.shape_cast %38 : vector<512x8xf32> to vector<16x32x8xf32>
    %c31_i32 = arith.constant 31 : i32
    %44 = tpu.dynamic_rotate %43 by %c31_i32 dim 1 : vector<16x32x8xf32>, i32 -> vector<16x32x8xf32>
    %45 = arith.addf %42, %44 : vector<16x32x8xf32>
    %c0_38 = arith.constant 0 : index
    %c0_39 = arith.constant 0 : index
    %46 = vector.load %arg3[%c0_38, %c0_39] : memref<1x8xf32, #tpu.memory_space<vmem>>, vector<1x8xf32>
    %47 = vector.shape_cast %46 : vector<1x8xf32> to vector<1x1x8xf32>
    %48 = vector.broadcast %47 : vector<1x1x8xf32> to vector<16x32x8xf32>
    %49 = arith.mulf %45, %48 : vector<16x32x8xf32>
    %c0_40 = arith.constant 0 : index
    %c0_41 = arith.constant 0 : index
    %50 = vector.load %arg4[%c0_40, %c0_41] : memref<1x8xf32, #tpu.memory_space<vmem>>, vector<1x8xf32>
    %51 = vector.shape_cast %50 : vector<1x8xf32> to vector<1x1x8xf32>
    %52 = vector.broadcast %51 : vector<1x1x8xf32> to vector<16x32x8xf32>
    %53 = arith.addf %49, %52 : vector<16x32x8xf32>
    %cst_42 = arith.constant 0.000000e+00 : f32
    %54 = vector.broadcast %cst_42 : f32 to vector<16x32x8xf32>
    %55 = arith.maximumf %53, %54 : vector<16x32x8xf32>
    %56 = tpu.iota {dimensions = array<i32: 1>} : vector<1x32x1xi32>
    %c1_i32_43 = arith.constant 1 : i32
    %57 = vector.broadcast %c1_i32_43 : i32 to vector<1x32x1xi32>
    %58 = arith.cmpi sge, %56, %57 : vector<1x32x1xi32>
    %c16_i32 = arith.constant 16 : i32
    %59 = vector.broadcast %c16_i32 : i32 to vector<1x32x1xi32>
    %60 = arith.cmpi sle, %56, %59 : vector<1x32x1xi32>
    %61 = arith.andi %58, %60 : vector<1x32x1xi1>
    %cst_44 = arith.constant 0.000000e+00 : f32
    %62 = vector.shape_cast %61 : vector<1x32x1xi1> to vector<1x32x1xi1>
    %63 = vector.broadcast %62 : vector<1x32x1xi1> to vector<16x32x8xi1>
    %64 = vector.broadcast %cst_44 : f32 to vector<16x32x8xf32>
    %65 = arith.select %63, %55, %64 : vector<16x32x8xi1>, vector<16x32x8xf32>
    %66 = arith.truncf %65 : vector<16x32x8xf32> to vector<16x32x8xbf16>
    %cst_45 = arith.constant 0.000000e+00 : bf16
    %67 = vector.broadcast %cst_45 : bf16 to vector<1x1x32x8xbf16>
    %c0_46 = arith.constant 0 : index
    %c0_47 = arith.constant 0 : index
    %c0_48 = arith.constant 0 : index
    %c0_49 = arith.constant 0 : index
    %68 = vector.load %arg9[%c0_46, %c0_47, %c0_48, %c0_49] : memref<1x18x32x8xbf16, #tpu.memory_space<vmem>>, vector<1x1x32x8xbf16>
    tpu.vector_store %arg9[%c0_46, %c0_47, %c0_48, %c0_49], %67 {strides = array<i32>} : memref<1x18x32x8xbf16, #tpu.memory_space<vmem>>, vector<1x1x32x8xbf16>,
    %c0_50 = arith.constant 0 : index
    %c17 = arith.constant 17 : index
    %c0_51 = arith.constant 0 : index
    %c0_52 = arith.constant 0 : index
    %69 = vector.load %arg9[%c0_50, %c17, %c0_51, %c0_52] : memref<1x18x32x8xbf16, #tpu.memory_space<vmem>>, vector<1x1x32x8xbf16>
    tpu.vector_store %arg9[%c0_50, %c17, %c0_51, %c0_52], %67 {strides = array<i32>} : memref<1x18x32x8xbf16, #tpu.memory_space<vmem>>, vector<1x1x32x8xbf16>,
    %70 = vector.shape_cast %66 : vector<16x32x8xbf16> to vector<1x16x32x8xbf16>
    %c0_53 = arith.constant 0 : index
    %c1_54 = arith.constant 1 : index
    %c0_55 = arith.constant 0 : index
    %c0_56 = arith.constant 0 : index
    %71 = vector.load %arg9[%c0_53, %c1_54, %c0_55, %c0_56] : memref<1x18x32x8xbf16, #tpu.memory_space<vmem>>, vector<1x16x32x8xbf16>
    tpu.vector_store %arg9[%c0_53, %c1_54, %c0_55, %c0_56], %70 {strides = array<i32>} : memref<1x18x32x8xbf16, #tpu.memory_space<vmem>>, vector<1x16x32x8xbf16>,
    %c0_57 = arith.constant 0 : index
    %c0_58 = arith.constant 0 : index
    %c0_59 = arith.constant 0 : index
    %c0_60 = arith.constant 0 : index
    %72 = vector.load %arg9[%c0_57, %c0_58, %c0_59, %c0_60] : memref<1x18x32x8xbf16, #tpu.memory_space<vmem>>, vector<1x16x32x8xbf16>
    %73 = vector.shape_cast %72 : vector<1x16x32x8xbf16> to vector<512x8xbf16>
    %c0_61 = arith.constant 0 : index
    %c0_62 = arith.constant 0 : index
    %c0_63 = arith.constant 0 : index
    %74 = vector.load %arg5[%c0_61, %c0_62, %c0_63] : memref<9x8x8xbf16, #tpu.memory_space<vmem>>, vector<1x8x8xbf16>
    %75 = vector.shape_cast %74 : vector<1x8x8xbf16> to vector<8x8xbf16>
    %cst_64 = arith.constant dense<0.000000e+00> : vector<512x8xf32>
    %76 = tpu.matmul %73, %75, %cst_64 {dimension_numbers = #tpu.dot_dimension_numbers<[1], [0], [0], [1], [0, 0, 1, 1], [], []>} : vector<512x8xbf16>, vector<8x8xbf16>, vector<512x8xf32> -> vector<512x8xf32>
    %c1_65 = arith.constant 1 : index
    %c0_66 = arith.constant 0 : index
    %c0_67 = arith.constant 0 : index
    %77 = vector.load %arg5[%c1_65, %c0_66, %c0_67] : memref<9x8x8xbf16, #tpu.memory_space<vmem>>, vector<1x8x8xbf16>
    %78 = vector.shape_cast %77 : vector<1x8x8xbf16> to vector<8x8xbf16>
    %cst_68 = arith.constant dense<0.000000e+00> : vector<512x8xf32>
    %79 = tpu.matmul %73, %78, %cst_68 {dimension_numbers = #tpu.dot_dimension_numbers<[1], [0], [0], [1], [0, 0, 1, 1], [], []>} : vector<512x8xbf16>, vector<8x8xbf16>, vector<512x8xf32> -> vector<512x8xf32>
    %c2_69 = arith.constant 2 : index
    %c0_70 = arith.constant 0 : index
    %c0_71 = arith.constant 0 : index
    %80 = vector.load %arg5[%c2_69, %c0_70, %c0_71] : memref<9x8x8xbf16, #tpu.memory_space<vmem>>, vector<1x8x8xbf16>
    %81 = vector.shape_cast %80 : vector<1x8x8xbf16> to vector<8x8xbf16>
    %cst_72 = arith.constant dense<0.000000e+00> : vector<512x8xf32>
    %82 = tpu.matmul %73, %81, %cst_72 {dimension_numbers = #tpu.dot_dimension_numbers<[1], [0], [0], [1], [0, 0, 1, 1], [], []>} : vector<512x8xbf16>, vector<8x8xbf16>, vector<512x8xf32> -> vector<512x8xf32>
    %c0_73 = arith.constant 0 : index
    %c1_74 = arith.constant 1 : index
    %c0_75 = arith.constant 0 : index
    %c0_76 = arith.constant 0 : index
    %83 = vector.load %arg9[%c0_73, %c1_74, %c0_75, %c0_76] : memref<1x18x32x8xbf16, #tpu.memory_space<vmem>>, vector<1x16x32x8xbf16>
    %84 = vector.shape_cast %83 : vector<1x16x32x8xbf16> to vector<512x8xbf16>
    %c3_77 = arith.constant 3 : index
    %c0_78 = arith.constant 0 : index
    %c0_79 = arith.constant 0 : index
    %85 = vector.load %arg5[%c3_77, %c0_78, %c0_79] : memref<9x8x8xbf16, #tpu.memory_space<vmem>>, vector<1x8x8xbf16>
    %86 = vector.shape_cast %85 : vector<1x8x8xbf16> to vector<8x8xbf16>
    %cst_80 = arith.constant dense<0.000000e+00> : vector<512x8xf32>
    %87 = tpu.matmul %84, %86, %cst_80 {dimension_numbers = #tpu.dot_dimension_numbers<[1], [0], [0], [1], [0, 0, 1, 1], [], []>} : vector<512x8xbf16>, vector<8x8xbf16>, vector<512x8xf32> -> vector<512x8xf32>
    %88 = arith.addf %76, %87 : vector<512x8xf32>
    %c4_81 = arith.constant 4 : index
    %c0_82 = arith.constant 0 : index
    %c0_83 = arith.constant 0 : index
    %89 = vector.load %arg5[%c4_81, %c0_82, %c0_83] : memref<9x8x8xbf16, #tpu.memory_space<vmem>>, vector<1x8x8xbf16>
    %90 = vector.shape_cast %89 : vector<1x8x8xbf16> to vector<8x8xbf16>
    %cst_84 = arith.constant dense<0.000000e+00> : vector<512x8xf32>
    %91 = tpu.matmul %84, %90, %cst_84 {dimension_numbers = #tpu.dot_dimension_numbers<[1], [0], [0], [1], [0, 0, 1, 1], [], []>} : vector<512x8xbf16>, vector<8x8xbf16>, vector<512x8xf32> -> vector<512x8xf32>
    %92 = arith.addf %79, %91 : vector<512x8xf32>
    %c5_85 = arith.constant 5 : index
    %c0_86 = arith.constant 0 : index
    %c0_87 = arith.constant 0 : index
    %93 = vector.load %arg5[%c5_85, %c0_86, %c0_87] : memref<9x8x8xbf16, #tpu.memory_space<vmem>>, vector<1x8x8xbf16>
    %94 = vector.shape_cast %93 : vector<1x8x8xbf16> to vector<8x8xbf16>
    %cst_88 = arith.constant dense<0.000000e+00> : vector<512x8xf32>
    %95 = tpu.matmul %84, %94, %cst_88 {dimension_numbers = #tpu.dot_dimension_numbers<[1], [0], [0], [1], [0, 0, 1, 1], [], []>} : vector<512x8xbf16>, vector<8x8xbf16>, vector<512x8xf32> -> vector<512x8xf32>
    %96 = arith.addf %82, %95 : vector<512x8xf32>
    %c0_89 = arith.constant 0 : index
    %c2_90 = arith.constant 2 : index
    %c0_91 = arith.constant 0 : index
    %c0_92 = arith.constant 0 : index
    %97 = vector.load %arg9[%c0_89, %c2_90, %c0_91, %c0_92] : memref<1x18x32x8xbf16, #tpu.memory_space<vmem>>, vector<1x16x32x8xbf16>
    %98 = vector.shape_cast %97 : vector<1x16x32x8xbf16> to vector<512x8xbf16>
    %c6_93 = arith.constant 6 : index
    %c0_94 = arith.constant 0 : index
    %c0_95 = arith.constant 0 : index
    %99 = vector.load %arg5[%c6_93, %c0_94, %c0_95] : memref<9x8x8xbf16, #tpu.memory_space<vmem>>, vector<1x8x8xbf16>
    %100 = vector.shape_cast %99 : vector<1x8x8xbf16> to vector<8x8xbf16>
    %cst_96 = arith.constant dense<0.000000e+00> : vector<512x8xf32>
    %101 = tpu.matmul %98, %100, %cst_96 {dimension_numbers = #tpu.dot_dimension_numbers<[1], [0], [0], [1], [0, 0, 1, 1], [], []>} : vector<512x8xbf16>, vector<8x8xbf16>, vector<512x8xf32> -> vector<512x8xf32>
    %102 = arith.addf %88, %101 : vector<512x8xf32>
    %c7_97 = arith.constant 7 : index
    %c0_98 = arith.constant 0 : index
    %c0_99 = arith.constant 0 : index
    %103 = vector.load %arg5[%c7_97, %c0_98, %c0_99] : memref<9x8x8xbf16, #tpu.memory_space<vmem>>, vector<1x8x8xbf16>
    %104 = vector.shape_cast %103 : vector<1x8x8xbf16> to vector<8x8xbf16>
    %cst_100 = arith.constant dense<0.000000e+00> : vector<512x8xf32>
    %105 = tpu.matmul %98, %104, %cst_100 {dimension_numbers = #tpu.dot_dimension_numbers<[1], [0], [0], [1], [0, 0, 1, 1], [], []>} : vector<512x8xbf16>, vector<8x8xbf16>, vector<512x8xf32> -> vector<512x8xf32>
    %106 = arith.addf %92, %105 : vector<512x8xf32>
    %c8_101 = arith.constant 8 : index
    %c0_102 = arith.constant 0 : index
    %c0_103 = arith.constant 0 : index
    %107 = vector.load %arg5[%c8_101, %c0_102, %c0_103] : memref<9x8x8xbf16, #tpu.memory_space<vmem>>, vector<1x8x8xbf16>
    %108 = vector.shape_cast %107 : vector<1x8x8xbf16> to vector<8x8xbf16>
    %cst_104 = arith.constant dense<0.000000e+00> : vector<512x8xf32>
    %109 = tpu.matmul %98, %108, %cst_104 {dimension_numbers = #tpu.dot_dimension_numbers<[1], [0], [0], [1], [0, 0, 1, 1], [], []>} : vector<512x8xbf16>, vector<8x8xbf16>, vector<512x8xf32> -> vector<512x8xf32>
    %110 = arith.addf %96, %109 : vector<512x8xf32>
    %111 = vector.shape_cast %102 : vector<512x8xf32> to vector<16x32x8xf32>
    %112 = vector.shape_cast %106 : vector<512x8xf32> to vector<16x32x8xf32>
    %c31_i32_105 = arith.constant 31 : i32
    %113 = tpu.dynamic_rotate %112 by %c31_i32_105 dim 1 : vector<16x32x8xf32>, i32 -> vector<16x32x8xf32>
    %114 = arith.addf %111, %113 : vector<16x32x8xf32>
    %115 = vector.shape_cast %110 : vector<512x8xf32> to vector<16x32x8xf32>
    %c30_i32 = arith.constant 30 : i32
    %116 = tpu.dynamic_rotate %115 by %c30_i32 dim 1 : vector<16x32x8xf32>, i32 -> vector<16x32x8xf32>
    %117 = arith.addf %114, %116 : vector<16x32x8xf32>
    %c0_106 = arith.constant 0 : index
    %c1_107 = arith.constant 1 : index
    %c0_108 = arith.constant 0 : index
    %c0_109 = arith.constant 0 : index
    %118 = vector.load %arg1[%c0_106, %c1_107, %c0_108, %c0_109] : memref<1x18x32x8xbf16, #tpu.memory_space<vmem>>, vector<1x16x32x8xbf16>
    %119 = arith.extf %118 : vector<1x16x32x8xbf16> to vector<1x16x32x8xf32>
    %120 = vector.shape_cast %119 : vector<1x16x32x8xf32> to vector<16x32x8xf32>
    %c31_i32_110 = arith.constant 31 : i32
    %121 = tpu.dynamic_rotate %120 by %c31_i32_110 dim 1 : vector<16x32x8xf32>, i32 -> vector<16x32x8xf32>
    %c0_111 = arith.constant 0 : index
    %c0_112 = arith.constant 0 : index
    %122 = vector.load %arg6[%c0_111, %c0_112] : memref<1x8xf32, #tpu.memory_space<vmem>>, vector<1x8xf32>
    %123 = vector.shape_cast %122 : vector<1x8xf32> to vector<1x1x8xf32>
    %124 = vector.broadcast %123 : vector<1x1x8xf32> to vector<16x32x8xf32>
    %125 = arith.mulf %117, %124 : vector<16x32x8xf32>
    %c0_113 = arith.constant 0 : index
    %c0_114 = arith.constant 0 : index
    %126 = vector.load %arg7[%c0_113, %c0_114] : memref<1x8xf32, #tpu.memory_space<vmem>>, vector<1x8xf32>
    %127 = vector.shape_cast %126 : vector<1x8xf32> to vector<1x1x8xf32>
    %128 = vector.broadcast %127 : vector<1x1x8xf32> to vector<16x32x8xf32>
    %129 = arith.addf %125, %128 : vector<16x32x8xf32>
    %130 = arith.addf %129, %121 : vector<16x32x8xf32>
    %131 = vector.extract_strided_slice %130 {offsets = [0, 0, 0], sizes = [16, 16, 8], strides = [1, 1, 1]} : vector<16x32x8xf32> to vector<16x16x8xf32>
    %132 = arith.truncf %131 : vector<16x16x8xf32> to vector<16x16x8xbf16>
    %133 = vector.shape_cast %132 : vector<16x16x8xbf16> to vector<1x16x16x8xbf16>
    %c0_115 = arith.constant 0 : index
    %c0_116 = arith.constant 0 : index
    %c0_117 = arith.constant 0 : index
    %c0_118 = arith.constant 0 : index
    %134 = vector.load %arg8[%c0_115, %c0_116, %c0_117, %c0_118] : memref<1x16x16x8xbf16, #tpu.memory_space<vmem>>, vector<1x16x16x8xbf16>
    tpu.vector_store %arg8[%c0_115, %c0_116, %c0_117, %c0_118], %133 {strides = array<i32>} : memref<1x16x16x8xbf16, #tpu.memory_space<vmem>>, vector<1x16x16x8xbf16>,
    return
  }
  func.func @transform_0(%arg0: i32) -> (i32, i32, i32, i32) {
    %c0_i32 = arith.constant 0 : i32
    %c0_i32_0 = arith.constant 0 : i32
    %c0_i32_1 = arith.constant 0 : i32
    %c0_i32_2 = arith.constant 0 : i32
    return %arg0, %c0_i32, %c0_i32_0, %c0_i32_1 : i32, i32, i32, i32
  }
  func.func @transform_1(%arg0: i32) -> (i32, i32, i32) {
    %c0_i32 = arith.constant 0 : i32
    %c0_i32_0 = arith.constant 0 : i32
    %c0_i32_1 = arith.constant 0 : i32
    %c0_i32_2 = arith.constant 0 : i32
    return %c0_i32, %c0_i32_0, %c0_i32_1 : i32, i32, i32
  }
  func.func @transform_2(%arg0: i32) -> (i32, i32) {
    %c0_i32 = arith.constant 0 : i32
    %c0_i32_0 = arith.constant 0 : i32
    %c0_i32_1 = arith.constant 0 : i32
    return %c0_i32, %c0_i32_0 : i32, i32
  }
  func.func @transform_3(%arg0: i32) -> (i32, i32) {
    %c0_i32 = arith.constant 0 : i32
    %c0_i32_0 = arith.constant 0 : i32
    %c0_i32_1 = arith.constant 0 : i32
    return %c0_i32, %c0_i32_0 : i32, i32
  }
  func.func @transform_4(%arg0: i32) -> (i32, i32, i32) {
    %c0_i32 = arith.constant 0 : i32
    %c0_i32_0 = arith.constant 0 : i32
    %c0_i32_1 = arith.constant 0 : i32
    %c0_i32_2 = arith.constant 0 : i32
    return %c0_i32, %c0_i32_0, %c0_i32_1 : i32, i32, i32
  }
  func.func @transform_5(%arg0: i32) -> (i32, i32) {
    %c0_i32 = arith.constant 0 : i32
    %c0_i32_0 = arith.constant 0 : i32
    %c0_i32_1 = arith.constant 0 : i32
    return %c0_i32, %c0_i32_0 : i32, i32
  }
  func.func @transform_6(%arg0: i32) -> (i32, i32) {
    %c0_i32 = arith.constant 0 : i32
    %c0_i32_0 = arith.constant 0 : i32
    %c0_i32_1 = arith.constant 0 : i32
    return %c0_i32, %c0_i32_0 : i32, i32
  }
  func.func @transform_7(%arg0: i32) -> (i32, i32, i32, i32) {
    %c0_i32 = arith.constant 0 : i32
    %c0_i32_0 = arith.constant 0 : i32
    %c0_i32_1 = arith.constant 0 : i32
    %c0_i32_2 = arith.constant 0 : i32
    return %arg0, %c0_i32, %c0_i32_0, %c0_i32_1 : i32, i32, i32, i32
  }
}

</mosaic_0001>

<llo_original>
// kernel: tpu_custom_call.1
$region0: #{tpu_custom_call.1}
  #allocation0 [shape = 'u32[]', space=smem, size = 0x4, offset = 0x4, fixed_abs, tag = 'smem constant byte address 0x4 - core index']
  #allocation1 [shape = 'u32[72,128]{1,0:T(1,128)}', space=vmem, size = 0x9000, scoped, tag = 'internal scratch']
  #allocation2 [shape = 'bf16[1,18,32,8]{3,2,1,0:T(8,128)(2,1)}', space=vmem, size = 0x24000, scoped, tag = 'scratch operand']
  %s0 = inlined_call_operand.vmem [shape: bf16[2,18,32,8], index: 0, kind: input, shape index: {}]
  %s1 = inlined_call_operand.vmem [shape: bf16[9,8,8], index: 1, kind: input, shape index: {}]
  %s2 = inlined_call_operand.vmem [shape: f32[1,8], index: 2, kind: input, shape index: {}]
  %s3 = inlined_call_operand.vmem [shape: f32[1,8], index: 3, kind: input, shape index: {}]
  %s4 = inlined_call_operand.vmem [shape: bf16[9,8,8], index: 4, kind: input, shape index: {}]
  %s5 = inlined_call_operand.vmem [shape: f32[1,8], index: 5, kind: input, shape index: {}]
  %s6 = inlined_call_operand.vmem [shape: f32[1,8], index: 6, kind: input, shape index: {}]
  %s7 = inlined_call_operand.vmem [shape: bf16[2,16,16,8], index: 7, kind: output, shape index: {}]
  %s8 = sld [smem:[#allocation0]]
  $region61: #{tpu_custom_call.1} parent=0
    _
  %s10 = ssub.s32 1, %s8
  %s11 = scalar_select 0, %s10, %s8
  loop: start=0, step=1, limit=4
  $region2: #{tpu_custom_call.1} parent=0 // loop_pre_header
    _
  $region3: #{tpu_custom_call.1} parent=0 // loop_header
    %s13 = sphi 0, %s17
    %p14 = scmp.ge.s32.totalorder %s13, 4
    %s23 = sphi 0, %s25
    %s26 = sphi 0, %s23
    %s27 = sphi 0, %s26
    %s43 = sphi 0, %s27
    %s47 = sphi 0, %s47
    %s49 = sphi 0, %s47
    %s50 = sphi 0, %s49
    %s64 = sphi 0, %s50
    %s68 = sphi 0, %s68
    %s70 = sphi 0, %s68
    %s71 = sphi 0, %s70
    %s85 = sphi 0, %s71
    %s89 = sphi 0, %s89
    %s91 = sphi 0, %s89
    %s92 = sphi 0, %s91
    %s106 = sphi 0, %s92
    %s110 = sphi 0, %s110
    %s112 = sphi 0, %s110
    %s113 = sphi 0, %s112
    %s127 = sphi 0, %s113
    %s131 = sphi 0, %s131
    %s133 = sphi 0, %s131
    %s134 = sphi 0, %s133
    %s148 = sphi 0, %s134
    %s152 = sphi 0, %s152
    %s154 = sphi 0, %s152
    %s155 = sphi 0, %s154
    %s169 = sphi 0, %s155
    %s175 = sphi 0, %s177
    %s178 = sphi 0, %s175
    %s179 = sphi 0, %s178
    %s195 = sphi 0, %s179
  $region4: #{tpu_custom_call.1} parent=0 // loop_header_branch
    %16 = sbr.rel (%p14) target = $region8
  $region5: #{tpu_custom_call.1} parent=0 // loop_body
    %s18 = ssub.s32 %s13, 1
    %s19 = ssub.s32 %s13, 2
    %s20 = sadd.s32 %s13, 1
    %s21 = ssub.s32 %s13, %s20
    %p22 = scmp.eq.s32.totalorder %s21, 0
    %s24 = sadd.s32 %s23, 1
    %s25 = scalar_select %p22, %s23, %s24
    %p28 = pneg %p22
    %p29 = scmp.eq.s32.totalorder %s13, 1
    %p30 = por %p28, %p29
    %p31 = scmp.ne.s32.totalorder %s23, %s26
    %p32 = scmp.eq.s32.totalorder %s13, 0
    %p33 = por %p31, %p32
    %p34 = scmp.ne.s32.totalorder %s23, %s26
    %p35 = scmp.eq.s32.totalorder %s18, 1
    %p36 = por %p34, %p35
    %p37 = scmp.ne.s32.totalorder %s26, %s27
    %p38 = scmp.eq.s32.totalorder %s18, 0
    %p39 = por %p37, %p38
    %p40 = scmp.ne.s32.totalorder %s26, %s27
    %p41 = scmp.eq.s32.totalorder %s19, 1
    %p42 = por %p40, %p41
    %p44 = scmp.ne.s32.totalorder %s27, %s43
    %p45 = scmp.eq.s32.totalorder %s19, 0
    %p46 = por %p44, %p45
    %s48 = sadd.s32 %s47, 1
    %p51 = scmp.eq.s32.totalorder %s13, 1
    %p52 = scmp.ne.s32.totalorder %s47, %s49
    %p53 = scmp.eq.s32.totalorder %s13, 0
    %p54 = por %p52, %p53
    %p55 = scmp.ne.s32.totalorder %s47, %s49
    %p56 = scmp.eq.s32.totalorder %s18, 1
    %p57 = por %p55, %p56
    %p58 = scmp.ne.s32.totalorder %s49, %s50
    %p59 = scmp.eq.s32.totalorder %s18, 0
    %p60 = por %p58, %p59
    %p61 = scmp.ne.s32.totalorder %s49, %s50
    %p62 = scmp.eq.s32.totalorder %s19, 1
    %p63 = por %p61, %p62
    %p65 = scmp.ne.s32.totalorder %s50, %s64
    %p66 = scmp.eq.s32.totalorder %s19, 0
    %p67 = por %p65, %p66
    %s69 = sadd.s32 %s68, 1
    %p72 = scmp.eq.s32.totalorder %s13, 1
    %p73 = scmp.ne.s32.totalorder %s68, %s70
    %p74 = scmp.eq.s32.totalorder %s13, 0
    %p75 = por %p73, %p74
    %p76 = scmp.ne.s32.totalorder %s68, %s70
    %p77 = scmp.eq.s32.totalorder %s18, 1
    %p78 = por %p76, %p77
    %p79 = scmp.ne.s32.totalorder %s70, %s71
    %p80 = scmp.eq.s32.totalorder %s18, 0
    %p81 = por %p79, %p80
    %p82 = scmp.ne.s32.totalorder %s70, %s71
    %p83 = scmp.eq.s32.totalorder %s19, 1
    %p84 = por %p82, %p83
    %p86 = scmp.ne.s32.totalorder %s71, %s85
    %p87 = scmp.eq.s32.totalorder %s19, 0
    %p88 = por %p86, %p87
    %s90 = sadd.s32 %s89, 1
    %p93 = scmp.eq.s32.totalorder %s13, 1
    %p94 = scmp.ne.s32.totalorder %s89, %s91
    %p95 = scmp.eq.s32.totalorder %s13, 0
    %p96 = por %p94, %p95
    %p97 = scmp.ne.s32.totalorder %s89, %s91
    %p98 = scmp.eq.s32.totalorder %s18, 1
    %p99 = por %p97, %p98
    %p100 = scmp.ne.s32.totalorder %s91, %s92
    %p101 = scmp.eq.s32.totalorder %s18, 0
    %p102 = por %p100, %p101
    %p103 = scmp.ne.s32.totalorder %s91, %s92
    %p104 = scmp.eq.s32.totalorder %s19, 1
    %p105 = por %p103, %p104
    %p107 = scmp.ne.s32.totalorder %s92, %s106
    %p108 = scmp.eq.s32.totalorder %s19, 0
    %p109 = por %p107, %p108
    %s111 = sadd.s32 %s110, 1
    %p114 = scmp.eq.s32.totalorder %s13, 1
    %p115 = scmp.ne.s32.totalorder %s110, %s112
    %p116 = scmp.eq.s32.totalorder %s13, 0
    %p117 = por %p115, %p116
    %p118 = scmp.ne.s32.totalorder %s110, %s112
    %p119 = scmp.eq.s32.totalorder %s18, 1
    %p120 = por %p118, %p119
    %p121 = scmp.ne.s32.totalorder %s112, %s113
    %p122 = scmp.eq.s32.totalorder %s18, 0
    %p123 = por %p121, %p122
    %p124 = scmp.ne.s32.totalorder %s112, %s113
    %p125 = scmp.eq.s32.totalorder %s19, 1
    %p126 = por %p124, %p125
    %p128 = scmp.ne.s32.totalorder %s113, %s127
    %p129 = scmp.eq.s32.totalorder %s19, 0
    %p130 = por %p128, %p129
    %s132 = sadd.s32 %s131, 1
    %p135 = scmp.eq.s32.totalorder %s13, 1
    %p136 = scmp.ne.s32.totalorder %s131, %s133
    %p137 = scmp.eq.s32.totalorder %s13, 0
    %p138 = por %p136, %p137
    %p139 = scmp.ne.s32.totalorder %s131, %s133
    %p140 = scmp.eq.s32.totalorder %s18, 1
    %p141 = por %p139, %p140
    %p142 = scmp.ne.s32.totalorder %s133, %s134
    %p143 = scmp.eq.s32.totalorder %s18, 0
    %p144 = por %p142, %p143
    %p145 = scmp.ne.s32.totalorder %s133, %s134
    %p146 = scmp.eq.s32.totalorder %s19, 1
    %p147 = por %p145, %p146
    %p149 = scmp.ne.s32.totalorder %s134, %s148
    %p150 = scmp.eq.s32.totalorder %s19, 0
    %p151 = por %p149, %p150
    %s153 = sadd.s32 %s152, 1
    %p156 = scmp.eq.s32.totalorder %s13, 1
    %p157 = scmp.ne.s32.totalorder %s152, %s154
    %p158 = scmp.eq.s32.totalorder %s13, 0
    %p159 = por %p157, %p158
    %p160 = scmp.ne.s32.totalorder %s152, %s154
    %p161 = scmp.eq.s32.totalorder %s18, 1
    %p162 = por %p160, %p161
    %p163 = scmp.ne.s32.totalorder %s154, %s155
    %p164 = scmp.eq.s32.totalorder %s18, 0
    %p165 = por %p163, %p164
    %p166 = scmp.ne.s32.totalorder %s154, %s155
    %p167 = scmp.eq.s32.totalorder %s19, 1
    %p168 = por %p166, %p167
    %p170 = scmp.ne.s32.totalorder %s155, %s169
    %p171 = scmp.eq.s32.totalorder %s19, 0
    %p172 = por %p170, %p171
    %s173 = ssub.s32 %s13, %s20
    %p174 = scmp.eq.s32.totalorder %s173, 0
    %s176 = sadd.s32 %s175, 1
    %s177 = scalar_select %p174, %s175, %s176
    %p180 = pneg %p174
    %p181 = scmp.eq.s32.totalorder %s13, 1
    %p182 = por %p180, %p181
    %p183 = scmp.ne.s32.totalorder %s175, %s178
    %p184 = scmp.eq.s32.totalorder %s13, 0
    %p185 = por %p183, %p184
    %p186 = scmp.ne.s32.totalorder %s175, %s178
    %p187 = scmp.eq.s32.totalorder %s18, 1
    %p188 = por %p186, %p187
    %p189 = scmp.ne.s32.totalorder %s178, %s179
    %p190 = scmp.eq.s32.totalorder %s18, 0
    %p191 = por %p189, %p190
    %p192 = scmp.ne.s32.totalorder %s178, %s179
    %p193 = scmp.eq.s32.totalorder %s19, 1
    %p194 = por %p192, %p193
    %p196 = scmp.ne.s32.totalorder %s179, %s195
    %p197 = scmp.eq.s32.totalorder %s19, 0
    %p198 = por %p196, %p197
    %p199 = scmp.le.s32.totalorder 1, %s13
    %p200 = scmp.lt.s32.totalorder %s13, 3
    %p201 = pnand %p199, %p200
    %p202 = pneg %p201
    // Predicated region
    $region9: #{tpu_custom_call.1} parent=5 // pred_check
      _
    $region10: #{tpu_custom_call.1} parent=5 // pred_check_branch
      %204 = sbr.rel (%p201) target = $region12
    $region11: #{tpu_custom_call.1} parent=5 // pred_region
      %s205 = ssub.s32 %s13, 1
      // Predicated region
      $region13: #{tpu_custom_call.1} parent=11 // pred_check
        %p206 = pneg %p60
      $region14: #{tpu_custom_call.1} parent=11 // pred_check_branch
        %208 = sbr.rel (%p206) target = $region16
      $region15: #{tpu_custom_call.1} parent=11 // pred_region
        _
      $region16: #{tpu_custom_call.1} parent=11 // pred_fallthru
        _
      // Predicated region
      $region17: #{tpu_custom_call.1} parent=11 // pred_check
        %p209 = pneg %p81
      $region18: #{tpu_custom_call.1} parent=11 // pred_check_branch
        %211 = sbr.rel (%p209) target = $region20
      $region19: #{tpu_custom_call.1} parent=11 // pred_region
        _
      $region20: #{tpu_custom_call.1} parent=11 // pred_fallthru
        _
      // Predicated region
      $region21: #{tpu_custom_call.1} parent=11 // pred_check
        %p212 = pneg %p102
      $region22: #{tpu_custom_call.1} parent=11 // pred_check_branch
        %214 = sbr.rel (%p212) target = $region24
      $region23: #{tpu_custom_call.1} parent=11 // pred_region
        _
      $region24: #{tpu_custom_call.1} parent=11 // pred_fallthru
        _
      // Predicated region
      $region25: #{tpu_custom_call.1} parent=11 // pred_check
        %p215 = pneg %p123
      $region26: #{tpu_custom_call.1} parent=11 // pred_check_branch
        %217 = sbr.rel (%p215) target = $region28
      $region27: #{tpu_custom_call.1} parent=11 // pred_region
        _
      $region28: #{tpu_custom_call.1} parent=11 // pred_fallthru
        _
      // Predicated region
      $region29: #{tpu_custom_call.1} parent=11 // pred_check
        %p218 = pneg %p144
      $region30: #{tpu_custom_call.1} parent=11 // pred_check_branch
        %220 = sbr.rel (%p218) target = $region32
      $region31: #{tpu_custom_call.1} parent=11 // pred_region
        _
      $region32: #{tpu_custom_call.1} parent=11 // pred_fallthru
        _
      // Predicated region
      $region33: #{tpu_custom_call.1} parent=11 // pred_check
        %p221 = pneg %p165
      $region34: #{tpu_custom_call.1} parent=11 // pred_check_branch
        %223 = sbr.rel (%p221) target = $region36
      $region35: #{tpu_custom_call.1} parent=11 // pred_region
        _
      $region36: #{tpu_custom_call.1} parent=11 // pred_fallthru
        _
    $region12: #{tpu_custom_call.1} parent=5 // pred_fallthru
      _
    %p224 = scmp.lt.s32.totalorder %s13, 2
    // Predicated region
    $region37: #{tpu_custom_call.1} parent=5 // pred_check
      %p225 = pneg %p224
    $region38: #{tpu_custom_call.1} parent=5 // pred_check_branch
      %227 = sbr.rel (%p225) target = $region40
    $region39: #{tpu_custom_call.1} parent=5 // pred_region
      // Predicated region
      $region41: #{tpu_custom_call.1} parent=39 // pred_check
        %p228 = pneg %p33
      $region42: #{tpu_custom_call.1} parent=39 // pred_check_branch
        %230 = sbr.rel (%p228) target = $region44
      $region43: #{tpu_custom_call.1} parent=39 // pred_region
        %p231 = scmp.lt.s32.totalorder %s13, 1
        %s232 = scalar_select %p231, %s13, 1
        %s233 = smul.addr %s232, 72
        %s234 = smul.addr %s233, 4
        %s235 = scalar_lea.vmem %s0, %s234
      $region44: #{tpu_custom_call.1} parent=39 // pred_fallthru
        _
    $region40: #{tpu_custom_call.1} parent=5 // pred_fallthru
      _
    %p236 = scmp.le.s32.totalorder 1, %s13
    %p237 = scmp.lt.s32.totalorder %s13, 3
    %p238 = pnand %p236, %p237
    %p239 = pneg %p238
    // Predicated region
    $region45: #{tpu_custom_call.1} parent=5 // pred_check
      _
    $region46: #{tpu_custom_call.1} parent=5 // pred_check_branch
      %241 = sbr.rel (%p238) target = $region48
    $region47: #{tpu_custom_call.1} parent=5 // pred_region
      %s242 = ssub.s32 %s13, 1
      %p243 = scmp.lt.s32.totalorder %s18, 1
      %s244 = scalar_select %p243, %s18, 1
      %s245 = smul.addr %s244, 72
      %s246 = smul.addr %s245, 4
      %s247 = scalar_lea.vmem %s0, %s246
      %p248 = pneg %p39
      %p249 = pneg %p36
      %p250 = pneg %p60
      %p251 = pneg %p57
      %p252 = pneg %p81
      %p253 = pneg %p78
      %p254 = pneg %p102
      %p255 = pneg %p99
      %p256 = pneg %p123
      %p257 = pneg %p120
      %p258 = pneg %p144
      %p259 = pneg %p141
      %p260 = pneg %p165
      %p261 = pneg %p162
      %p262 = pneg %p191
      %p263 = pneg %p188
      %p264 = scmp.lt.s32.totalorder %s18, 1
      %s265 = scalar_select %p264, %s18, 1
      %s266 = smul.addr %s265, 32
      %s267 = smul.addr %s266, 4
      %s268 = scalar_lea.vmem %s7, %s267
      %p269 = scmp.lt.s32.totalorder %s18, 1
      %s270 = scalar_select %p269, %s18, 1
      %s271 = smul.addr %s270, 72
      %s272 = smul.addr %s271, 4
      %s273 = scalar_lea.vmem %s0, %s272
      %p274 = scmp.lt.s32.totalorder %s18, 1
      %s275 = scalar_select %p274, %s18, 1
      %s276 = smul.addr %s275, 32
      %s277 = smul.addr %s276, 4
      %s278 = scalar_lea.vmem %s7, %s277
      %v280 = vld [vmem:[%s273] sm:$0xf]
      %v281 = vld [vmem:[%s273 + $0x4] sm:$0xf]
      %v282 = vld [vmem:[%s273 + $0x8] sm:$0xf]
      %v283 = vld [vmem:[%s273 + $0xc] sm:$0xf]
      %v284 = vld [vmem:[%s273 + $0x10] sm:$0xf]
      %v285 = vld [vmem:[%s273 + $0x14] sm:$0xf]
      %v286 = vld [vmem:[%s273 + $0x18] sm:$0xf]
      %v287 = vld [vmem:[%s273 + $0x1c] sm:$0xf]
      %v288 = vld [vmem:[%s273 + $0x20] sm:$0xf]
      %v289 = vld [vmem:[%s273 + $0x24] sm:$0xf]
      %v290 = vld [vmem:[%s273 + $0x28] sm:$0xf]
      %v291 = vld [vmem:[%s273 + $0x2c] sm:$0xf]
      %v292 = vld [vmem:[%s273 + $0x30] sm:$0xf]
      %v293 = vld [vmem:[%s273 + $0x34] sm:$0xf]
      %v294 = vld [vmem:[%s273 + $0x38] sm:$0xf]
      %v295 = vld [vmem:[%s273 + $0x3c] sm:$0xf]
      %v296 = vld [vmem:[%s273 + $0x40] sm:$0xf]
      %v297 = vld [vmem:[%s273 + $0x44] sm:$0xf]
      %v298 = vld [vmem:[%s273 + $0x48] sm:$0xf]
      %v299 = vld [vmem:[%s273 + $0x4c] sm:$0xf]
      %v300 = vld [vmem:[%s273 + $0x50] sm:$0xf]
      %v301 = vld [vmem:[%s273 + $0x54] sm:$0xf]
      %v302 = vld [vmem:[%s273 + $0x58] sm:$0xf]
      %v303 = vld [vmem:[%s273 + $0x5c] sm:$0xf]
      %v304 = vld [vmem:[%s273 + $0x60] sm:$0xf]
      %v305 = vld [vmem:[%s273 + $0x64] sm:$0xf]
      %v306 = vld [vmem:[%s273 + $0x68] sm:$0xf]
      %v307 = vld [vmem:[%s273 + $0x6c] sm:$0xf]
      %v308 = vld [vmem:[%s273 + $0x70] sm:$0xf]
      %v309 = vld [vmem:[%s273 + $0x74] sm:$0xf]
      %v310 = vld [vmem:[%s273 + $0x78] sm:$0xf]
      %v311 = vld [vmem:[%s273 + $0x7c] sm:$0xf]
      %v312 = vld [vmem:[%s273 + $0x80] sm:$0xf]
      %v313 = vld [vmem:[%s273 + $0x84] sm:$0xf]
      %v314 = vld [vmem:[%s273 + $0x88] sm:$0xf]
      %v315 = vld [vmem:[%s273 + $0x8c] sm:$0xf]
      %v316 = vld [vmem:[%s273 + $0x90] sm:$0xf]
      %v317 = vld [vmem:[%s273 + $0x94] sm:$0xf]
      %v318 = vld [vmem:[%s273 + $0x98] sm:$0xf]
      %v319 = vld [vmem:[%s273 + $0x9c] sm:$0xf]
      %v320 = vld [vmem:[%s273 + $0xa0] sm:$0xf]
      %v321 = vld [vmem:[%s273 + $0xa4] sm:$0xf]
      %v322 = vld [vmem:[%s273 + $0xa8] sm:$0xf]
      %v323 = vld [vmem:[%s273 + $0xac] sm:$0xf]
      %v324 = vld [vmem:[%s273 + $0xb0] sm:$0xf]
      %v325 = vld [vmem:[%s273 + $0xb4] sm:$0xf]
      %v326 = vld [vmem:[%s273 + $0xb8] sm:$0xf]
      %v327 = vld [vmem:[%s273 + $0xbc] sm:$0xf]
      %v328 = vld [vmem:[%s273 + $0xc0] sm:$0xf]
      %v329 = vld [vmem:[%s273 + $0xc4] sm:$0xf]
      %v330 = vld [vmem:[%s273 + $0xc8] sm:$0xf]
      %v331 = vld [vmem:[%s273 + $0xcc] sm:$0xf]
      %v332 = vld [vmem:[%s273 + $0xd0] sm:$0xf]
      %v333 = vld [vmem:[%s273 + $0xd4] sm:$0xf]
      %v334 = vld [vmem:[%s273 + $0xd8] sm:$0xf]
      %v335 = vld [vmem:[%s273 + $0xdc] sm:$0xf]
      %v336 = vld [vmem:[%s273 + $0xe0] sm:$0xf]
      %v337 = vld [vmem:[%s273 + $0xe4] sm:$0xf]
      %v338 = vld [vmem:[%s273 + $0xe8] sm:$0xf]
      %v339 = vld [vmem:[%s273 + $0xec] sm:$0xf]
      %v340 = vld [vmem:[%s273 + $0xf0] sm:$0xf]
      %v341 = vld [vmem:[%s273 + $0xf4] sm:$0xf]
      %v342 = vld [vmem:[%s273 + $0xf8] sm:$0xf]
      %v343 = vld [vmem:[%s273 + $0xfc] sm:$0xf]
      %v344 = vld [vmem:[%s1] sm:$0xf]
      %s345 = scalar_lea.vmem %s1, 4
      %v346 = vld [vmem:[%s345] sm:$0xf]
      %s347 = scalar_lea.vmem %s1, 8
      %v348 = vld [vmem:[%s347] sm:$0xf]
      %s349 = scalar_lea.vmem %s273, 16
      %v350 = vld [vmem:[%s349] sm:$0xf]
      %v351 = vld [vmem:[%s349 + $0x4] sm:$0xf]
      %v352 = vld [vmem:[%s349 + $0x8] sm:$0xf]
      %v353 = vld [vmem:[%s349 + $0xc] sm:$0xf]
      %v354 = vld [vmem:[%s349 + $0x10] sm:$0xf]
      %v355 = vld [vmem:[%s349 + $0x14] sm:$0xf]
      %v356 = vld [vmem:[%s349 + $0x18] sm:$0xf]
      %v357 = vld [vmem:[%s349 + $0x1c] sm:$0xf]
      %v358 = vld [vmem:[%s349 + $0x20] sm:$0xf]
      %v359 = vld [vmem:[%s349 + $0x24] sm:$0xf]
      %v360 = vld [vmem:[%s349 + $0x28] sm:$0xf]
      %v361 = vld [vmem:[%s349 + $0x2c] sm:$0xf]
      %v362 = vld [vmem:[%s349 + $0x30] sm:$0xf]
      %v363 = vld [vmem:[%s349 + $0x34] sm:$0xf]
      %v364 = vld [vmem:[%s349 + $0x38] sm:$0xf]
      %v365 = vld [vmem:[%s349 + $0x3c] sm:$0xf]
      %v366 = vld [vmem:[%s349 + $0x40] sm:$0xf]
      %v367 = vld [vmem:[%s349 + $0x44] sm:$0xf]
      %v368 = vld [vmem:[%s349 + $0x48] sm:$0xf]
      %v369 = vld [vmem:[%s349 + $0x4c] sm:$0xf]
      %v370 = vld [vmem:[%s349 + $0x50] sm:$0xf]
      %v371 = vld [vmem:[%s349 + $0x54] sm:$0xf]
      %v372 = vld [vmem:[%s349 + $0x58] sm:$0xf]
      %v373 = vld [vmem:[%s349 + $0x5c] sm:$0xf]
      %v374 = vld [vmem:[%s349 + $0x60] sm:$0xf]
      %v375 = vld [vmem:[%s349 + $0x64] sm:$0xf]
      %v376 = vld [vmem:[%s349 + $0x68] sm:$0xf]
      %v377 = vld [vmem:[%s349 + $0x6c] sm:$0xf]
      %v378 = vld [vmem:[%s349 + $0x70] sm:$0xf]
      %v379 = vld [vmem:[%s349 + $0x74] sm:$0xf]
      %v380 = vld [vmem:[%s349 + $0x78] sm:$0xf]
      %v381 = vld [vmem:[%s349 + $0x7c] sm:$0xf]
      %v382 = vld [vmem:[%s349 + $0x80] sm:$0xf]
      %v383 = vld [vmem:[%s349 + $0x84] sm:$0xf]
      %v384 = vld [vmem:[%s349 + $0x88] sm:$0xf]
      %v385 = vld [vmem:[%s349 + $0x8c] sm:$0xf]
      %v386 = vld [vmem:[%s349 + $0x90] sm:$0xf]
      %v387 = vld [vmem:[%s349 + $0x94] sm:$0xf]
      %v388 = vld [vmem:[%s349 + $0x98] sm:$0xf]
      %v389 = vld [vmem:[%s349 + $0x9c] sm:$0xf]
      %v390 = vld [vmem:[%s349 + $0xa0] sm:$0xf]
      %v391 = vld [vmem:[%s349 + $0xa4] sm:$0xf]
      %v392 = vld [vmem:[%s349 + $0xa8] sm:$0xf]
      %v393 = vld [vmem:[%s349 + $0xac] sm:$0xf]
      %v394 = vld [vmem:[%s349 + $0xb0] sm:$0xf]
      %v395 = vld [vmem:[%s349 + $0xb4] sm:$0xf]
      %v396 = vld [vmem:[%s349 + $0xb8] sm:$0xf]
      %v397 = vld [vmem:[%s349 + $0xbc] sm:$0xf]
      %v398 = vld [vmem:[%s349 + $0xc0] sm:$0xf]
      %v399 = vld [vmem:[%s349 + $0xc4] sm:$0xf]
      %v400 = vld [vmem:[%s349 + $0xc8] sm:$0xf]
      %v401 = vld [vmem:[%s349 + $0xcc] sm:$0xf]
      %v402 = vld [vmem:[%s349 + $0xd0] sm:$0xf]
      %v403 = vld [vmem:[%s349 + $0xd4] sm:$0xf]
      %v404 = vld [vmem:[%s349 + $0xd8] sm:$0xf]
      %v405 = vld [vmem:[%s349 + $0xdc] sm:$0xf]
      %v406 = vld [vmem:[%s349 + $0xe0] sm:$0xf]
      %v407 = vld [vmem:[%s349 + $0xe4] sm:$0xf]
      %v408 = vld [vmem:[%s349 + $0xe8] sm:$0xf]
      %v409 = vld [vmem:[%s349 + $0xec] sm:$0xf]
      %v410 = vld [vmem:[%s349 + $0xf0] sm:$0xf]
      %v411 = vld [vmem:[%s349 + $0xf4] sm:$0xf]
      %v412 = vld [vmem:[%s349 + $0xf8] sm:$0xf]
      %v413 = vld [vmem:[%s349 + $0xfc] sm:$0xf]
      %s414 = scalar_lea.vmem %s1, 12
      %v415 = vld [vmem:[%s414] sm:$0xf]
      %v480 = vunpack.c.l.b16 %v350
      %v481 = vunpack.c.l.b16 %v351
      %v482 = vunpack.c.l.b16 %v352
      %v483 = vunpack.c.l.b16 %v353
      %v484 = vunpack.c.l.b16 %v354
      %v485 = vunpack.c.l.b16 %v355
      %v486 = vunpack.c.l.b16 %v356
      %v487 = vunpack.c.l.b16 %v357
      %v488 = vunpack.c.l.b16 %v358
      %v489 = vunpack.c.l.b16 %v359
      %v490 = vunpack.c.l.b16 %v360
      %v491 = vunpack.c.l.b16 %v361
      %v492 = vunpack.c.l.b16 %v362
      %v493 = vunpack.c.l.b16 %v363
      %v494 = vunpack.c.l.b16 %v364
      %v495 = vunpack.c.l.b16 %v365
      %v496 = vunpack.c.l.b16 %v366
      %v497 = vunpack.c.l.b16 %v367
      %v498 = vunpack.c.l.b16 %v368
      %v499 = vunpack.c.l.b16 %v369
      %v500 = vunpack.c.l.b16 %v370
      %v501 = vunpack.c.l.b16 %v371
      %v502 = vunpack.c.l.b16 %v372
      %v503 = vunpack.c.l.b16 %v373
      %v504 = vunpack.c.l.b16 %v374
      %v505 = vunpack.c.l.b16 %v375
      %v506 = vunpack.c.l.b16 %v376
      %v507 = vunpack.c.l.b16 %v377
      %v508 = vunpack.c.l.b16 %v378
      %v509 = vunpack.c.l.b16 %v379
      %v510 = vunpack.c.l.b16 %v380
      %v511 = vunpack.c.l.b16 %v381
      %v512 = vunpack.c.l.b16 %v382
      %v513 = vunpack.c.l.b16 %v383
      %v514 = vunpack.c.l.b16 %v384
      %v515 = vunpack.c.l.b16 %v385
      %v516 = vunpack.c.l.b16 %v386
      %v517 = vunpack.c.l.b16 %v387
      %v518 = vunpack.c.l.b16 %v388
      %v519 = vunpack.c.l.b16 %v389
      %v520 = vunpack.c.l.b16 %v390
      %v521 = vunpack.c.l.b16 %v391
      %v522 = vunpack.c.l.b16 %v392
      %v523 = vunpack.c.l.b16 %v393
      %v524 = vunpack.c.l.b16 %v394
      %v525 = vunpack.c.l.b16 %v395
      %v526 = vunpack.c.l.b16 %v396
      %v527 = vunpack.c.l.b16 %v397
      %v528 = vunpack.c.l.b16 %v398
      %v529 = vunpack.c.l.b16 %v399
      %v530 = vunpack.c.l.b16 %v400
      %v531 = vunpack.c.l.b16 %v401
      %v532 = vunpack.c.l.b16 %v402
      %v533 = vunpack.c.l.b16 %v403
      %v534 = vunpack.c.l.b16 %v404
      %v535 = vunpack.c.l.b16 %v405
      %v536 = vunpack.c.l.b16 %v406
      %v537 = vunpack.c.l.b16 %v407
      %v538 = vunpack.c.l.b16 %v408
      %v539 = vunpack.c.l.b16 %v409
      %v540 = vunpack.c.l.b16 %v410
      %v541 = vunpack.c.l.b16 %v411
      %v542 = vunpack.c.l.b16 %v412
      %v543 = vunpack.c.l.b16 %v413
      %v544 = vpack.c.b16 %v481, %v480
      %v545 = vpack.c.b16 %v483, %v482
      %v546 = vpack.c.b16 %v485, %v484
      %v547 = vpack.c.b16 %v487, %v486
      %v548 = vpack.c.b16 %v489, %v488
      %v549 = vpack.c.b16 %v491, %v490
      %v550 = vpack.c.b16 %v493, %v492
      %v551 = vpack.c.b16 %v495, %v494
      %v552 = vpack.c.b16 %v497, %v496
      %v553 = vpack.c.b16 %v499, %v498
      %v554 = vpack.c.b16 %v501, %v500
      %v555 = vpack.c.b16 %v503, %v502
      %v556 = vpack.c.b16 %v505, %v504
      %v557 = vpack.c.b16 %v507, %v506
      %v558 = vpack.c.b16 %v509, %v508
      %v559 = vpack.c.b16 %v511, %v510
      %v560 = vpack.c.b16 %v513, %v512
      %v561 = vpack.c.b16 %v515, %v514
      %v562 = vpack.c.b16 %v517, %v516
      %v563 = vpack.c.b16 %v519, %v518
      %v564 = vpack.c.b16 %v521, %v520
      %v565 = vpack.c.b16 %v523, %v522
      %v566 = vpack.c.b16 %v525, %v524
      %v567 = vpack.c.b16 %v527, %v526
      %v568 = vpack.c.b16 %v529, %v528
      %v569 = vpack.c.b16 %v531, %v530
      %v570 = vpack.c.b16 %v533, %v532
      %v571 = vpack.c.b16 %v535, %v534
      %v572 = vpack.c.b16 %v537, %v536
      %v573 = vpack.c.b16 %v539, %v538
      %v574 = vpack.c.b16 %v541, %v540
      %v575 = vpack.c.b16 %v543, %v542
      %vm576 = vcmask 64512
      %v578 = vsel %vm576, %v544, 0
      %v581 = vsel %vm576, %v545, 0
      %v584 = vsel %vm576, %v546, 0
      %v587 = vsel %vm576, %v547, 0
      %v590 = vsel %vm576, %v548, 0
      %v593 = vsel %vm576, %v549, 0
      %v596 = vsel %vm576, %v550, 0
      %v599 = vsel %vm576, %v551, 0
      %v602 = vsel %vm576, %v552, 0
      %v605 = vsel %vm576, %v553, 0
      %v608 = vsel %vm576, %v554, 0
      %v611 = vsel %vm576, %v555, 0
      %v614 = vsel %vm576, %v556, 0
      %v617 = vsel %vm576, %v557, 0
      %v620 = vsel %vm576, %v558, 0
      %v623 = vsel %vm576, %v559, 0
      %v626 = vsel %vm576, %v560, 0
      %v629 = vsel %vm576, %v561, 0
      %v632 = vsel %vm576, %v562, 0
      %v635 = vsel %vm576, %v563, 0
      %v638 = vsel %vm576, %v564, 0
      %v641 = vsel %vm576, %v565, 0
      %v644 = vsel %vm576, %v566, 0
      %v647 = vsel %vm576, %v567, 0
      %v650 = vsel %vm576, %v568, 0
      %v653 = vsel %vm576, %v569, 0
      %v656 = vsel %vm576, %v570, 0
      %v659 = vsel %vm576, %v571, 0
      %v662 = vsel %vm576, %v572, 0
      %v665 = vsel %vm576, %v573, 0
      %v668 = vsel %vm576, %v574, 0
      %v671 = vsel %vm576, %v575, 0
      %vm673 = vcmask 1043456
      %v675 = vsel %vm673, %v415, 0
      %677 = vmatpush.bf16.msra.mxu0 0
      %678 = vmatpush.bf16.msra.mxu0 0
      %679 = vmatpush.bf16.msra.mxu0 0
      %680 = vmatpush.bf16.msra.mxu0 0
      %681 = vmatpush.bf16.msra.mxu0 0
      %682 = vmatpush.bf16.msra.mxu0 0
      %683 = vmatpush.bf16.msra.mxu0 0
      %684 = vmatpush.bf16.msra.mxu0 %v675
      %685 = vmatmul.bf16.gmra.mxu0 %v578
      %v686 = vpop.f32.mrf.mxu0
      %v687 = vadd.f32 0.0, %v686
      %v688 = vpop.f32.mrf.mxu0
      %v689 = vadd.f32 0.0, %v688
      %690 = vmatmul.bf16.gmra.mxu0 %v581
      %v691 = vpop.f32.mrf.mxu0
      %v692 = vadd.f32 0.0, %v691
      %v693 = vpop.f32.mrf.mxu0
      %v694 = vadd.f32 0.0, %v693
      %695 = vmatmul.bf16.gmra.mxu0 %v584
      %v696 = vpop.f32.mrf.mxu0
      %v697 = vadd.f32 0.0, %v696
      %v698 = vpop.f32.mrf.mxu0
      %v699 = vadd.f32 0.0, %v698
      %700 = vmatmul.bf16.gmra.mxu0 %v587
      %v701 = vpop.f32.mrf.mxu0
      %v702 = vadd.f32 0.0, %v701
      %v703 = vpop.f32.mrf.mxu0
      %v704 = vadd.f32 0.0, %v703
      %705 = vmatmul.bf16.gmra.mxu0 %v590
      %v706 = vpop.f32.mrf.mxu0
      %v707 = vadd.f32 0.0, %v706
      %v708 = vpop.f32.mrf.mxu0
      %v709 = vadd.f32 0.0, %v708
      %710 = vmatmul.bf16.gmra.mxu0 %v593
      %v711 = vpop.f32.mrf.mxu0
      %v712 = vadd.f32 0.0, %v711
      %v713 = vpop.f32.mrf.mxu0
      %v714 = vadd.f32 0.0, %v713
      %715 = vmatmul.bf16.gmra.mxu0 %v596
      %v716 = vpop.f32.mrf.mxu0
      %v717 = vadd.f32 0.0, %v716
      %v718 = vpop.f32.mrf.mxu0
      %v719 = vadd.f32 0.0, %v718
      %720 = vmatmul.bf16.gmra.mxu0 %v599
      %v721 = vpop.f32.mrf.mxu0
      %v722 = vadd.f32 0.0, %v721
      %v723 = vpop.f32.mrf.mxu0
      %v724 = vadd.f32 0.0, %v723
      %725 = vmatmul.bf16.gmra.mxu0 %v602
      %v726 = vpop.f32.mrf.mxu0
      %v727 = vadd.f32 0.0, %v726
      %v728 = vpop.f32.mrf.mxu0
      %v729 = vadd.f32 0.0, %v728
      %730 = vmatmul.bf16.gmra.mxu0 %v605
      %v731 = vpop.f32.mrf.mxu0
      %v732 = vadd.f32 0.0, %v731
      %v733 = vpop.f32.mrf.mxu0
      %v734 = vadd.f32 0.0, %v733
      %735 = vmatmul.bf16.gmra.mxu0 %v608
      %v736 = vpop.f32.mrf.mxu0
      %v737 = vadd.f32 0.0, %v736
      %v738 = vpop.f32.mrf.mxu0
      %v739 = vadd.f32 0.0, %v738
      %740 = vmatmul.bf16.gmra.mxu0 %v611
      %v741 = vpop.f32.mrf.mxu0
      %v742 = vadd.f32 0.0, %v741
      %v743 = vpop.f32.mrf.mxu0
      %v744 = vadd.f32 0.0, %v743
      %745 = vmatmul.bf16.gmra.mxu0 %v614
      %v746 = vpop.f32.mrf.mxu0
      %v747 = vadd.f32 0.0, %v746
      %v748 = vpop.f32.mrf.mxu0
      %v749 = vadd.f32 0.0, %v748
      %750 = vmatmul.bf16.gmra.mxu0 %v617
      %v751 = vpop.f32.mrf.mxu0
      %v752 = vadd.f32 0.0, %v751
      %v753 = vpop.f32.mrf.mxu0
      %v754 = vadd.f32 0.0, %v753
      %755 = vmatmul.bf16.gmra.mxu0 %v620
      %v756 = vpop.f32.mrf.mxu0
      %v757 = vadd.f32 0.0, %v756
      %v758 = vpop.f32.mrf.mxu0
      %v759 = vadd.f32 0.0, %v758
      %760 = vmatmul.bf16.gmra.mxu0 %v623
      %v761 = vpop.f32.mrf.mxu0
      %v762 = vadd.f32 0.0, %v761
      %v763 = vpop.f32.mrf.mxu0
      %v764 = vadd.f32 0.0, %v763
      %765 = vmatmul.bf16.gmra.mxu0 %v626
      %v766 = vpop.f32.mrf.mxu0
      %v767 = vadd.f32 0.0, %v766
      %v768 = vpop.f32.mrf.mxu0
      %v769 = vadd.f32 0.0, %v768
      %770 = vmatmul.bf16.gmra.mxu0 %v629
      %v771 = vpop.f32.mrf.mxu0
      %v772 = vadd.f32 0.0, %v771
      %v773 = vpop.f32.mrf.mxu0
      %v774 = vadd.f32 0.0, %v773
      %775 = vmatmul.bf16.gmra.mxu0 %v632
      %v776 = vpop.f32.mrf.mxu0
      %v777 = vadd.f32 0.0, %v776
      %v778 = vpop.f32.mrf.mxu0
      %v779 = vadd.f32 0.0, %v778
      %780 = vmatmul.bf16.gmra.mxu0 %v635
      %v781 = vpop.f32.mrf.mxu0
      %v782 = vadd.f32 0.0, %v781
      %v783 = vpop.f32.mrf.mxu0
      %v784 = vadd.f32 0.0, %v783
      %785 = vmatmul.bf16.gmra.mxu0 %v638
      %v786 = vpop.f32.mrf.mxu0
      %v787 = vadd.f32 0.0, %v786
      %v788 = vpop.f32.mrf.mxu0
      %v789 = vadd.f32 0.0, %v788
      %790 = vmatmul.bf16.gmra.mxu0 %v641
      %v791 = vpop.f32.mrf.mxu0
      %v792 = vadd.f32 0.0, %v791
      %v793 = vpop.f32.mrf.mxu0
      %v794 = vadd.f32 0.0, %v793
      %795 = vmatmul.bf16.gmra.mxu0 %v644
      %v796 = vpop.f32.mrf.mxu0
      %v797 = vadd.f32 0.0, %v796
      %v798 = vpop.f32.mrf.mxu0
      %v799 = vadd.f32 0.0, %v798
      %800 = vmatmul.bf16.gmra.mxu0 %v647
      %v801 = vpop.f32.mrf.mxu0
      %v802 = vadd.f32 0.0, %v801
      %v803 = vpop.f32.mrf.mxu0
      %v804 = vadd.f32 0.0, %v803
      %805 = vmatmul.bf16.gmra.mxu0 %v650
      %v806 = vpop.f32.mrf.mxu0
      %v807 = vadd.f32 0.0, %v806
      %v808 = vpop.f32.mrf.mxu0
      %v809 = vadd.f32 0.0, %v808
      %810 = vmatmul.bf16.gmra.mxu0 %v653
      %v811 = vpop.f32.mrf.mxu0
      %v812 = vadd.f32 0.0, %v811
      %v813 = vpop.f32.mrf.mxu0
      %v814 = vadd.f32 0.0, %v813
      %815 = vmatmul.bf16.gmra.mxu0 %v656
      %v816 = vpop.f32.mrf.mxu0
      %v817 = vadd.f32 0.0, %v816
      %v818 = vpop.f32.mrf.mxu0
      %v819 = vadd.f32 0.0, %v818
      %820 = vmatmul.bf16.gmra.mxu0 %v659
      %v821 = vpop.f32.mrf.mxu0
      %v822 = vadd.f32 0.0, %v821
      %v823 = vpop.f32.mrf.mxu0
      %v824 = vadd.f32 0.0, %v823
      %825 = vmatmul.bf16.gmra.mxu0 %v662
      %v826 = vpop.f32.mrf.mxu0
      %v827 = vadd.f32 0.0, %v826
      %v828 = vpop.f32.mrf.mxu0
      %v829 = vadd.f32 0.0, %v828
      %830 = vmatmul.bf16.gmra.mxu0 %v665
      %v831 = vpop.f32.mrf.mxu0
      %v832 = vadd.f32 0.0, %v831
      %v833 = vpop.f32.mrf.mxu0
      %v834 = vadd.f32 0.0, %v833
      %835 = vmatmul.bf16.gmra.mxu0 %v668
      %v836 = vpop.f32.mrf.mxu0
      %v837 = vadd.f32 0.0, %v836
      %v838 = vpop.f32.mrf.mxu0
      %v839 = vadd.f32 0.0, %v838
      %840 = vmatmul.bf16.gmra.mxu0 %v671
      %v841 = vpop.f32.mrf.mxu0
      %v842 = vadd.f32 0.0, %v841
      %v843 = vpop.f32.mrf.mxu0
      %v844 = vadd.f32 0.0, %v843
      %845 = vdwg.mxu0
      %v910 = vunpack.c.l.b16 %v280
      %v911 = vunpack.c.l.b16 %v281
      %v912 = vunpack.c.l.b16 %v282
      %v913 = vunpack.c.l.b16 %v283
      %v914 = vunpack.c.l.b16 %v284
      %v915 = vunpack.c.l.b16 %v285
      %v916 = vunpack.c.l.b16 %v286
      %v917 = vunpack.c.l.b16 %v287
      %v918 = vunpack.c.l.b16 %v288
      %v919 = vunpack.c.l.b16 %v289
      %v920 = vunpack.c.l.b16 %v290
      %v921 = vunpack.c.l.b16 %v291
      %v922 = vunpack.c.l.b16 %v292
      %v923 = vunpack.c.l.b16 %v293
      %v924 = vunpack.c.l.b16 %v294
      %v925 = vunpack.c.l.b16 %v295
      %v926 = vunpack.c.l.b16 %v296
      %v927 = vunpack.c.l.b16 %v297
      %v928 = vunpack.c.l.b16 %v298
      %v929 = vunpack.c.l.b16 %v299
      %v930 = vunpack.c.l.b16 %v300
      %v931 = vunpack.c.l.b16 %v301
      %v932 = vunpack.c.l.b16 %v302
      %v933 = vunpack.c.l.b16 %v303
      %v934 = vunpack.c.l.b16 %v304
      %v935 = vunpack.c.l.b16 %v305
      %v936 = vunpack.c.l.b16 %v306
      %v937 = vunpack.c.l.b16 %v307
      %v938 = vunpack.c.l.b16 %v308
      %v939 = vunpack.c.l.b16 %v309
      %v940 = vunpack.c.l.b16 %v310
      %v941 = vunpack.c.l.b16 %v311
      %v942 = vunpack.c.l.b16 %v312
      %v943 = vunpack.c.l.b16 %v313
      %v944 = vunpack.c.l.b16 %v314
      %v945 = vunpack.c.l.b16 %v315
      %v946 = vunpack.c.l.b16 %v316
      %v947 = vunpack.c.l.b16 %v317
      %v948 = vunpack.c.l.b16 %v318
      %v949 = vunpack.c.l.b16 %v319
      %v950 = vunpack.c.l.b16 %v320
      %v951 = vunpack.c.l.b16 %v321
      %v952 = vunpack.c.l.b16 %v322
      %v953 = vunpack.c.l.b16 %v323
      %v954 = vunpack.c.l.b16 %v324
      %v955 = vunpack.c.l.b16 %v325
      %v956 = vunpack.c.l.b16 %v326
      %v957 = vunpack.c.l.b16 %v327
      %v958 = vunpack.c.l.b16 %v328
      %v959 = vunpack.c.l.b16 %v329
      %v960 = vunpack.c.l.b16 %v330
      %v961 = vunpack.c.l.b16 %v331
      %v962 = vunpack.c.l.b16 %v332
      %v963 = vunpack.c.l.b16 %v333
      %v964 = vunpack.c.l.b16 %v334
      %v965 = vunpack.c.l.b16 %v335
      %v966 = vunpack.c.l.b16 %v336
      %v967 = vunpack.c.l.b16 %v337
      %v968 = vunpack.c.l.b16 %v338
      %v969 = vunpack.c.l.b16 %v339
      %v970 = vunpack.c.l.b16 %v340
      %v971 = vunpack.c.l.b16 %v341
      %v972 = vunpack.c.l.b16 %v342
      %v973 = vunpack.c.l.b16 %v343
      %v974 = vpack.c.b16 %v911, %v910
      %v975 = vpack.c.b16 %v913, %v912
      %v976 = vpack.c.b16 %v915, %v914
      %v977 = vpack.c.b16 %v917, %v916
      %v978 = vpack.c.b16 %v919, %v918
      %v979 = vpack.c.b16 %v921, %v920
      %v980 = vpack.c.b16 %v923, %v922
      %v981 = vpack.c.b16 %v925, %v924
      %v982 = vpack.c.b16 %v927, %v926
      %v983 = vpack.c.b16 %v929, %v928
      %v984 = vpack.c.b16 %v931, %v930
      %v985 = vpack.c.b16 %v933, %v932
      %v986 = vpack.c.b16 %v935, %v934
      %v987 = vpack.c.b16 %v937, %v936
      %v988 = vpack.c.b16 %v939, %v938
      %v989 = vpack.c.b16 %v941, %v940
      %v990 = vpack.c.b16 %v943, %v942
      %v991 = vpack.c.b16 %v945, %v944
      %v992 = vpack.c.b16 %v947, %v946
      %v993 = vpack.c.b16 %v949, %v948
      %v994 = vpack.c.b16 %v951, %v950
      %v995 = vpack.c.b16 %v953, %v952
      %v996 = vpack.c.b16 %v955, %v954
      %v997 = vpack.c.b16 %v957, %v956
      %v998 = vpack.c.b16 %v959, %v958
      %v999 = vpack.c.b16 %v961, %v960
      %v1000 = vpack.c.b16 %v963, %v962
      %v1001 = vpack.c.b16 %v965, %v964
      %v1002 = vpack.c.b16 %v967, %v966
      %v1003 = vpack.c.b16 %v969, %v968
      %v1004 = vpack.c.b16 %v971, %v970
      %v1005 = vpack.c.b16 %v973, %v972
      %v1007 = vsel %vm576, %v974, 0
      %v1010 = vsel %vm576, %v975, 0
      %v1013 = vsel %vm576, %v976, 0
      %v1016 = vsel %vm576, %v977, 0
      %v1019 = vsel %vm576, %v978, 0
      %v1022 = vsel %vm576, %v979, 0
      %v1025 = vsel %vm576, %v980, 0
      %v1028 = vsel %vm576, %v981, 0
      %v1031 = vsel %vm576, %v982, 0
      %v1034 = vsel %vm576, %v983, 0
      %v1037 = vsel %vm576, %v984, 0
      %v1040 = vsel %vm576, %v985, 0
      %v1043 = vsel %vm576, %v986, 0
      %v1046 = vsel %vm576, %v987, 0
      %v1049 = vsel %vm576, %v988, 0
      %v1052 = vsel %vm576, %v989, 0
      %v1055 = vsel %vm576, %v990, 0
      %v1058 = vsel %vm576, %v991, 0
      %v1061 = vsel %vm576, %v992, 0
      %v1064 = vsel %vm576, %v993, 0
      %v1067 = vsel %vm576, %v994, 0
      %v1070 = vsel %vm576, %v995, 0
      %v1073 = vsel %vm576, %v996, 0
      %v1076 = vsel %vm576, %v997, 0
      %v1079 = vsel %vm576, %v998, 0
      %v1082 = vsel %vm576, %v999, 0
      %v1085 = vsel %vm576, %v1000, 0
      %v1088 = vsel %vm576, %v1001, 0
      %v1091 = vsel %vm576, %v1002, 0
      %v1094 = vsel %vm576, %v1003, 0
      %v1097 = vsel %vm576, %v1004, 0
      %v1100 = vsel %vm576, %v1005, 0
      %v1103 = vsel %vm673, %v344, 0
      %1105 = vmatpush.bf16.msra.mxu0 0
      %1106 = vmatpush.bf16.msra.mxu0 0
      %1107 = vmatpush.bf16.msra.mxu0 0
      %1108 = vmatpush.bf16.msra.mxu0 0
      %1109 = vmatpush.bf16.msra.mxu0 0
      %1110 = vmatpush.bf16.msra.mxu0 0
      %1111 = vmatpush.bf16.msra.mxu0 0
      %1112 = vmatpush.bf16.msra.mxu0 %v1103
      %1113 = vmatmul.bf16.gmra.mxu0 %v1007
      %v1114 = vpop.f32.mrf.mxu0
      %v1115 = vadd.f32 %v687, %v1114
      %v1116 = vpop.f32.mrf.mxu0
      %v1117 = vadd.f32 %v689, %v1116
      %1118 = vmatmul.bf16.gmra.mxu0 %v1010
      %v1119 = vpop.f32.mrf.mxu0
      %v1120 = vadd.f32 %v692, %v1119
      %v1121 = vpop.f32.mrf.mxu0
      %v1122 = vadd.f32 %v694, %v1121
      %1123 = vmatmul.bf16.gmra.mxu0 %v1013
      %v1124 = vpop.f32.mrf.mxu0
      %v1125 = vadd.f32 %v697, %v1124
      %v1126 = vpop.f32.mrf.mxu0
      %v1127 = vadd.f32 %v699, %v1126
      %1128 = vmatmul.bf16.gmra.mxu0 %v1016
      %v1129 = vpop.f32.mrf.mxu0
      %v1130 = vadd.f32 %v702, %v1129
      %v1131 = vpop.f32.mrf.mxu0
      %v1132 = vadd.f32 %v704, %v1131
      %1133 = vmatmul.bf16.gmra.mxu0 %v1019
      %v1134 = vpop.f32.mrf.mxu0
      %v1135 = vadd.f32 %v707, %v1134
      %v1136 = vpop.f32.mrf.mxu0
      %v1137 = vadd.f32 %v709, %v1136
      %1138 = vmatmul.bf16.gmra.mxu0 %v1022
      %v1139 = vpop.f32.mrf.mxu0
      %v1140 = vadd.f32 %v712, %v1139
      %v1141 = vpop.f32.mrf.mxu0
      %v1142 = vadd.f32 %v714, %v1141
      %1143 = vmatmul.bf16.gmra.mxu0 %v1025
      %v1144 = vpop.f32.mrf.mxu0
      %v1145 = vadd.f32 %v717, %v1144
      %v1146 = vpop.f32.mrf.mxu0
      %v1147 = vadd.f32 %v719, %v1146
      %1148 = vmatmul.bf16.gmra.mxu0 %v1028
      %v1149 = vpop.f32.mrf.mxu0
      %v1150 = vadd.f32 %v722, %v1149
      %v1151 = vpop.f32.mrf.mxu0
      %v1152 = vadd.f32 %v724, %v1151
      %1153 = vmatmul.bf16.gmra.mxu0 %v1031
      %v1154 = vpop.f32.mrf.mxu0
      %v1155 = vadd.f32 %v727, %v1154
      %v1156 = vpop.f32.mrf.mxu0
      %v1157 = vadd.f32 %v729, %v1156
      %1158 = vmatmul.bf16.gmra.mxu0 %v1034
      %v1159 = vpop.f32.mrf.mxu0
      %v1160 = vadd.f32 %v732, %v1159
      %v1161 = vpop.f32.mrf.mxu0
      %v1162 = vadd.f32 %v734, %v1161
      %1163 = vmatmul.bf16.gmra.mxu0 %v1037
      %v1164 = vpop.f32.mrf.mxu0
      %v1165 = vadd.f32 %v737, %v1164
      %v1166 = vpop.f32.mrf.mxu0
      %v1167 = vadd.f32 %v739, %v1166
      %1168 = vmatmul.bf16.gmra.mxu0 %v1040
      %v1169 = vpop.f32.mrf.mxu0
      %v1170 = vadd.f32 %v742, %v1169
      %v1171 = vpop.f32.mrf.mxu0
      %v1172 = vadd.f32 %v744, %v1171
      %1173 = vmatmul.bf16.gmra.mxu0 %v1043
      %v1174 = vpop.f32.mrf.mxu0
      %v1175 = vadd.f32 %v747, %v1174
      %v1176 = vpop.f32.mrf.mxu0
      %v1177 = vadd.f32 %v749, %v1176
      %1178 = vmatmul.bf16.gmra.mxu0 %v1046
      %v1179 = vpop.f32.mrf.mxu0
      %v1180 = vadd.f32 %v752, %v1179
      %v1181 = vpop.f32.mrf.mxu0
      %v1182 = vadd.f32 %v754, %v1181
      %1183 = vmatmul.bf16.gmra.mxu0 %v1049
      %v1184 = vpop.f32.mrf.mxu0
      %v1185 = vadd.f32 %v757, %v1184
      %v1186 = vpop.f32.mrf.mxu0
      %v1187 = vadd.f32 %v759, %v1186
      %1188 = vmatmul.bf16.gmra.mxu0 %v1052
      %v1189 = vpop.f32.mrf.mxu0
      %v1190 = vadd.f32 %v762, %v1189
      %v1191 = vpop.f32.mrf.mxu0
      %v1192 = vadd.f32 %v764, %v1191
      %1193 = vmatmul.bf16.gmra.mxu0 %v1055
      %v1194 = vpop.f32.mrf.mxu0
      %v1195 = vadd.f32 %v767, %v1194
      %v1196 = vpop.f32.mrf.mxu0
      %v1197 = vadd.f32 %v769, %v1196
      %1198 = vmatmul.bf16.gmra.mxu0 %v1058
      %v1199 = vpop.f32.mrf.mxu0
      %v1200 = vadd.f32 %v772, %v1199
      %v1201 = vpop.f32.mrf.mxu0
      %v1202 = vadd.f32 %v774, %v1201
      %1203 = vmatmul.bf16.gmra.mxu0 %v1061
      %v1204 = vpop.f32.mrf.mxu0
      %v1205 = vadd.f32 %v777, %v1204
      %v1206 = vpop.f32.mrf.mxu0
      %v1207 = vadd.f32 %v779, %v1206
      %1208 = vmatmul.bf16.gmra.mxu0 %v1064
      %v1209 = vpop.f32.mrf.mxu0
      %v1210 = vadd.f32 %v782, %v1209
      %v1211 = vpop.f32.mrf.mxu0
      %v1212 = vadd.f32 %v784, %v1211
      %1213 = vmatmul.bf16.gmra.mxu0 %v1067
      %v1214 = vpop.f32.mrf.mxu0
      %v1215 = vadd.f32 %v787, %v1214
      %v1216 = vpop.f32.mrf.mxu0
      %v1217 = vadd.f32 %v789, %v1216
      %1218 = vmatmul.bf16.gmra.mxu0 %v1070
      %v1219 = vpop.f32.mrf.mxu0
      %v1220 = vadd.f32 %v792, %v1219
      %v1221 = vpop.f32.mrf.mxu0
      %v1222 = vadd.f32 %v794, %v1221
      %1223 = vmatmul.bf16.gmra.mxu0 %v1073
      %v1224 = vpop.f32.mrf.mxu0
      %v1225 = vadd.f32 %v797, %v1224
      %v1226 = vpop.f32.mrf.mxu0
      %v1227 = vadd.f32 %v799, %v1226
      %1228 = vmatmul.bf16.gmra.mxu0 %v1076
      %v1229 = vpop.f32.mrf.mxu0
      %v1230 = vadd.f32 %v802, %v1229
      %v1231 = vpop.f32.mrf.mxu0
      %v1232 = vadd.f32 %v804, %v1231
      %1233 = vmatmul.bf16.gmra.mxu0 %v1079
      %v1234 = vpop.f32.mrf.mxu0
      %v1235 = vadd.f32 %v807, %v1234
      %v1236 = vpop.f32.mrf.mxu0
      %v1237 = vadd.f32 %v809, %v1236
      %1238 = vmatmul.bf16.gmra.mxu0 %v1082
      %v1239 = vpop.f32.mrf.mxu0
      %v1240 = vadd.f32 %v812, %v1239
      %v1241 = vpop.f32.mrf.mxu0
      %v1242 = vadd.f32 %v814, %v1241
      %1243 = vmatmul.bf16.gmra.mxu0 %v1085
      %v1244 = vpop.f32.mrf.mxu0
      %v1245 = vadd.f32 %v817, %v1244
      %v1246 = vpop.f32.mrf.mxu0
      %v1247 = vadd.f32 %v819, %v1246
      %1248 = vmatmul.bf16.gmra.mxu0 %v1088
      %v1249 = vpop.f32.mrf.mxu0
      %v1250 = vadd.f32 %v822, %v1249
      %v1251 = vpop.f32.mrf.mxu0
      %v1252 = vadd.f32 %v824, %v1251
      %1253 = vmatmul.bf16.gmra.mxu0 %v1091
      %v1254 = vpop.f32.mrf.mxu0
      %v1255 = vadd.f32 %v827, %v1254
      %v1256 = vpop.f32.mrf.mxu0
      %v1257 = vadd.f32 %v829, %v1256
      %1258 = vmatmul.bf16.gmra.mxu0 %v1094
      %v1259 = vpop.f32.mrf.mxu0
      %v1260 = vadd.f32 %v832, %v1259
      %v1261 = vpop.f32.mrf.mxu0
      %v1262 = vadd.f32 %v834, %v1261
      %1263 = vmatmul.bf16.gmra.mxu0 %v1097
      %v1264 = vpop.f32.mrf.mxu0
      %v1265 = vadd.f32 %v837, %v1264
      %v1266 = vpop.f32.mrf.mxu0
      %v1267 = vadd.f32 %v839, %v1266
      %1268 = vmatmul.bf16.gmra.mxu0 %v1100
      %v1269 = vpop.f32.mrf.mxu0
      %v1270 = vadd.f32 %v842, %v1269
      %v1271 = vpop.f32.mrf.mxu0
      %v1272 = vadd.f32 %v844, %v1271
      %1273 = vdwg.mxu0
      %s1274 = scalar_lea.vmem %s1, 16
      %v1275 = vld [vmem:[%s1274] sm:$0xf]
      %v1277 = vsel %vm673, %v1275, 0
      %1279 = vmatpush.bf16.msra.mxu0 0
      %1280 = vmatpush.bf16.msra.mxu0 0
      %1281 = vmatpush.bf16.msra.mxu0 0
      %1282 = vmatpush.bf16.msra.mxu0 0
      %1283 = vmatpush.bf16.msra.mxu0 0
      %1284 = vmatpush.bf16.msra.mxu0 0
      %1285 = vmatpush.bf16.msra.mxu0 0
      %1286 = vmatpush.bf16.msra.mxu0 %v1277
      %1287 = vmatmul.bf16.gmra.mxu0 %v578
      %v1288 = vpop.f32.mrf.mxu0
      %v1289 = vadd.f32 0.0, %v1288
      %v1290 = vpop.f32.mrf.mxu0
      %v1291 = vadd.f32 0.0, %v1290
      %1292 = vmatmul.bf16.gmra.mxu0 %v581
      %v1293 = vpop.f32.mrf.mxu0
      %v1294 = vadd.f32 0.0, %v1293
      %v1295 = vpop.f32.mrf.mxu0
      %v1296 = vadd.f32 0.0, %v1295
      %1297 = vmatmul.bf16.gmra.mxu0 %v584
      %v1298 = vpop.f32.mrf.mxu0
      %v1299 = vadd.f32 0.0, %v1298
      %v1300 = vpop.f32.mrf.mxu0
      %v1301 = vadd.f32 0.0, %v1300
      %1302 = vmatmul.bf16.gmra.mxu0 %v587
      %v1303 = vpop.f32.mrf.mxu0
      %v1304 = vadd.f32 0.0, %v1303
      %v1305 = vpop.f32.mrf.mxu0
      %v1306 = vadd.f32 0.0, %v1305
      %1307 = vmatmul.bf16.gmra.mxu0 %v590
      %v1308 = vpop.f32.mrf.mxu0
      %v1309 = vadd.f32 0.0, %v1308
      %v1310 = vpop.f32.mrf.mxu0
      %v1311 = vadd.f32 0.0, %v1310
      %1312 = vmatmul.bf16.gmra.mxu0 %v593
      %v1313 = vpop.f32.mrf.mxu0
      %v1314 = vadd.f32 0.0, %v1313
      %v1315 = vpop.f32.mrf.mxu0
      %v1316 = vadd.f32 0.0, %v1315
      %1317 = vmatmul.bf16.gmra.mxu0 %v596
      %v1318 = vpop.f32.mrf.mxu0
      %v1319 = vadd.f32 0.0, %v1318
      %v1320 = vpop.f32.mrf.mxu0
      %v1321 = vadd.f32 0.0, %v1320
      %1322 = vmatmul.bf16.gmra.mxu0 %v599
      %v1323 = vpop.f32.mrf.mxu0
      %v1324 = vadd.f32 0.0, %v1323
      %v1325 = vpop.f32.mrf.mxu0
      %v1326 = vadd.f32 0.0, %v1325
      %1327 = vmatmul.bf16.gmra.mxu0 %v602
      %v1328 = vpop.f32.mrf.mxu0
      %v1329 = vadd.f32 0.0, %v1328
      %v1330 = vpop.f32.mrf.mxu0
      %v1331 = vadd.f32 0.0, %v1330
      %1332 = vmatmul.bf16.gmra.mxu0 %v605
      %v1333 = vpop.f32.mrf.mxu0
      %v1334 = vadd.f32 0.0, %v1333
      %v1335 = vpop.f32.mrf.mxu0
      %v1336 = vadd.f32 0.0, %v1335
      %1337 = vmatmul.bf16.gmra.mxu0 %v608
      %v1338 = vpop.f32.mrf.mxu0
      %v1339 = vadd.f32 0.0, %v1338
      %v1340 = vpop.f32.mrf.mxu0
      %v1341 = vadd.f32 0.0, %v1340
      %1342 = vmatmul.bf16.gmra.mxu0 %v611
      %v1343 = vpop.f32.mrf.mxu0
      %v1344 = vadd.f32 0.0, %v1343
      %v1345 = vpop.f32.mrf.mxu0
      %v1346 = vadd.f32 0.0, %v1345
      %1347 = vmatmul.bf16.gmra.mxu0 %v614
      %v1348 = vpop.f32.mrf.mxu0
      %v1349 = vadd.f32 0.0, %v1348
      %v1350 = vpop.f32.mrf.mxu0
      %v1351 = vadd.f32 0.0, %v1350
      %1352 = vmatmul.bf16.gmra.mxu0 %v617
      %v1353 = vpop.f32.mrf.mxu0
      %v1354 = vadd.f32 0.0, %v1353
      %v1355 = vpop.f32.mrf.mxu0
      %v1356 = vadd.f32 0.0, %v1355
      %1357 = vmatmul.bf16.gmra.mxu0 %v620
      %v1358 = vpop.f32.mrf.mxu0
      %v1359 = vadd.f32 0.0, %v1358
      %v1360 = vpop.f32.mrf.mxu0
      %v1361 = vadd.f32 0.0, %v1360
      %1362 = vmatmul.bf16.gmra.mxu0 %v623
      %v1363 = vpop.f32.mrf.mxu0
      %v1364 = vadd.f32 0.0, %v1363
      %v1365 = vpop.f32.mrf.mxu0
      %v1366 = vadd.f32 0.0, %v1365
      %1367 = vmatmul.bf16.gmra.mxu0 %v626
      %v1368 = vpop.f32.mrf.mxu0
      %v1369 = vadd.f32 0.0, %v1368
      %v1370 = vpop.f32.mrf.mxu0
      %v1371 = vadd.f32 0.0, %v1370
      %1372 = vmatmul.bf16.gmra.mxu0 %v629
      %v1373 = vpop.f32.mrf.mxu0
      %v1374 = vadd.f32 0.0, %v1373
      %v1375 = vpop.f32.mrf.mxu0
      %v1376 = vadd.f32 0.0, %v1375
      %1377 = vmatmul.bf16.gmra.mxu0 %v632
      %v1378 = vpop.f32.mrf.mxu0
      %v1379 = vadd.f32 0.0, %v1378
      %v1380 = vpop.f32.mrf.mxu0
      %v1381 = vadd.f32 0.0, %v1380
      %1382 = vmatmul.bf16.gmra.mxu0 %v635
      %v1383 = vpop.f32.mrf.mxu0
      %v1384 = vadd.f32 0.0, %v1383
      %v1385 = vpop.f32.mrf.mxu0
      %v1386 = vadd.f32 0.0, %v1385
      %1387 = vmatmul.bf16.gmra.mxu0 %v638
      %v1388 = vpop.f32.mrf.mxu0
      %v1389 = vadd.f32 0.0, %v1388
      %v1390 = vpop.f32.mrf.mxu0
      %v1391 = vadd.f32 0.0, %v1390
      %1392 = vmatmul.bf16.gmra.mxu0 %v641
      %v1393 = vpop.f32.mrf.mxu0
      %v1394 = vadd.f32 0.0, %v1393
      %v1395 = vpop.f32.mrf.mxu0
      %v1396 = vadd.f32 0.0, %v1395
      %1397 = vmatmul.bf16.gmra.mxu0 %v644
      %v1398 = vpop.f32.mrf.mxu0
      %v1399 = vadd.f32 0.0, %v1398
      %v1400 = vpop.f32.mrf.mxu0
      %v1401 = vadd.f32 0.0, %v1400
      %1402 = vmatmul.bf16.gmra.mxu0 %v647
      %v1403 = vpop.f32.mrf.mxu0
      %v1404 = vadd.f32 0.0, %v1403
      %v1405 = vpop.f32.mrf.mxu0
      %v1406 = vadd.f32 0.0, %v1405
      %1407 = vmatmul.bf16.gmra.mxu0 %v650
      %v1408 = vpop.f32.mrf.mxu0
      %v1409 = vadd.f32 0.0, %v1408
      %v1410 = vpop.f32.mrf.mxu0
      %v1411 = vadd.f32 0.0, %v1410
      %1412 = vmatmul.bf16.gmra.mxu0 %v653
      %v1413 = vpop.f32.mrf.mxu0
      %v1414 = vadd.f32 0.0, %v1413
      %v1415 = vpop.f32.mrf.mxu0
      %v1416 = vadd.f32 0.0, %v1415
      %1417 = vmatmul.bf16.gmra.mxu0 %v656
      %v1418 = vpop.f32.mrf.mxu0
      %v1419 = vadd.f32 0.0, %v1418
      %v1420 = vpop.f32.mrf.mxu0
      %v1421 = vadd.f32 0.0, %v1420
      %1422 = vmatmul.bf16.gmra.mxu0 %v659
      %v1423 = vpop.f32.mrf.mxu0
      %v1424 = vadd.f32 0.0, %v1423
      %v1425 = vpop.f32.mrf.mxu0
      %v1426 = vadd.f32 0.0, %v1425
      %1427 = vmatmul.bf16.gmra.mxu0 %v662
      %v1428 = vpop.f32.mrf.mxu0
      %v1429 = vadd.f32 0.0, %v1428
      %v1430 = vpop.f32.mrf.mxu0
      %v1431 = vadd.f32 0.0, %v1430
      %1432 = vmatmul.bf16.gmra.mxu0 %v665
      %v1433 = vpop.f32.mrf.mxu0
      %v1434 = vadd.f32 0.0, %v1433
      %v1435 = vpop.f32.mrf.mxu0
      %v1436 = vadd.f32 0.0, %v1435
      %1437 = vmatmul.bf16.gmra.mxu0 %v668
      %v1438 = vpop.f32.mrf.mxu0
      %v1439 = vadd.f32 0.0, %v1438
      %v1440 = vpop.f32.mrf.mxu0
      %v1441 = vadd.f32 0.0, %v1440
      %1442 = vmatmul.bf16.gmra.mxu0 %v671
      %v1443 = vpop.f32.mrf.mxu0
      %v1444 = vadd.f32 0.0, %v1443
      %v1445 = vpop.f32.mrf.mxu0
      %v1446 = vadd.f32 0.0, %v1445
      %1447 = vdwg.mxu0
      %v1449 = vsel %vm673, %v346, 0
      %1451 = vmatpush.bf16.msra.mxu0 0
      %1452 = vmatpush.bf16.msra.mxu0 0
      %1453 = vmatpush.bf16.msra.mxu0 0
      %1454 = vmatpush.bf16.msra.mxu0 0
      %1455 = vmatpush.bf16.msra.mxu0 0
      %1456 = vmatpush.bf16.msra.mxu0 0
      %1457 = vmatpush.bf16.msra.mxu0 0
      %1458 = vmatpush.bf16.msra.mxu0 %v1449
      %1459 = vmatmul.bf16.gmra.mxu0 %v1007
      %v1460 = vpop.f32.mrf.mxu0
      %v1461 = vadd.f32 %v1289, %v1460
      %v1462 = vpop.f32.mrf.mxu0
      %v1463 = vadd.f32 %v1291, %v1462
      %1464 = vmatmul.bf16.gmra.mxu0 %v1010
      %v1465 = vpop.f32.mrf.mxu0
      %v1466 = vadd.f32 %v1294, %v1465
      %v1467 = vpop.f32.mrf.mxu0
      %v1468 = vadd.f32 %v1296, %v1467
      %1469 = vmatmul.bf16.gmra.mxu0 %v1013
      %v1470 = vpop.f32.mrf.mxu0
      %v1471 = vadd.f32 %v1299, %v1470
      %v1472 = vpop.f32.mrf.mxu0
      %v1473 = vadd.f32 %v1301, %v1472
      %1474 = vmatmul.bf16.gmra.mxu0 %v1016
      %v1475 = vpop.f32.mrf.mxu0
      %v1476 = vadd.f32 %v1304, %v1475
      %v1477 = vpop.f32.mrf.mxu0
      %v1478 = vadd.f32 %v1306, %v1477
      %1479 = vmatmul.bf16.gmra.mxu0 %v1019
      %v1480 = vpop.f32.mrf.mxu0
      %v1481 = vadd.f32 %v1309, %v1480
      %v1482 = vpop.f32.mrf.mxu0
      %v1483 = vadd.f32 %v1311, %v1482
      %1484 = vmatmul.bf16.gmra.mxu0 %v1022
      %v1485 = vpop.f32.mrf.mxu0
      %v1486 = vadd.f32 %v1314, %v1485
      %v1487 = vpop.f32.mrf.mxu0
      %v1488 = vadd.f32 %v1316, %v1487
      %1489 = vmatmul.bf16.gmra.mxu0 %v1025
      %v1490 = vpop.f32.mrf.mxu0
      %v1491 = vadd.f32 %v1319, %v1490
      %v1492 = vpop.f32.mrf.mxu0
      %v1493 = vadd.f32 %v1321, %v1492
      %1494 = vmatmul.bf16.gmra.mxu0 %v1028
      %v1495 = vpop.f32.mrf.mxu0
      %v1496 = vadd.f32 %v1324, %v1495
      %v1497 = vpop.f32.mrf.mxu0
      %v1498 = vadd.f32 %v1326, %v1497
      %1499 = vmatmul.bf16.gmra.mxu0 %v1031
      %v1500 = vpop.f32.mrf.mxu0
      %v1501 = vadd.f32 %v1329, %v1500
      %v1502 = vpop.f32.mrf.mxu0
      %v1503 = vadd.f32 %v1331, %v1502
      %1504 = vmatmul.bf16.gmra.mxu0 %v1034
      %v1505 = vpop.f32.mrf.mxu0
      %v1506 = vadd.f32 %v1334, %v1505
      %v1507 = vpop.f32.mrf.mxu0
      %v1508 = vadd.f32 %v1336, %v1507
      %1509 = vmatmul.bf16.gmra.mxu0 %v1037
      %v1510 = vpop.f32.mrf.mxu0
      %v1511 = vadd.f32 %v1339, %v1510
      %v1512 = vpop.f32.mrf.mxu0
      %v1513 = vadd.f32 %v1341, %v1512
      %1514 = vmatmul.bf16.gmra.mxu0 %v1040
      %v1515 = vpop.f32.mrf.mxu0
      %v1516 = vadd.f32 %v1344, %v1515
      %v1517 = vpop.f32.mrf.mxu0
      %v1518 = vadd.f32 %v1346, %v1517
      %1519 = vmatmul.bf16.gmra.mxu0 %v1043
      %v1520 = vpop.f32.mrf.mxu0
      %v1521 = vadd.f32 %v1349, %v1520
      %v1522 = vpop.f32.mrf.mxu0
      %v1523 = vadd.f32 %v1351, %v1522
      %1524 = vmatmul.bf16.gmra.mxu0 %v1046
      %v1525 = vpop.f32.mrf.mxu0
      %v1526 = vadd.f32 %v1354, %v1525
      %v1527 = vpop.f32.mrf.mxu0
      %v1528 = vadd.f32 %v1356, %v1527
      %1529 = vmatmul.bf16.gmra.mxu0 %v1049
      %v1530 = vpop.f32.mrf.mxu0
      %v1531 = vadd.f32 %v1359, %v1530
      %v1532 = vpop.f32.mrf.mxu0
      %v1533 = vadd.f32 %v1361, %v1532
      %1534 = vmatmul.bf16.gmra.mxu0 %v1052
      %v1535 = vpop.f32.mrf.mxu0
      %v1536 = vadd.f32 %v1364, %v1535
      %v1537 = vpop.f32.mrf.mxu0
      %v1538 = vadd.f32 %v1366, %v1537
      %1539 = vmatmul.bf16.gmra.mxu0 %v1055
      %v1540 = vpop.f32.mrf.mxu0
      %v1541 = vadd.f32 %v1369, %v1540
      %v1542 = vpop.f32.mrf.mxu0
      %v1543 = vadd.f32 %v1371, %v1542
      %1544 = vmatmul.bf16.gmra.mxu0 %v1058
      %v1545 = vpop.f32.mrf.mxu0
      %v1546 = vadd.f32 %v1374, %v1545
      %v1547 = vpop.f32.mrf.mxu0
      %v1548 = vadd.f32 %v1376, %v1547
      %1549 = vmatmul.bf16.gmra.mxu0 %v1061
      %v1550 = vpop.f32.mrf.mxu0
      %v1551 = vadd.f32 %v1379, %v1550
      %v1552 = vpop.f32.mrf.mxu0
      %v1553 = vadd.f32 %v1381, %v1552
      %1554 = vmatmul.bf16.gmra.mxu0 %v1064
      %v1555 = vpop.f32.mrf.mxu0
      %v1556 = vadd.f32 %v1384, %v1555
      %v1557 = vpop.f32.mrf.mxu0
      %v1558 = vadd.f32 %v1386, %v1557
      %1559 = vmatmul.bf16.gmra.mxu0 %v1067
      %v1560 = vpop.f32.mrf.mxu0
      %v1561 = vadd.f32 %v1389, %v1560
      %v1562 = vpop.f32.mrf.mxu0
      %v1563 = vadd.f32 %v1391, %v1562
      %1564 = vmatmul.bf16.gmra.mxu0 %v1070
      %v1565 = vpop.f32.mrf.mxu0
      %v1566 = vadd.f32 %v1394, %v1565
      %v1567 = vpop.f32.mrf.mxu0
      %v1568 = vadd.f32 %v1396, %v1567
      %1569 = vmatmul.bf16.gmra.mxu0 %v1073
      %v1570 = vpop.f32.mrf.mxu0
      %v1571 = vadd.f32 %v1399, %v1570
      %v1572 = vpop.f32.mrf.mxu0
      %v1573 = vadd.f32 %v1401, %v1572
      %1574 = vmatmul.bf16.gmra.mxu0 %v1076
      %v1575 = vpop.f32.mrf.mxu0
      %v1576 = vadd.f32 %v1404, %v1575
      %v1577 = vpop.f32.mrf.mxu0
      %v1578 = vadd.f32 %v1406, %v1577
      %1579 = vmatmul.bf16.gmra.mxu0 %v1079
      %v1580 = vpop.f32.mrf.mxu0
      %v1581 = vadd.f32 %v1409, %v1580
      %v1582 = vpop.f32.mrf.mxu0
      %v1583 = vadd.f32 %v1411, %v1582
      %1584 = vmatmul.bf16.gmra.mxu0 %v1082
      %v1585 = vpop.f32.mrf.mxu0
      %v1586 = vadd.f32 %v1414, %v1585
      %v1587 = vpop.f32.mrf.mxu0
      %v1588 = vadd.f32 %v1416, %v1587
      %1589 = vmatmul.bf16.gmra.mxu0 %v1085
      %v1590 = vpop.f32.mrf.mxu0
      %v1591 = vadd.f32 %v1419, %v1590
      %v1592 = vpop.f32.mrf.mxu0
      %v1593 = vadd.f32 %v1421, %v1592
      %1594 = vmatmul.bf16.gmra.mxu0 %v1088
      %v1595 = vpop.f32.mrf.mxu0
      %v1596 = vadd.f32 %v1424, %v1595
      %v1597 = vpop.f32.mrf.mxu0
      %v1598 = vadd.f32 %v1426, %v1597
      %1599 = vmatmul.bf16.gmra.mxu0 %v1091
      %v1600 = vpop.f32.mrf.mxu0
      %v1601 = vadd.f32 %v1429, %v1600
      %v1602 = vpop.f32.mrf.mxu0
      %v1603 = vadd.f32 %v1431, %v1602
      %1604 = vmatmul.bf16.gmra.mxu0 %v1094
      %v1605 = vpop.f32.mrf.mxu0
      %v1606 = vadd.f32 %v1434, %v1605
      %v1607 = vpop.f32.mrf.mxu0
      %v1608 = vadd.f32 %v1436, %v1607
      %1609 = vmatmul.bf16.gmra.mxu0 %v1097
      %v1610 = vpop.f32.mrf.mxu0
      %v1611 = vadd.f32 %v1439, %v1610
      %v1612 = vpop.f32.mrf.mxu0
      %v1613 = vadd.f32 %v1441, %v1612
      %1614 = vmatmul.bf16.gmra.mxu0 %v1100
      %v1615 = vpop.f32.mrf.mxu0
      %v1616 = vadd.f32 %v1444, %v1615
      %v1617 = vpop.f32.mrf.mxu0
      %v1618 = vadd.f32 %v1446, %v1617
      %1619 = vdwg.mxu0
      %s1620 = scalar_lea.vmem %s1, 20
      %v1621 = vld [vmem:[%s1620] sm:$0xf]
      %v1623 = vsel %vm673, %v1621, 0
      %1625 = vmatpush.bf16.msra.mxu0 0
      %1626 = vmatpush.bf16.msra.mxu0 0
      %1627 = vmatpush.bf16.msra.mxu0 0
      %1628 = vmatpush.bf16.msra.mxu0 0
      %1629 = vmatpush.bf16.msra.mxu0 0
      %1630 = vmatpush.bf16.msra.mxu0 0
      %1631 = vmatpush.bf16.msra.mxu0 0
      %1632 = vmatpush.bf16.msra.mxu0 %v1623
      %1633 = vmatmul.bf16.gmra.mxu0 %v578
      %v1634 = vpop.f32.mrf.mxu0
      %v1635 = vadd.f32 0.0, %v1634
      %v1636 = vpop.f32.mrf.mxu0
      %v1637 = vadd.f32 0.0, %v1636
      %1638 = vmatmul.bf16.gmra.mxu0 %v581
      %v1639 = vpop.f32.mrf.mxu0
      %v1640 = vadd.f32 0.0, %v1639
      %v1641 = vpop.f32.mrf.mxu0
      %v1642 = vadd.f32 0.0, %v1641
      %1643 = vmatmul.bf16.gmra.mxu0 %v584
      %v1644 = vpop.f32.mrf.mxu0
      %v1645 = vadd.f32 0.0, %v1644
      %v1646 = vpop.f32.mrf.mxu0
      %v1647 = vadd.f32 0.0, %v1646
      %1648 = vmatmul.bf16.gmra.mxu0 %v587
      %v1649 = vpop.f32.mrf.mxu0
      %v1650 = vadd.f32 0.0, %v1649
      %v1651 = vpop.f32.mrf.mxu0
      %v1652 = vadd.f32 0.0, %v1651
      %1653 = vmatmul.bf16.gmra.mxu0 %v590
      %v1654 = vpop.f32.mrf.mxu0
      %v1655 = vadd.f32 0.0, %v1654
      %v1656 = vpop.f32.mrf.mxu0
      %v1657 = vadd.f32 0.0, %v1656
      %1658 = vmatmul.bf16.gmra.mxu0 %v593
      %v1659 = vpop.f32.mrf.mxu0
      %v1660 = vadd.f32 0.0, %v1659
      %v1661 = vpop.f32.mrf.mxu0
      %v1662 = vadd.f32 0.0, %v1661
      %1663 = vmatmul.bf16.gmra.mxu0 %v596
      %v1664 = vpop.f32.mrf.mxu0
      %v1665 = vadd.f32 0.0, %v1664
      %v1666 = vpop.f32.mrf.mxu0
      %v1667 = vadd.f32 0.0, %v1666
      %1668 = vmatmul.bf16.gmra.mxu0 %v599
      %v1669 = vpop.f32.mrf.mxu0
      %v1670 = vadd.f32 0.0, %v1669
      %v1671 = vpop.f32.mrf.mxu0
      %v1672 = vadd.f32 0.0, %v1671
      %1673 = vmatmul.bf16.gmra.mxu0 %v602
      %v1674 = vpop.f32.mrf.mxu0
      %v1675 = vadd.f32 0.0, %v1674
      %v1676 = vpop.f32.mrf.mxu0
      %v1677 = vadd.f32 0.0, %v1676
      %1678 = vmatmul.bf16.gmra.mxu0 %v605
      %v1679 = vpop.f32.mrf.mxu0
      %v1680 = vadd.f32 0.0, %v1679
      %v1681 = vpop.f32.mrf.mxu0
      %v1682 = vadd.f32 0.0, %v1681
      %1683 = vmatmul.bf16.gmra.mxu0 %v608
      %v1684 = vpop.f32.mrf.mxu0
      %v1685 = vadd.f32 0.0, %v1684
      %v1686 = vpop.f32.mrf.mxu0
      %v1687 = vadd.f32 0.0, %v1686
      %1688 = vmatmul.bf16.gmra.mxu0 %v611
      %v1689 = vpop.f32.mrf.mxu0
      %v1690 = vadd.f32 0.0, %v1689
      %v1691 = vpop.f32.mrf.mxu0
      %v1692 = vadd.f32 0.0, %v1691
      %1693 = vmatmul.bf16.gmra.mxu0 %v614
      %v1694 = vpop.f32.mrf.mxu0
      %v1695 = vadd.f32 0.0, %v1694
      %v1696 = vpop.f32.mrf.mxu0
      %v1697 = vadd.f32 0.0, %v1696
      %1698 = vmatmul.bf16.gmra.mxu0 %v617
      %v1699 = vpop.f32.mrf.mxu0
      %v1700 = vadd.f32 0.0, %v1699
      %v1701 = vpop.f32.mrf.mxu0
      %v1702 = vadd.f32 0.0, %v1701
      %1703 = vmatmul.bf16.gmra.mxu0 %v620
      %v1704 = vpop.f32.mrf.mxu0
      %v1705 = vadd.f32 0.0, %v1704
      %v1706 = vpop.f32.mrf.mxu0
      %v1707 = vadd.f32 0.0, %v1706
      %1708 = vmatmul.bf16.gmra.mxu0 %v623
      %v1709 = vpop.f32.mrf.mxu0
      %v1710 = vadd.f32 0.0, %v1709
      %v1711 = vpop.f32.mrf.mxu0
      %v1712 = vadd.f32 0.0, %v1711
      %1713 = vmatmul.bf16.gmra.mxu0 %v626
      %v1714 = vpop.f32.mrf.mxu0
      %v1715 = vadd.f32 0.0, %v1714
      %v1716 = vpop.f32.mrf.mxu0
      %v1717 = vadd.f32 0.0, %v1716
      %1718 = vmatmul.bf16.gmra.mxu0 %v629
      %v1719 = vpop.f32.mrf.mxu0
      %v1720 = vadd.f32 0.0, %v1719
      %v1721 = vpop.f32.mrf.mxu0
      %v1722 = vadd.f32 0.0, %v1721
      %1723 = vmatmul.bf16.gmra.mxu0 %v632
      %v1724 = vpop.f32.mrf.mxu0
      %v1725 = vadd.f32 0.0, %v1724
      %v1726 = vpop.f32.mrf.mxu0
      %v1727 = vadd.f32 0.0, %v1726
      %1728 = vmatmul.bf16.gmra.mxu0 %v635
      %v1729 = vpop.f32.mrf.mxu0
      %v1730 = vadd.f32 0.0, %v1729
      %v1731 = vpop.f32.mrf.mxu0
      %v1732 = vadd.f32 0.0, %v1731
      %1733 = vmatmul.bf16.gmra.mxu0 %v638
      %v1734 = vpop.f32.mrf.mxu0
      %v1735 = vadd.f32 0.0, %v1734
      %v1736 = vpop.f32.mrf.mxu0
      %v1737 = vadd.f32 0.0, %v1736
      %1738 = vmatmul.bf16.gmra.mxu0 %v641
      %v1739 = vpop.f32.mrf.mxu0
      %v1740 = vadd.f32 0.0, %v1739
      %v1741 = vpop.f32.mrf.mxu0
      %v1742 = vadd.f32 0.0, %v1741
      %1743 = vmatmul.bf16.gmra.mxu0 %v644
      %v1744 = vpop.f32.mrf.mxu0
      %v1745 = vadd.f32 0.0, %v1744
      %v1746 = vpop.f32.mrf.mxu0
      %v1747 = vadd.f32 0.0, %v1746
      %1748 = vmatmul.bf16.gmra.mxu0 %v647
      %v1749 = vpop.f32.mrf.mxu0
      %v1750 = vadd.f32 0.0, %v1749
      %v1751 = vpop.f32.mrf.mxu0
      %v1752 = vadd.f32 0.0, %v1751
      %1753 = vmatmul.bf16.gmra.mxu0 %v650
      %v1754 = vpop.f32.mrf.mxu0
      %v1755 = vadd.f32 0.0, %v1754
      %v1756 = vpop.f32.mrf.mxu0
      %v1757 = vadd.f32 0.0, %v1756
      %1758 = vmatmul.bf16.gmra.mxu0 %v653
      %v1759 = vpop.f32.mrf.mxu0
      %v1760 = vadd.f32 0.0, %v1759
      %v1761 = vpop.f32.mrf.mxu0
      %v1762 = vadd.f32 0.0, %v1761
      %1763 = vmatmul.bf16.gmra.mxu0 %v656
      %v1764 = vpop.f32.mrf.mxu0
      %v1765 = vadd.f32 0.0, %v1764
      %v1766 = vpop.f32.mrf.mxu0
      %v1767 = vadd.f32 0.0, %v1766
      %1768 = vmatmul.bf16.gmra.mxu0 %v659
      %v1769 = vpop.f32.mrf.mxu0
      %v1770 = vadd.f32 0.0, %v1769
      %v1771 = vpop.f32.mrf.mxu0
      %v1772 = vadd.f32 0.0, %v1771
      %1773 = vmatmul.bf16.gmra.mxu0 %v662
      %v1774 = vpop.f32.mrf.mxu0
      %v1775 = vadd.f32 0.0, %v1774
      %v1776 = vpop.f32.mrf.mxu0
      %v1777 = vadd.f32 0.0, %v1776
      %1778 = vmatmul.bf16.gmra.mxu0 %v665
      %v1779 = vpop.f32.mrf.mxu0
      %v1780 = vadd.f32 0.0, %v1779
      %v1781 = vpop.f32.mrf.mxu0
      %v1782 = vadd.f32 0.0, %v1781
      %1783 = vmatmul.bf16.gmra.mxu0 %v668
      %v1784 = vpop.f32.mrf.mxu0
      %v1785 = vadd.f32 0.0, %v1784
      %v1786 = vpop.f32.mrf.mxu0
      %v1787 = vadd.f32 0.0, %v1786
      %1788 = vmatmul.bf16.gmra.mxu0 %v671
      %v1789 = vpop.f32.mrf.mxu0
      %v1790 = vadd.f32 0.0, %v1789
      %v1791 = vpop.f32.mrf.mxu0
      %v1792 = vadd.f32 0.0, %v1791
      %1793 = vdwg.mxu0
      %v1795 = vsel %vm673, %v348, 0
      %1797 = vmatpush.bf16.msra.mxu0 0
      %1798 = vmatpush.bf16.msra.mxu0 0
      %1799 = vmatpush.bf16.msra.mxu0 0
      %1800 = vmatpush.bf16.msra.mxu0 0
      %1801 = vmatpush.bf16.msra.mxu0 0
      %1802 = vmatpush.bf16.msra.mxu0 0
      %1803 = vmatpush.bf16.msra.mxu0 0
      %1804 = vmatpush.bf16.msra.mxu0 %v1795
      %1805 = vmatmul.bf16.gmra.mxu0 %v1007
      %v1806 = vpop.f32.mrf.mxu0
      %v1807 = vadd.f32 %v1635, %v1806
      %v1808 = vpop.f32.mrf.mxu0
      %v1809 = vadd.f32 %v1637, %v1808
      %1810 = vmatmul.bf16.gmra.mxu0 %v1010
      %v1811 = vpop.f32.mrf.mxu0
      %v1812 = vadd.f32 %v1640, %v1811
      %v1813 = vpop.f32.mrf.mxu0
      %v1814 = vadd.f32 %v1642, %v1813
      %1815 = vmatmul.bf16.gmra.mxu0 %v1013
      %v1816 = vpop.f32.mrf.mxu0
      %v1817 = vadd.f32 %v1645, %v1816
      %v1818 = vpop.f32.mrf.mxu0
      %v1819 = vadd.f32 %v1647, %v1818
      %1820 = vmatmul.bf16.gmra.mxu0 %v1016
      %v1821 = vpop.f32.mrf.mxu0
      %v1822 = vadd.f32 %v1650, %v1821
      %v1823 = vpop.f32.mrf.mxu0
      %v1824 = vadd.f32 %v1652, %v1823
      %1825 = vmatmul.bf16.gmra.mxu0 %v1019
      %v1826 = vpop.f32.mrf.mxu0
      %v1827 = vadd.f32 %v1655, %v1826
      %v1828 = vpop.f32.mrf.mxu0
      %v1829 = vadd.f32 %v1657, %v1828
      %1830 = vmatmul.bf16.gmra.mxu0 %v1022
      %v1831 = vpop.f32.mrf.mxu0
      %v1832 = vadd.f32 %v1660, %v1831
      %v1833 = vpop.f32.mrf.mxu0
      %v1834 = vadd.f32 %v1662, %v1833
      %1835 = vmatmul.bf16.gmra.mxu0 %v1025
      %v1836 = vpop.f32.mrf.mxu0
      %v1837 = vadd.f32 %v1665, %v1836
      %v1838 = vpop.f32.mrf.mxu0
      %v1839 = vadd.f32 %v1667, %v1838
      %1840 = vmatmul.bf16.gmra.mxu0 %v1028
      %v1841 = vpop.f32.mrf.mxu0
      %v1842 = vadd.f32 %v1670, %v1841
      %v1843 = vpop.f32.mrf.mxu0
      %v1844 = vadd.f32 %v1672, %v1843
      %1845 = vmatmul.bf16.gmra.mxu0 %v1031
      %v1846 = vpop.f32.mrf.mxu0
      %v1847 = vadd.f32 %v1675, %v1846
      %v1848 = vpop.f32.mrf.mxu0
      %v1849 = vadd.f32 %v1677, %v1848
      %1850 = vmatmul.bf16.gmra.mxu0 %v1034
      %v1851 = vpop.f32.mrf.mxu0
      %v1852 = vadd.f32 %v1680, %v1851
      %v1853 = vpop.f32.mrf.mxu0
      %v1854 = vadd.f32 %v1682, %v1853
      %1855 = vmatmul.bf16.gmra.mxu0 %v1037
      %v1856 = vpop.f32.mrf.mxu0
      %v1857 = vadd.f32 %v1685, %v1856
      %v1858 = vpop.f32.mrf.mxu0
      %v1859 = vadd.f32 %v1687, %v1858
      %1860 = vmatmul.bf16.gmra.mxu0 %v1040
      %v1861 = vpop.f32.mrf.mxu0
      %v1862 = vadd.f32 %v1690, %v1861
      %v1863 = vpop.f32.mrf.mxu0
      %v1864 = vadd.f32 %v1692, %v1863
      %1865 = vmatmul.bf16.gmra.mxu0 %v1043
      %v1866 = vpop.f32.mrf.mxu0
      %v1867 = vadd.f32 %v1695, %v1866
      %v1868 = vpop.f32.mrf.mxu0
      %v1869 = vadd.f32 %v1697, %v1868
      %1870 = vmatmul.bf16.gmra.mxu0 %v1046
      %v1871 = vpop.f32.mrf.mxu0
      %v1872 = vadd.f32 %v1700, %v1871
      %v1873 = vpop.f32.mrf.mxu0
      %v1874 = vadd.f32 %v1702, %v1873
      %1875 = vmatmul.bf16.gmra.mxu0 %v1049
      %v1876 = vpop.f32.mrf.mxu0
      %v1877 = vadd.f32 %v1705, %v1876
      %v1878 = vpop.f32.mrf.mxu0
      %v1879 = vadd.f32 %v1707, %v1878
      %1880 = vmatmul.bf16.gmra.mxu0 %v1052
      %v1881 = vpop.f32.mrf.mxu0
      %v1882 = vadd.f32 %v1710, %v1881
      %v1883 = vpop.f32.mrf.mxu0
      %v1884 = vadd.f32 %v1712, %v1883
      %1885 = vmatmul.bf16.gmra.mxu0 %v1055
      %v1886 = vpop.f32.mrf.mxu0
      %v1887 = vadd.f32 %v1715, %v1886
      %v1888 = vpop.f32.mrf.mxu0
      %v1889 = vadd.f32 %v1717, %v1888
      %1890 = vmatmul.bf16.gmra.mxu0 %v1058
      %v1891 = vpop.f32.mrf.mxu0
      %v1892 = vadd.f32 %v1720, %v1891
      %v1893 = vpop.f32.mrf.mxu0
      %v1894 = vadd.f32 %v1722, %v1893
      %1895 = vmatmul.bf16.gmra.mxu0 %v1061
      %v1896 = vpop.f32.mrf.mxu0
      %v1897 = vadd.f32 %v1725, %v1896
      %v1898 = vpop.f32.mrf.mxu0
      %v1899 = vadd.f32 %v1727, %v1898
      %1900 = vmatmul.bf16.gmra.mxu0 %v1064
      %v1901 = vpop.f32.mrf.mxu0
      %v1902 = vadd.f32 %v1730, %v1901
      %v1903 = vpop.f32.mrf.mxu0
      %v1904 = vadd.f32 %v1732, %v1903
      %1905 = vmatmul.bf16.gmra.mxu0 %v1067
      %v1906 = vpop.f32.mrf.mxu0
      %v1907 = vadd.f32 %v1735, %v1906
      %v1908 = vpop.f32.mrf.mxu0
      %v1909 = vadd.f32 %v1737, %v1908
      %1910 = vmatmul.bf16.gmra.mxu0 %v1070
      %v1911 = vpop.f32.mrf.mxu0
      %v1912 = vadd.f32 %v1740, %v1911
      %v1913 = vpop.f32.mrf.mxu0
      %v1914 = vadd.f32 %v1742, %v1913
      %1915 = vmatmul.bf16.gmra.mxu0 %v1073
      %v1916 = vpop.f32.mrf.mxu0
      %v1917 = vadd.f32 %v1745, %v1916
      %v1918 = vpop.f32.mrf.mxu0
      %v1919 = vadd.f32 %v1747, %v1918
      %1920 = vmatmul.bf16.gmra.mxu0 %v1076
      %v1921 = vpop.f32.mrf.mxu0
      %v1922 = vadd.f32 %v1750, %v1921
      %v1923 = vpop.f32.mrf.mxu0
      %v1924 = vadd.f32 %v1752, %v1923
      %1925 = vmatmul.bf16.gmra.mxu0 %v1079
      %v1926 = vpop.f32.mrf.mxu0
      %v1927 = vadd.f32 %v1755, %v1926
      %v1928 = vpop.f32.mrf.mxu0
      %v1929 = vadd.f32 %v1757, %v1928
      %1930 = vmatmul.bf16.gmra.mxu0 %v1082
      %v1931 = vpop.f32.mrf.mxu0
      %v1932 = vadd.f32 %v1760, %v1931
      %v1933 = vpop.f32.mrf.mxu0
      %v1934 = vadd.f32 %v1762, %v1933
      %1935 = vmatmul.bf16.gmra.mxu0 %v1085
      %v1936 = vpop.f32.mrf.mxu0
      %v1937 = vadd.f32 %v1765, %v1936
      %v1938 = vpop.f32.mrf.mxu0
      %v1939 = vadd.f32 %v1767, %v1938
      %1940 = vmatmul.bf16.gmra.mxu0 %v1088
      %v1941 = vpop.f32.mrf.mxu0
      %v1942 = vadd.f32 %v1770, %v1941
      %v1943 = vpop.f32.mrf.mxu0
      %v1944 = vadd.f32 %v1772, %v1943
      %1945 = vmatmul.bf16.gmra.mxu0 %v1091
      %v1946 = vpop.f32.mrf.mxu0
      %v1947 = vadd.f32 %v1775, %v1946
      %v1948 = vpop.f32.mrf.mxu0
      %v1949 = vadd.f32 %v1777, %v1948
      %1950 = vmatmul.bf16.gmra.mxu0 %v1094
      %v1951 = vpop.f32.mrf.mxu0
      %v1952 = vadd.f32 %v1780, %v1951
      %v1953 = vpop.f32.mrf.mxu0
      %v1954 = vadd.f32 %v1782, %v1953
      %1955 = vmatmul.bf16.gmra.mxu0 %v1097
      %v1956 = vpop.f32.mrf.mxu0
      %v1957 = vadd.f32 %v1785, %v1956
      %v1958 = vpop.f32.mrf.mxu0
      %v1959 = vadd.f32 %v1787, %v1958
      %1960 = vmatmul.bf16.gmra.mxu0 %v1100
      %v1961 = vpop.f32.mrf.mxu0
      %v1962 = vadd.f32 %v1790, %v1961
      %v1963 = vpop.f32.mrf.mxu0
      %v1964 = vadd.f32 %v1792, %v1963
      %1965 = vdwg.mxu0
      %s1966 = scalar_lea.vmem %s273, 32
      %v1967 = vld [vmem:[%s1966] sm:$0xf]
      %v1968 = vld [vmem:[%s1966 + $0x4] sm:$0xf]
      %v1969 = vld [vmem:[%s1966 + $0x8] sm:$0xf]
      %v1970 = vld [vmem:[%s1966 + $0xc] sm:$0xf]
      %v1971 = vld [vmem:[%s1966 + $0x10] sm:$0xf]
      %v1972 = vld [vmem:[%s1966 + $0x14] sm:$0xf]
      %v1973 = vld [vmem:[%s1966 + $0x18] sm:$0xf]
      %v1974 = vld [vmem:[%s1966 + $0x1c] sm:$0xf]
      %v1975 = vld [vmem:[%s1966 + $0x20] sm:$0xf]
      %v1976 = vld [vmem:[%s1966 + $0x24] sm:$0xf]
      %v1977 = vld [vmem:[%s1966 + $0x28] sm:$0xf]
      %v1978 = vld [vmem:[%s1966 + $0x2c] sm:$0xf]
      %v1979 = vld [vmem:[%s1966 + $0x30] sm:$0xf]
      %v1980 = vld [vmem:[%s1966 + $0x34] sm:$0xf]
      %v1981 = vld [vmem:[%s1966 + $0x38] sm:$0xf]
      %v1982 = vld [vmem:[%s1966 + $0x3c] sm:$0xf]
      %v1983 = vld [vmem:[%s1966 + $0x40] sm:$0xf]
      %v1984 = vld [vmem:[%s1966 + $0x44] sm:$0xf]
      %v1985 = vld [vmem:[%s1966 + $0x48] sm:$0xf]
      %v1986 = vld [vmem:[%s1966 + $0x4c] sm:$0xf]
      %v1987 = vld [vmem:[%s1966 + $0x50] sm:$0xf]
      %v1988 = vld [vmem:[%s1966 + $0x54] sm:$0xf]
      %v1989 = vld [vmem:[%s1966 + $0x58] sm:$0xf]
      %v1990 = vld [vmem:[%s1966 + $0x5c] sm:$0xf]
      %v1991 = vld [vmem:[%s1966 + $0x60] sm:$0xf]
      %v1992 = vld [vmem:[%s1966 + $0x64] sm:$0xf]
      %v1993 = vld [vmem:[%s1966 + $0x68] sm:$0xf]
      %v1994 = vld [vmem:[%s1966 + $0x6c] sm:$0xf]
      %v1995 = vld [vmem:[%s1966 + $0x70] sm:$0xf]
      %v1996 = vld [vmem:[%s1966 + $0x74] sm:$0xf]
      %v1997 = vld [vmem:[%s1966 + $0x78] sm:$0xf]
      %v1998 = vld [vmem:[%s1966 + $0x7c] sm:$0xf]
      %v1999 = vld [vmem:[%s1966 + $0x80] sm:$0xf]
      %v2000 = vld [vmem:[%s1966 + $0x84] sm:$0xf]
      %v2001 = vld [vmem:[%s1966 + $0x88] sm:$0xf]
      %v2002 = vld [vmem:[%s1966 + $0x8c] sm:$0xf]
      %v2003 = vld [vmem:[%s1966 + $0x90] sm:$0xf]
      %v2004 = vld [vmem:[%s1966 + $0x94] sm:$0xf]
      %v2005 = vld [vmem:[%s1966 + $0x98] sm:$0xf]
      %v2006 = vld [vmem:[%s1966 + $0x9c] sm:$0xf]
      %v2007 = vld [vmem:[%s1966 + $0xa0] sm:$0xf]
      %v2008 = vld [vmem:[%s1966 + $0xa4] sm:$0xf]
      %v2009 = vld [vmem:[%s1966 + $0xa8] sm:$0xf]
      %v2010 = vld [vmem:[%s1966 + $0xac] sm:$0xf]
      %v2011 = vld [vmem:[%s1966 + $0xb0] sm:$0xf]
      %v2012 = vld [vmem:[%s1966 + $0xb4] sm:$0xf]
      %v2013 = vld [vmem:[%s1966 + $0xb8] sm:$0xf]
      %v2014 = vld [vmem:[%s1966 + $0xbc] sm:$0xf]
      %v2015 = vld [vmem:[%s1966 + $0xc0] sm:$0xf]
      %v2016 = vld [vmem:[%s1966 + $0xc4] sm:$0xf]
      %v2017 = vld [vmem:[%s1966 + $0xc8] sm:$0xf]
      %v2018 = vld [vmem:[%s1966 + $0xcc] sm:$0xf]
      %v2019 = vld [vmem:[%s1966 + $0xd0] sm:$0xf]
      %v2020 = vld [vmem:[%s1966 + $0xd4] sm:$0xf]
      %v2021 = vld [vmem:[%s1966 + $0xd8] sm:$0xf]
      %v2022 = vld [vmem:[%s1966 + $0xdc] sm:$0xf]
      %v2023 = vld [vmem:[%s1966 + $0xe0] sm:$0xf]
      %v2024 = vld [vmem:[%s1966 + $0xe4] sm:$0xf]
      %v2025 = vld [vmem:[%s1966 + $0xe8] sm:$0xf]
      %v2026 = vld [vmem:[%s1966 + $0xec] sm:$0xf]
      %v2027 = vld [vmem:[%s1966 + $0xf0] sm:$0xf]
      %v2028 = vld [vmem:[%s1966 + $0xf4] sm:$0xf]
      %v2029 = vld [vmem:[%s1966 + $0xf8] sm:$0xf]
      %v2030 = vld [vmem:[%s1966 + $0xfc] sm:$0xf]
      %s2031 = scalar_lea.vmem %s1, 24
      %v2032 = vld [vmem:[%s2031] sm:$0xf]
      %v2097 = vunpack.c.l.b16 %v1967
      %v2098 = vunpack.c.l.b16 %v1968
      %v2099 = vunpack.c.l.b16 %v1969
      %v2100 = vunpack.c.l.b16 %v1970
      %v2101 = vunpack.c.l.b16 %v1971
      %v2102 = vunpack.c.l.b16 %v1972
      %v2103 = vunpack.c.l.b16 %v1973
      %v2104 = vunpack.c.l.b16 %v1974
      %v2105 = vunpack.c.l.b16 %v1975
      %v2106 = vunpack.c.l.b16 %v1976
      %v2107 = vunpack.c.l.b16 %v1977
      %v2108 = vunpack.c.l.b16 %v1978
      %v2109 = vunpack.c.l.b16 %v1979
      %v2110 = vunpack.c.l.b16 %v1980
      %v2111 = vunpack.c.l.b16 %v1981
      %v2112 = vunpack.c.l.b16 %v1982
      %v2113 = vunpack.c.l.b16 %v1983
      %v2114 = vunpack.c.l.b16 %v1984
      %v2115 = vunpack.c.l.b16 %v1985
      %v2116 = vunpack.c.l.b16 %v1986
      %v2117 = vunpack.c.l.b16 %v1987
      %v2118 = vunpack.c.l.b16 %v1988
      %v2119 = vunpack.c.l.b16 %v1989
      %v2120 = vunpack.c.l.b16 %v1990
      %v2121 = vunpack.c.l.b16 %v1991
      %v2122 = vunpack.c.l.b16 %v1992
      %v2123 = vunpack.c.l.b16 %v1993
      %v2124 = vunpack.c.l.b16 %v1994
      %v2125 = vunpack.c.l.b16 %v1995
      %v2126 = vunpack.c.l.b16 %v1996
      %v2127 = vunpack.c.l.b16 %v1997
      %v2128 = vunpack.c.l.b16 %v1998
      %v2129 = vunpack.c.l.b16 %v1999
      %v2130 = vunpack.c.l.b16 %v2000
      %v2131 = vunpack.c.l.b16 %v2001
      %v2132 = vunpack.c.l.b16 %v2002
      %v2133 = vunpack.c.l.b16 %v2003
      %v2134 = vunpack.c.l.b16 %v2004
      %v2135 = vunpack.c.l.b16 %v2005
      %v2136 = vunpack.c.l.b16 %v2006
      %v2137 = vunpack.c.l.b16 %v2007
      %v2138 = vunpack.c.l.b16 %v2008
      %v2139 = vunpack.c.l.b16 %v2009
      %v2140 = vunpack.c.l.b16 %v2010
      %v2141 = vunpack.c.l.b16 %v2011
      %v2142 = vunpack.c.l.b16 %v2012
      %v2143 = vunpack.c.l.b16 %v2013
      %v2144 = vunpack.c.l.b16 %v2014
      %v2145 = vunpack.c.l.b16 %v2015
      %v2146 = vunpack.c.l.b16 %v2016
      %v2147 = vunpack.c.l.b16 %v2017
      %v2148 = vunpack.c.l.b16 %v2018
      %v2149 = vunpack.c.l.b16 %v2019
      %v2150 = vunpack.c.l.b16 %v2020
      %v2151 = vunpack.c.l.b16 %v2021
      %v2152 = vunpack.c.l.b16 %v2022
      %v2153 = vunpack.c.l.b16 %v2023
      %v2154 = vunpack.c.l.b16 %v2024
      %v2155 = vunpack.c.l.b16 %v2025
      %v2156 = vunpack.c.l.b16 %v2026
      %v2157 = vunpack.c.l.b16 %v2027
      %v2158 = vunpack.c.l.b16 %v2028
      %v2159 = vunpack.c.l.b16 %v2029
      %v2160 = vunpack.c.l.b16 %v2030
      %v2161 = vpack.c.b16 %v2098, %v2097
      %v2162 = vpack.c.b16 %v2100, %v2099
      %v2163 = vpack.c.b16 %v2102, %v2101
      %v2164 = vpack.c.b16 %v2104, %v2103
      %v2165 = vpack.c.b16 %v2106, %v2105
      %v2166 = vpack.c.b16 %v2108, %v2107
      %v2167 = vpack.c.b16 %v2110, %v2109
      %v2168 = vpack.c.b16 %v2112, %v2111
      %v2169 = vpack.c.b16 %v2114, %v2113
      %v2170 = vpack.c.b16 %v2116, %v2115
      %v2171 = vpack.c.b16 %v2118, %v2117
      %v2172 = vpack.c.b16 %v2120, %v2119
      %v2173 = vpack.c.b16 %v2122, %v2121
      %v2174 = vpack.c.b16 %v2124, %v2123
      %v2175 = vpack.c.b16 %v2126, %v2125
      %v2176 = vpack.c.b16 %v2128, %v2127
      %v2177 = vpack.c.b16 %v2130, %v2129
      %v2178 = vpack.c.b16 %v2132, %v2131
      %v2179 = vpack.c.b16 %v2134, %v2133
      %v2180 = vpack.c.b16 %v2136, %v2135
      %v2181 = vpack.c.b16 %v2138, %v2137
      %v2182 = vpack.c.b16 %v2140, %v2139
      %v2183 = vpack.c.b16 %v2142, %v2141
      %v2184 = vpack.c.b16 %v2144, %v2143
      %v2185 = vpack.c.b16 %v2146, %v2145
      %v2186 = vpack.c.b16 %v2148, %v2147
      %v2187 = vpack.c.b16 %v2150, %v2149
      %v2188 = vpack.c.b16 %v2152, %v2151
      %v2189 = vpack.c.b16 %v2154, %v2153
      %v2190 = vpack.c.b16 %v2156, %v2155
      %v2191 = vpack.c.b16 %v2158, %v2157
      %v2192 = vpack.c.b16 %v2160, %v2159
      %v2194 = vsel %vm576, %v2161, 0
      %v2197 = vsel %vm576, %v2162, 0
      %v2200 = vsel %vm576, %v2163, 0
      %v2203 = vsel %vm576, %v2164, 0
      %v2206 = vsel %vm576, %v2165, 0
      %v2209 = vsel %vm576, %v2166, 0
      %v2212 = vsel %vm576, %v2167, 0
      %v2215 = vsel %vm576, %v2168, 0
      %v2218 = vsel %vm576, %v2169, 0
      %v2221 = vsel %vm576, %v2170, 0
      %v2224 = vsel %vm576, %v2171, 0
      %v2227 = vsel %vm576, %v2172, 0
      %v2230 = vsel %vm576, %v2173, 0
      %v2233 = vsel %vm576, %v2174, 0
      %v2236 = vsel %vm576, %v2175, 0
      %v2239 = vsel %vm576, %v2176, 0
      %v2242 = vsel %vm576, %v2177, 0
      %v2245 = vsel %vm576, %v2178, 0
      %v2248 = vsel %vm576, %v2179, 0
      %v2251 = vsel %vm576, %v2180, 0
      %v2254 = vsel %vm576, %v2181, 0
      %v2257 = vsel %vm576, %v2182, 0
      %v2260 = vsel %vm576, %v2183, 0
      %v2263 = vsel %vm576, %v2184, 0
      %v2266 = vsel %vm576, %v2185, 0
      %v2269 = vsel %vm576, %v2186, 0
      %v2272 = vsel %vm576, %v2187, 0
      %v2275 = vsel %vm576, %v2188, 0
      %v2278 = vsel %vm576, %v2189, 0
      %v2281 = vsel %vm576, %v2190, 0
      %v2284 = vsel %vm576, %v2191, 0
      %v2287 = vsel %vm576, %v2192, 0
      %v2290 = vsel %vm673, %v2032, 0
      %2292 = vmatpush.bf16.msra.mxu0 0
      %2293 = vmatpush.bf16.msra.mxu0 0
      %2294 = vmatpush.bf16.msra.mxu0 0
      %2295 = vmatpush.bf16.msra.mxu0 0
      %2296 = vmatpush.bf16.msra.mxu0 0
      %2297 = vmatpush.bf16.msra.mxu0 0
      %2298 = vmatpush.bf16.msra.mxu0 0
      %2299 = vmatpush.bf16.msra.mxu0 %v2290
      %2300 = vmatmul.bf16.gmra.mxu0 %v2194
      %v2301 = vpop.f32.mrf.mxu0
      %v2302 = vadd.f32 0.0, %v2301
      %v2303 = vpop.f32.mrf.mxu0
      %v2304 = vadd.f32 0.0, %v2303
      %2305 = vmatmul.bf16.gmra.mxu0 %v2197
      %v2306 = vpop.f32.mrf.mxu0
      %v2307 = vadd.f32 0.0, %v2306
      %v2308 = vpop.f32.mrf.mxu0
      %v2309 = vadd.f32 0.0, %v2308
      %2310 = vmatmul.bf16.gmra.mxu0 %v2200
      %v2311 = vpop.f32.mrf.mxu0
      %v2312 = vadd.f32 0.0, %v2311
      %v2313 = vpop.f32.mrf.mxu0
      %v2314 = vadd.f32 0.0, %v2313
      %2315 = vmatmul.bf16.gmra.mxu0 %v2203
      %v2316 = vpop.f32.mrf.mxu0
      %v2317 = vadd.f32 0.0, %v2316
      %v2318 = vpop.f32.mrf.mxu0
      %v2319 = vadd.f32 0.0, %v2318
      %2320 = vmatmul.bf16.gmra.mxu0 %v2206
      %v2321 = vpop.f32.mrf.mxu0
      %v2322 = vadd.f32 0.0, %v2321
      %v2323 = vpop.f32.mrf.mxu0
      %v2324 = vadd.f32 0.0, %v2323
      %2325 = vmatmul.bf16.gmra.mxu0 %v2209
      %v2326 = vpop.f32.mrf.mxu0
      %v2327 = vadd.f32 0.0, %v2326
      %v2328 = vpop.f32.mrf.mxu0
      %v2329 = vadd.f32 0.0, %v2328
      %2330 = vmatmul.bf16.gmra.mxu0 %v2212
      %v2331 = vpop.f32.mrf.mxu0
      %v2332 = vadd.f32 0.0, %v2331
      %v2333 = vpop.f32.mrf.mxu0
      %v2334 = vadd.f32 0.0, %v2333
      %2335 = vmatmul.bf16.gmra.mxu0 %v2215
      %v2336 = vpop.f32.mrf.mxu0
      %v2337 = vadd.f32 0.0, %v2336
      %v2338 = vpop.f32.mrf.mxu0
      %v2339 = vadd.f32 0.0, %v2338
      %2340 = vmatmul.bf16.gmra.mxu0 %v2218
      %v2341 = vpop.f32.mrf.mxu0
      %v2342 = vadd.f32 0.0, %v2341
      %v2343 = vpop.f32.mrf.mxu0
      %v2344 = vadd.f32 0.0, %v2343
      %2345 = vmatmul.bf16.gmra.mxu0 %v2221
      %v2346 = vpop.f32.mrf.mxu0
      %v2347 = vadd.f32 0.0, %v2346
      %v2348 = vpop.f32.mrf.mxu0
      %v2349 = vadd.f32 0.0, %v2348
      %2350 = vmatmul.bf16.gmra.mxu0 %v2224
      %v2351 = vpop.f32.mrf.mxu0
      %v2352 = vadd.f32 0.0, %v2351
      %v2353 = vpop.f32.mrf.mxu0
      %v2354 = vadd.f32 0.0, %v2353
      %2355 = vmatmul.bf16.gmra.mxu0 %v2227
      %v2356 = vpop.f32.mrf.mxu0
      %v2357 = vadd.f32 0.0, %v2356
      %v2358 = vpop.f32.mrf.mxu0
      %v2359 = vadd.f32 0.0, %v2358
      %2360 = vmatmul.bf16.gmra.mxu0 %v2230
      %v2361 = vpop.f32.mrf.mxu0
      %v2362 = vadd.f32 0.0, %v2361
      %v2363 = vpop.f32.mrf.mxu0
      %v2364 = vadd.f32 0.0, %v2363
      %2365 = vmatmul.bf16.gmra.mxu0 %v2233
      %v2366 = vpop.f32.mrf.mxu0
      %v2367 = vadd.f32 0.0, %v2366
      %v2368 = vpop.f32.mrf.mxu0
      %v2369 = vadd.f32 0.0, %v2368
      %2370 = vmatmul.bf16.gmra.mxu0 %v2236
      %v2371 = vpop.f32.mrf.mxu0
      %v2372 = vadd.f32 0.0, %v2371
      %v2373 = vpop.f32.mrf.mxu0
      %v2374 = vadd.f32 0.0, %v2373
      %2375 = vmatmul.bf16.gmra.mxu0 %v2239
      %v2376 = vpop.f32.mrf.mxu0
      %v2377 = vadd.f32 0.0, %v2376
      %v2378 = vpop.f32.mrf.mxu0
      %v2379 = vadd.f32 0.0, %v2378
      %2380 = vmatmul.bf16.gmra.mxu0 %v2242
      %v2381 = vpop.f32.mrf.mxu0
      %v2382 = vadd.f32 0.0, %v2381
      %v2383 = vpop.f32.mrf.mxu0
      %v2384 = vadd.f32 0.0, %v2383
      %2385 = vmatmul.bf16.gmra.mxu0 %v2245
      %v2386 = vpop.f32.mrf.mxu0
      %v2387 = vadd.f32 0.0, %v2386
      %v2388 = vpop.f32.mrf.mxu0
      %v2389 = vadd.f32 0.0, %v2388
      %2390 = vmatmul.bf16.gmra.mxu0 %v2248
      %v2391 = vpop.f32.mrf.mxu0
      %v2392 = vadd.f32 0.0, %v2391
      %v2393 = vpop.f32.mrf.mxu0
      %v2394 = vadd.f32 0.0, %v2393
      %2395 = vmatmul.bf16.gmra.mxu0 %v2251
      %v2396 = vpop.f32.mrf.mxu0
      %v2397 = vadd.f32 0.0, %v2396
      %v2398 = vpop.f32.mrf.mxu0
      %v2399 = vadd.f32 0.0, %v2398
      %2400 = vmatmul.bf16.gmra.mxu0 %v2254
      %v2401 = vpop.f32.mrf.mxu0
      %v2402 = vadd.f32 0.0, %v2401
      %v2403 = vpop.f32.mrf.mxu0
      %v2404 = vadd.f32 0.0, %v2403
      %2405 = vmatmul.bf16.gmra.mxu0 %v2257
      %v2406 = vpop.f32.mrf.mxu0
      %v2407 = vadd.f32 0.0, %v2406
      %v2408 = vpop.f32.mrf.mxu0
      %v2409 = vadd.f32 0.0, %v2408
      %2410 = vmatmul.bf16.gmra.mxu0 %v2260
      %v2411 = vpop.f32.mrf.mxu0
      %v2412 = vadd.f32 0.0, %v2411
      %v2413 = vpop.f32.mrf.mxu0
      %v2414 = vadd.f32 0.0, %v2413
      %2415 = vmatmul.bf16.gmra.mxu0 %v2263
      %v2416 = vpop.f32.mrf.mxu0
      %v2417 = vadd.f32 0.0, %v2416
      %v2418 = vpop.f32.mrf.mxu0
      %v2419 = vadd.f32 0.0, %v2418
      %2420 = vmatmul.bf16.gmra.mxu0 %v2266
      %v2421 = vpop.f32.mrf.mxu0
      %v2422 = vadd.f32 0.0, %v2421
      %v2423 = vpop.f32.mrf.mxu0
      %v2424 = vadd.f32 0.0, %v2423
      %2425 = vmatmul.bf16.gmra.mxu0 %v2269
      %v2426 = vpop.f32.mrf.mxu0
      %v2427 = vadd.f32 0.0, %v2426
      %v2428 = vpop.f32.mrf.mxu0
      %v2429 = vadd.f32 0.0, %v2428
      %2430 = vmatmul.bf16.gmra.mxu0 %v2272
      %v2431 = vpop.f32.mrf.mxu0
      %v2432 = vadd.f32 0.0, %v2431
      %v2433 = vpop.f32.mrf.mxu0
      %v2434 = vadd.f32 0.0, %v2433
      %2435 = vmatmul.bf16.gmra.mxu0 %v2275
      %v2436 = vpop.f32.mrf.mxu0
      %v2437 = vadd.f32 0.0, %v2436
      %v2438 = vpop.f32.mrf.mxu0
      %v2439 = vadd.f32 0.0, %v2438
      %2440 = vmatmul.bf16.gmra.mxu0 %v2278
      %v2441 = vpop.f32.mrf.mxu0
      %v2442 = vadd.f32 0.0, %v2441
      %v2443 = vpop.f32.mrf.mxu0
      %v2444 = vadd.f32 0.0, %v2443
      %2445 = vmatmul.bf16.gmra.mxu0 %v2281
      %v2446 = vpop.f32.mrf.mxu0
      %v2447 = vadd.f32 0.0, %v2446
      %v2448 = vpop.f32.mrf.mxu0
      %v2449 = vadd.f32 0.0, %v2448
      %2450 = vmatmul.bf16.gmra.mxu0 %v2284
      %v2451 = vpop.f32.mrf.mxu0
      %v2452 = vadd.f32 0.0, %v2451
      %v2453 = vpop.f32.mrf.mxu0
      %v2454 = vadd.f32 0.0, %v2453
      %2455 = vmatmul.bf16.gmra.mxu0 %v2287
      %v2456 = vpop.f32.mrf.mxu0
      %v2457 = vadd.f32 0.0, %v2456
      %v2458 = vpop.f32.mrf.mxu0
      %v2459 = vadd.f32 0.0, %v2458
      %2460 = vdwg.mxu0
      %v2461 = vadd.f32 %v1115, %v2302
      %v2462 = vadd.f32 %v1117, %v2304
      %v2463 = vadd.f32 %v1120, %v2307
      %v2464 = vadd.f32 %v1122, %v2309
      %v2465 = vadd.f32 %v1125, %v2312
      %v2466 = vadd.f32 %v1127, %v2314
      %v2467 = vadd.f32 %v1130, %v2317
      %v2468 = vadd.f32 %v1132, %v2319
      %v2469 = vadd.f32 %v1135, %v2322
      %v2470 = vadd.f32 %v1137, %v2324
      %v2471 = vadd.f32 %v1140, %v2327
      %v2472 = vadd.f32 %v1142, %v2329
      %v2473 = vadd.f32 %v1145, %v2332
      %v2474 = vadd.f32 %v1147, %v2334
      %v2475 = vadd.f32 %v1150, %v2337
      %v2476 = vadd.f32 %v1152, %v2339
      %v2477 = vadd.f32 %v1155, %v2342
      %v2478 = vadd.f32 %v1157, %v2344
      %v2479 = vadd.f32 %v1160, %v2347
      %v2480 = vadd.f32 %v1162, %v2349
      %v2481 = vadd.f32 %v1165, %v2352
      %v2482 = vadd.f32 %v1167, %v2354
      %v2483 = vadd.f32 %v1170, %v2357
      %v2484 = vadd.f32 %v1172, %v2359
      %v2485 = vadd.f32 %v1175, %v2362
      %v2486 = vadd.f32 %v1177, %v2364
      %v2487 = vadd.f32 %v1180, %v2367
      %v2488 = vadd.f32 %v1182, %v2369
      %v2489 = vadd.f32 %v1185, %v2372
      %v2490 = vadd.f32 %v1187, %v2374
      %v2491 = vadd.f32 %v1190, %v2377
      %v2492 = vadd.f32 %v1192, %v2379
      %v2493 = vadd.f32 %v1195, %v2382
      %v2494 = vadd.f32 %v1197, %v2384
      %v2495 = vadd.f32 %v1200, %v2387
      %v2496 = vadd.f32 %v1202, %v2389
      %v2497 = vadd.f32 %v1205, %v2392
      %v2498 = vadd.f32 %v1207, %v2394
      %v2499 = vadd.f32 %v1210, %v2397
      %v2500 = vadd.f32 %v1212, %v2399
      %v2501 = vadd.f32 %v1215, %v2402
      %v2502 = vadd.f32 %v1217, %v2404
      %v2503 = vadd.f32 %v1220, %v2407
      %v2504 = vadd.f32 %v1222, %v2409
      %v2505 = vadd.f32 %v1225, %v2412
      %v2506 = vadd.f32 %v1227, %v2414
      %v2507 = vadd.f32 %v1230, %v2417
      %v2508 = vadd.f32 %v1232, %v2419
      %v2509 = vadd.f32 %v1235, %v2422
      %v2510 = vadd.f32 %v1237, %v2424
      %v2511 = vadd.f32 %v1240, %v2427
      %v2512 = vadd.f32 %v1242, %v2429
      %v2513 = vadd.f32 %v1245, %v2432
      %v2514 = vadd.f32 %v1247, %v2434
      %v2515 = vadd.f32 %v1250, %v2437
      %v2516 = vadd.f32 %v1252, %v2439
      %v2517 = vadd.f32 %v1255, %v2442
      %v2518 = vadd.f32 %v1257, %v2444
      %v2519 = vadd.f32 %v1260, %v2447
      %v2520 = vadd.f32 %v1262, %v2449
      %v2521 = vadd.f32 %v1265, %v2452
      %v2522 = vadd.f32 %v1267, %v2454
      %v2523 = vadd.f32 %v1270, %v2457
      %v2524 = vadd.f32 %v1272, %v2459
      %s2525 = scalar_lea.vmem %s1, 28
      %v2526 = vld [vmem:[%s2525] sm:$0xf]
      %v2528 = vsel %vm673, %v2526, 0
      %2530 = vmatpush.bf16.msra.mxu0 0
      %2531 = vmatpush.bf16.msra.mxu0 0
      %2532 = vmatpush.bf16.msra.mxu0 0
      %2533 = vmatpush.bf16.msra.mxu0 0
      %2534 = vmatpush.bf16.msra.mxu0 0
      %2535 = vmatpush.bf16.msra.mxu0 0
      %2536 = vmatpush.bf16.msra.mxu0 0
      %2537 = vmatpush.bf16.msra.mxu0 %v2528
      %2538 = vmatmul.bf16.gmra.mxu0 %v2194
      %v2539 = vpop.f32.mrf.mxu0
      %v2540 = vadd.f32 0.0, %v2539
      %v2541 = vpop.f32.mrf.mxu0
      %v2542 = vadd.f32 0.0, %v2541
      %2543 = vmatmul.bf16.gmra.mxu0 %v2197
      %v2544 = vpop.f32.mrf.mxu0
      %v2545 = vadd.f32 0.0, %v2544
      %v2546 = vpop.f32.mrf.mxu0
      %v2547 = vadd.f32 0.0, %v2546
      %2548 = vmatmul.bf16.gmra.mxu0 %v2200
      %v2549 = vpop.f32.mrf.mxu0
      %v2550 = vadd.f32 0.0, %v2549
      %v2551 = vpop.f32.mrf.mxu0
      %v2552 = vadd.f32 0.0, %v2551
      %2553 = vmatmul.bf16.gmra.mxu0 %v2203
      %v2554 = vpop.f32.mrf.mxu0
      %v2555 = vadd.f32 0.0, %v2554
      %v2556 = vpop.f32.mrf.mxu0
      %v2557 = vadd.f32 0.0, %v2556
      %2558 = vmatmul.bf16.gmra.mxu0 %v2206
      %v2559 = vpop.f32.mrf.mxu0
      %v2560 = vadd.f32 0.0, %v2559
      %v2561 = vpop.f32.mrf.mxu0
      %v2562 = vadd.f32 0.0, %v2561
      %2563 = vmatmul.bf16.gmra.mxu0 %v2209
      %v2564 = vpop.f32.mrf.mxu0
      %v2565 = vadd.f32 0.0, %v2564
      %v2566 = vpop.f32.mrf.mxu0
      %v2567 = vadd.f32 0.0, %v2566
      %2568 = vmatmul.bf16.gmra.mxu0 %v2212
      %v2569 = vpop.f32.mrf.mxu0
      %v2570 = vadd.f32 0.0, %v2569
      %v2571 = vpop.f32.mrf.mxu0
      %v2572 = vadd.f32 0.0, %v2571
      %2573 = vmatmul.bf16.gmra.mxu0 %v2215
      %v2574 = vpop.f32.mrf.mxu0
      %v2575 = vadd.f32 0.0, %v2574
      %v2576 = vpop.f32.mrf.mxu0
      %v2577 = vadd.f32 0.0, %v2576
      %2578 = vmatmul.bf16.gmra.mxu0 %v2218
      %v2579 = vpop.f32.mrf.mxu0
      %v2580 = vadd.f32 0.0, %v2579
      %v2581 = vpop.f32.mrf.mxu0
      %v2582 = vadd.f32 0.0, %v2581
      %2583 = vmatmul.bf16.gmra.mxu0 %v2221
      %v2584 = vpop.f32.mrf.mxu0
      %v2585 = vadd.f32 0.0, %v2584
      %v2586 = vpop.f32.mrf.mxu0
      %v2587 = vadd.f32 0.0, %v2586
      %2588 = vmatmul.bf16.gmra.mxu0 %v2224
      %v2589 = vpop.f32.mrf.mxu0
      %v2590 = vadd.f32 0.0, %v2589
      %v2591 = vpop.f32.mrf.mxu0
      %v2592 = vadd.f32 0.0, %v2591
      %2593 = vmatmul.bf16.gmra.mxu0 %v2227
      %v2594 = vpop.f32.mrf.mxu0
      %v2595 = vadd.f32 0.0, %v2594
      %v2596 = vpop.f32.mrf.mxu0
      %v2597 = vadd.f32 0.0, %v2596
      %2598 = vmatmul.bf16.gmra.mxu0 %v2230
      %v2599 = vpop.f32.mrf.mxu0
      %v2600 = vadd.f32 0.0, %v2599
      %v2601 = vpop.f32.mrf.mxu0
      %v2602 = vadd.f32 0.0, %v2601
      %2603 = vmatmul.bf16.gmra.mxu0 %v2233
      %v2604 = vpop.f32.mrf.mxu0
      %v2605 = vadd.f32 0.0, %v2604
      %v2606 = vpop.f32.mrf.mxu0
      %v2607 = vadd.f32 0.0, %v2606
      %2608 = vmatmul.bf16.gmra.mxu0 %v2236
      %v2609 = vpop.f32.mrf.mxu0
      %v2610 = vadd.f32 0.0, %v2609
      %v2611 = vpop.f32.mrf.mxu0
      %v2612 = vadd.f32 0.0, %v2611
      %2613 = vmatmul.bf16.gmra.mxu0 %v2239
      %v2614 = vpop.f32.mrf.mxu0
      %v2615 = vadd.f32 0.0, %v2614
      %v2616 = vpop.f32.mrf.mxu0
      %v2617 = vadd.f32 0.0, %v2616
      %2618 = vmatmul.bf16.gmra.mxu0 %v2242
      %v2619 = vpop.f32.mrf.mxu0
      %v2620 = vadd.f32 0.0, %v2619
      %v2621 = vpop.f32.mrf.mxu0
      %v2622 = vadd.f32 0.0, %v2621
      %2623 = vmatmul.bf16.gmra.mxu0 %v2245
      %v2624 = vpop.f32.mrf.mxu0
      %v2625 = vadd.f32 0.0, %v2624
      %v2626 = vpop.f32.mrf.mxu0
      %v2627 = vadd.f32 0.0, %v2626
      %2628 = vmatmul.bf16.gmra.mxu0 %v2248
      %v2629 = vpop.f32.mrf.mxu0
      %v2630 = vadd.f32 0.0, %v2629
      %v2631 = vpop.f32.mrf.mxu0
      %v2632 = vadd.f32 0.0, %v2631
      %2633 = vmatmul.bf16.gmra.mxu0 %v2251
      %v2634 = vpop.f32.mrf.mxu0
      %v2635 = vadd.f32 0.0, %v2634
      %v2636 = vpop.f32.mrf.mxu0
      %v2637 = vadd.f32 0.0, %v2636
      %2638 = vmatmul.bf16.gmra.mxu0 %v2254
      %v2639 = vpop.f32.mrf.mxu0
      %v2640 = vadd.f32 0.0, %v2639
      %v2641 = vpop.f32.mrf.mxu0
      %v2642 = vadd.f32 0.0, %v2641
      %2643 = vmatmul.bf16.gmra.mxu0 %v2257
      %v2644 = vpop.f32.mrf.mxu0
      %v2645 = vadd.f32 0.0, %v2644
      %v2646 = vpop.f32.mrf.mxu0
      %v2647 = vadd.f32 0.0, %v2646
      %2648 = vmatmul.bf16.gmra.mxu0 %v2260
      %v2649 = vpop.f32.mrf.mxu0
      %v2650 = vadd.f32 0.0, %v2649
      %v2651 = vpop.f32.mrf.mxu0
      %v2652 = vadd.f32 0.0, %v2651
      %2653 = vmatmul.bf16.gmra.mxu0 %v2263
      %v2654 = vpop.f32.mrf.mxu0
      %v2655 = vadd.f32 0.0, %v2654
      %v2656 = vpop.f32.mrf.mxu0
      %v2657 = vadd.f32 0.0, %v2656
      %2658 = vmatmul.bf16.gmra.mxu0 %v2266
      %v2659 = vpop.f32.mrf.mxu0
      %v2660 = vadd.f32 0.0, %v2659
      %v2661 = vpop.f32.mrf.mxu0
      %v2662 = vadd.f32 0.0, %v2661
      %2663 = vmatmul.bf16.gmra.mxu0 %v2269
      %v2664 = vpop.f32.mrf.mxu0
      %v2665 = vadd.f32 0.0, %v2664
      %v2666 = vpop.f32.mrf.mxu0
      %v2667 = vadd.f32 0.0, %v2666
      %2668 = vmatmul.bf16.gmra.mxu0 %v2272
      %v2669 = vpop.f32.mrf.mxu0
      %v2670 = vadd.f32 0.0, %v2669
      %v2671 = vpop.f32.mrf.mxu0
      %v2672 = vadd.f32 0.0, %v2671
      %2673 = vmatmul.bf16.gmra.mxu0 %v2275
      %v2674 = vpop.f32.mrf.mxu0
      %v2675 = vadd.f32 0.0, %v2674
      %v2676 = vpop.f32.mrf.mxu0
      %v2677 = vadd.f32 0.0, %v2676
      %2678 = vmatmul.bf16.gmra.mxu0 %v2278
      %v2679 = vpop.f32.mrf.mxu0
      %v2680 = vadd.f32 0.0, %v2679
      %v2681 = vpop.f32.mrf.mxu0
      %v2682 = vadd.f32 0.0, %v2681
      %2683 = vmatmul.bf16.gmra.mxu0 %v2281
      %v2684 = vpop.f32.mrf.mxu0
      %v2685 = vadd.f32 0.0, %v2684
      %v2686 = vpop.f32.mrf.mxu0
      %v2687 = vadd.f32 0.0, %v2686
      %2688 = vmatmul.bf16.gmra.mxu0 %v2284
      %v2689 = vpop.f32.mrf.mxu0
      %v2690 = vadd.f32 0.0, %v2689
      %v2691 = vpop.f32.mrf.mxu0
      %v2692 = vadd.f32 0.0, %v2691
      %2693 = vmatmul.bf16.gmra.mxu0 %v2287
      %v2694 = vpop.f32.mrf.mxu0
      %v2695 = vadd.f32 0.0, %v2694
      %v2696 = vpop.f32.mrf.mxu0
      %v2697 = vadd.f32 0.0, %v2696
      %2698 = vdwg.mxu0
      %v2699 = vadd.f32 %v1461, %v2540
      %v2700 = vadd.f32 %v1463, %v2542
      %v2701 = vadd.f32 %v1466, %v2545
      %v2702 = vadd.f32 %v1468, %v2547
      %v2703 = vadd.f32 %v1471, %v2550
      %v2704 = vadd.f32 %v1473, %v2552
      %v2705 = vadd.f32 %v1476, %v2555
      %v2706 = vadd.f32 %v1478, %v2557
      %v2707 = vadd.f32 %v1481, %v2560
      %v2708 = vadd.f32 %v1483, %v2562
      %v2709 = vadd.f32 %v1486, %v2565
      %v2710 = vadd.f32 %v1488, %v2567
      %v2711 = vadd.f32 %v1491, %v2570
      %v2712 = vadd.f32 %v1493, %v2572
      %v2713 = vadd.f32 %v1496, %v2575
      %v2714 = vadd.f32 %v1498, %v2577
      %v2715 = vadd.f32 %v1501, %v2580
      %v2716 = vadd.f32 %v1503, %v2582
      %v2717 = vadd.f32 %v1506, %v2585
      %v2718 = vadd.f32 %v1508, %v2587
      %v2719 = vadd.f32 %v1511, %v2590
      %v2720 = vadd.f32 %v1513, %v2592
      %v2721 = vadd.f32 %v1516, %v2595
      %v2722 = vadd.f32 %v1518, %v2597
      %v2723 = vadd.f32 %v1521, %v2600
      %v2724 = vadd.f32 %v1523, %v2602
      %v2725 = vadd.f32 %v1526, %v2605
      %v2726 = vadd.f32 %v1528, %v2607
      %v2727 = vadd.f32 %v1531, %v2610
      %v2728 = vadd.f32 %v1533, %v2612
      %v2729 = vadd.f32 %v1536, %v2615
      %v2730 = vadd.f32 %v1538, %v2617
      %v2731 = vadd.f32 %v1541, %v2620
      %v2732 = vadd.f32 %v1543, %v2622
      %v2733 = vadd.f32 %v1546, %v2625
      %v2734 = vadd.f32 %v1548, %v2627
      %v2735 = vadd.f32 %v1551, %v2630
      %v2736 = vadd.f32 %v1553, %v2632
      %v2737 = vadd.f32 %v1556, %v2635
      %v2738 = vadd.f32 %v1558, %v2637
      %v2739 = vadd.f32 %v1561, %v2640
      %v2740 = vadd.f32 %v1563, %v2642
      %v2741 = vadd.f32 %v1566, %v2645
      %v2742 = vadd.f32 %v1568, %v2647
      %v2743 = vadd.f32 %v1571, %v2650
      %v2744 = vadd.f32 %v1573, %v2652
      %v2745 = vadd.f32 %v1576, %v2655
      %v2746 = vadd.f32 %v1578, %v2657
      %v2747 = vadd.f32 %v1581, %v2660
      %v2748 = vadd.f32 %v1583, %v2662
      %v2749 = vadd.f32 %v1586, %v2665
      %v2750 = vadd.f32 %v1588, %v2667
      %v2751 = vadd.f32 %v1591, %v2670
      %v2752 = vadd.f32 %v1593, %v2672
      %v2753 = vadd.f32 %v1596, %v2675
      %v2754 = vadd.f32 %v1598, %v2677
      %v2755 = vadd.f32 %v1601, %v2680
      %v2756 = vadd.f32 %v1603, %v2682
      %v2757 = vadd.f32 %v1606, %v2685
      %v2758 = vadd.f32 %v1608, %v2687
      %v2759 = vadd.f32 %v1611, %v2690
      %v2760 = vadd.f32 %v1613, %v2692
      %v2761 = vadd.f32 %v1616, %v2695
      %v2762 = vadd.f32 %v1618, %v2697
      %s2763 = scalar_lea.vmem %s1, 32
      %v2764 = vld [vmem:[%s2763] sm:$0xf]
      %v2766 = vsel %vm673, %v2764, 0
      %2768 = vmatpush.bf16.msra.mxu0 0
      %2769 = vmatpush.bf16.msra.mxu0 0
      %2770 = vmatpush.bf16.msra.mxu0 0
      %2771 = vmatpush.bf16.msra.mxu0 0
      %2772 = vmatpush.bf16.msra.mxu0 0
      %2773 = vmatpush.bf16.msra.mxu0 0
      %2774 = vmatpush.bf16.msra.mxu0 0
      %2775 = vmatpush.bf16.msra.mxu0 %v2766
      %2776 = vmatmul.bf16.gmra.mxu0 %v2194
      %v2777 = vpop.f32.mrf.mxu0
      %v2778 = vadd.f32 0.0, %v2777
      %v2779 = vpop.f32.mrf.mxu0
      %v2780 = vadd.f32 0.0, %v2779
      %2781 = vmatmul.bf16.gmra.mxu0 %v2197
      %v2782 = vpop.f32.mrf.mxu0
      %v2783 = vadd.f32 0.0, %v2782
      %v2784 = vpop.f32.mrf.mxu0
      %v2785 = vadd.f32 0.0, %v2784
      %2786 = vmatmul.bf16.gmra.mxu0 %v2200
      %v2787 = vpop.f32.mrf.mxu0
      %v2788 = vadd.f32 0.0, %v2787
      %v2789 = vpop.f32.mrf.mxu0
      %v2790 = vadd.f32 0.0, %v2789
      %2791 = vmatmul.bf16.gmra.mxu0 %v2203
      %v2792 = vpop.f32.mrf.mxu0
      %v2793 = vadd.f32 0.0, %v2792
      %v2794 = vpop.f32.mrf.mxu0
      %v2795 = vadd.f32 0.0, %v2794
      %2796 = vmatmul.bf16.gmra.mxu0 %v2206
      %v2797 = vpop.f32.mrf.mxu0
      %v2798 = vadd.f32 0.0, %v2797
      %v2799 = vpop.f32.mrf.mxu0
      %v2800 = vadd.f32 0.0, %v2799
      %2801 = vmatmul.bf16.gmra.mxu0 %v2209
      %v2802 = vpop.f32.mrf.mxu0
      %v2803 = vadd.f32 0.0, %v2802
      %v2804 = vpop.f32.mrf.mxu0
      %v2805 = vadd.f32 0.0, %v2804
      %2806 = vmatmul.bf16.gmra.mxu0 %v2212
      %v2807 = vpop.f32.mrf.mxu0
      %v2808 = vadd.f32 0.0, %v2807
      %v2809 = vpop.f32.mrf.mxu0
      %v2810 = vadd.f32 0.0, %v2809
      %2811 = vmatmul.bf16.gmra.mxu0 %v2215
      %v2812 = vpop.f32.mrf.mxu0
      %v2813 = vadd.f32 0.0, %v2812
      %v2814 = vpop.f32.mrf.mxu0
      %v2815 = vadd.f32 0.0, %v2814
      %2816 = vmatmul.bf16.gmra.mxu0 %v2218
      %v2817 = vpop.f32.mrf.mxu0
      %v2818 = vadd.f32 0.0, %v2817
      %v2819 = vpop.f32.mrf.mxu0
      %v2820 = vadd.f32 0.0, %v2819
      %2821 = vmatmul.bf16.gmra.mxu0 %v2221
      %v2822 = vpop.f32.mrf.mxu0
      %v2823 = vadd.f32 0.0, %v2822
      %v2824 = vpop.f32.mrf.mxu0
      %v2825 = vadd.f32 0.0, %v2824
      %2826 = vmatmul.bf16.gmra.mxu0 %v2224
      %v2827 = vpop.f32.mrf.mxu0
      %v2828 = vadd.f32 0.0, %v2827
      %v2829 = vpop.f32.mrf.mxu0
      %v2830 = vadd.f32 0.0, %v2829
      %2831 = vmatmul.bf16.gmra.mxu0 %v2227
      %v2832 = vpop.f32.mrf.mxu0
      %v2833 = vadd.f32 0.0, %v2832
      %v2834 = vpop.f32.mrf.mxu0
      %v2835 = vadd.f32 0.0, %v2834
      %2836 = vmatmul.bf16.gmra.mxu0 %v2230
      %v2837 = vpop.f32.mrf.mxu0
      %v2838 = vadd.f32 0.0, %v2837
      %v2839 = vpop.f32.mrf.mxu0
      %v2840 = vadd.f32 0.0, %v2839
      %2841 = vmatmul.bf16.gmra.mxu0 %v2233
      %v2842 = vpop.f32.mrf.mxu0
      %v2843 = vadd.f32 0.0, %v2842
      %v2844 = vpop.f32.mrf.mxu0
      %v2845 = vadd.f32 0.0, %v2844
      %2846 = vmatmul.bf16.gmra.mxu0 %v2236
      %v2847 = vpop.f32.mrf.mxu0
      %v2848 = vadd.f32 0.0, %v2847
      %v2849 = vpop.f32.mrf.mxu0
      %v2850 = vadd.f32 0.0, %v2849
      %2851 = vmatmul.bf16.gmra.mxu0 %v2239
      %v2852 = vpop.f32.mrf.mxu0
      %v2853 = vadd.f32 0.0, %v2852
      %v2854 = vpop.f32.mrf.mxu0
      %v2855 = vadd.f32 0.0, %v2854
      %2856 = vmatmul.bf16.gmra.mxu0 %v2242
      %v2857 = vpop.f32.mrf.mxu0
      %v2858 = vadd.f32 0.0, %v2857
      %v2859 = vpop.f32.mrf.mxu0
      %v2860 = vadd.f32 0.0, %v2859
      %2861 = vmatmul.bf16.gmra.mxu0 %v2245
      %v2862 = vpop.f32.mrf.mxu0
      %v2863 = vadd.f32 0.0, %v2862
      %v2864 = vpop.f32.mrf.mxu0
      %v2865 = vadd.f32 0.0, %v2864
      %2866 = vmatmul.bf16.gmra.mxu0 %v2248
      %v2867 = vpop.f32.mrf.mxu0
      %v2868 = vadd.f32 0.0, %v2867
      %v2869 = vpop.f32.mrf.mxu0
      %v2870 = vadd.f32 0.0, %v2869
      %2871 = vmatmul.bf16.gmra.mxu0 %v2251
      %v2872 = vpop.f32.mrf.mxu0
      %v2873 = vadd.f32 0.0, %v2872
      %v2874 = vpop.f32.mrf.mxu0
      %v2875 = vadd.f32 0.0, %v2874
      %2876 = vmatmul.bf16.gmra.mxu0 %v2254
      %v2877 = vpop.f32.mrf.mxu0
      %v2878 = vadd.f32 0.0, %v2877
      %v2879 = vpop.f32.mrf.mxu0
      %v2880 = vadd.f32 0.0, %v2879
      %2881 = vmatmul.bf16.gmra.mxu0 %v2257
      %v2882 = vpop.f32.mrf.mxu0
      %v2883 = vadd.f32 0.0, %v2882
      %v2884 = vpop.f32.mrf.mxu0
      %v2885 = vadd.f32 0.0, %v2884
      %2886 = vmatmul.bf16.gmra.mxu0 %v2260
      %v2887 = vpop.f32.mrf.mxu0
      %v2888 = vadd.f32 0.0, %v2887
      %v2889 = vpop.f32.mrf.mxu0
      %v2890 = vadd.f32 0.0, %v2889
      %2891 = vmatmul.bf16.gmra.mxu0 %v2263
      %v2892 = vpop.f32.mrf.mxu0
      %v2893 = vadd.f32 0.0, %v2892
      %v2894 = vpop.f32.mrf.mxu0
      %v2895 = vadd.f32 0.0, %v2894
      %2896 = vmatmul.bf16.gmra.mxu0 %v2266
      %v2897 = vpop.f32.mrf.mxu0
      %v2898 = vadd.f32 0.0, %v2897
      %v2899 = vpop.f32.mrf.mxu0
      %v2900 = vadd.f32 0.0, %v2899
      %2901 = vmatmul.bf16.gmra.mxu0 %v2269
      %v2902 = vpop.f32.mrf.mxu0
      %v2903 = vadd.f32 0.0, %v2902
      %v2904 = vpop.f32.mrf.mxu0
      %v2905 = vadd.f32 0.0, %v2904
      %2906 = vmatmul.bf16.gmra.mxu0 %v2272
      %v2907 = vpop.f32.mrf.mxu0
      %v2908 = vadd.f32 0.0, %v2907
      %v2909 = vpop.f32.mrf.mxu0
      %v2910 = vadd.f32 0.0, %v2909
      %2911 = vmatmul.bf16.gmra.mxu0 %v2275
      %v2912 = vpop.f32.mrf.mxu0
      %v2913 = vadd.f32 0.0, %v2912
      %v2914 = vpop.f32.mrf.mxu0
      %v2915 = vadd.f32 0.0, %v2914
      %2916 = vmatmul.bf16.gmra.mxu0 %v2278
      %v2917 = vpop.f32.mrf.mxu0
      %v2918 = vadd.f32 0.0, %v2917
      %v2919 = vpop.f32.mrf.mxu0
      %v2920 = vadd.f32 0.0, %v2919
      %2921 = vmatmul.bf16.gmra.mxu0 %v2281
      %v2922 = vpop.f32.mrf.mxu0
      %v2923 = vadd.f32 0.0, %v2922
      %v2924 = vpop.f32.mrf.mxu0
      %v2925 = vadd.f32 0.0, %v2924
      %2926 = vmatmul.bf16.gmra.mxu0 %v2284
      %v2927 = vpop.f32.mrf.mxu0
      %v2928 = vadd.f32 0.0, %v2927
      %v2929 = vpop.f32.mrf.mxu0
      %v2930 = vadd.f32 0.0, %v2929
      %2931 = vmatmul.bf16.gmra.mxu0 %v2287
      %v2932 = vpop.f32.mrf.mxu0
      %v2933 = vadd.f32 0.0, %v2932
      %v2934 = vpop.f32.mrf.mxu0
      %v2935 = vadd.f32 0.0, %v2934
      %2936 = vdwg.mxu0
      %v2937 = vadd.f32 %v1807, %v2778
      %v2938 = vadd.f32 %v1809, %v2780
      %v2939 = vadd.f32 %v1812, %v2783
      %v2940 = vadd.f32 %v1814, %v2785
      %v2941 = vadd.f32 %v1817, %v2788
      %v2942 = vadd.f32 %v1819, %v2790
      %v2943 = vadd.f32 %v1822, %v2793
      %v2944 = vadd.f32 %v1824, %v2795
      %v2945 = vadd.f32 %v1827, %v2798
      %v2946 = vadd.f32 %v1829, %v2800
      %v2947 = vadd.f32 %v1832, %v2803
      %v2948 = vadd.f32 %v1834, %v2805
      %v2949 = vadd.f32 %v1837, %v2808
      %v2950 = vadd.f32 %v1839, %v2810
      %v2951 = vadd.f32 %v1842, %v2813
      %v2952 = vadd.f32 %v1844, %v2815
      %v2953 = vadd.f32 %v1847, %v2818
      %v2954 = vadd.f32 %v1849, %v2820
      %v2955 = vadd.f32 %v1852, %v2823
      %v2956 = vadd.f32 %v1854, %v2825
      %v2957 = vadd.f32 %v1857, %v2828
      %v2958 = vadd.f32 %v1859, %v2830
      %v2959 = vadd.f32 %v1862, %v2833
      %v2960 = vadd.f32 %v1864, %v2835
      %v2961 = vadd.f32 %v1867, %v2838
      %v2962 = vadd.f32 %v1869, %v2840
      %v2963 = vadd.f32 %v1872, %v2843
      %v2964 = vadd.f32 %v1874, %v2845
      %v2965 = vadd.f32 %v1877, %v2848
      %v2966 = vadd.f32 %v1879, %v2850
      %v2967 = vadd.f32 %v1882, %v2853
      %v2968 = vadd.f32 %v1884, %v2855
      %v2969 = vadd.f32 %v1887, %v2858
      %v2970 = vadd.f32 %v1889, %v2860
      %v2971 = vadd.f32 %v1892, %v2863
      %v2972 = vadd.f32 %v1894, %v2865
      %v2973 = vadd.f32 %v1897, %v2868
      %v2974 = vadd.f32 %v1899, %v2870
      %v2975 = vadd.f32 %v1902, %v2873
      %v2976 = vadd.f32 %v1904, %v2875
      %v2977 = vadd.f32 %v1907, %v2878
      %v2978 = vadd.f32 %v1909, %v2880
      %v2979 = vadd.f32 %v1912, %v2883
      %v2980 = vadd.f32 %v1914, %v2885
      %v2981 = vadd.f32 %v1917, %v2888
      %v2982 = vadd.f32 %v1919, %v2890
      %v2983 = vadd.f32 %v1922, %v2893
      %v2984 = vadd.f32 %v1924, %v2895
      %v2985 = vadd.f32 %v1927, %v2898
      %v2986 = vadd.f32 %v1929, %v2900
      %v2987 = vadd.f32 %v1932, %v2903
      %v2988 = vadd.f32 %v1934, %v2905
      %v2989 = vadd.f32 %v1937, %v2908
      %v2990 = vadd.f32 %v1939, %v2910
      %v2991 = vadd.f32 %v1942, %v2913
      %v2992 = vadd.f32 %v1944, %v2915
      %v2993 = vadd.f32 %v1947, %v2918
      %v2994 = vadd.f32 %v1949, %v2920
      %v2995 = vadd.f32 %v1952, %v2923
      %v2996 = vadd.f32 %v1954, %v2925
      %v2997 = vadd.f32 %v1957, %v2928
      %v2998 = vadd.f32 %v1959, %v2930
      %v2999 = vadd.f32 %v1962, %v2933
      %v3000 = vadd.f32 %v1964, %v2935
      %v3001 = vrot.slane %v2461, 7
      %v3002 = vrot.slane %v2465, 7
      %v3003 = vrot.slane %v2469, 7
      %v3004 = vrot.slane %v2473, 7
      %v3005 = vrot.slane %v2477, 7
      %v3006 = vrot.slane %v2481, 7
      %v3007 = vrot.slane %v2485, 7
      %v3008 = vrot.slane %v2489, 7
      %v3009 = vrot.slane %v2493, 7
      %v3010 = vrot.slane %v2497, 7
      %v3011 = vrot.slane %v2501, 7
      %v3012 = vrot.slane %v2505, 7
      %v3013 = vrot.slane %v2509, 7
      %v3014 = vrot.slane %v2513, 7
      %v3015 = vrot.slane %v2517, 7
      %v3016 = vrot.slane %v2521, 7
      %v3017 = vrot.slane %v2462, 7
      %v3018 = vrot.slane %v2466, 7
      %v3019 = vrot.slane %v2470, 7
      %v3020 = vrot.slane %v2474, 7
      %v3021 = vrot.slane %v2478, 7
      %v3022 = vrot.slane %v2482, 7
      %v3023 = vrot.slane %v2486, 7
      %v3024 = vrot.slane %v2490, 7
      %v3025 = vrot.slane %v2494, 7
      %v3026 = vrot.slane %v2498, 7
      %v3027 = vrot.slane %v2502, 7
      %v3028 = vrot.slane %v2506, 7
      %v3029 = vrot.slane %v2510, 7
      %v3030 = vrot.slane %v2514, 7
      %v3031 = vrot.slane %v2518, 7
      %v3032 = vrot.slane %v2522, 7
      %v3033 = vrot.slane %v2463, 7
      %v3034 = vrot.slane %v2467, 7
      %v3035 = vrot.slane %v2471, 7
      %v3036 = vrot.slane %v2475, 7
      %v3037 = vrot.slane %v2479, 7
      %v3038 = vrot.slane %v2483, 7
      %v3039 = vrot.slane %v2487, 7
      %v3040 = vrot.slane %v2491, 7
      %v3041 = vrot.slane %v2495, 7
      %v3042 = vrot.slane %v2499, 7
      %v3043 = vrot.slane %v2503, 7
      %v3044 = vrot.slane %v2507, 7
      %v3045 = vrot.slane %v2511, 7
      %v3046 = vrot.slane %v2515, 7
      %v3047 = vrot.slane %v2519, 7
      %v3048 = vrot.slane %v2523, 7
      %v3049 = vrot.slane %v2464, 7
      %v3050 = vrot.slane %v2468, 7
      %v3051 = vrot.slane %v2472, 7
      %v3052 = vrot.slane %v2476, 7
      %v3053 = vrot.slane %v2480, 7
      %v3054 = vrot.slane %v2484, 7
      %v3055 = vrot.slane %v2488, 7
      %v3056 = vrot.slane %v2492, 7
      %v3057 = vrot.slane %v2496, 7
      %v3058 = vrot.slane %v2500, 7
      %v3059 = vrot.slane %v2504, 7
      %v3060 = vrot.slane %v2508, 7
      %v3061 = vrot.slane %v2512, 7
      %v3062 = vrot.slane %v2516, 7
      %v3063 = vrot.slane %v2520, 7
      %v3064 = vrot.slane %v2524, 7
      %v3065 = vlaneseq
      %v3066 = vshrl.u32 %v3065, 7
      %vm3067 = vcmp.lt.s32.totalorder %v3066, 1
      %v3068 = vsel %vm3067, %v3033, %v3049
      %v3069 = vsel %vm3067, %v3034, %v3050
      %v3070 = vsel %vm3067, %v3035, %v3051
      %v3071 = vsel %vm3067, %v3036, %v3052
      %v3072 = vsel %vm3067, %v3037, %v3053
      %v3073 = vsel %vm3067, %v3038, %v3054
      %v3074 = vsel %vm3067, %v3039, %v3055
      %v3075 = vsel %vm3067, %v3040, %v3056
      %v3076 = vsel %vm3067, %v3041, %v3057
      %v3077 = vsel %vm3067, %v3042, %v3058
      %v3078 = vsel %vm3067, %v3043, %v3059
      %v3079 = vsel %vm3067, %v3044, %v3060
      %v3080 = vsel %vm3067, %v3045, %v3061
      %v3081 = vsel %vm3067, %v3046, %v3062
      %v3082 = vsel %vm3067, %v3047, %v3063
      %v3083 = vsel %vm3067, %v3048, %v3064
      %v3084 = vsel %vm3067, %v3017, %v3033
      %v3085 = vsel %vm3067, %v3018, %v3034
      %v3086 = vsel %vm3067, %v3019, %v3035
      %v3087 = vsel %vm3067, %v3020, %v3036
      %v3088 = vsel %vm3067, %v3021, %v3037
      %v3089 = vsel %vm3067, %v3022, %v3038
      %v3090 = vsel %vm3067, %v3023, %v3039
      %v3091 = vsel %vm3067, %v3024, %v3040
      %v3092 = vsel %vm3067, %v3025, %v3041
      %v3093 = vsel %vm3067, %v3026, %v3042
      %v3094 = vsel %vm3067, %v3027, %v3043
      %v3095 = vsel %vm3067, %v3028, %v3044
      %v3096 = vsel %vm3067, %v3029, %v3045
      %v3097 = vsel %vm3067, %v3030, %v3046
      %v3098 = vsel %vm3067, %v3031, %v3047
      %v3099 = vsel %vm3067, %v3032, %v3048
      %v3100 = vsel %vm3067, %v3001, %v3017
      %v3101 = vsel %vm3067, %v3002, %v3018
      %v3102 = vsel %vm3067, %v3003, %v3019
      %v3103 = vsel %vm3067, %v3004, %v3020
      %v3104 = vsel %vm3067, %v3005, %v3021
      %v3105 = vsel %vm3067, %v3006, %v3022
      %v3106 = vsel %vm3067, %v3007, %v3023
      %v3107 = vsel %vm3067, %v3008, %v3024
      %v3108 = vsel %vm3067, %v3009, %v3025
      %v3109 = vsel %vm3067, %v3010, %v3026
      %v3110 = vsel %vm3067, %v3011, %v3027
      %v3111 = vsel %vm3067, %v3012, %v3028
      %v3112 = vsel %vm3067, %v3013, %v3029
      %v3113 = vsel %vm3067, %v3014, %v3030
      %v3114 = vsel %vm3067, %v3015, %v3031
      %v3115 = vsel %vm3067, %v3016, %v3032
      %v3116 = vsel %vm3067, %v3049, %v3001
      %v3117 = vsel %vm3067, %v3050, %v3002
      %v3118 = vsel %vm3067, %v3051, %v3003
      %v3119 = vsel %vm3067, %v3052, %v3004
      %v3120 = vsel %vm3067, %v3053, %v3005
      %v3121 = vsel %vm3067, %v3054, %v3006
      %v3122 = vsel %vm3067, %v3055, %v3007
      %v3123 = vsel %vm3067, %v3056, %v3008
      %v3124 = vsel %vm3067, %v3057, %v3009
      %v3125 = vsel %vm3067, %v3058, %v3010
      %v3126 = vsel %vm3067, %v3059, %v3011
      %v3127 = vsel %vm3067, %v3060, %v3012
      %v3128 = vsel %vm3067, %v3061, %v3013
      %v3129 = vsel %vm3067, %v3062, %v3014
      %v3130 = vsel %vm3067, %v3063, %v3015
      %v3131 = vsel %vm3067, %v3064, %v3016
      %v3132 = vadd.f32 %v3116, %v2699
      %v3133 = vadd.f32 %v3100, %v2700
      %v3134 = vadd.f32 %v3084, %v2701
      %v3135 = vadd.f32 %v3068, %v2702
      %v3136 = vadd.f32 %v3117, %v2703
      %v3137 = vadd.f32 %v3101, %v2704
      %v3138 = vadd.f32 %v3085, %v2705
      %v3139 = vadd.f32 %v3069, %v2706
      %v3140 = vadd.f32 %v3118, %v2707
      %v3141 = vadd.f32 %v3102, %v2708
      %v3142 = vadd.f32 %v3086, %v2709
      %v3143 = vadd.f32 %v3070, %v2710
      %v3144 = vadd.f32 %v3119, %v2711
      %v3145 = vadd.f32 %v3103, %v2712
      %v3146 = vadd.f32 %v3087, %v2713
      %v3147 = vadd.f32 %v3071, %v2714
      %v3148 = vadd.f32 %v3120, %v2715
      %v3149 = vadd.f32 %v3104, %v2716
      %v3150 = vadd.f32 %v3088, %v2717
      %v3151 = vadd.f32 %v3072, %v2718
      %v3152 = vadd.f32 %v3121, %v2719
      %v3153 = vadd.f32 %v3105, %v2720
      %v3154 = vadd.f32 %v3089, %v2721
      %v3155 = vadd.f32 %v3073, %v2722
      %v3156 = vadd.f32 %v3122, %v2723
      %v3157 = vadd.f32 %v3106, %v2724
      %v3158 = vadd.f32 %v3090, %v2725
      %v3159 = vadd.f32 %v3074, %v2726
      %v3160 = vadd.f32 %v3123, %v2727
      %v3161 = vadd.f32 %v3107, %v2728
      %v3162 = vadd.f32 %v3091, %v2729
      %v3163 = vadd.f32 %v3075, %v2730
      %v3164 = vadd.f32 %v3124, %v2731
      %v3165 = vadd.f32 %v3108, %v2732
      %v3166 = vadd.f32 %v3092, %v2733
      %v3167 = vadd.f32 %v3076, %v2734
      %v3168 = vadd.f32 %v3125, %v2735
      %v3169 = vadd.f32 %v3109, %v2736
      %v3170 = vadd.f32 %v3093, %v2737
      %v3171 = vadd.f32 %v3077, %v2738
      %v3172 = vadd.f32 %v3126, %v2739
      %v3173 = vadd.f32 %v3110, %v2740
      %v3174 = vadd.f32 %v3094, %v2741
      %v3175 = vadd.f32 %v3078, %v2742
      %v3176 = vadd.f32 %v3127, %v2743
      %v3177 = vadd.f32 %v3111, %v2744
      %v3178 = vadd.f32 %v3095, %v2745
      %v3179 = vadd.f32 %v3079, %v2746
      %v3180 = vadd.f32 %v3128, %v2747
      %v3181 = vadd.f32 %v3112, %v2748
      %v3182 = vadd.f32 %v3096, %v2749
      %v3183 = vadd.f32 %v3080, %v2750
      %v3184 = vadd.f32 %v3129, %v2751
      %v3185 = vadd.f32 %v3113, %v2752
      %v3186 = vadd.f32 %v3097, %v2753
      %v3187 = vadd.f32 %v3081, %v2754
      %v3188 = vadd.f32 %v3130, %v2755
      %v3189 = vadd.f32 %v3114, %v2756
      %v3190 = vadd.f32 %v3098, %v2757
      %v3191 = vadd.f32 %v3082, %v2758
      %v3192 = vadd.f32 %v3131, %v2759
      %v3193 = vadd.f32 %v3115, %v2760
      %v3194 = vadd.f32 %v3099, %v2761
      %v3195 = vadd.f32 %v3083, %v2762
      %v3196 = vrot.slane %v2937, 1
      %v3197 = vrot.slane %v2941, 1
      %v3198 = vrot.slane %v2945, 1
      %v3199 = vrot.slane %v2949, 1
      %v3200 = vrot.slane %v2953, 1
      %v3201 = vrot.slane %v2957, 1
      %v3202 = vrot.slane %v2961, 1
      %v3203 = vrot.slane %v2965, 1
      %v3204 = vrot.slane %v2969, 1
      %v3205 = vrot.slane %v2973, 1
      %v3206 = vrot.slane %v2977, 1
      %v3207 = vrot.slane %v2981, 1
      %v3208 = vrot.slane %v2985, 1
      %v3209 = vrot.slane %v2989, 1
      %v3210 = vrot.slane %v2993, 1
      %v3211 = vrot.slane %v2997, 1
      %v3212 = vrot.slane %v2938, 1
      %v3213 = vrot.slane %v2942, 1
      %v3214 = vrot.slane %v2946, 1
      %v3215 = vrot.slane %v2950, 1
      %v3216 = vrot.slane %v2954, 1
      %v3217 = vrot.slane %v2958, 1
      %v3218 = vrot.slane %v2962, 1
      %v3219 = vrot.slane %v2966, 1
      %v3220 = vrot.slane %v2970, 1
      %v3221 = vrot.slane %v2974, 1
      %v3222 = vrot.slane %v2978, 1
      %v3223 = vrot.slane %v2982, 1
      %v3224 = vrot.slane %v2986, 1
      %v3225 = vrot.slane %v2990, 1
      %v3226 = vrot.slane %v2994, 1
      %v3227 = vrot.slane %v2998, 1
      %v3228 = vrot.slane %v2939, 1
      %v3229 = vrot.slane %v2943, 1
      %v3230 = vrot.slane %v2947, 1
      %v3231 = vrot.slane %v2951, 1
      %v3232 = vrot.slane %v2955, 1
      %v3233 = vrot.slane %v2959, 1
      %v3234 = vrot.slane %v2963, 1
      %v3235 = vrot.slane %v2967, 1
      %v3236 = vrot.slane %v2971, 1
      %v3237 = vrot.slane %v2975, 1
      %v3238 = vrot.slane %v2979, 1
      %v3239 = vrot.slane %v2983, 1
      %v3240 = vrot.slane %v2987, 1
      %v3241 = vrot.slane %v2991, 1
      %v3242 = vrot.slane %v2995, 1
      %v3243 = vrot.slane %v2999, 1
      %v3244 = vrot.slane %v2940, 1
      %v3245 = vrot.slane %v2944, 1
      %v3246 = vrot.slane %v2948, 1
      %v3247 = vrot.slane %v2952, 1
      %v3248 = vrot.slane %v2956, 1
      %v3249 = vrot.slane %v2960, 1
      %v3250 = vrot.slane %v2964, 1
      %v3251 = vrot.slane %v2968, 1
      %v3252 = vrot.slane %v2972, 1
      %v3253 = vrot.slane %v2976, 1
      %v3254 = vrot.slane %v2980, 1
      %v3255 = vrot.slane %v2984, 1
      %v3256 = vrot.slane %v2988, 1
      %v3257 = vrot.slane %v2992, 1
      %v3258 = vrot.slane %v2996, 1
      %v3259 = vrot.slane %v3000, 1
      %vm3260 = vcmp.lt.s32.totalorder %v3066, 7
      %v3261 = vsel %vm3260, %v3228, %v3244
      %v3262 = vsel %vm3260, %v3229, %v3245
      %v3263 = vsel %vm3260, %v3230, %v3246
      %v3264 = vsel %vm3260, %v3231, %v3247
      %v3265 = vsel %vm3260, %v3232, %v3248
      %v3266 = vsel %vm3260, %v3233, %v3249
      %v3267 = vsel %vm3260, %v3234, %v3250
      %v3268 = vsel %vm3260, %v3235, %v3251
      %v3269 = vsel %vm3260, %v3236, %v3252
      %v3270 = vsel %vm3260, %v3237, %v3253
      %v3271 = vsel %vm3260, %v3238, %v3254
      %v3272 = vsel %vm3260, %v3239, %v3255
      %v3273 = vsel %vm3260, %v3240, %v3256
      %v3274 = vsel %vm3260, %v3241, %v3257
      %v3275 = vsel %vm3260, %v3242, %v3258
      %v3276 = vsel %vm3260, %v3243, %v3259
      %v3277 = vsel %vm3260, %v3212, %v3228
      %v3278 = vsel %vm3260, %v3213, %v3229
      %v3279 = vsel %vm3260, %v3214, %v3230
      %v3280 = vsel %vm3260, %v3215, %v3231
      %v3281 = vsel %vm3260, %v3216, %v3232
      %v3282 = vsel %vm3260, %v3217, %v3233
      %v3283 = vsel %vm3260, %v3218, %v3234
      %v3284 = vsel %vm3260, %v3219, %v3235
      %v3285 = vsel %vm3260, %v3220, %v3236
      %v3286 = vsel %vm3260, %v3221, %v3237
      %v3287 = vsel %vm3260, %v3222, %v3238
      %v3288 = vsel %vm3260, %v3223, %v3239
      %v3289 = vsel %vm3260, %v3224, %v3240
      %v3290 = vsel %vm3260, %v3225, %v3241
      %v3291 = vsel %vm3260, %v3226, %v3242
      %v3292 = vsel %vm3260, %v3227, %v3243
      %v3293 = vsel %vm3260, %v3196, %v3212
      %v3294 = vsel %vm3260, %v3197, %v3213
      %v3295 = vsel %vm3260, %v3198, %v3214
      %v3296 = vsel %vm3260, %v3199, %v3215
      %v3297 = vsel %vm3260, %v3200, %v3216
      %v3298 = vsel %vm3260, %v3201, %v3217
      %v3299 = vsel %vm3260, %v3202, %v3218
      %v3300 = vsel %vm3260, %v3203, %v3219
      %v3301 = vsel %vm3260, %v3204, %v3220
      %v3302 = vsel %vm3260, %v3205, %v3221
      %v3303 = vsel %vm3260, %v3206, %v3222
      %v3304 = vsel %vm3260, %v3207, %v3223
      %v3305 = vsel %vm3260, %v3208, %v3224
      %v3306 = vsel %vm3260, %v3209, %v3225
      %v3307 = vsel %vm3260, %v3210, %v3226
      %v3308 = vsel %vm3260, %v3211, %v3227
      %v3309 = vsel %vm3260, %v3244, %v3196
      %v3310 = vsel %vm3260, %v3245, %v3197
      %v3311 = vsel %vm3260, %v3246, %v3198
      %v3312 = vsel %vm3260, %v3247, %v3199
      %v3313 = vsel %vm3260, %v3248, %v3200
      %v3314 = vsel %vm3260, %v3249, %v3201
      %v3315 = vsel %vm3260, %v3250, %v3202
      %v3316 = vsel %vm3260, %v3251, %v3203
      %v3317 = vsel %vm3260, %v3252, %v3204
      %v3318 = vsel %vm3260, %v3253, %v3205
      %v3319 = vsel %vm3260, %v3254, %v3206
      %v3320 = vsel %vm3260, %v3255, %v3207
      %v3321 = vsel %vm3260, %v3256, %v3208
      %v3322 = vsel %vm3260, %v3257, %v3209
      %v3323 = vsel %vm3260, %v3258, %v3210
      %v3324 = vsel %vm3260, %v3259, %v3211
      %v3325 = vadd.f32 %v3132, %v3293
      %v3326 = vadd.f32 %v3133, %v3277
      %v3327 = vadd.f32 %v3134, %v3261
      %v3328 = vadd.f32 %v3135, %v3309
      %v3329 = vadd.f32 %v3136, %v3294
      %v3330 = vadd.f32 %v3137, %v3278
      %v3331 = vadd.f32 %v3138, %v3262
      %v3332 = vadd.f32 %v3139, %v3310
      %v3333 = vadd.f32 %v3140, %v3295
      %v3334 = vadd.f32 %v3141, %v3279
      %v3335 = vadd.f32 %v3142, %v3263
      %v3336 = vadd.f32 %v3143, %v3311
      %v3337 = vadd.f32 %v3144, %v3296
      %v3338 = vadd.f32 %v3145, %v3280
      %v3339 = vadd.f32 %v3146, %v3264
      %v3340 = vadd.f32 %v3147, %v3312
      %v3341 = vadd.f32 %v3148, %v3297
      %v3342 = vadd.f32 %v3149, %v3281
      %v3343 = vadd.f32 %v3150, %v3265
      %v3344 = vadd.f32 %v3151, %v3313
      %v3345 = vadd.f32 %v3152, %v3298
      %v3346 = vadd.f32 %v3153, %v3282
      %v3347 = vadd.f32 %v3154, %v3266
      %v3348 = vadd.f32 %v3155, %v3314
      %v3349 = vadd.f32 %v3156, %v3299
      %v3350 = vadd.f32 %v3157, %v3283
      %v3351 = vadd.f32 %v3158, %v3267
      %v3352 = vadd.f32 %v3159, %v3315
      %v3353 = vadd.f32 %v3160, %v3300
      %v3354 = vadd.f32 %v3161, %v3284
      %v3355 = vadd.f32 %v3162, %v3268
      %v3356 = vadd.f32 %v3163, %v3316
      %v3357 = vadd.f32 %v3164, %v3301
      %v3358 = vadd.f32 %v3165, %v3285
      %v3359 = vadd.f32 %v3166, %v3269
      %v3360 = vadd.f32 %v3167, %v3317
      %v3361 = vadd.f32 %v3168, %v3302
      %v3362 = vadd.f32 %v3169, %v3286
      %v3363 = vadd.f32 %v3170, %v3270
      %v3364 = vadd.f32 %v3171, %v3318
      %v3365 = vadd.f32 %v3172, %v3303
      %v3366 = vadd.f32 %v3173, %v3287
      %v3367 = vadd.f32 %v3174, %v3271
      %v3368 = vadd.f32 %v3175, %v3319
      %v3369 = vadd.f32 %v3176, %v3304
      %v3370 = vadd.f32 %v3177, %v3288
      %v3371 = vadd.f32 %v3178, %v3272
      %v3372 = vadd.f32 %v3179, %v3320
      %v3373 = vadd.f32 %v3180, %v3305
      %v3374 = vadd.f32 %v3181, %v3289
      %v3375 = vadd.f32 %v3182, %v3273
      %v3376 = vadd.f32 %v3183, %v3321
      %v3377 = vadd.f32 %v3184, %v3306
      %v3378 = vadd.f32 %v3185, %v3290
      %v3379 = vadd.f32 %v3186, %v3274
      %v3380 = vadd.f32 %v3187, %v3322
      %v3381 = vadd.f32 %v3188, %v3307
      %v3382 = vadd.f32 %v3189, %v3291
      %v3383 = vadd.f32 %v3190, %v3275
      %v3384 = vadd.f32 %v3191, %v3323
      %v3385 = vadd.f32 %v3192, %v3308
      %v3386 = vadd.f32 %v3193, %v3292
      %v3387 = vadd.f32 %v3194, %v3276
      %v3388 = vadd.f32 %v3195, %v3324
      %v3389 = vld [vmem:[%s2] sm:$0x1]
      %v3391 = vperm.slane %v3389, 0
      %v3393 = vmul.f32 %v3325, %v3391
      %v3394 = vmul.f32 %v3326, %v3391
      %v3395 = vmul.f32 %v3327, %v3391
      %v3396 = vmul.f32 %v3328, %v3391
      %v3397 = vmul.f32 %v3329, %v3391
      %v3398 = vmul.f32 %v3330, %v3391
      %v3399 = vmul.f32 %v3331, %v3391
      %v3400 = vmul.f32 %v3332, %v3391
      %v3401 = vmul.f32 %v3333, %v3391
      %v3402 = vmul.f32 %v3334, %v3391
      %v3403 = vmul.f32 %v3335, %v3391
      %v3404 = vmul.f32 %v3336, %v3391
      %v3405 = vmul.f32 %v3337, %v3391
      %v3406 = vmul.f32 %v3338, %v3391
      %v3407 = vmul.f32 %v3339, %v3391
      %v3408 = vmul.f32 %v3340, %v3391
      %v3409 = vmul.f32 %v3341, %v3391
      %v3410 = vmul.f32 %v3342, %v3391
      %v3411 = vmul.f32 %v3343, %v3391
      %v3412 = vmul.f32 %v3344, %v3391
      %v3413 = vmul.f32 %v3345, %v3391
      %v3414 = vmul.f32 %v3346, %v3391
      %v3415 = vmul.f32 %v3347, %v3391
      %v3416 = vmul.f32 %v3348, %v3391
      %v3417 = vmul.f32 %v3349, %v3391
      %v3418 = vmul.f32 %v3350, %v3391
      %v3419 = vmul.f32 %v3351, %v3391
      %v3420 = vmul.f32 %v3352, %v3391
      %v3421 = vmul.f32 %v3353, %v3391
      %v3422 = vmul.f32 %v3354, %v3391
      %v3423 = vmul.f32 %v3355, %v3391
      %v3424 = vmul.f32 %v3356, %v3391
      %v3425 = vmul.f32 %v3357, %v3391
      %v3426 = vmul.f32 %v3358, %v3391
      %v3427 = vmul.f32 %v3359, %v3391
      %v3428 = vmul.f32 %v3360, %v3391
      %v3429 = vmul.f32 %v3361, %v3391
      %v3430 = vmul.f32 %v3362, %v3391
      %v3431 = vmul.f32 %v3363, %v3391
      %v3432 = vmul.f32 %v3364, %v3391
      %v3433 = vmul.f32 %v3365, %v3391
      %v3434 = vmul.f32 %v3366, %v3391
      %v3435 = vmul.f32 %v3367, %v3391
      %v3436 = vmul.f32 %v3368, %v3391
      %v3437 = vmul.f32 %v3369, %v3391
      %v3438 = vmul.f32 %v3370, %v3391
      %v3439 = vmul.f32 %v3371, %v3391
      %v3440 = vmul.f32 %v3372, %v3391
      %v3441 = vmul.f32 %v3373, %v3391
      %v3442 = vmul.f32 %v3374, %v3391
      %v3443 = vmul.f32 %v3375, %v3391
      %v3444 = vmul.f32 %v3376, %v3391
      %v3445 = vmul.f32 %v3377, %v3391
      %v3446 = vmul.f32 %v3378, %v3391
      %v3447 = vmul.f32 %v3379, %v3391
      %v3448 = vmul.f32 %v3380, %v3391
      %v3449 = vmul.f32 %v3381, %v3391
      %v3450 = vmul.f32 %v3382, %v3391
      %v3451 = vmul.f32 %v3383, %v3391
      %v3452 = vmul.f32 %v3384, %v3391
      %v3453 = vmul.f32 %v3385, %v3391
      %v3454 = vmul.f32 %v3386, %v3391
      %v3455 = vmul.f32 %v3387, %v3391
      %v3456 = vmul.f32 %v3388, %v3391
      %v3457 = vld [vmem:[%s3] sm:$0x1]
      %v3459 = vperm.slane %v3457, 0
      %v3461 = vadd.f32 %v3393, %v3459
      %v3462 = vadd.f32 %v3394, %v3459
      %v3463 = vadd.f32 %v3395, %v3459
      %v3464 = vadd.f32 %v3396, %v3459
      %v3465 = vadd.f32 %v3397, %v3459
      %v3466 = vadd.f32 %v3398, %v3459
      %v3467 = vadd.f32 %v3399, %v3459
      %v3468 = vadd.f32 %v3400, %v3459
      %v3469 = vadd.f32 %v3401, %v3459
      %v3470 = vadd.f32 %v3402, %v3459
      %v3471 = vadd.f32 %v3403, %v3459
      %v3472 = vadd.f32 %v3404, %v3459
      %v3473 = vadd.f32 %v3405, %v3459
      %v3474 = vadd.f32 %v3406, %v3459
      %v3475 = vadd.f32 %v3407, %v3459
      %v3476 = vadd.f32 %v3408, %v3459
      %v3477 = vadd.f32 %v3409, %v3459
      %v3478 = vadd.f32 %v3410, %v3459
      %v3479 = vadd.f32 %v3411, %v3459
      %v3480 = vadd.f32 %v3412, %v3459
      %v3481 = vadd.f32 %v3413, %v3459
      %v3482 = vadd.f32 %v3414, %v3459
      %v3483 = vadd.f32 %v3415, %v3459
      %v3484 = vadd.f32 %v3416, %v3459
      %v3485 = vadd.f32 %v3417, %v3459
      %v3486 = vadd.f32 %v3418, %v3459
      %v3487 = vadd.f32 %v3419, %v3459
      %v3488 = vadd.f32 %v3420, %v3459
      %v3489 = vadd.f32 %v3421, %v3459
      %v3490 = vadd.f32 %v3422, %v3459
      %v3491 = vadd.f32 %v3423, %v3459
      %v3492 = vadd.f32 %v3424, %v3459
      %v3493 = vadd.f32 %v3425, %v3459
      %v3494 = vadd.f32 %v3426, %v3459
      %v3495 = vadd.f32 %v3427, %v3459
      %v3496 = vadd.f32 %v3428, %v3459
      %v3497 = vadd.f32 %v3429, %v3459
      %v3498 = vadd.f32 %v3430, %v3459
      %v3499 = vadd.f32 %v3431, %v3459
      %v3500 = vadd.f32 %v3432, %v3459
      %v3501 = vadd.f32 %v3433, %v3459
      %v3502 = vadd.f32 %v3434, %v3459
      %v3503 = vadd.f32 %v3435, %v3459
      %v3504 = vadd.f32 %v3436, %v3459
      %v3505 = vadd.f32 %v3437, %v3459
      %v3506 = vadd.f32 %v3438, %v3459
      %v3507 = vadd.f32 %v3439, %v3459
      %v3508 = vadd.f32 %v3440, %v3459
      %v3509 = vadd.f32 %v3441, %v3459
      %v3510 = vadd.f32 %v3442, %v3459
      %v3511 = vadd.f32 %v3443, %v3459
      %v3512 = vadd.f32 %v3444, %v3459
      %v3513 = vadd.f32 %v3445, %v3459
      %v3514 = vadd.f32 %v3446, %v3459
      %v3515 = vadd.f32 %v3447, %v3459
      %v3516 = vadd.f32 %v3448, %v3459
      %v3517 = vadd.f32 %v3449, %v3459
      %v3518 = vadd.f32 %v3450, %v3459
      %v3519 = vadd.f32 %v3451, %v3459
      %v3520 = vadd.f32 %v3452, %v3459
      %v3521 = vadd.f32 %v3453, %v3459
      %v3522 = vadd.f32 %v3454, %v3459
      %v3523 = vadd.f32 %v3455, %v3459
      %v3524 = vadd.f32 %v3456, %v3459
      %v3525 = vmax.f32 %v3461, 0.0
      %v3526 = vmax.f32 %v3462, 0.0
      %v3527 = vmax.f32 %v3463, 0.0
      %v3528 = vmax.f32 %v3464, 0.0
      %v3529 = vmax.f32 %v3465, 0.0
      %v3530 = vmax.f32 %v3466, 0.0
      %v3531 = vmax.f32 %v3467, 0.0
      %v3532 = vmax.f32 %v3468, 0.0
      %v3533 = vmax.f32 %v3469, 0.0
      %v3534 = vmax.f32 %v3470, 0.0
      %v3535 = vmax.f32 %v3471, 0.0
      %v3536 = vmax.f32 %v3472, 0.0
      %v3537 = vmax.f32 %v3473, 0.0
      %v3538 = vmax.f32 %v3474, 0.0
      %v3539 = vmax.f32 %v3475, 0.0
      %v3540 = vmax.f32 %v3476, 0.0
      %v3541 = vmax.f32 %v3477, 0.0
      %v3542 = vmax.f32 %v3478, 0.0
      %v3543 = vmax.f32 %v3479, 0.0
      %v3544 = vmax.f32 %v3480, 0.0
      %v3545 = vmax.f32 %v3481, 0.0
      %v3546 = vmax.f32 %v3482, 0.0
      %v3547 = vmax.f32 %v3483, 0.0
      %v3548 = vmax.f32 %v3484, 0.0
      %v3549 = vmax.f32 %v3485, 0.0
      %v3550 = vmax.f32 %v3486, 0.0
      %v3551 = vmax.f32 %v3487, 0.0
      %v3552 = vmax.f32 %v3488, 0.0
      %v3553 = vmax.f32 %v3489, 0.0
      %v3554 = vmax.f32 %v3490, 0.0
      %v3555 = vmax.f32 %v3491, 0.0
      %v3556 = vmax.f32 %v3492, 0.0
      %v3557 = vmax.f32 %v3493, 0.0
      %v3558 = vmax.f32 %v3494, 0.0
      %v3559 = vmax.f32 %v3495, 0.0
      %v3560 = vmax.f32 %v3496, 0.0
      %v3561 = vmax.f32 %v3497, 0.0
      %v3562 = vmax.f32 %v3498, 0.0
      %v3563 = vmax.f32 %v3499, 0.0
      %v3564 = vmax.f32 %v3500, 0.0
      %v3565 = vmax.f32 %v3501, 0.0
      %v3566 = vmax.f32 %v3502, 0.0
      %v3567 = vmax.f32 %v3503, 0.0
      %v3568 = vmax.f32 %v3504, 0.0
      %v3569 = vmax.f32 %v3505, 0.0
      %v3570 = vmax.f32 %v3506, 0.0
      %v3571 = vmax.f32 %v3507, 0.0
      %v3572 = vmax.f32 %v3508, 0.0
      %v3573 = vmax.f32 %v3509, 0.0
      %v3574 = vmax.f32 %v3510, 0.0
      %v3575 = vmax.f32 %v3511, 0.0
      %v3576 = vmax.f32 %v3512, 0.0
      %v3577 = vmax.f32 %v3513, 0.0
      %v3578 = vmax.f32 %v3514, 0.0
      %v3579 = vmax.f32 %v3515, 0.0
      %v3580 = vmax.f32 %v3516, 0.0
      %v3581 = vmax.f32 %v3517, 0.0
      %v3582 = vmax.f32 %v3518, 0.0
      %v3583 = vmax.f32 %v3519, 0.0
      %v3584 = vmax.f32 %v3520, 0.0
      %v3585 = vmax.f32 %v3521, 0.0
      %v3586 = vmax.f32 %v3522, 0.0
      %v3587 = vmax.f32 %v3523, 0.0
      %v3588 = vmax.f32 %v3524, 0.0
      %v3589 = vadd.s32 %v3066, 8
      %v3590 = vadd.s32 %v3066, 16
      %v3591 = vadd.s32 %v3066, 24
      %vm3592 = vcmp.ge.s32.totalorder %v3066, 1
      %vm3593 = vcmp.ge.s32.totalorder %v3589, 1
      %vm3594 = vcmp.ge.s32.totalorder %v3590, 1
      %vm3595 = vcmp.ge.s32.totalorder %v3591, 1
      %vm3596 = vcmp.le.s32.totalorder %v3066, 16
      %vm3597 = vcmp.le.s32.totalorder %v3589, 16
      %vm3598 = vcmp.le.s32.totalorder %v3590, 16
      %vm3599 = vcmp.le.s32.totalorder %v3591, 16
      %vm3600 = vmand %vm3592, %vm3596
      %vm3601 = vmand %vm3593, %vm3597
      %vm3602 = vmand %vm3594, %vm3598
      %vm3603 = vmand %vm3595, %vm3599
      %v3604 = vsel %vm3600, 1, 0
      %v3605 = vsel %vm3601, 1, 0
      %v3606 = vsel %vm3602, 1, 0
      %v3607 = vsel %vm3603, 1, 0
      %vm3608 = vcmp.eq.s32.totalorder %v3604, 1
      %vm3609 = vcmp.eq.s32.totalorder %v3605, 1
      %vm3610 = vcmp.eq.s32.totalorder %v3606, 1
      %vm3611 = vcmp.eq.s32.totalorder %v3607, 1
      %v3612 = vsel %vm3608, %v3525, 0.0
      %v3613 = vsel %vm3609, %v3526, 0.0
      %v3614 = vsel %vm3610, %v3527, 0.0
      %v3615 = vsel %vm3611, %v3528, 0.0
      %v3616 = vsel %vm3608, %v3529, 0.0
      %v3617 = vsel %vm3609, %v3530, 0.0
      %v3618 = vsel %vm3610, %v3531, 0.0
      %v3619 = vsel %vm3611, %v3532, 0.0
      %v3620 = vsel %vm3608, %v3533, 0.0
      %v3621 = vsel %vm3609, %v3534, 0.0
      %v3622 = vsel %vm3610, %v3535, 0.0
      %v3623 = vsel %vm3611, %v3536, 0.0
      %v3624 = vsel %vm3608, %v3537, 0.0
      %v3625 = vsel %vm3609, %v3538, 0.0
      %v3626 = vsel %vm3610, %v3539, 0.0
      %v3627 = vsel %vm3611, %v3540, 0.0
      %v3628 = vsel %vm3608, %v3541, 0.0
      %v3629 = vsel %vm3609, %v3542, 0.0
      %v3630 = vsel %vm3610, %v3543, 0.0
      %v3631 = vsel %vm3611, %v3544, 0.0
      %v3632 = vsel %vm3608, %v3545, 0.0
      %v3633 = vsel %vm3609, %v3546, 0.0
      %v3634 = vsel %vm3610, %v3547, 0.0
      %v3635 = vsel %vm3611, %v3548, 0.0
      %v3636 = vsel %vm3608, %v3549, 0.0
      %v3637 = vsel %vm3609, %v3550, 0.0
      %v3638 = vsel %vm3610, %v3551, 0.0
      %v3639 = vsel %vm3611, %v3552, 0.0
      %v3640 = vsel %vm3608, %v3553, 0.0
      %v3641 = vsel %vm3609, %v3554, 0.0
      %v3642 = vsel %vm3610, %v3555, 0.0
      %v3643 = vsel %vm3611, %v3556, 0.0
      %v3644 = vsel %vm3608, %v3557, 0.0
      %v3645 = vsel %vm3609, %v3558, 0.0
      %v3646 = vsel %vm3610, %v3559, 0.0
      %v3647 = vsel %vm3611, %v3560, 0.0
      %v3648 = vsel %vm3608, %v3561, 0.0
      %v3649 = vsel %vm3609, %v3562, 0.0
      %v3650 = vsel %vm3610, %v3563, 0.0
      %v3651 = vsel %vm3611, %v3564, 0.0
      %v3652 = vsel %vm3608, %v3565, 0.0
      %v3653 = vsel %vm3609, %v3566, 0.0
      %v3654 = vsel %vm3610, %v3567, 0.0
      %v3655 = vsel %vm3611, %v3568, 0.0
      %v3656 = vsel %vm3608, %v3569, 0.0
      %v3657 = vsel %vm3609, %v3570, 0.0
      %v3658 = vsel %vm3610, %v3571, 0.0
      %v3659 = vsel %vm3611, %v3572, 0.0
      %v3660 = vsel %vm3608, %v3573, 0.0
      %v3661 = vsel %vm3609, %v3574, 0.0
      %v3662 = vsel %vm3610, %v3575, 0.0
      %v3663 = vsel %vm3611, %v3576, 0.0
      %v3664 = vsel %vm3608, %v3577, 0.0
      %v3665 = vsel %vm3609, %v3578, 0.0
      %v3666 = vsel %vm3610, %v3579, 0.0
      %v3667 = vsel %vm3611, %v3580, 0.0
      %v3668 = vsel %vm3608, %v3581, 0.0
      %v3669 = vsel %vm3609, %v3582, 0.0
      %v3670 = vsel %vm3610, %v3583, 0.0
      %v3671 = vsel %vm3611, %v3584, 0.0
      %v3672 = vsel %vm3608, %v3585, 0.0
      %v3673 = vsel %vm3609, %v3586, 0.0
      %v3674 = vsel %vm3610, %v3587, 0.0
      %v3675 = vsel %vm3611, %v3588, 0.0
      %v3676 = vpack.c.bf16 %v3612, %v3612
      %v3677 = vpack.c.bf16 %v3613, %v3613
      %v3678 = vpack.c.bf16 %v3614, %v3614
      %v3679 = vpack.c.bf16 %v3615, %v3615
      %v3680 = vpack.c.bf16 %v3616, %v3616
      %v3681 = vpack.c.bf16 %v3617, %v3617
      %v3682 = vpack.c.bf16 %v3618, %v3618
      %v3683 = vpack.c.bf16 %v3619, %v3619
      %v3684 = vpack.c.bf16 %v3620, %v3620
      %v3685 = vpack.c.bf16 %v3621, %v3621
      %v3686 = vpack.c.bf16 %v3622, %v3622
      %v3687 = vpack.c.bf16 %v3623, %v3623
      %v3688 = vpack.c.bf16 %v3624, %v3624
      %v3689 = vpack.c.bf16 %v3625, %v3625
      %v3690 = vpack.c.bf16 %v3626, %v3626
      %v3691 = vpack.c.bf16 %v3627, %v3627
      %v3692 = vpack.c.bf16 %v3628, %v3628
      %v3693 = vpack.c.bf16 %v3629, %v3629
      %v3694 = vpack.c.bf16 %v3630, %v3630
      %v3695 = vpack.c.bf16 %v3631, %v3631
      %v3696 = vpack.c.bf16 %v3632, %v3632
      %v3697 = vpack.c.bf16 %v3633, %v3633
      %v3698 = vpack.c.bf16 %v3634, %v3634
      %v3699 = vpack.c.bf16 %v3635, %v3635
      %v3700 = vpack.c.bf16 %v3636, %v3636
      %v3701 = vpack.c.bf16 %v3637, %v3637
      %v3702 = vpack.c.bf16 %v3638, %v3638
      %v3703 = vpack.c.bf16 %v3639, %v3639
      %v3704 = vpack.c.bf16 %v3640, %v3640
      %v3705 = vpack.c.bf16 %v3641, %v3641
      %v3706 = vpack.c.bf16 %v3642, %v3642
      %v3707 = vpack.c.bf16 %v3643, %v3643
      %v3708 = vpack.c.bf16 %v3644, %v3644
      %v3709 = vpack.c.bf16 %v3645, %v3645
      %v3710 = vpack.c.bf16 %v3646, %v3646
      %v3711 = vpack.c.bf16 %v3647, %v3647
      %v3712 = vpack.c.bf16 %v3648, %v3648
      %v3713 = vpack.c.bf16 %v3649, %v3649
      %v3714 = vpack.c.bf16 %v3650, %v3650
      %v3715 = vpack.c.bf16 %v3651, %v3651
      %v3716 = vpack.c.bf16 %v3652, %v3652
      %v3717 = vpack.c.bf16 %v3653, %v3653
      %v3718 = vpack.c.bf16 %v3654, %v3654
      %v3719 = vpack.c.bf16 %v3655, %v3655
      %v3720 = vpack.c.bf16 %v3656, %v3656
      %v3721 = vpack.c.bf16 %v3657, %v3657
      %v3722 = vpack.c.bf16 %v3658, %v3658
      %v3723 = vpack.c.bf16 %v3659, %v3659
      %v3724 = vpack.c.bf16 %v3660, %v3660
      %v3725 = vpack.c.bf16 %v3661, %v3661
      %v3726 = vpack.c.bf16 %v3662, %v3662
      %v3727 = vpack.c.bf16 %v3663, %v3663
      %v3728 = vpack.c.bf16 %v3664, %v3664
      %v3729 = vpack.c.bf16 %v3665, %v3665
      %v3730 = vpack.c.bf16 %v3666, %v3666
      %v3731 = vpack.c.bf16 %v3667, %v3667
      %v3732 = vpack.c.bf16 %v3668, %v3668
      %v3733 = vpack.c.bf16 %v3669, %v3669
      %v3734 = vpack.c.bf16 %v3670, %v3670
      %v3735 = vpack.c.bf16 %v3671, %v3671
      %v3736 = vpack.c.bf16 %v3672, %v3672
      %v3737 = vpack.c.bf16 %v3673, %v3673
      %v3738 = vpack.c.bf16 %v3674, %v3674
      %v3739 = vpack.c.bf16 %v3675, %v3675
      %vm3740 = vcmask 60416
      %3741 = vst.msk [vmem:[#allocation2] sm:$0xf] %vm3740, 0
      %3742 = vst.msk [vmem:[#allocation2 + $0x4] sm:$0xf] %vm3740, 0
      %3743 = vst.msk [vmem:[#allocation2 + $0x8] sm:$0xf] %vm3740, 0
      %3744 = vst.msk [vmem:[#allocation2 + $0xc] sm:$0xf] %vm3740, 0
      %s3745 = scalar_lea.vmem [#allocation2], 272
      %3746 = vst.msk [vmem:[%s3745] sm:$0xf] %vm3740, 0
      %3747 = vst.msk [vmem:[%s3745 + $0x4] sm:$0xf] %vm3740, 0
      %3748 = vst.msk [vmem:[%s3745 + $0x8] sm:$0xf] %vm3740, 0
      %3749 = vst.msk [vmem:[%s3745 + $0xc] sm:$0xf] %vm3740, 0
      %s3750 = scalar_lea.vmem [#allocation2], 16
      %3751 = vst.msk [vmem:[%s3750] sm:$0xf] %vm3740, %v3676
      %3752 = vst.msk [vmem:[%s3750 + $0x4] sm:$0xf] %vm3740, %v3677
      %3753 = vst.msk [vmem:[%s3750 + $0x8] sm:$0xf] %vm3740, %v3678
      %3754 = vst.msk [vmem:[%s3750 + $0xc] sm:$0xf] %vm3740, %v3679
      %3755 = vst.msk [vmem:[%s3750 + $0x10] sm:$0xf] %vm3740, %v3680
      %3756 = vst.msk [vmem:[%s3750 + $0x14] sm:$0xf] %vm3740, %v3681
      %3757 = vst.msk [vmem:[%s3750 + $0x18] sm:$0xf] %vm3740, %v3682
      %3758 = vst.msk [vmem:[%s3750 + $0x1c] sm:$0xf] %vm3740, %v3683
      %3759 = vst.msk [vmem:[%s3750 + $0x20] sm:$0xf] %vm3740, %v3684
      %3760 = vst.msk [vmem:[%s3750 + $0x24] sm:$0xf] %vm3740, %v3685
      %3761 = vst.msk [vmem:[%s3750 + $0x28] sm:$0xf] %vm3740, %v3686
      %3762 = vst.msk [vmem:[%s3750 + $0x2c] sm:$0xf] %vm3740, %v3687
      %3763 = vst.msk [vmem:[%s3750 + $0x30] sm:$0xf] %vm3740, %v3688
      %3764 = vst.msk [vmem:[%s3750 + $0x34] sm:$0xf] %vm3740, %v3689
      %3765 = vst.msk [vmem:[%s3750 + $0x38] sm:$0xf] %vm3740, %v3690
      %3766 = vst.msk [vmem:[%s3750 + $0x3c] sm:$0xf] %vm3740, %v3691
      %3767 = vst.msk [vmem:[%s3750 + $0x40] sm:$0xf] %vm3740, %v3692
      %3768 = vst.msk [vmem:[%s3750 + $0x44] sm:$0xf] %vm3740, %v3693
      %3769 = vst.msk [vmem:[%s3750 + $0x48] sm:$0xf] %vm3740, %v3694
      %3770 = vst.msk [vmem:[%s3750 + $0x4c] sm:$0xf] %vm3740, %v3695
      %3771 = vst.msk [vmem:[%s3750 + $0x50] sm:$0xf] %vm3740, %v3696
      %3772 = vst.msk [vmem:[%s3750 + $0x54] sm:$0xf] %vm3740, %v3697
      %3773 = vst.msk [vmem:[%s3750 + $0x58] sm:$0xf] %vm3740, %v3698
      %3774 = vst.msk [vmem:[%s3750 + $0x5c] sm:$0xf] %vm3740, %v3699
      %3775 = vst.msk [vmem:[%s3750 + $0x60] sm:$0xf] %vm3740, %v3700
      %3776 = vst.msk [vmem:[%s3750 + $0x64] sm:$0xf] %vm3740, %v3701
      %3777 = vst.msk [vmem:[%s3750 + $0x68] sm:$0xf] %vm3740, %v3702
      %3778 = vst.msk [vmem:[%s3750 + $0x6c] sm:$0xf] %vm3740, %v3703
      %3779 = vst.msk [vmem:[%s3750 + $0x70] sm:$0xf] %vm3740, %v3704
      %3780 = vst.msk [vmem:[%s3750 + $0x74] sm:$0xf] %vm3740, %v3705
      %3781 = vst.msk [vmem:[%s3750 + $0x78] sm:$0xf] %vm3740, %v3706
      %3782 = vst.msk [vmem:[%s3750 + $0x7c] sm:$0xf] %vm3740, %v3707
      %3783 = vst.msk [vmem:[%s3750 + $0x80] sm:$0xf] %vm3740, %v3708
      %3784 = vst.msk [vmem:[%s3750 + $0x84] sm:$0xf] %vm3740, %v3709
      %3785 = vst.msk [vmem:[%s3750 + $0x88] sm:$0xf] %vm3740, %v3710
      %3786 = vst.msk [vmem:[%s3750 + $0x8c] sm:$0xf] %vm3740, %v3711
      %3787 = vst.msk [vmem:[%s3750 + $0x90] sm:$0xf] %vm3740, %v3712
      %3788 = vst.msk [vmem:[%s3750 + $0x94] sm:$0xf] %vm3740, %v3713
      %3789 = vst.msk [vmem:[%s3750 + $0x98] sm:$0xf] %vm3740, %v3714
      %3790 = vst.msk [vmem:[%s3750 + $0x9c] sm:$0xf] %vm3740, %v3715
      %3791 = vst.msk [vmem:[%s3750 + $0xa0] sm:$0xf] %vm3740, %v3716
      %3792 = vst.msk [vmem:[%s3750 + $0xa4] sm:$0xf] %vm3740, %v3717
      %3793 = vst.msk [vmem:[%s3750 + $0xa8] sm:$0xf] %vm3740, %v3718
      %3794 = vst.msk [vmem:[%s3750 + $0xac] sm:$0xf] %vm3740, %v3719
      %3795 = vst.msk [vmem:[%s3750 + $0xb0] sm:$0xf] %vm3740, %v3720
      %3796 = vst.msk [vmem:[%s3750 + $0xb4] sm:$0xf] %vm3740, %v3721
      %3797 = vst.msk [vmem:[%s3750 + $0xb8] sm:$0xf] %vm3740, %v3722
      %3798 = vst.msk [vmem:[%s3750 + $0xbc] sm:$0xf] %vm3740, %v3723
      %3799 = vst.msk [vmem:[%s3750 + $0xc0] sm:$0xf] %vm3740, %v3724
      %3800 = vst.msk [vmem:[%s3750 + $0xc4] sm:$0xf] %vm3740, %v3725
      %3801 = vst.msk [vmem:[%s3750 + $0xc8] sm:$0xf] %vm3740, %v3726
      %3802 = vst.msk [vmem:[%s3750 + $0xcc] sm:$0xf] %vm3740, %v3727
      %3803 = vst.msk [vmem:[%s3750 + $0xd0] sm:$0xf] %vm3740, %v3728
      %3804 = vst.msk [vmem:[%s3750 + $0xd4] sm:$0xf] %vm3740, %v3729
      %3805 = vst.msk [vmem:[%s3750 + $0xd8] sm:$0xf] %vm3740, %v3730
      %3806 = vst.msk [vmem:[%s3750 + $0xdc] sm:$0xf] %vm3740, %v3731
      %3807 = vst.msk [vmem:[%s3750 + $0xe0] sm:$0xf] %vm3740, %v3732
      %3808 = vst.msk [vmem:[%s3750 + $0xe4] sm:$0xf] %vm3740, %v3733
      %3809 = vst.msk [vmem:[%s3750 + $0xe8] sm:$0xf] %vm3740, %v3734
      %3810 = vst.msk [vmem:[%s3750 + $0xec] sm:$0xf] %vm3740, %v3735
      %3811 = vst.msk [vmem:[%s3750 + $0xf0] sm:$0xf] %vm3740, %v3736
      %3812 = vst.msk [vmem:[%s3750 + $0xf4] sm:$0xf] %vm3740, %v3737
      %3813 = vst.msk [vmem:[%s3750 + $0xf8] sm:$0xf] %vm3740, %v3738
      %3814 = vst.msk [vmem:[%s3750 + $0xfc] sm:$0xf] %vm3740, %v3739
      %v3815 = vld [vmem:[#allocation2] sm:$0xf]
      %v3816 = vld [vmem:[#allocation2 + $0x4] sm:$0xf]
      %v3817 = vld [vmem:[#allocation2 + $0x8] sm:$0xf]
      %v3818 = vld [vmem:[#allocation2 + $0xc] sm:$0xf]
      %v3819 = vld [vmem:[#allocation2 + $0x10] sm:$0xf]
      %v3820 = vld [vmem:[#allocation2 + $0x14] sm:$0xf]
      %v3821 = vld [vmem:[#allocation2 + $0x18] sm:$0xf]
      %v3822 = vld [vmem:[#allocation2 + $0x1c] sm:$0xf]
      %v3823 = vld [vmem:[#allocation2 + $0x20] sm:$0xf]
      %v3824 = vld [vmem:[#allocation2 + $0x24] sm:$0xf]
      %v3825 = vld [vmem:[#allocation2 + $0x28] sm:$0xf]
      %v3826 = vld [vmem:[#allocation2 + $0x2c] sm:$0xf]
      %v3827 = vld [vmem:[#allocation2 + $0x30] sm:$0xf]
      %v3828 = vld [vmem:[#allocation2 + $0x34] sm:$0xf]
      %v3829 = vld [vmem:[#allocation2 + $0x38] sm:$0xf]
      %v3830 = vld [vmem:[#allocation2 + $0x3c] sm:$0xf]
      %v3831 = vld [vmem:[#allocation2 + $0x40] sm:$0xf]
      %v3832 = vld [vmem:[#allocation2 + $0x44] sm:$0xf]
      %v3833 = vld [vmem:[#allocation2 + $0x48] sm:$0xf]
      %v3834 = vld [vmem:[#allocation2 + $0x4c] sm:$0xf]
      %v3835 = vld [vmem:[#allocation2 + $0x50] sm:$0xf]
      %v3836 = vld [vmem:[#allocation2 + $0x54] sm:$0xf]
      %v3837 = vld [vmem:[#allocation2 + $0x58] sm:$0xf]
      %v3838 = vld [vmem:[#allocation2 + $0x5c] sm:$0xf]
      %v3839 = vld [vmem:[#allocation2 + $0x60] sm:$0xf]
      %v3840 = vld [vmem:[#allocation2 + $0x64] sm:$0xf]
      %v3841 = vld [vmem:[#allocation2 + $0x68] sm:$0xf]
      %v3842 = vld [vmem:[#allocation2 + $0x6c] sm:$0xf]
      %v3843 = vld [vmem:[#allocation2 + $0x70] sm:$0xf]
      %v3844 = vld [vmem:[#allocation2 + $0x74] sm:$0xf]
      %v3845 = vld [vmem:[#allocation2 + $0x78] sm:$0xf]
      %v3846 = vld [vmem:[#allocation2 + $0x7c] sm:$0xf]
      %v3847 = vld [vmem:[#allocation2 + $0x80] sm:$0xf]
      %v3848 = vld [vmem:[#allocation2 + $0x84] sm:$0xf]
      %v3849 = vld [vmem:[#allocation2 + $0x88] sm:$0xf]
      %v3850 = vld [vmem:[#allocation2 + $0x8c] sm:$0xf]
      %v3851 = vld [vmem:[#allocation2 + $0x90] sm:$0xf]
      %v3852 = vld [vmem:[#allocation2 + $0x94] sm:$0xf]
      %v3853 = vld [vmem:[#allocation2 + $0x98] sm:$0xf]
      %v3854 = vld [vmem:[#allocation2 + $0x9c] sm:$0xf]
      %v3855 = vld [vmem:[#allocation2 + $0xa0] sm:$0xf]
      %v3856 = vld [vmem:[#allocation2 + $0xa4] sm:$0xf]
      %v3857 = vld [vmem:[#allocation2 + $0xa8] sm:$0xf]
      %v3858 = vld [vmem:[#allocation2 + $0xac] sm:$0xf]
      %v3859 = vld [vmem:[#allocation2 + $0xb0] sm:$0xf]
      %v3860 = vld [vmem:[#allocation2 + $0xb4] sm:$0xf]
      %v3861 = vld [vmem:[#allocation2 + $0xb8] sm:$0xf]
      %v3862 = vld [vmem:[#allocation2 + $0xbc] sm:$0xf]
      %v3863 = vld [vmem:[#allocation2 + $0xc0] sm:$0xf]
      %v3864 = vld [vmem:[#allocation2 + $0xc4] sm:$0xf]
      %v3865 = vld [vmem:[#allocation2 + $0xc8] sm:$0xf]
      %v3866 = vld [vmem:[#allocation2 + $0xcc] sm:$0xf]
      %v3867 = vld [vmem:[#allocation2 + $0xd0] sm:$0xf]
      %v3868 = vld [vmem:[#allocation2 + $0xd4] sm:$0xf]
      %v3869 = vld [vmem:[#allocation2 + $0xd8] sm:$0xf]
      %v3870 = vld [vmem:[#allocation2 + $0xdc] sm:$0xf]
      %v3871 = vld [vmem:[#allocation2 + $0xe0] sm:$0xf]
      %v3872 = vld [vmem:[#allocation2 + $0xe4] sm:$0xf]
      %v3873 = vld [vmem:[#allocation2 + $0xe8] sm:$0xf]
      %v3874 = vld [vmem:[#allocation2 + $0xec] sm:$0xf]
      %v3875 = vld [vmem:[#allocation2 + $0xf0] sm:$0xf]
      %v3876 = vld [vmem:[#allocation2 + $0xf4] sm:$0xf]
      %v3877 = vld [vmem:[#allocation2 + $0xf8] sm:$0xf]
      %v3878 = vld [vmem:[#allocation2 + $0xfc] sm:$0xf]
      %v3879 = vld [vmem:[%s4] sm:$0xf]
      %s3880 = scalar_lea.vmem %s4, 4
      %v3881 = vld [vmem:[%s3880] sm:$0xf]
      %s3882 = scalar_lea.vmem %s4, 8
      %v3883 = vld [vmem:[%s3882] sm:$0xf]
      %v3884 = vld [vmem:[%s3750] sm:$0xf]
      %v3885 = vld [vmem:[%s3750 + $0x4] sm:$0xf]
      %v3886 = vld [vmem:[%s3750 + $0x8] sm:$0xf]
      %v3887 = vld [vmem:[%s3750 + $0xc] sm:$0xf]
      %v3888 = vld [vmem:[%s3750 + $0x10] sm:$0xf]
      %v3889 = vld [vmem:[%s3750 + $0x14] sm:$0xf]
      %v3890 = vld [vmem:[%s3750 + $0x18] sm:$0xf]
      %v3891 = vld [vmem:[%s3750 + $0x1c] sm:$0xf]
      %v3892 = vld [vmem:[%s3750 + $0x20] sm:$0xf]
      %v3893 = vld [vmem:[%s3750 + $0x24] sm:$0xf]
      %v3894 = vld [vmem:[%s3750 + $0x28] sm:$0xf]
      %v3895 = vld [vmem:[%s3750 + $0x2c] sm:$0xf]
      %v3896 = vld [vmem:[%s3750 + $0x30] sm:$0xf]
      %v3897 = vld [vmem:[%s3750 + $0x34] sm:$0xf]
      %v3898 = vld [vmem:[%s3750 + $0x38] sm:$0xf]
      %v3899 = vld [vmem:[%s3750 + $0x3c] sm:$0xf]
      %v3900 = vld [vmem:[%s3750 + $0x40] sm:$0xf]
      %v3901 = vld [vmem:[%s3750 + $0x44] sm:$0xf]
      %v3902 = vld [vmem:[%s3750 + $0x48] sm:$0xf]
      %v3903 = vld [vmem:[%s3750 + $0x4c] sm:$0xf]
      %v3904 = vld [vmem:[%s3750 + $0x50] sm:$0xf]
      %v3905 = vld [vmem:[%s3750 + $0x54] sm:$0xf]
      %v3906 = vld [vmem:[%s3750 + $0x58] sm:$0xf]
      %v3907 = vld [vmem:[%s3750 + $0x5c] sm:$0xf]
      %v3908 = vld [vmem:[%s3750 + $0x60] sm:$0xf]
      %v3909 = vld [vmem:[%s3750 + $0x64] sm:$0xf]
      %v3910 = vld [vmem:[%s3750 + $0x68] sm:$0xf]
      %v3911 = vld [vmem:[%s3750 + $0x6c] sm:$0xf]
      %v3912 = vld [vmem:[%s3750 + $0x70] sm:$0xf]
      %v3913 = vld [vmem:[%s3750 + $0x74] sm:$0xf]
      %v3914 = vld [vmem:[%s3750 + $0x78] sm:$0xf]
      %v3915 = vld [vmem:[%s3750 + $0x7c] sm:$0xf]
      %v3916 = vld [vmem:[%s3750 + $0x80] sm:$0xf]
      %v3917 = vld [vmem:[%s3750 + $0x84] sm:$0xf]
      %v3918 = vld [vmem:[%s3750 + $0x88] sm:$0xf]
      %v3919 = vld [vmem:[%s3750 + $0x8c] sm:$0xf]
      %v3920 = vld [vmem:[%s3750 + $0x90] sm:$0xf]
      %v3921 = vld [vmem:[%s3750 + $0x94] sm:$0xf]
      %v3922 = vld [vmem:[%s3750 + $0x98] sm:$0xf]
      %v3923 = vld [vmem:[%s3750 + $0x9c] sm:$0xf]
      %v3924 = vld [vmem:[%s3750 + $0xa0] sm:$0xf]
      %v3925 = vld [vmem:[%s3750 + $0xa4] sm:$0xf]
      %v3926 = vld [vmem:[%s3750 + $0xa8] sm:$0xf]
      %v3927 = vld [vmem:[%s3750 + $0xac] sm:$0xf]
      %v3928 = vld [vmem:[%s3750 + $0xb0] sm:$0xf]
      %v3929 = vld [vmem:[%s3750 + $0xb4] sm:$0xf]
      %v3930 = vld [vmem:[%s3750 + $0xb8] sm:$0xf]
      %v3931 = vld [vmem:[%s3750 + $0xbc] sm:$0xf]
      %v3932 = vld [vmem:[%s3750 + $0xc0] sm:$0xf]
      %v3933 = vld [vmem:[%s3750 + $0xc4] sm:$0xf]
      %v3934 = vld [vmem:[%s3750 + $0xc8] sm:$0xf]
      %v3935 = vld [vmem:[%s3750 + $0xcc] sm:$0xf]
      %v3936 = vld [vmem:[%s3750 + $0xd0] sm:$0xf]
      %v3937 = vld [vmem:[%s3750 + $0xd4] sm:$0xf]
      %v3938 = vld [vmem:[%s3750 + $0xd8] sm:$0xf]
      %v3939 = vld [vmem:[%s3750 + $0xdc] sm:$0xf]
      %v3940 = vld [vmem:[%s3750 + $0xe0] sm:$0xf]
      %v3941 = vld [vmem:[%s3750 + $0xe4] sm:$0xf]
      %v3942 = vld [vmem:[%s3750 + $0xe8] sm:$0xf]
      %v3943 = vld [vmem:[%s3750 + $0xec] sm:$0xf]
      %v3944 = vld [vmem:[%s3750 + $0xf0] sm:$0xf]
      %v3945 = vld [vmem:[%s3750 + $0xf4] sm:$0xf]
      %v3946 = vld [vmem:[%s3750 + $0xf8] sm:$0xf]
      %v3947 = vld [vmem:[%s3750 + $0xfc] sm:$0xf]
      %s3948 = scalar_lea.vmem %s4, 12
      %v3949 = vld [vmem:[%s3948] sm:$0xf]
      %v4014 = vunpack.c.l.b16 %v3884
      %v4015 = vunpack.c.l.b16 %v3885
      %v4016 = vunpack.c.l.b16 %v3886
      %v4017 = vunpack.c.l.b16 %v3887
      %v4018 = vunpack.c.l.b16 %v3888
      %v4019 = vunpack.c.l.b16 %v3889
      %v4020 = vunpack.c.l.b16 %v3890
      %v4021 = vunpack.c.l.b16 %v3891
      %v4022 = vunpack.c.l.b16 %v3892
      %v4023 = vunpack.c.l.b16 %v3893
      %v4024 = vunpack.c.l.b16 %v3894
      %v4025 = vunpack.c.l.b16 %v3895
      %v4026 = vunpack.c.l.b16 %v3896
      %v4027 = vunpack.c.l.b16 %v3897
      %v4028 = vunpack.c.l.b16 %v3898
      %v4029 = vunpack.c.l.b16 %v3899
      %v4030 = vunpack.c.l.b16 %v3900
      %v4031 = vunpack.c.l.b16 %v3901
      %v4032 = vunpack.c.l.b16 %v3902
      %v4033 = vunpack.c.l.b16 %v3903
      %v4034 = vunpack.c.l.b16 %v3904
      %v4035 = vunpack.c.l.b16 %v3905
      %v4036 = vunpack.c.l.b16 %v3906
      %v4037 = vunpack.c.l.b16 %v3907
      %v4038 = vunpack.c.l.b16 %v3908
      %v4039 = vunpack.c.l.b16 %v3909
      %v4040 = vunpack.c.l.b16 %v3910
      %v4041 = vunpack.c.l.b16 %v3911
      %v4042 = vunpack.c.l.b16 %v3912
      %v4043 = vunpack.c.l.b16 %v3913
      %v4044 = vunpack.c.l.b16 %v3914
      %v4045 = vunpack.c.l.b16 %v3915
      %v4046 = vunpack.c.l.b16 %v3916
      %v4047 = vunpack.c.l.b16 %v3917
      %v4048 = vunpack.c.l.b16 %v3918
      %v4049 = vunpack.c.l.b16 %v3919
      %v4050 = vunpack.c.l.b16 %v3920
      %v4051 = vunpack.c.l.b16 %v3921
      %v4052 = vunpack.c.l.b16 %v3922
      %v4053 = vunpack.c.l.b16 %v3923
      %v4054 = vunpack.c.l.b16 %v3924
      %v4055 = vunpack.c.l.b16 %v3925
      %v4056 = vunpack.c.l.b16 %v3926
      %v4057 = vunpack.c.l.b16 %v3927
      %v4058 = vunpack.c.l.b16 %v3928
      %v4059 = vunpack.c.l.b16 %v3929
      %v4060 = vunpack.c.l.b16 %v3930
      %v4061 = vunpack.c.l.b16 %v3931
      %v4062 = vunpack.c.l.b16 %v3932
      %v4063 = vunpack.c.l.b16 %v3933
      %v4064 = vunpack.c.l.b16 %v3934
      %v4065 = vunpack.c.l.b16 %v3935
      %v4066 = vunpack.c.l.b16 %v3936
      %v4067 = vunpack.c.l.b16 %v3937
      %v4068 = vunpack.c.l.b16 %v3938
      %v4069 = vunpack.c.l.b16 %v3939
      %v4070 = vunpack.c.l.b16 %v3940
      %v4071 = vunpack.c.l.b16 %v3941
      %v4072 = vunpack.c.l.b16 %v3942
      %v4073 = vunpack.c.l.b16 %v3943
      %v4074 = vunpack.c.l.b16 %v3944
      %v4075 = vunpack.c.l.b16 %v3945
      %v4076 = vunpack.c.l.b16 %v3946
      %v4077 = vunpack.c.l.b16 %v3947
      %v4078 = vpack.c.b16 %v4015, %v4014
      %v4079 = vpack.c.b16 %v4017, %v4016
      %v4080 = vpack.c.b16 %v4019, %v4018
      %v4081 = vpack.c.b16 %v4021, %v4020
      %v4082 = vpack.c.b16 %v4023, %v4022
      %v4083 = vpack.c.b16 %v4025, %v4024
      %v4084 = vpack.c.b16 %v4027, %v4026
      %v4085 = vpack.c.b16 %v4029, %v4028
      %v4086 = vpack.c.b16 %v4031, %v4030
      %v4087 = vpack.c.b16 %v4033, %v4032
      %v4088 = vpack.c.b16 %v4035, %v4034
      %v4089 = vpack.c.b16 %v4037, %v4036
      %v4090 = vpack.c.b16 %v4039, %v4038
      %v4091 = vpack.c.b16 %v4041, %v4040
      %v4092 = vpack.c.b16 %v4043, %v4042
      %v4093 = vpack.c.b16 %v4045, %v4044
      %v4094 = vpack.c.b16 %v4047, %v4046
      %v4095 = vpack.c.b16 %v4049, %v4048
      %v4096 = vpack.c.b16 %v4051, %v4050
      %v4097 = vpack.c.b16 %v4053, %v4052
      %v4098 = vpack.c.b16 %v4055, %v4054
      %v4099 = vpack.c.b16 %v4057, %v4056
      %v4100 = vpack.c.b16 %v4059, %v4058
      %v4101 = vpack.c.b16 %v4061, %v4060
      %v4102 = vpack.c.b16 %v4063, %v4062
      %v4103 = vpack.c.b16 %v4065, %v4064
      %v4104 = vpack.c.b16 %v4067, %v4066
      %v4105 = vpack.c.b16 %v4069, %v4068
      %v4106 = vpack.c.b16 %v4071, %v4070
      %v4107 = vpack.c.b16 %v4073, %v4072
      %v4108 = vpack.c.b16 %v4075, %v4074
      %v4109 = vpack.c.b16 %v4077, %v4076
      %v4111 = vsel %vm576, %v4078, 0
      %v4114 = vsel %vm576, %v4079, 0
      %v4117 = vsel %vm576, %v4080, 0
      %v4120 = vsel %vm576, %v4081, 0
      %v4123 = vsel %vm576, %v4082, 0
      %v4126 = vsel %vm576, %v4083, 0
      %v4129 = vsel %vm576, %v4084, 0
      %v4132 = vsel %vm576, %v4085, 0
      %v4135 = vsel %vm576, %v4086, 0
      %v4138 = vsel %vm576, %v4087, 0
      %v4141 = vsel %vm576, %v4088, 0
      %v4144 = vsel %vm576, %v4089, 0
      %v4147 = vsel %vm576, %v4090, 0
      %v4150 = vsel %vm576, %v4091, 0
      %v4153 = vsel %vm576, %v4092, 0
      %v4156 = vsel %vm576, %v4093, 0
      %v4159 = vsel %vm576, %v4094, 0
      %v4162 = vsel %vm576, %v4095, 0
      %v4165 = vsel %vm576, %v4096, 0
      %v4168 = vsel %vm576, %v4097, 0
      %v4171 = vsel %vm576, %v4098, 0
      %v4174 = vsel %vm576, %v4099, 0
      %v4177 = vsel %vm576, %v4100, 0
      %v4180 = vsel %vm576, %v4101, 0
      %v4183 = vsel %vm576, %v4102, 0
      %v4186 = vsel %vm576, %v4103, 0
      %v4189 = vsel %vm576, %v4104, 0
      %v4192 = vsel %vm576, %v4105, 0
      %v4195 = vsel %vm576, %v4106, 0
      %v4198 = vsel %vm576, %v4107, 0
      %v4201 = vsel %vm576, %v4108, 0
      %v4204 = vsel %vm576, %v4109, 0
      %v4207 = vsel %vm673, %v3949, 0
      %4209 = vmatpush.bf16.msra.mxu0 0
      %4210 = vmatpush.bf16.msra.mxu0 0
      %4211 = vmatpush.bf16.msra.mxu0 0
      %4212 = vmatpush.bf16.msra.mxu0 0
      %4213 = vmatpush.bf16.msra.mxu0 0
      %4214 = vmatpush.bf16.msra.mxu0 0
      %4215 = vmatpush.bf16.msra.mxu0 0
      %4216 = vmatpush.bf16.msra.mxu0 %v4207
      %4217 = vmatmul.bf16.gmra.mxu0 %v4111
      %v4218 = vpop.f32.mrf.mxu0
      %v4219 = vadd.f32 0.0, %v4218
      %v4220 = vpop.f32.mrf.mxu0
      %v4221 = vadd.f32 0.0, %v4220
      %4222 = vmatmul.bf16.gmra.mxu0 %v4114
      %v4223 = vpop.f32.mrf.mxu0
      %v4224 = vpop.f32.mrf.mxu0
      %4225 = vmatmul.bf16.gmra.mxu0 %v4117
      %v4226 = vpop.f32.mrf.mxu0
      %v4227 = vadd.f32 0.0, %v4226
      %v4228 = vpop.f32.mrf.mxu0
      %v4229 = vadd.f32 0.0, %v4228
      %4230 = vmatmul.bf16.gmra.mxu0 %v4120
      %v4231 = vpop.f32.mrf.mxu0
      %v4232 = vpop.f32.mrf.mxu0
      %4233 = vmatmul.bf16.gmra.mxu0 %v4123
      %v4234 = vpop.f32.mrf.mxu0
      %v4235 = vadd.f32 0.0, %v4234
      %v4236 = vpop.f32.mrf.mxu0
      %v4237 = vadd.f32 0.0, %v4236
      %4238 = vmatmul.bf16.gmra.mxu0 %v4126
      %v4239 = vpop.f32.mrf.mxu0
      %v4240 = vpop.f32.mrf.mxu0
      %4241 = vmatmul.bf16.gmra.mxu0 %v4129
      %v4242 = vpop.f32.mrf.mxu0
      %v4243 = vadd.f32 0.0, %v4242
      %v4244 = vpop.f32.mrf.mxu0
      %v4245 = vadd.f32 0.0, %v4244
      %4246 = vmatmul.bf16.gmra.mxu0 %v4132
      %v4247 = vpop.f32.mrf.mxu0
      %v4248 = vpop.f32.mrf.mxu0
      %4249 = vmatmul.bf16.gmra.mxu0 %v4135
      %v4250 = vpop.f32.mrf.mxu0
      %v4251 = vadd.f32 0.0, %v4250
      %v4252 = vpop.f32.mrf.mxu0
      %v4253 = vadd.f32 0.0, %v4252
      %4254 = vmatmul.bf16.gmra.mxu0 %v4138
      %v4255 = vpop.f32.mrf.mxu0
      %v4256 = vpop.f32.mrf.mxu0
      %4257 = vmatmul.bf16.gmra.mxu0 %v4141
      %v4258 = vpop.f32.mrf.mxu0
      %v4259 = vadd.f32 0.0, %v4258
      %v4260 = vpop.f32.mrf.mxu0
      %v4261 = vadd.f32 0.0, %v4260
      %4262 = vmatmul.bf16.gmra.mxu0 %v4144
      %v4263 = vpop.f32.mrf.mxu0
      %v4264 = vpop.f32.mrf.mxu0
      %4265 = vmatmul.bf16.gmra.mxu0 %v4147
      %v4266 = vpop.f32.mrf.mxu0
      %v4267 = vadd.f32 0.0, %v4266
      %v4268 = vpop.f32.mrf.mxu0
      %v4269 = vadd.f32 0.0, %v4268
      %4270 = vmatmul.bf16.gmra.mxu0 %v4150
      %v4271 = vpop.f32.mrf.mxu0
      %v4272 = vpop.f32.mrf.mxu0
      %4273 = vmatmul.bf16.gmra.mxu0 %v4153
      %v4274 = vpop.f32.mrf.mxu0
      %v4275 = vadd.f32 0.0, %v4274
      %v4276 = vpop.f32.mrf.mxu0
      %v4277 = vadd.f32 0.0, %v4276
      %4278 = vmatmul.bf16.gmra.mxu0 %v4156
      %v4279 = vpop.f32.mrf.mxu0
      %v4280 = vpop.f32.mrf.mxu0
      %4281 = vmatmul.bf16.gmra.mxu0 %v4159
      %v4282 = vpop.f32.mrf.mxu0
      %v4283 = vadd.f32 0.0, %v4282
      %v4284 = vpop.f32.mrf.mxu0
      %v4285 = vadd.f32 0.0, %v4284
      %4286 = vmatmul.bf16.gmra.mxu0 %v4162
      %v4287 = vpop.f32.mrf.mxu0
      %v4288 = vpop.f32.mrf.mxu0
      %4289 = vmatmul.bf16.gmra.mxu0 %v4165
      %v4290 = vpop.f32.mrf.mxu0
      %v4291 = vadd.f32 0.0, %v4290
      %v4292 = vpop.f32.mrf.mxu0
      %v4293 = vadd.f32 0.0, %v4292
      %4294 = vmatmul.bf16.gmra.mxu0 %v4168
      %v4295 = vpop.f32.mrf.mxu0
      %v4296 = vpop.f32.mrf.mxu0
      %4297 = vmatmul.bf16.gmra.mxu0 %v4171
      %v4298 = vpop.f32.mrf.mxu0
      %v4299 = vadd.f32 0.0, %v4298
      %v4300 = vpop.f32.mrf.mxu0
      %v4301 = vadd.f32 0.0, %v4300
      %4302 = vmatmul.bf16.gmra.mxu0 %v4174
      %v4303 = vpop.f32.mrf.mxu0
      %v4304 = vpop.f32.mrf.mxu0
      %4305 = vmatmul.bf16.gmra.mxu0 %v4177
      %v4306 = vpop.f32.mrf.mxu0
      %v4307 = vadd.f32 0.0, %v4306
      %v4308 = vpop.f32.mrf.mxu0
      %v4309 = vadd.f32 0.0, %v4308
      %4310 = vmatmul.bf16.gmra.mxu0 %v4180
      %v4311 = vpop.f32.mrf.mxu0
      %v4312 = vpop.f32.mrf.mxu0
      %4313 = vmatmul.bf16.gmra.mxu0 %v4183
      %v4314 = vpop.f32.mrf.mxu0
      %v4315 = vadd.f32 0.0, %v4314
      %v4316 = vpop.f32.mrf.mxu0
      %v4317 = vadd.f32 0.0, %v4316
      %4318 = vmatmul.bf16.gmra.mxu0 %v4186
      %v4319 = vpop.f32.mrf.mxu0
      %v4320 = vpop.f32.mrf.mxu0
      %4321 = vmatmul.bf16.gmra.mxu0 %v4189
      %v4322 = vpop.f32.mrf.mxu0
      %v4323 = vadd.f32 0.0, %v4322
      %v4324 = vpop.f32.mrf.mxu0
      %v4325 = vadd.f32 0.0, %v4324
      %4326 = vmatmul.bf16.gmra.mxu0 %v4192
      %v4327 = vpop.f32.mrf.mxu0
      %v4328 = vpop.f32.mrf.mxu0
      %4329 = vmatmul.bf16.gmra.mxu0 %v4195
      %v4330 = vpop.f32.mrf.mxu0
      %v4331 = vadd.f32 0.0, %v4330
      %v4332 = vpop.f32.mrf.mxu0
      %v4333 = vadd.f32 0.0, %v4332
      %4334 = vmatmul.bf16.gmra.mxu0 %v4198
      %v4335 = vpop.f32.mrf.mxu0
      %v4336 = vpop.f32.mrf.mxu0
      %4337 = vmatmul.bf16.gmra.mxu0 %v4201
      %v4338 = vpop.f32.mrf.mxu0
      %v4339 = vadd.f32 0.0, %v4338
      %v4340 = vpop.f32.mrf.mxu0
      %v4341 = vadd.f32 0.0, %v4340
      %4342 = vmatmul.bf16.gmra.mxu0 %v4204
      %v4343 = vpop.f32.mrf.mxu0
      %v4344 = vpop.f32.mrf.mxu0
      %4345 = vdwg.mxu0
      %v4410 = vunpack.c.l.b16 %v3815
      %v4411 = vunpack.c.l.b16 %v3816
      %v4412 = vunpack.c.l.b16 %v3817
      %v4413 = vunpack.c.l.b16 %v3818
      %v4414 = vunpack.c.l.b16 %v3819
      %v4415 = vunpack.c.l.b16 %v3820
      %v4416 = vunpack.c.l.b16 %v3821
      %v4417 = vunpack.c.l.b16 %v3822
      %v4418 = vunpack.c.l.b16 %v3823
      %v4419 = vunpack.c.l.b16 %v3824
      %v4420 = vunpack.c.l.b16 %v3825
      %v4421 = vunpack.c.l.b16 %v3826
      %v4422 = vunpack.c.l.b16 %v3827
      %v4423 = vunpack.c.l.b16 %v3828
      %v4424 = vunpack.c.l.b16 %v3829
      %v4425 = vunpack.c.l.b16 %v3830
      %v4426 = vunpack.c.l.b16 %v3831
      %v4427 = vunpack.c.l.b16 %v3832
      %v4428 = vunpack.c.l.b16 %v3833
      %v4429 = vunpack.c.l.b16 %v3834
      %v4430 = vunpack.c.l.b16 %v3835
      %v4431 = vunpack.c.l.b16 %v3836
      %v4432 = vunpack.c.l.b16 %v3837
      %v4433 = vunpack.c.l.b16 %v3838
      %v4434 = vunpack.c.l.b16 %v3839
      %v4435 = vunpack.c.l.b16 %v3840
      %v4436 = vunpack.c.l.b16 %v3841
      %v4437 = vunpack.c.l.b16 %v3842
      %v4438 = vunpack.c.l.b16 %v3843
      %v4439 = vunpack.c.l.b16 %v3844
      %v4440 = vunpack.c.l.b16 %v3845
      %v4441 = vunpack.c.l.b16 %v3846
      %v4442 = vunpack.c.l.b16 %v3847
      %v4443 = vunpack.c.l.b16 %v3848
      %v4444 = vunpack.c.l.b16 %v3849
      %v4445 = vunpack.c.l.b16 %v3850
      %v4446 = vunpack.c.l.b16 %v3851
      %v4447 = vunpack.c.l.b16 %v3852
      %v4448 = vunpack.c.l.b16 %v3853
      %v4449 = vunpack.c.l.b16 %v3854
      %v4450 = vunpack.c.l.b16 %v3855
      %v4451 = vunpack.c.l.b16 %v3856
      %v4452 = vunpack.c.l.b16 %v3857
      %v4453 = vunpack.c.l.b16 %v3858
      %v4454 = vunpack.c.l.b16 %v3859
      %v4455 = vunpack.c.l.b16 %v3860
      %v4456 = vunpack.c.l.b16 %v3861
      %v4457 = vunpack.c.l.b16 %v3862
      %v4458 = vunpack.c.l.b16 %v3863
      %v4459 = vunpack.c.l.b16 %v3864
      %v4460 = vunpack.c.l.b16 %v3865
      %v4461 = vunpack.c.l.b16 %v3866
      %v4462 = vunpack.c.l.b16 %v3867
      %v4463 = vunpack.c.l.b16 %v3868
      %v4464 = vunpack.c.l.b16 %v3869
      %v4465 = vunpack.c.l.b16 %v3870
      %v4466 = vunpack.c.l.b16 %v3871
      %v4467 = vunpack.c.l.b16 %v3872
      %v4468 = vunpack.c.l.b16 %v3873
      %v4469 = vunpack.c.l.b16 %v3874
      %v4470 = vunpack.c.l.b16 %v3875
      %v4471 = vunpack.c.l.b16 %v3876
      %v4472 = vunpack.c.l.b16 %v3877
      %v4473 = vunpack.c.l.b16 %v3878
      %v4474 = vpack.c.b16 %v4411, %v4410
      %v4475 = vpack.c.b16 %v4413, %v4412
      %v4476 = vpack.c.b16 %v4415, %v4414
      %v4477 = vpack.c.b16 %v4417, %v4416
      %v4478 = vpack.c.b16 %v4419, %v4418
      %v4479 = vpack.c.b16 %v4421, %v4420
      %v4480 = vpack.c.b16 %v4423, %v4422
      %v4481 = vpack.c.b16 %v4425, %v4424
      %v4482 = vpack.c.b16 %v4427, %v4426
      %v4483 = vpack.c.b16 %v4429, %v4428
      %v4484 = vpack.c.b16 %v4431, %v4430
      %v4485 = vpack.c.b16 %v4433, %v4432
      %v4486 = vpack.c.b16 %v4435, %v4434
      %v4487 = vpack.c.b16 %v4437, %v4436
      %v4488 = vpack.c.b16 %v4439, %v4438
      %v4489 = vpack.c.b16 %v4441, %v4440
      %v4490 = vpack.c.b16 %v4443, %v4442
      %v4491 = vpack.c.b16 %v4445, %v4444
      %v4492 = vpack.c.b16 %v4447, %v4446
      %v4493 = vpack.c.b16 %v4449, %v4448
      %v4494 = vpack.c.b16 %v4451, %v4450
      %v4495 = vpack.c.b16 %v4453, %v4452
      %v4496 = vpack.c.b16 %v4455, %v4454
      %v4497 = vpack.c.b16 %v4457, %v4456
      %v4498 = vpack.c.b16 %v4459, %v4458
      %v4499 = vpack.c.b16 %v4461, %v4460
      %v4500 = vpack.c.b16 %v4463, %v4462
      %v4501 = vpack.c.b16 %v4465, %v4464
      %v4502 = vpack.c.b16 %v4467, %v4466
      %v4503 = vpack.c.b16 %v4469, %v4468
      %v4504 = vpack.c.b16 %v4471, %v4470
      %v4505 = vpack.c.b16 %v4473, %v4472
      %v4507 = vsel %vm576, %v4474, 0
      %v4510 = vsel %vm576, %v4475, 0
      %v4513 = vsel %vm576, %v4476, 0
      %v4516 = vsel %vm576, %v4477, 0
      %v4519 = vsel %vm576, %v4478, 0
      %v4522 = vsel %vm576, %v4479, 0
      %v4525 = vsel %vm576, %v4480, 0
      %v4528 = vsel %vm576, %v4481, 0
      %v4531 = vsel %vm576, %v4482, 0
      %v4534 = vsel %vm576, %v4483, 0
      %v4537 = vsel %vm576, %v4484, 0
      %v4540 = vsel %vm576, %v4485, 0
      %v4543 = vsel %vm576, %v4486, 0
      %v4546 = vsel %vm576, %v4487, 0
      %v4549 = vsel %vm576, %v4488, 0
      %v4552 = vsel %vm576, %v4489, 0
      %v4555 = vsel %vm576, %v4490, 0
      %v4558 = vsel %vm576, %v4491, 0
      %v4561 = vsel %vm576, %v4492, 0
      %v4564 = vsel %vm576, %v4493, 0
      %v4567 = vsel %vm576, %v4494, 0
      %v4570 = vsel %vm576, %v4495, 0
      %v4573 = vsel %vm576, %v4496, 0
      %v4576 = vsel %vm576, %v4497, 0
      %v4579 = vsel %vm576, %v4498, 0
      %v4582 = vsel %vm576, %v4499, 0
      %v4585 = vsel %vm576, %v4500, 0
      %v4588 = vsel %vm576, %v4501, 0
      %v4591 = vsel %vm576, %v4502, 0
      %v4594 = vsel %vm576, %v4503, 0
      %v4597 = vsel %vm576, %v4504, 0
      %v4600 = vsel %vm576, %v4505, 0
      %v4603 = vsel %vm673, %v3879, 0
      %4605 = vmatpush.bf16.msra.mxu0 0
      %4606 = vmatpush.bf16.msra.mxu0 0
      %4607 = vmatpush.bf16.msra.mxu0 0
      %4608 = vmatpush.bf16.msra.mxu0 0
      %4609 = vmatpush.bf16.msra.mxu0 0
      %4610 = vmatpush.bf16.msra.mxu0 0
      %4611 = vmatpush.bf16.msra.mxu0 0
      %4612 = vmatpush.bf16.msra.mxu0 %v4603
      %4613 = vmatmul.bf16.gmra.mxu0 %v4507
      %v4614 = vpop.f32.mrf.mxu0
      %v4615 = vadd.f32 %v4219, %v4614
      %v4616 = vpop.f32.mrf.mxu0
      %v4617 = vadd.f32 %v4221, %v4616
      %4618 = vmatmul.bf16.gmra.mxu0 %v4510
      %v4619 = vpop.f32.mrf.mxu0
      %v4620 = vpop.f32.mrf.mxu0
      %4621 = vmatmul.bf16.gmra.mxu0 %v4513
      %v4622 = vpop.f32.mrf.mxu0
      %v4623 = vadd.f32 %v4227, %v4622
      %v4624 = vpop.f32.mrf.mxu0
      %v4625 = vadd.f32 %v4229, %v4624
      %4626 = vmatmul.bf16.gmra.mxu0 %v4516
      %v4627 = vpop.f32.mrf.mxu0
      %v4628 = vpop.f32.mrf.mxu0
      %4629 = vmatmul.bf16.gmra.mxu0 %v4519
      %v4630 = vpop.f32.mrf.mxu0
      %v4631 = vadd.f32 %v4235, %v4630
      %v4632 = vpop.f32.mrf.mxu0
      %v4633 = vadd.f32 %v4237, %v4632
      %4634 = vmatmul.bf16.gmra.mxu0 %v4522
      %v4635 = vpop.f32.mrf.mxu0
      %v4636 = vpop.f32.mrf.mxu0
      %4637 = vmatmul.bf16.gmra.mxu0 %v4525
      %v4638 = vpop.f32.mrf.mxu0
      %v4639 = vadd.f32 %v4243, %v4638
      %v4640 = vpop.f32.mrf.mxu0
      %v4641 = vadd.f32 %v4245, %v4640
      %4642 = vmatmul.bf16.gmra.mxu0 %v4528
      %v4643 = vpop.f32.mrf.mxu0
      %v4644 = vpop.f32.mrf.mxu0
      %4645 = vmatmul.bf16.gmra.mxu0 %v4531
      %v4646 = vpop.f32.mrf.mxu0
      %v4647 = vadd.f32 %v4251, %v4646
      %v4648 = vpop.f32.mrf.mxu0
      %v4649 = vadd.f32 %v4253, %v4648
      %4650 = vmatmul.bf16.gmra.mxu0 %v4534
      %v4651 = vpop.f32.mrf.mxu0
      %v4652 = vpop.f32.mrf.mxu0
      %4653 = vmatmul.bf16.gmra.mxu0 %v4537
      %v4654 = vpop.f32.mrf.mxu0
      %v4655 = vadd.f32 %v4259, %v4654
      %v4656 = vpop.f32.mrf.mxu0
      %v4657 = vadd.f32 %v4261, %v4656
      %4658 = vmatmul.bf16.gmra.mxu0 %v4540
      %v4659 = vpop.f32.mrf.mxu0
      %v4660 = vpop.f32.mrf.mxu0
      %4661 = vmatmul.bf16.gmra.mxu0 %v4543
      %v4662 = vpop.f32.mrf.mxu0
      %v4663 = vadd.f32 %v4267, %v4662
      %v4664 = vpop.f32.mrf.mxu0
      %v4665 = vadd.f32 %v4269, %v4664
      %4666 = vmatmul.bf16.gmra.mxu0 %v4546
      %v4667 = vpop.f32.mrf.mxu0
      %v4668 = vpop.f32.mrf.mxu0
      %4669 = vmatmul.bf16.gmra.mxu0 %v4549
      %v4670 = vpop.f32.mrf.mxu0
      %v4671 = vadd.f32 %v4275, %v4670
      %v4672 = vpop.f32.mrf.mxu0
      %v4673 = vadd.f32 %v4277, %v4672
      %4674 = vmatmul.bf16.gmra.mxu0 %v4552
      %v4675 = vpop.f32.mrf.mxu0
      %v4676 = vpop.f32.mrf.mxu0
      %4677 = vmatmul.bf16.gmra.mxu0 %v4555
      %v4678 = vpop.f32.mrf.mxu0
      %v4679 = vadd.f32 %v4283, %v4678
      %v4680 = vpop.f32.mrf.mxu0
      %v4681 = vadd.f32 %v4285, %v4680
      %4682 = vmatmul.bf16.gmra.mxu0 %v4558
      %v4683 = vpop.f32.mrf.mxu0
      %v4684 = vpop.f32.mrf.mxu0
      %4685 = vmatmul.bf16.gmra.mxu0 %v4561
      %v4686 = vpop.f32.mrf.mxu0
      %v4687 = vadd.f32 %v4291, %v4686
      %v4688 = vpop.f32.mrf.mxu0
      %v4689 = vadd.f32 %v4293, %v4688
      %4690 = vmatmul.bf16.gmra.mxu0 %v4564
      %v4691 = vpop.f32.mrf.mxu0
      %v4692 = vpop.f32.mrf.mxu0
      %4693 = vmatmul.bf16.gmra.mxu0 %v4567
      %v4694 = vpop.f32.mrf.mxu0
      %v4695 = vadd.f32 %v4299, %v4694
      %v4696 = vpop.f32.mrf.mxu0
      %v4697 = vadd.f32 %v4301, %v4696
      %4698 = vmatmul.bf16.gmra.mxu0 %v4570
      %v4699 = vpop.f32.mrf.mxu0
      %v4700 = vpop.f32.mrf.mxu0
      %4701 = vmatmul.bf16.gmra.mxu0 %v4573
      %v4702 = vpop.f32.mrf.mxu0
      %v4703 = vadd.f32 %v4307, %v4702
      %v4704 = vpop.f32.mrf.mxu0
      %v4705 = vadd.f32 %v4309, %v4704
      %4706 = vmatmul.bf16.gmra.mxu0 %v4576
      %v4707 = vpop.f32.mrf.mxu0
      %v4708 = vpop.f32.mrf.mxu0
      %4709 = vmatmul.bf16.gmra.mxu0 %v4579
      %v4710 = vpop.f32.mrf.mxu0
      %v4711 = vadd.f32 %v4315, %v4710
      %v4712 = vpop.f32.mrf.mxu0
      %v4713 = vadd.f32 %v4317, %v4712
      %4714 = vmatmul.bf16.gmra.mxu0 %v4582
      %v4715 = vpop.f32.mrf.mxu0
      %v4716 = vpop.f32.mrf.mxu0
      %4717 = vmatmul.bf16.gmra.mxu0 %v4585
      %v4718 = vpop.f32.mrf.mxu0
      %v4719 = vadd.f32 %v4323, %v4718
      %v4720 = vpop.f32.mrf.mxu0
      %v4721 = vadd.f32 %v4325, %v4720
      %4722 = vmatmul.bf16.gmra.mxu0 %v4588
      %v4723 = vpop.f32.mrf.mxu0
      %v4724 = vpop.f32.mrf.mxu0
      %4725 = vmatmul.bf16.gmra.mxu0 %v4591
      %v4726 = vpop.f32.mrf.mxu0
      %v4727 = vadd.f32 %v4331, %v4726
      %v4728 = vpop.f32.mrf.mxu0
      %v4729 = vadd.f32 %v4333, %v4728
      %4730 = vmatmul.bf16.gmra.mxu0 %v4594
      %v4731 = vpop.f32.mrf.mxu0
      %v4732 = vpop.f32.mrf.mxu0
      %4733 = vmatmul.bf16.gmra.mxu0 %v4597
      %v4734 = vpop.f32.mrf.mxu0
      %v4735 = vadd.f32 %v4339, %v4734
      %v4736 = vpop.f32.mrf.mxu0
      %v4737 = vadd.f32 %v4341, %v4736
      %4738 = vmatmul.bf16.gmra.mxu0 %v4600
      %v4739 = vpop.f32.mrf.mxu0
      %v4740 = vpop.f32.mrf.mxu0
      %4741 = vdwg.mxu0
      %s4742 = scalar_lea.vmem %s4, 16
      %v4743 = vld [vmem:[%s4742] sm:$0xf]
      %v4745 = vsel %vm673, %v4743, 0
      %4747 = vmatpush.bf16.msra.mxu0 0
      %4748 = vmatpush.bf16.msra.mxu0 0
      %4749 = vmatpush.bf16.msra.mxu0 0
      %4750 = vmatpush.bf16.msra.mxu0 0
      %4751 = vmatpush.bf16.msra.mxu0 0
      %4752 = vmatpush.bf16.msra.mxu0 0
      %4753 = vmatpush.bf16.msra.mxu0 0
      %4754 = vmatpush.bf16.msra.mxu0 %v4745
      %4755 = vmatmul.bf16.gmra.mxu0 %v4111
      %v4756 = vpop.f32.mrf.mxu0
      %v4757 = vadd.f32 0.0, %v4756
      %v4758 = vpop.f32.mrf.mxu0
      %v4759 = vadd.f32 0.0, %v4758
      %4760 = vmatmul.bf16.gmra.mxu0 %v4114
      %v4761 = vpop.f32.mrf.mxu0
      %v4762 = vadd.f32 0.0, %v4761
      %v4763 = vpop.f32.mrf.mxu0
      %4764 = vmatmul.bf16.gmra.mxu0 %v4117
      %v4765 = vpop.f32.mrf.mxu0
      %v4766 = vadd.f32 0.0, %v4765
      %v4767 = vpop.f32.mrf.mxu0
      %v4768 = vadd.f32 0.0, %v4767
      %4769 = vmatmul.bf16.gmra.mxu0 %v4120
      %v4770 = vpop.f32.mrf.mxu0
      %v4771 = vadd.f32 0.0, %v4770
      %v4772 = vpop.f32.mrf.mxu0
      %4773 = vmatmul.bf16.gmra.mxu0 %v4123
      %v4774 = vpop.f32.mrf.mxu0
      %v4775 = vadd.f32 0.0, %v4774
      %v4776 = vpop.f32.mrf.mxu0
      %v4777 = vadd.f32 0.0, %v4776
      %4778 = vmatmul.bf16.gmra.mxu0 %v4126
      %v4779 = vpop.f32.mrf.mxu0
      %v4780 = vadd.f32 0.0, %v4779
      %v4781 = vpop.f32.mrf.mxu0
      %4782 = vmatmul.bf16.gmra.mxu0 %v4129
      %v4783 = vpop.f32.mrf.mxu0
      %v4784 = vadd.f32 0.0, %v4783
      %v4785 = vpop.f32.mrf.mxu0
      %v4786 = vadd.f32 0.0, %v4785
      %4787 = vmatmul.bf16.gmra.mxu0 %v4132
      %v4788 = vpop.f32.mrf.mxu0
      %v4789 = vadd.f32 0.0, %v4788
      %v4790 = vpop.f32.mrf.mxu0
      %4791 = vmatmul.bf16.gmra.mxu0 %v4135
      %v4792 = vpop.f32.mrf.mxu0
      %v4793 = vadd.f32 0.0, %v4792
      %v4794 = vpop.f32.mrf.mxu0
      %v4795 = vadd.f32 0.0, %v4794
      %4796 = vmatmul.bf16.gmra.mxu0 %v4138
      %v4797 = vpop.f32.mrf.mxu0
      %v4798 = vadd.f32 0.0, %v4797
      %v4799 = vpop.f32.mrf.mxu0
      %4800 = vmatmul.bf16.gmra.mxu0 %v4141
      %v4801 = vpop.f32.mrf.mxu0
      %v4802 = vadd.f32 0.0, %v4801
      %v4803 = vpop.f32.mrf.mxu0
      %v4804 = vadd.f32 0.0, %v4803
      %4805 = vmatmul.bf16.gmra.mxu0 %v4144
      %v4806 = vpop.f32.mrf.mxu0
      %v4807 = vadd.f32 0.0, %v4806
      %v4808 = vpop.f32.mrf.mxu0
      %4809 = vmatmul.bf16.gmra.mxu0 %v4147
      %v4810 = vpop.f32.mrf.mxu0
      %v4811 = vadd.f32 0.0, %v4810
      %v4812 = vpop.f32.mrf.mxu0
      %v4813 = vadd.f32 0.0, %v4812
      %4814 = vmatmul.bf16.gmra.mxu0 %v4150
      %v4815 = vpop.f32.mrf.mxu0
      %v4816 = vadd.f32 0.0, %v4815
      %v4817 = vpop.f32.mrf.mxu0
      %4818 = vmatmul.bf16.gmra.mxu0 %v4153
      %v4819 = vpop.f32.mrf.mxu0
      %v4820 = vadd.f32 0.0, %v4819
      %v4821 = vpop.f32.mrf.mxu0
      %v4822 = vadd.f32 0.0, %v4821
      %4823 = vmatmul.bf16.gmra.mxu0 %v4156
      %v4824 = vpop.f32.mrf.mxu0
      %v4825 = vadd.f32 0.0, %v4824
      %v4826 = vpop.f32.mrf.mxu0
      %4827 = vmatmul.bf16.gmra.mxu0 %v4159
      %v4828 = vpop.f32.mrf.mxu0
      %v4829 = vadd.f32 0.0, %v4828
      %v4830 = vpop.f32.mrf.mxu0
      %v4831 = vadd.f32 0.0, %v4830
      %4832 = vmatmul.bf16.gmra.mxu0 %v4162
      %v4833 = vpop.f32.mrf.mxu0
      %v4834 = vadd.f32 0.0, %v4833
      %v4835 = vpop.f32.mrf.mxu0
      %4836 = vmatmul.bf16.gmra.mxu0 %v4165
      %v4837 = vpop.f32.mrf.mxu0
      %v4838 = vadd.f32 0.0, %v4837
      %v4839 = vpop.f32.mrf.mxu0
      %v4840 = vadd.f32 0.0, %v4839
      %4841 = vmatmul.bf16.gmra.mxu0 %v4168
      %v4842 = vpop.f32.mrf.mxu0
      %v4843 = vadd.f32 0.0, %v4842
      %v4844 = vpop.f32.mrf.mxu0
      %4845 = vmatmul.bf16.gmra.mxu0 %v4171
      %v4846 = vpop.f32.mrf.mxu0
      %v4847 = vadd.f32 0.0, %v4846
      %v4848 = vpop.f32.mrf.mxu0
      %v4849 = vadd.f32 0.0, %v4848
      %4850 = vmatmul.bf16.gmra.mxu0 %v4174
      %v4851 = vpop.f32.mrf.mxu0
      %v4852 = vadd.f32 0.0, %v4851
      %v4853 = vpop.f32.mrf.mxu0
      %4854 = vmatmul.bf16.gmra.mxu0 %v4177
      %v4855 = vpop.f32.mrf.mxu0
      %v4856 = vadd.f32 0.0, %v4855
      %v4857 = vpop.f32.mrf.mxu0
      %v4858 = vadd.f32 0.0, %v4857
      %4859 = vmatmul.bf16.gmra.mxu0 %v4180
      %v4860 = vpop.f32.mrf.mxu0
      %v4861 = vadd.f32 0.0, %v4860
      %v4862 = vpop.f32.mrf.mxu0
      %4863 = vmatmul.bf16.gmra.mxu0 %v4183
      %v4864 = vpop.f32.mrf.mxu0
      %v4865 = vadd.f32 0.0, %v4864
      %v4866 = vpop.f32.mrf.mxu0
      %v4867 = vadd.f32 0.0, %v4866
      %4868 = vmatmul.bf16.gmra.mxu0 %v4186
      %v4869 = vpop.f32.mrf.mxu0
      %v4870 = vadd.f32 0.0, %v4869
      %v4871 = vpop.f32.mrf.mxu0
      %4872 = vmatmul.bf16.gmra.mxu0 %v4189
      %v4873 = vpop.f32.mrf.mxu0
      %v4874 = vadd.f32 0.0, %v4873
      %v4875 = vpop.f32.mrf.mxu0
      %v4876 = vadd.f32 0.0, %v4875
      %4877 = vmatmul.bf16.gmra.mxu0 %v4192
      %v4878 = vpop.f32.mrf.mxu0
      %v4879 = vadd.f32 0.0, %v4878
      %v4880 = vpop.f32.mrf.mxu0
      %4881 = vmatmul.bf16.gmra.mxu0 %v4195
      %v4882 = vpop.f32.mrf.mxu0
      %v4883 = vadd.f32 0.0, %v4882
      %v4884 = vpop.f32.mrf.mxu0
      %v4885 = vadd.f32 0.0, %v4884
      %4886 = vmatmul.bf16.gmra.mxu0 %v4198
      %v4887 = vpop.f32.mrf.mxu0
      %v4888 = vadd.f32 0.0, %v4887
      %v4889 = vpop.f32.mrf.mxu0
      %4890 = vmatmul.bf16.gmra.mxu0 %v4201
      %v4891 = vpop.f32.mrf.mxu0
      %v4892 = vadd.f32 0.0, %v4891
      %v4893 = vpop.f32.mrf.mxu0
      %v4894 = vadd.f32 0.0, %v4893
      %4895 = vmatmul.bf16.gmra.mxu0 %v4204
      %v4896 = vpop.f32.mrf.mxu0
      %v4897 = vadd.f32 0.0, %v4896
      %v4898 = vpop.f32.mrf.mxu0
      %4899 = vdwg.mxu0
      %v4901 = vsel %vm673, %v3881, 0
      %4903 = vmatpush.bf16.msra.mxu0 0
      %4904 = vmatpush.bf16.msra.mxu0 0
      %4905 = vmatpush.bf16.msra.mxu0 0
      %4906 = vmatpush.bf16.msra.mxu0 0
      %4907 = vmatpush.bf16.msra.mxu0 0
      %4908 = vmatpush.bf16.msra.mxu0 0
      %4909 = vmatpush.bf16.msra.mxu0 0
      %4910 = vmatpush.bf16.msra.mxu0 %v4901
      %4911 = vmatmul.bf16.gmra.mxu0 %v4507
      %v4912 = vpop.f32.mrf.mxu0
      %v4913 = vadd.f32 %v4757, %v4912
      %v4914 = vpop.f32.mrf.mxu0
      %v4915 = vadd.f32 %v4759, %v4914
      %4916 = vmatmul.bf16.gmra.mxu0 %v4510
      %v4917 = vpop.f32.mrf.mxu0
      %v4918 = vadd.f32 %v4762, %v4917
      %v4919 = vpop.f32.mrf.mxu0
      %4920 = vmatmul.bf16.gmra.mxu0 %v4513
      %v4921 = vpop.f32.mrf.mxu0
      %v4922 = vadd.f32 %v4766, %v4921
      %v4923 = vpop.f32.mrf.mxu0
      %v4924 = vadd.f32 %v4768, %v4923
      %4925 = vmatmul.bf16.gmra.mxu0 %v4516
      %v4926 = vpop.f32.mrf.mxu0
      %v4927 = vadd.f32 %v4771, %v4926
      %v4928 = vpop.f32.mrf.mxu0
      %4929 = vmatmul.bf16.gmra.mxu0 %v4519
      %v4930 = vpop.f32.mrf.mxu0
      %v4931 = vadd.f32 %v4775, %v4930
      %v4932 = vpop.f32.mrf.mxu0
      %v4933 = vadd.f32 %v4777, %v4932
      %4934 = vmatmul.bf16.gmra.mxu0 %v4522
      %v4935 = vpop.f32.mrf.mxu0
      %v4936 = vadd.f32 %v4780, %v4935
      %v4937 = vpop.f32.mrf.mxu0
      %4938 = vmatmul.bf16.gmra.mxu0 %v4525
      %v4939 = vpop.f32.mrf.mxu0
      %v4940 = vadd.f32 %v4784, %v4939
      %v4941 = vpop.f32.mrf.mxu0
      %v4942 = vadd.f32 %v4786, %v4941
      %4943 = vmatmul.bf16.gmra.mxu0 %v4528
      %v4944 = vpop.f32.mrf.mxu0
      %v4945 = vadd.f32 %v4789, %v4944
      %v4946 = vpop.f32.mrf.mxu0
      %4947 = vmatmul.bf16.gmra.mxu0 %v4531
      %v4948 = vpop.f32.mrf.mxu0
      %v4949 = vadd.f32 %v4793, %v4948
      %v4950 = vpop.f32.mrf.mxu0
      %v4951 = vadd.f32 %v4795, %v4950
      %4952 = vmatmul.bf16.gmra.mxu0 %v4534
      %v4953 = vpop.f32.mrf.mxu0
      %v4954 = vadd.f32 %v4798, %v4953
      %v4955 = vpop.f32.mrf.mxu0
      %4956 = vmatmul.bf16.gmra.mxu0 %v4537
      %v4957 = vpop.f32.mrf.mxu0
      %v4958 = vadd.f32 %v4802, %v4957
      %v4959 = vpop.f32.mrf.mxu0
      %v4960 = vadd.f32 %v4804, %v4959
      %4961 = vmatmul.bf16.gmra.mxu0 %v4540
      %v4962 = vpop.f32.mrf.mxu0
      %v4963 = vadd.f32 %v4807, %v4962
      %v4964 = vpop.f32.mrf.mxu0
      %4965 = vmatmul.bf16.gmra.mxu0 %v4543
      %v4966 = vpop.f32.mrf.mxu0
      %v4967 = vadd.f32 %v4811, %v4966
      %v4968 = vpop.f32.mrf.mxu0
      %v4969 = vadd.f32 %v4813, %v4968
      %4970 = vmatmul.bf16.gmra.mxu0 %v4546
      %v4971 = vpop.f32.mrf.mxu0
      %v4972 = vadd.f32 %v4816, %v4971
      %v4973 = vpop.f32.mrf.mxu0
      %4974 = vmatmul.bf16.gmra.mxu0 %v4549
      %v4975 = vpop.f32.mrf.mxu0
      %v4976 = vadd.f32 %v4820, %v4975
      %v4977 = vpop.f32.mrf.mxu0
      %v4978 = vadd.f32 %v4822, %v4977
      %4979 = vmatmul.bf16.gmra.mxu0 %v4552
      %v4980 = vpop.f32.mrf.mxu0
      %v4981 = vadd.f32 %v4825, %v4980
      %v4982 = vpop.f32.mrf.mxu0
      %4983 = vmatmul.bf16.gmra.mxu0 %v4555
      %v4984 = vpop.f32.mrf.mxu0
      %v4985 = vadd.f32 %v4829, %v4984
      %v4986 = vpop.f32.mrf.mxu0
      %v4987 = vadd.f32 %v4831, %v4986
      %4988 = vmatmul.bf16.gmra.mxu0 %v4558
      %v4989 = vpop.f32.mrf.mxu0
      %v4990 = vadd.f32 %v4834, %v4989
      %v4991 = vpop.f32.mrf.mxu0
      %4992 = vmatmul.bf16.gmra.mxu0 %v4561
      %v4993 = vpop.f32.mrf.mxu0
      %v4994 = vadd.f32 %v4838, %v4993
      %v4995 = vpop.f32.mrf.mxu0
      %v4996 = vadd.f32 %v4840, %v4995
      %4997 = vmatmul.bf16.gmra.mxu0 %v4564
      %v4998 = vpop.f32.mrf.mxu0
      %v4999 = vadd.f32 %v4843, %v4998
      %v5000 = vpop.f32.mrf.mxu0
      %5001 = vmatmul.bf16.gmra.mxu0 %v4567
      %v5002 = vpop.f32.mrf.mxu0
      %v5003 = vadd.f32 %v4847, %v5002
      %v5004 = vpop.f32.mrf.mxu0
      %v5005 = vadd.f32 %v4849, %v5004
      %5006 = vmatmul.bf16.gmra.mxu0 %v4570
      %v5007 = vpop.f32.mrf.mxu0
      %v5008 = vadd.f32 %v4852, %v5007
      %v5009 = vpop.f32.mrf.mxu0
      %5010 = vmatmul.bf16.gmra.mxu0 %v4573
      %v5011 = vpop.f32.mrf.mxu0
      %v5012 = vadd.f32 %v4856, %v5011
      %v5013 = vpop.f32.mrf.mxu0
      %v5014 = vadd.f32 %v4858, %v5013
      %5015 = vmatmul.bf16.gmra.mxu0 %v4576
      %v5016 = vpop.f32.mrf.mxu0
      %v5017 = vadd.f32 %v4861, %v5016
      %v5018 = vpop.f32.mrf.mxu0
      %5019 = vmatmul.bf16.gmra.mxu0 %v4579
      %v5020 = vpop.f32.mrf.mxu0
      %v5021 = vadd.f32 %v4865, %v5020
      %v5022 = vpop.f32.mrf.mxu0
      %v5023 = vadd.f32 %v4867, %v5022
      %5024 = vmatmul.bf16.gmra.mxu0 %v4582
      %v5025 = vpop.f32.mrf.mxu0
      %v5026 = vadd.f32 %v4870, %v5025
      %v5027 = vpop.f32.mrf.mxu0
      %5028 = vmatmul.bf16.gmra.mxu0 %v4585
      %v5029 = vpop.f32.mrf.mxu0
      %v5030 = vadd.f32 %v4874, %v5029
      %v5031 = vpop.f32.mrf.mxu0
      %v5032 = vadd.f32 %v4876, %v5031
      %5033 = vmatmul.bf16.gmra.mxu0 %v4588
      %v5034 = vpop.f32.mrf.mxu0
      %v5035 = vadd.f32 %v4879, %v5034
      %v5036 = vpop.f32.mrf.mxu0
      %5037 = vmatmul.bf16.gmra.mxu0 %v4591
      %v5038 = vpop.f32.mrf.mxu0
      %v5039 = vadd.f32 %v4883, %v5038
      %v5040 = vpop.f32.mrf.mxu0
      %v5041 = vadd.f32 %v4885, %v5040
      %5042 = vmatmul.bf16.gmra.mxu0 %v4594
      %v5043 = vpop.f32.mrf.mxu0
      %v5044 = vadd.f32 %v4888, %v5043
      %v5045 = vpop.f32.mrf.mxu0
      %5046 = vmatmul.bf16.gmra.mxu0 %v4597
      %v5047 = vpop.f32.mrf.mxu0
      %v5048 = vadd.f32 %v4892, %v5047
      %v5049 = vpop.f32.mrf.mxu0
      %v5050 = vadd.f32 %v4894, %v5049
      %5051 = vmatmul.bf16.gmra.mxu0 %v4600
      %v5052 = vpop.f32.mrf.mxu0
      %v5053 = vadd.f32 %v4897, %v5052
      %v5054 = vpop.f32.mrf.mxu0
      %5055 = vdwg.mxu0
      %s5056 = scalar_lea.vmem %s4, 20
      %v5057 = vld [vmem:[%s5056] sm:$0xf]
      %v5059 = vsel %vm673, %v5057, 0
      %5061 = vmatpush.bf16.msra.mxu0 0
      %5062 = vmatpush.bf16.msra.mxu0 0
      %5063 = vmatpush.bf16.msra.mxu0 0
      %5064 = vmatpush.bf16.msra.mxu0 0
      %5065 = vmatpush.bf16.msra.mxu0 0
      %5066 = vmatpush.bf16.msra.mxu0 0
      %5067 = vmatpush.bf16.msra.mxu0 0
      %5068 = vmatpush.bf16.msra.mxu0 %v5059
      %5069 = vmatmul.bf16.gmra.mxu0 %v4111
      %v5070 = vpop.f32.mrf.mxu0
      %v5071 = vadd.f32 0.0, %v5070
      %v5072 = vpop.f32.mrf.mxu0
      %v5073 = vadd.f32 0.0, %v5072
      %5074 = vmatmul.bf16.gmra.mxu0 %v4114
      %v5075 = vpop.f32.mrf.mxu0
      %v5076 = vadd.f32 0.0, %v5075
      %v5077 = vpop.f32.mrf.mxu0
      %5078 = vmatmul.bf16.gmra.mxu0 %v4117
      %v5079 = vpop.f32.mrf.mxu0
      %v5080 = vadd.f32 0.0, %v5079
      %v5081 = vpop.f32.mrf.mxu0
      %v5082 = vadd.f32 0.0, %v5081
      %5083 = vmatmul.bf16.gmra.mxu0 %v4120
      %v5084 = vpop.f32.mrf.mxu0
      %v5085 = vadd.f32 0.0, %v5084
      %v5086 = vpop.f32.mrf.mxu0
      %5087 = vmatmul.bf16.gmra.mxu0 %v4123
      %v5088 = vpop.f32.mrf.mxu0
      %v5089 = vadd.f32 0.0, %v5088
      %v5090 = vpop.f32.mrf.mxu0
      %v5091 = vadd.f32 0.0, %v5090
      %5092 = vmatmul.bf16.gmra.mxu0 %v4126
      %v5093 = vpop.f32.mrf.mxu0
      %v5094 = vadd.f32 0.0, %v5093
      %v5095 = vpop.f32.mrf.mxu0
      %5096 = vmatmul.bf16.gmra.mxu0 %v4129
      %v5097 = vpop.f32.mrf.mxu0
      %v5098 = vadd.f32 0.0, %v5097
      %v5099 = vpop.f32.mrf.mxu0
      %v5100 = vadd.f32 0.0, %v5099
      %5101 = vmatmul.bf16.gmra.mxu0 %v4132
      %v5102 = vpop.f32.mrf.mxu0
      %v5103 = vadd.f32 0.0, %v5102
      %v5104 = vpop.f32.mrf.mxu0
      %5105 = vmatmul.bf16.gmra.mxu0 %v4135
      %v5106 = vpop.f32.mrf.mxu0
      %v5107 = vadd.f32 0.0, %v5106
      %v5108 = vpop.f32.mrf.mxu0
      %v5109 = vadd.f32 0.0, %v5108
      %5110 = vmatmul.bf16.gmra.mxu0 %v4138
      %v5111 = vpop.f32.mrf.mxu0
      %v5112 = vadd.f32 0.0, %v5111
      %v5113 = vpop.f32.mrf.mxu0
      %5114 = vmatmul.bf16.gmra.mxu0 %v4141
      %v5115 = vpop.f32.mrf.mxu0
      %v5116 = vadd.f32 0.0, %v5115
      %v5117 = vpop.f32.mrf.mxu0
      %v5118 = vadd.f32 0.0, %v5117
      %5119 = vmatmul.bf16.gmra.mxu0 %v4144
      %v5120 = vpop.f32.mrf.mxu0
      %v5121 = vadd.f32 0.0, %v5120
      %v5122 = vpop.f32.mrf.mxu0
      %5123 = vmatmul.bf16.gmra.mxu0 %v4147
      %v5124 = vpop.f32.mrf.mxu0
      %v5125 = vadd.f32 0.0, %v5124
      %v5126 = vpop.f32.mrf.mxu0
      %v5127 = vadd.f32 0.0, %v5126
      %5128 = vmatmul.bf16.gmra.mxu0 %v4150
      %v5129 = vpop.f32.mrf.mxu0
      %v5130 = vadd.f32 0.0, %v5129
      %v5131 = vpop.f32.mrf.mxu0
      %5132 = vmatmul.bf16.gmra.mxu0 %v4153
      %v5133 = vpop.f32.mrf.mxu0
      %v5134 = vadd.f32 0.0, %v5133
      %v5135 = vpop.f32.mrf.mxu0
      %v5136 = vadd.f32 0.0, %v5135
      %5137 = vmatmul.bf16.gmra.mxu0 %v4156
      %v5138 = vpop.f32.mrf.mxu0
      %v5139 = vadd.f32 0.0, %v5138
      %v5140 = vpop.f32.mrf.mxu0
      %5141 = vmatmul.bf16.gmra.mxu0 %v4159
      %v5142 = vpop.f32.mrf.mxu0
      %v5143 = vadd.f32 0.0, %v5142
      %v5144 = vpop.f32.mrf.mxu0
      %v5145 = vadd.f32 0.0, %v5144
      %5146 = vmatmul.bf16.gmra.mxu0 %v4162
      %v5147 = vpop.f32.mrf.mxu0
      %v5148 = vadd.f32 0.0, %v5147
      %v5149 = vpop.f32.mrf.mxu0
      %5150 = vmatmul.bf16.gmra.mxu0 %v4165
      %v5151 = vpop.f32.mrf.mxu0
      %v5152 = vadd.f32 0.0, %v5151
      %v5153 = vpop.f32.mrf.mxu0
      %v5154 = vadd.f32 0.0, %v5153
      %5155 = vmatmul.bf16.gmra.mxu0 %v4168
      %v5156 = vpop.f32.mrf.mxu0
      %v5157 = vadd.f32 0.0, %v5156
      %v5158 = vpop.f32.mrf.mxu0
      %5159 = vmatmul.bf16.gmra.mxu0 %v4171
      %v5160 = vpop.f32.mrf.mxu0
      %v5161 = vadd.f32 0.0, %v5160
      %v5162 = vpop.f32.mrf.mxu0
      %v5163 = vadd.f32 0.0, %v5162
      %5164 = vmatmul.bf16.gmra.mxu0 %v4174
      %v5165 = vpop.f32.mrf.mxu0
      %v5166 = vadd.f32 0.0, %v5165
      %v5167 = vpop.f32.mrf.mxu0
      %5168 = vmatmul.bf16.gmra.mxu0 %v4177
      %v5169 = vpop.f32.mrf.mxu0
      %v5170 = vadd.f32 0.0, %v5169
      %v5171 = vpop.f32.mrf.mxu0
      %v5172 = vadd.f32 0.0, %v5171
      %5173 = vmatmul.bf16.gmra.mxu0 %v4180
      %v5174 = vpop.f32.mrf.mxu0
      %v5175 = vadd.f32 0.0, %v5174
      %v5176 = vpop.f32.mrf.mxu0
      %5177 = vmatmul.bf16.gmra.mxu0 %v4183
      %v5178 = vpop.f32.mrf.mxu0
      %v5179 = vadd.f32 0.0, %v5178
      %v5180 = vpop.f32.mrf.mxu0
      %v5181 = vadd.f32 0.0, %v5180
      %5182 = vmatmul.bf16.gmra.mxu0 %v4186
      %v5183 = vpop.f32.mrf.mxu0
      %v5184 = vadd.f32 0.0, %v5183
      %v5185 = vpop.f32.mrf.mxu0
      %5186 = vmatmul.bf16.gmra.mxu0 %v4189
      %v5187 = vpop.f32.mrf.mxu0
      %v5188 = vadd.f32 0.0, %v5187
      %v5189 = vpop.f32.mrf.mxu0
      %v5190 = vadd.f32 0.0, %v5189
      %5191 = vmatmul.bf16.gmra.mxu0 %v4192
      %v5192 = vpop.f32.mrf.mxu0
      %v5193 = vadd.f32 0.0, %v5192
      %v5194 = vpop.f32.mrf.mxu0
      %5195 = vmatmul.bf16.gmra.mxu0 %v4195
      %v5196 = vpop.f32.mrf.mxu0
      %v5197 = vadd.f32 0.0, %v5196
      %v5198 = vpop.f32.mrf.mxu0
      %v5199 = vadd.f32 0.0, %v5198
      %5200 = vmatmul.bf16.gmra.mxu0 %v4198
      %v5201 = vpop.f32.mrf.mxu0
      %v5202 = vadd.f32 0.0, %v5201
      %v5203 = vpop.f32.mrf.mxu0
      %5204 = vmatmul.bf16.gmra.mxu0 %v4201
      %v5205 = vpop.f32.mrf.mxu0
      %v5206 = vadd.f32 0.0, %v5205
      %v5207 = vpop.f32.mrf.mxu0
      %v5208 = vadd.f32 0.0, %v5207
      %5209 = vmatmul.bf16.gmra.mxu0 %v4204
      %v5210 = vpop.f32.mrf.mxu0
      %v5211 = vadd.f32 0.0, %v5210
      %v5212 = vpop.f32.mrf.mxu0
      %5213 = vdwg.mxu0
      %v5215 = vsel %vm673, %v3883, 0
      %5217 = vmatpush.bf16.msra.mxu0 0
      %5218 = vmatpush.bf16.msra.mxu0 0
      %5219 = vmatpush.bf16.msra.mxu0 0
      %5220 = vmatpush.bf16.msra.mxu0 0
      %5221 = vmatpush.bf16.msra.mxu0 0
      %5222 = vmatpush.bf16.msra.mxu0 0
      %5223 = vmatpush.bf16.msra.mxu0 0
      %5224 = vmatpush.bf16.msra.mxu0 %v5215
      %5225 = vmatmul.bf16.gmra.mxu0 %v4507
      %v5226 = vpop.f32.mrf.mxu0
      %v5227 = vadd.f32 %v5071, %v5226
      %v5228 = vpop.f32.mrf.mxu0
      %v5229 = vadd.f32 %v5073, %v5228
      %5230 = vmatmul.bf16.gmra.mxu0 %v4510
      %v5231 = vpop.f32.mrf.mxu0
      %v5232 = vadd.f32 %v5076, %v5231
      %v5233 = vpop.f32.mrf.mxu0
      %5234 = vmatmul.bf16.gmra.mxu0 %v4513
      %v5235 = vpop.f32.mrf.mxu0
      %v5236 = vadd.f32 %v5080, %v5235
      %v5237 = vpop.f32.mrf.mxu0
      %v5238 = vadd.f32 %v5082, %v5237
      %5239 = vmatmul.bf16.gmra.mxu0 %v4516
      %v5240 = vpop.f32.mrf.mxu0
      %v5241 = vadd.f32 %v5085, %v5240
      %v5242 = vpop.f32.mrf.mxu0
      %5243 = vmatmul.bf16.gmra.mxu0 %v4519
      %v5244 = vpop.f32.mrf.mxu0
      %v5245 = vadd.f32 %v5089, %v5244
      %v5246 = vpop.f32.mrf.mxu0
      %v5247 = vadd.f32 %v5091, %v5246
      %5248 = vmatmul.bf16.gmra.mxu0 %v4522
      %v5249 = vpop.f32.mrf.mxu0
      %v5250 = vadd.f32 %v5094, %v5249
      %v5251 = vpop.f32.mrf.mxu0
      %5252 = vmatmul.bf16.gmra.mxu0 %v4525
      %v5253 = vpop.f32.mrf.mxu0
      %v5254 = vadd.f32 %v5098, %v5253
      %v5255 = vpop.f32.mrf.mxu0
      %v5256 = vadd.f32 %v5100, %v5255
      %5257 = vmatmul.bf16.gmra.mxu0 %v4528
      %v5258 = vpop.f32.mrf.mxu0
      %v5259 = vadd.f32 %v5103, %v5258
      %v5260 = vpop.f32.mrf.mxu0
      %5261 = vmatmul.bf16.gmra.mxu0 %v4531
      %v5262 = vpop.f32.mrf.mxu0
      %v5263 = vadd.f32 %v5107, %v5262
      %v5264 = vpop.f32.mrf.mxu0
      %v5265 = vadd.f32 %v5109, %v5264
      %5266 = vmatmul.bf16.gmra.mxu0 %v4534
      %v5267 = vpop.f32.mrf.mxu0
      %v5268 = vadd.f32 %v5112, %v5267
      %v5269 = vpop.f32.mrf.mxu0
      %5270 = vmatmul.bf16.gmra.mxu0 %v4537
      %v5271 = vpop.f32.mrf.mxu0
      %v5272 = vadd.f32 %v5116, %v5271
      %v5273 = vpop.f32.mrf.mxu0
      %v5274 = vadd.f32 %v5118, %v5273
      %5275 = vmatmul.bf16.gmra.mxu0 %v4540
      %v5276 = vpop.f32.mrf.mxu0
      %v5277 = vadd.f32 %v5121, %v5276
      %v5278 = vpop.f32.mrf.mxu0
      %5279 = vmatmul.bf16.gmra.mxu0 %v4543
      %v5280 = vpop.f32.mrf.mxu0
      %v5281 = vadd.f32 %v5125, %v5280
      %v5282 = vpop.f32.mrf.mxu0
      %v5283 = vadd.f32 %v5127, %v5282
      %5284 = vmatmul.bf16.gmra.mxu0 %v4546
      %v5285 = vpop.f32.mrf.mxu0
      %v5286 = vadd.f32 %v5130, %v5285
      %v5287 = vpop.f32.mrf.mxu0
      %5288 = vmatmul.bf16.gmra.mxu0 %v4549
      %v5289 = vpop.f32.mrf.mxu0
      %v5290 = vadd.f32 %v5134, %v5289
      %v5291 = vpop.f32.mrf.mxu0
      %v5292 = vadd.f32 %v5136, %v5291
      %5293 = vmatmul.bf16.gmra.mxu0 %v4552
      %v5294 = vpop.f32.mrf.mxu0
      %v5295 = vadd.f32 %v5139, %v5294
      %v5296 = vpop.f32.mrf.mxu0
      %5297 = vmatmul.bf16.gmra.mxu0 %v4555
      %v5298 = vpop.f32.mrf.mxu0
      %v5299 = vadd.f32 %v5143, %v5298
      %v5300 = vpop.f32.mrf.mxu0
      %v5301 = vadd.f32 %v5145, %v5300
      %5302 = vmatmul.bf16.gmra.mxu0 %v4558
      %v5303 = vpop.f32.mrf.mxu0
      %v5304 = vadd.f32 %v5148, %v5303
      %v5305 = vpop.f32.mrf.mxu0
      %5306 = vmatmul.bf16.gmra.mxu0 %v4561
      %v5307 = vpop.f32.mrf.mxu0
      %v5308 = vadd.f32 %v5152, %v5307
      %v5309 = vpop.f32.mrf.mxu0
      %v5310 = vadd.f32 %v5154, %v5309
      %5311 = vmatmul.bf16.gmra.mxu0 %v4564
      %v5312 = vpop.f32.mrf.mxu0
      %v5313 = vadd.f32 %v5157, %v5312
      %v5314 = vpop.f32.mrf.mxu0
      %5315 = vmatmul.bf16.gmra.mxu0 %v4567
      %v5316 = vpop.f32.mrf.mxu0
      %v5317 = vadd.f32 %v5161, %v5316
      %v5318 = vpop.f32.mrf.mxu0
      %v5319 = vadd.f32 %v5163, %v5318
      %5320 = vmatmul.bf16.gmra.mxu0 %v4570
      %v5321 = vpop.f32.mrf.mxu0
      %v5322 = vadd.f32 %v5166, %v5321
      %v5323 = vpop.f32.mrf.mxu0
      %5324 = vmatmul.bf16.gmra.mxu0 %v4573
      %v5325 = vpop.f32.mrf.mxu0
      %v5326 = vadd.f32 %v5170, %v5325
      %v5327 = vpop.f32.mrf.mxu0
      %v5328 = vadd.f32 %v5172, %v5327
      %5329 = vmatmul.bf16.gmra.mxu0 %v4576
      %v5330 = vpop.f32.mrf.mxu0
      %v5331 = vadd.f32 %v5175, %v5330
      %v5332 = vpop.f32.mrf.mxu0
      %5333 = vmatmul.bf16.gmra.mxu0 %v4579
      %v5334 = vpop.f32.mrf.mxu0
      %v5335 = vadd.f32 %v5179, %v5334
      %v5336 = vpop.f32.mrf.mxu0
      %v5337 = vadd.f32 %v5181, %v5336
      %5338 = vmatmul.bf16.gmra.mxu0 %v4582
      %v5339 = vpop.f32.mrf.mxu0
      %v5340 = vadd.f32 %v5184, %v5339
      %v5341 = vpop.f32.mrf.mxu0
      %5342 = vmatmul.bf16.gmra.mxu0 %v4585
      %v5343 = vpop.f32.mrf.mxu0
      %v5344 = vadd.f32 %v5188, %v5343
      %v5345 = vpop.f32.mrf.mxu0
      %v5346 = vadd.f32 %v5190, %v5345
      %5347 = vmatmul.bf16.gmra.mxu0 %v4588
      %v5348 = vpop.f32.mrf.mxu0
      %v5349 = vadd.f32 %v5193, %v5348
      %v5350 = vpop.f32.mrf.mxu0
      %5351 = vmatmul.bf16.gmra.mxu0 %v4591
      %v5352 = vpop.f32.mrf.mxu0
      %v5353 = vadd.f32 %v5197, %v5352
      %v5354 = vpop.f32.mrf.mxu0
      %v5355 = vadd.f32 %v5199, %v5354
      %5356 = vmatmul.bf16.gmra.mxu0 %v4594
      %v5357 = vpop.f32.mrf.mxu0
      %v5358 = vadd.f32 %v5202, %v5357
      %v5359 = vpop.f32.mrf.mxu0
      %5360 = vmatmul.bf16.gmra.mxu0 %v4597
      %v5361 = vpop.f32.mrf.mxu0
      %v5362 = vadd.f32 %v5206, %v5361
      %v5363 = vpop.f32.mrf.mxu0
      %v5364 = vadd.f32 %v5208, %v5363
      %5365 = vmatmul.bf16.gmra.mxu0 %v4600
      %v5366 = vpop.f32.mrf.mxu0
      %v5367 = vadd.f32 %v5211, %v5366
      %v5368 = vpop.f32.mrf.mxu0
      %5369 = vdwg.mxu0
      %s5370 = scalar_lea.vmem [#allocation2], 32
      %v5371 = vld [vmem:[%s5370] sm:$0xf]
      %v5372 = vld [vmem:[%s5370 + $0x4] sm:$0xf]
      %v5373 = vld [vmem:[%s5370 + $0x8] sm:$0xf]
      %v5374 = vld [vmem:[%s5370 + $0xc] sm:$0xf]
      %v5375 = vld [vmem:[%s5370 + $0x10] sm:$0xf]
      %v5376 = vld [vmem:[%s5370 + $0x14] sm:$0xf]
      %v5377 = vld [vmem:[%s5370 + $0x18] sm:$0xf]
      %v5378 = vld [vmem:[%s5370 + $0x1c] sm:$0xf]
      %v5379 = vld [vmem:[%s5370 + $0x20] sm:$0xf]
      %v5380 = vld [vmem:[%s5370 + $0x24] sm:$0xf]
      %v5381 = vld [vmem:[%s5370 + $0x28] sm:$0xf]
      %v5382 = vld [vmem:[%s5370 + $0x2c] sm:$0xf]
      %v5383 = vld [vmem:[%s5370 + $0x30] sm:$0xf]
      %v5384 = vld [vmem:[%s5370 + $0x34] sm:$0xf]
      %v5385 = vld [vmem:[%s5370 + $0x38] sm:$0xf]
      %v5386 = vld [vmem:[%s5370 + $0x3c] sm:$0xf]
      %v5387 = vld [vmem:[%s5370 + $0x40] sm:$0xf]
      %v5388 = vld [vmem:[%s5370 + $0x44] sm:$0xf]
      %v5389 = vld [vmem:[%s5370 + $0x48] sm:$0xf]
      %v5390 = vld [vmem:[%s5370 + $0x4c] sm:$0xf]
      %v5391 = vld [vmem:[%s5370 + $0x50] sm:$0xf]
      %v5392 = vld [vmem:[%s5370 + $0x54] sm:$0xf]
      %v5393 = vld [vmem:[%s5370 + $0x58] sm:$0xf]
      %v5394 = vld [vmem:[%s5370 + $0x5c] sm:$0xf]
      %v5395 = vld [vmem:[%s5370 + $0x60] sm:$0xf]
      %v5396 = vld [vmem:[%s5370 + $0x64] sm:$0xf]
      %v5397 = vld [vmem:[%s5370 + $0x68] sm:$0xf]
      %v5398 = vld [vmem:[%s5370 + $0x6c] sm:$0xf]
      %v5399 = vld [vmem:[%s5370 + $0x70] sm:$0xf]
      %v5400 = vld [vmem:[%s5370 + $0x74] sm:$0xf]
      %v5401 = vld [vmem:[%s5370 + $0x78] sm:$0xf]
      %v5402 = vld [vmem:[%s5370 + $0x7c] sm:$0xf]
      %v5403 = vld [vmem:[%s5370 + $0x80] sm:$0xf]
      %v5404 = vld [vmem:[%s5370 + $0x84] sm:$0xf]
      %v5405 = vld [vmem:[%s5370 + $0x88] sm:$0xf]
      %v5406 = vld [vmem:[%s5370 + $0x8c] sm:$0xf]
      %v5407 = vld [vmem:[%s5370 + $0x90] sm:$0xf]
      %v5408 = vld [vmem:[%s5370 + $0x94] sm:$0xf]
      %v5409 = vld [vmem:[%s5370 + $0x98] sm:$0xf]
      %v5410 = vld [vmem:[%s5370 + $0x9c] sm:$0xf]
      %v5411 = vld [vmem:[%s5370 + $0xa0] sm:$0xf]
      %v5412 = vld [vmem:[%s5370 + $0xa4] sm:$0xf]
      %v5413 = vld [vmem:[%s5370 + $0xa8] sm:$0xf]
      %v5414 = vld [vmem:[%s5370 + $0xac] sm:$0xf]
      %v5415 = vld [vmem:[%s5370 + $0xb0] sm:$0xf]
      %v5416 = vld [vmem:[%s5370 + $0xb4] sm:$0xf]
      %v5417 = vld [vmem:[%s5370 + $0xb8] sm:$0xf]
      %v5418 = vld [vmem:[%s5370 + $0xbc] sm:$0xf]
      %v5419 = vld [vmem:[%s5370 + $0xc0] sm:$0xf]
      %v5420 = vld [vmem:[%s5370 + $0xc4] sm:$0xf]
      %v5421 = vld [vmem:[%s5370 + $0xc8] sm:$0xf]
      %v5422 = vld [vmem:[%s5370 + $0xcc] sm:$0xf]
      %v5423 = vld [vmem:[%s5370 + $0xd0] sm:$0xf]
      %v5424 = vld [vmem:[%s5370 + $0xd4] sm:$0xf]
      %v5425 = vld [vmem:[%s5370 + $0xd8] sm:$0xf]
      %v5426 = vld [vmem:[%s5370 + $0xdc] sm:$0xf]
      %v5427 = vld [vmem:[%s5370 + $0xe0] sm:$0xf]
      %v5428 = vld [vmem:[%s5370 + $0xe4] sm:$0xf]
      %v5429 = vld [vmem:[%s5370 + $0xe8] sm:$0xf]
      %v5430 = vld [vmem:[%s5370 + $0xec] sm:$0xf]
      %v5431 = vld [vmem:[%s5370 + $0xf0] sm:$0xf]
      %v5432 = vld [vmem:[%s5370 + $0xf4] sm:$0xf]
      %v5433 = vld [vmem:[%s5370 + $0xf8] sm:$0xf]
      %v5434 = vld [vmem:[%s5370 + $0xfc] sm:$0xf]
      %s5435 = scalar_lea.vmem %s4, 24
      %v5436 = vld [vmem:[%s5435] sm:$0xf]
      %v5501 = vunpack.c.l.b16 %v5371
      %v5502 = vunpack.c.l.b16 %v5372
      %v5503 = vunpack.c.l.b16 %v5373
      %v5504 = vunpack.c.l.b16 %v5374
      %v5505 = vunpack.c.l.b16 %v5375
      %v5506 = vunpack.c.l.b16 %v5376
      %v5507 = vunpack.c.l.b16 %v5377
      %v5508 = vunpack.c.l.b16 %v5378
      %v5509 = vunpack.c.l.b16 %v5379
      %v5510 = vunpack.c.l.b16 %v5380
      %v5511 = vunpack.c.l.b16 %v5381
      %v5512 = vunpack.c.l.b16 %v5382
      %v5513 = vunpack.c.l.b16 %v5383
      %v5514 = vunpack.c.l.b16 %v5384
      %v5515 = vunpack.c.l.b16 %v5385
      %v5516 = vunpack.c.l.b16 %v5386
      %v5517 = vunpack.c.l.b16 %v5387
      %v5518 = vunpack.c.l.b16 %v5388
      %v5519 = vunpack.c.l.b16 %v5389
      %v5520 = vunpack.c.l.b16 %v5390
      %v5521 = vunpack.c.l.b16 %v5391
      %v5522 = vunpack.c.l.b16 %v5392
      %v5523 = vunpack.c.l.b16 %v5393
      %v5524 = vunpack.c.l.b16 %v5394
      %v5525 = vunpack.c.l.b16 %v5395
      %v5526 = vunpack.c.l.b16 %v5396
      %v5527 = vunpack.c.l.b16 %v5397
      %v5528 = vunpack.c.l.b16 %v5398
      %v5529 = vunpack.c.l.b16 %v5399
      %v5530 = vunpack.c.l.b16 %v5400
      %v5531 = vunpack.c.l.b16 %v5401
      %v5532 = vunpack.c.l.b16 %v5402
      %v5533 = vunpack.c.l.b16 %v5403
      %v5534 = vunpack.c.l.b16 %v5404
      %v5535 = vunpack.c.l.b16 %v5405
      %v5536 = vunpack.c.l.b16 %v5406
      %v5537 = vunpack.c.l.b16 %v5407
      %v5538 = vunpack.c.l.b16 %v5408
      %v5539 = vunpack.c.l.b16 %v5409
      %v5540 = vunpack.c.l.b16 %v5410
      %v5541 = vunpack.c.l.b16 %v5411
      %v5542 = vunpack.c.l.b16 %v5412
      %v5543 = vunpack.c.l.b16 %v5413
      %v5544 = vunpack.c.l.b16 %v5414
      %v5545 = vunpack.c.l.b16 %v5415
      %v5546 = vunpack.c.l.b16 %v5416
      %v5547 = vunpack.c.l.b16 %v5417
      %v5548 = vunpack.c.l.b16 %v5418
      %v5549 = vunpack.c.l.b16 %v5419
      %v5550 = vunpack.c.l.b16 %v5420
      %v5551 = vunpack.c.l.b16 %v5421
      %v5552 = vunpack.c.l.b16 %v5422
      %v5553 = vunpack.c.l.b16 %v5423
      %v5554 = vunpack.c.l.b16 %v5424
      %v5555 = vunpack.c.l.b16 %v5425
      %v5556 = vunpack.c.l.b16 %v5426
      %v5557 = vunpack.c.l.b16 %v5427
      %v5558 = vunpack.c.l.b16 %v5428
      %v5559 = vunpack.c.l.b16 %v5429
      %v5560 = vunpack.c.l.b16 %v5430
      %v5561 = vunpack.c.l.b16 %v5431
      %v5562 = vunpack.c.l.b16 %v5432
      %v5563 = vunpack.c.l.b16 %v5433
      %v5564 = vunpack.c.l.b16 %v5434
      %v5565 = vpack.c.b16 %v5502, %v5501
      %v5566 = vpack.c.b16 %v5504, %v5503
      %v5567 = vpack.c.b16 %v5506, %v5505
      %v5568 = vpack.c.b16 %v5508, %v5507
      %v5569 = vpack.c.b16 %v5510, %v5509
      %v5570 = vpack.c.b16 %v5512, %v5511
      %v5571 = vpack.c.b16 %v5514, %v5513
      %v5572 = vpack.c.b16 %v5516, %v5515
      %v5573 = vpack.c.b16 %v5518, %v5517
      %v5574 = vpack.c.b16 %v5520, %v5519
      %v5575 = vpack.c.b16 %v5522, %v5521
      %v5576 = vpack.c.b16 %v5524, %v5523
      %v5577 = vpack.c.b16 %v5526, %v5525
      %v5578 = vpack.c.b16 %v5528, %v5527
      %v5579 = vpack.c.b16 %v5530, %v5529
      %v5580 = vpack.c.b16 %v5532, %v5531
      %v5581 = vpack.c.b16 %v5534, %v5533
      %v5582 = vpack.c.b16 %v5536, %v5535
      %v5583 = vpack.c.b16 %v5538, %v5537
      %v5584 = vpack.c.b16 %v5540, %v5539
      %v5585 = vpack.c.b16 %v5542, %v5541
      %v5586 = vpack.c.b16 %v5544, %v5543
      %v5587 = vpack.c.b16 %v5546, %v5545
      %v5588 = vpack.c.b16 %v5548, %v5547
      %v5589 = vpack.c.b16 %v5550, %v5549
      %v5590 = vpack.c.b16 %v5552, %v5551
      %v5591 = vpack.c.b16 %v5554, %v5553
      %v5592 = vpack.c.b16 %v5556, %v5555
      %v5593 = vpack.c.b16 %v5558, %v5557
      %v5594 = vpack.c.b16 %v5560, %v5559
      %v5595 = vpack.c.b16 %v5562, %v5561
      %v5596 = vpack.c.b16 %v5564, %v5563
      %v5598 = vsel %vm576, %v5565, 0
      %v5601 = vsel %vm576, %v5566, 0
      %v5604 = vsel %vm576, %v5567, 0
      %v5607 = vsel %vm576, %v5568, 0
      %v5610 = vsel %vm576, %v5569, 0
      %v5613 = vsel %vm576, %v5570, 0
      %v5616 = vsel %vm576, %v5571, 0
      %v5619 = vsel %vm576, %v5572, 0
      %v5622 = vsel %vm576, %v5573, 0
      %v5625 = vsel %vm576, %v5574, 0
      %v5628 = vsel %vm576, %v5575, 0
      %v5631 = vsel %vm576, %v5576, 0
      %v5634 = vsel %vm576, %v5577, 0
      %v5637 = vsel %vm576, %v5578, 0
      %v5640 = vsel %vm576, %v5579, 0
      %v5643 = vsel %vm576, %v5580, 0
      %v5646 = vsel %vm576, %v5581, 0
      %v5649 = vsel %vm576, %v5582, 0
      %v5652 = vsel %vm576, %v5583, 0
      %v5655 = vsel %vm576, %v5584, 0
      %v5658 = vsel %vm576, %v5585, 0
      %v5661 = vsel %vm576, %v5586, 0
      %v5664 = vsel %vm576, %v5587, 0
      %v5667 = vsel %vm576, %v5588, 0
      %v5670 = vsel %vm576, %v5589, 0
      %v5673 = vsel %vm576, %v5590, 0
      %v5676 = vsel %vm576, %v5591, 0
      %v5679 = vsel %vm576, %v5592, 0
      %v5682 = vsel %vm576, %v5593, 0
      %v5685 = vsel %vm576, %v5594, 0
      %v5688 = vsel %vm576, %v5595, 0
      %v5691 = vsel %vm576, %v5596, 0
      %v5694 = vsel %vm673, %v5436, 0
      %5696 = vmatpush.bf16.msra.mxu0 0
      %5697 = vmatpush.bf16.msra.mxu0 0
      %5698 = vmatpush.bf16.msra.mxu0 0
      %5699 = vmatpush.bf16.msra.mxu0 0
      %5700 = vmatpush.bf16.msra.mxu0 0
      %5701 = vmatpush.bf16.msra.mxu0 0
      %5702 = vmatpush.bf16.msra.mxu0 0
      %5703 = vmatpush.bf16.msra.mxu0 %v5694
      %5704 = vmatmul.bf16.gmra.mxu0 %v5598
      %v5705 = vpop.f32.mrf.mxu0
      %v5706 = vadd.f32 0.0, %v5705
      %v5707 = vpop.f32.mrf.mxu0
      %v5708 = vadd.f32 0.0, %v5707
      %5709 = vmatmul.bf16.gmra.mxu0 %v5601
      %v5710 = vpop.f32.mrf.mxu0
      %v5711 = vpop.f32.mrf.mxu0
      %5712 = vmatmul.bf16.gmra.mxu0 %v5604
      %v5713 = vpop.f32.mrf.mxu0
      %v5714 = vadd.f32 0.0, %v5713
      %v5715 = vpop.f32.mrf.mxu0
      %v5716 = vadd.f32 0.0, %v5715
      %5717 = vmatmul.bf16.gmra.mxu0 %v5607
      %v5718 = vpop.f32.mrf.mxu0
      %v5719 = vpop.f32.mrf.mxu0
      %5720 = vmatmul.bf16.gmra.mxu0 %v5610
      %v5721 = vpop.f32.mrf.mxu0
      %v5722 = vadd.f32 0.0, %v5721
      %v5723 = vpop.f32.mrf.mxu0
      %v5724 = vadd.f32 0.0, %v5723
      %5725 = vmatmul.bf16.gmra.mxu0 %v5613
      %v5726 = vpop.f32.mrf.mxu0
      %v5727 = vpop.f32.mrf.mxu0
      %5728 = vmatmul.bf16.gmra.mxu0 %v5616
      %v5729 = vpop.f32.mrf.mxu0
      %v5730 = vadd.f32 0.0, %v5729
      %v5731 = vpop.f32.mrf.mxu0
      %v5732 = vadd.f32 0.0, %v5731
      %5733 = vmatmul.bf16.gmra.mxu0 %v5619
      %v5734 = vpop.f32.mrf.mxu0
      %v5735 = vpop.f32.mrf.mxu0
      %5736 = vmatmul.bf16.gmra.mxu0 %v5622
      %v5737 = vpop.f32.mrf.mxu0
      %v5738 = vadd.f32 0.0, %v5737
      %v5739 = vpop.f32.mrf.mxu0
      %v5740 = vadd.f32 0.0, %v5739
      %5741 = vmatmul.bf16.gmra.mxu0 %v5625
      %v5742 = vpop.f32.mrf.mxu0
      %v5743 = vpop.f32.mrf.mxu0
      %5744 = vmatmul.bf16.gmra.mxu0 %v5628
      %v5745 = vpop.f32.mrf.mxu0
      %v5746 = vadd.f32 0.0, %v5745
      %v5747 = vpop.f32.mrf.mxu0
      %v5748 = vadd.f32 0.0, %v5747
      %5749 = vmatmul.bf16.gmra.mxu0 %v5631
      %v5750 = vpop.f32.mrf.mxu0
      %v5751 = vpop.f32.mrf.mxu0
      %5752 = vmatmul.bf16.gmra.mxu0 %v5634
      %v5753 = vpop.f32.mrf.mxu0
      %v5754 = vadd.f32 0.0, %v5753
      %v5755 = vpop.f32.mrf.mxu0
      %v5756 = vadd.f32 0.0, %v5755
      %5757 = vmatmul.bf16.gmra.mxu0 %v5637
      %v5758 = vpop.f32.mrf.mxu0
      %v5759 = vpop.f32.mrf.mxu0
      %5760 = vmatmul.bf16.gmra.mxu0 %v5640
      %v5761 = vpop.f32.mrf.mxu0
      %v5762 = vadd.f32 0.0, %v5761
      %v5763 = vpop.f32.mrf.mxu0
      %v5764 = vadd.f32 0.0, %v5763
      %5765 = vmatmul.bf16.gmra.mxu0 %v5643
      %v5766 = vpop.f32.mrf.mxu0
      %v5767 = vpop.f32.mrf.mxu0
      %5768 = vmatmul.bf16.gmra.mxu0 %v5646
      %v5769 = vpop.f32.mrf.mxu0
      %v5770 = vadd.f32 0.0, %v5769
      %v5771 = vpop.f32.mrf.mxu0
      %v5772 = vadd.f32 0.0, %v5771
      %5773 = vmatmul.bf16.gmra.mxu0 %v5649
      %v5774 = vpop.f32.mrf.mxu0
      %v5775 = vpop.f32.mrf.mxu0
      %5776 = vmatmul.bf16.gmra.mxu0 %v5652
      %v5777 = vpop.f32.mrf.mxu0
      %v5778 = vadd.f32 0.0, %v5777
      %v5779 = vpop.f32.mrf.mxu0
      %v5780 = vadd.f32 0.0, %v5779
      %5781 = vmatmul.bf16.gmra.mxu0 %v5655
      %v5782 = vpop.f32.mrf.mxu0
      %v5783 = vpop.f32.mrf.mxu0
      %5784 = vmatmul.bf16.gmra.mxu0 %v5658
      %v5785 = vpop.f32.mrf.mxu0
      %v5786 = vadd.f32 0.0, %v5785
      %v5787 = vpop.f32.mrf.mxu0
      %v5788 = vadd.f32 0.0, %v5787
      %5789 = vmatmul.bf16.gmra.mxu0 %v5661
      %v5790 = vpop.f32.mrf.mxu0
      %v5791 = vpop.f32.mrf.mxu0
      %5792 = vmatmul.bf16.gmra.mxu0 %v5664
      %v5793 = vpop.f32.mrf.mxu0
      %v5794 = vadd.f32 0.0, %v5793
      %v5795 = vpop.f32.mrf.mxu0
      %v5796 = vadd.f32 0.0, %v5795
      %5797 = vmatmul.bf16.gmra.mxu0 %v5667
      %v5798 = vpop.f32.mrf.mxu0
      %v5799 = vpop.f32.mrf.mxu0
      %5800 = vmatmul.bf16.gmra.mxu0 %v5670
      %v5801 = vpop.f32.mrf.mxu0
      %v5802 = vadd.f32 0.0, %v5801
      %v5803 = vpop.f32.mrf.mxu0
      %v5804 = vadd.f32 0.0, %v5803
      %5805 = vmatmul.bf16.gmra.mxu0 %v5673
      %v5806 = vpop.f32.mrf.mxu0
      %v5807 = vpop.f32.mrf.mxu0
      %5808 = vmatmul.bf16.gmra.mxu0 %v5676
      %v5809 = vpop.f32.mrf.mxu0
      %v5810 = vadd.f32 0.0, %v5809
      %v5811 = vpop.f32.mrf.mxu0
      %v5812 = vadd.f32 0.0, %v5811
      %5813 = vmatmul.bf16.gmra.mxu0 %v5679
      %v5814 = vpop.f32.mrf.mxu0
      %v5815 = vpop.f32.mrf.mxu0
      %5816 = vmatmul.bf16.gmra.mxu0 %v5682
      %v5817 = vpop.f32.mrf.mxu0
      %v5818 = vadd.f32 0.0, %v5817
      %v5819 = vpop.f32.mrf.mxu0
      %v5820 = vadd.f32 0.0, %v5819
      %5821 = vmatmul.bf16.gmra.mxu0 %v5685
      %v5822 = vpop.f32.mrf.mxu0
      %v5823 = vpop.f32.mrf.mxu0
      %5824 = vmatmul.bf16.gmra.mxu0 %v5688
      %v5825 = vpop.f32.mrf.mxu0
      %v5826 = vadd.f32 0.0, %v5825
      %v5827 = vpop.f32.mrf.mxu0
      %v5828 = vadd.f32 0.0, %v5827
      %5829 = vmatmul.bf16.gmra.mxu0 %v5691
      %v5830 = vpop.f32.mrf.mxu0
      %v5831 = vpop.f32.mrf.mxu0
      %5832 = vdwg.mxu0
      %v5833 = vadd.f32 %v4615, %v5706
      %v5834 = vadd.f32 %v4617, %v5708
      %v5835 = vadd.f32 %v4623, %v5714
      %v5836 = vadd.f32 %v4625, %v5716
      %v5837 = vadd.f32 %v4631, %v5722
      %v5838 = vadd.f32 %v4633, %v5724
      %v5839 = vadd.f32 %v4639, %v5730
      %v5840 = vadd.f32 %v4641, %v5732
      %v5841 = vadd.f32 %v4647, %v5738
      %v5842 = vadd.f32 %v4649, %v5740
      %v5843 = vadd.f32 %v4655, %v5746
      %v5844 = vadd.f32 %v4657, %v5748
      %v5845 = vadd.f32 %v4663, %v5754
      %v5846 = vadd.f32 %v4665, %v5756
      %v5847 = vadd.f32 %v4671, %v5762
      %v5848 = vadd.f32 %v4673, %v5764
      %v5849 = vadd.f32 %v4679, %v5770
      %v5850 = vadd.f32 %v4681, %v5772
      %v5851 = vadd.f32 %v4687, %v5778
      %v5852 = vadd.f32 %v4689, %v5780
      %v5853 = vadd.f32 %v4695, %v5786
      %v5854 = vadd.f32 %v4697, %v5788
      %v5855 = vadd.f32 %v4703, %v5794
      %v5856 = vadd.f32 %v4705, %v5796
      %v5857 = vadd.f32 %v4711, %v5802
      %v5858 = vadd.f32 %v4713, %v5804
      %v5859 = vadd.f32 %v4719, %v5810
      %v5860 = vadd.f32 %v4721, %v5812
      %v5861 = vadd.f32 %v4727, %v5818
      %v5862 = vadd.f32 %v4729, %v5820
      %v5863 = vadd.f32 %v4735, %v5826
      %v5864 = vadd.f32 %v4737, %v5828
      %s5865 = scalar_lea.vmem %s4, 28
      %v5866 = vld [vmem:[%s5865] sm:$0xf]
      %v5868 = vsel %vm673, %v5866, 0
      %5870 = vmatpush.bf16.msra.mxu0 0
      %5871 = vmatpush.bf16.msra.mxu0 0
      %5872 = vmatpush.bf16.msra.mxu0 0
      %5873 = vmatpush.bf16.msra.mxu0 0
      %5874 = vmatpush.bf16.msra.mxu0 0
      %5875 = vmatpush.bf16.msra.mxu0 0
      %5876 = vmatpush.bf16.msra.mxu0 0
      %5877 = vmatpush.bf16.msra.mxu0 %v5868
      %5878 = vmatmul.bf16.gmra.mxu0 %v5598
      %v5879 = vpop.f32.mrf.mxu0
      %v5880 = vadd.f32 0.0, %v5879
      %v5881 = vpop.f32.mrf.mxu0
      %v5882 = vadd.f32 0.0, %v5881
      %5883 = vmatmul.bf16.gmra.mxu0 %v5601
      %v5884 = vpop.f32.mrf.mxu0
      %v5885 = vadd.f32 0.0, %v5884
      %v5886 = vpop.f32.mrf.mxu0
      %5887 = vmatmul.bf16.gmra.mxu0 %v5604
      %v5888 = vpop.f32.mrf.mxu0
      %v5889 = vadd.f32 0.0, %v5888
      %v5890 = vpop.f32.mrf.mxu0
      %v5891 = vadd.f32 0.0, %v5890
      %5892 = vmatmul.bf16.gmra.mxu0 %v5607
      %v5893 = vpop.f32.mrf.mxu0
      %v5894 = vadd.f32 0.0, %v5893
      %v5895 = vpop.f32.mrf.mxu0
      %5896 = vmatmul.bf16.gmra.mxu0 %v5610
      %v5897 = vpop.f32.mrf.mxu0
      %v5898 = vadd.f32 0.0, %v5897
      %v5899 = vpop.f32.mrf.mxu0
      %v5900 = vadd.f32 0.0, %v5899
      %5901 = vmatmul.bf16.gmra.mxu0 %v5613
      %v5902 = vpop.f32.mrf.mxu0
      %v5903 = vadd.f32 0.0, %v5902
      %v5904 = vpop.f32.mrf.mxu0
      %5905 = vmatmul.bf16.gmra.mxu0 %v5616
      %v5906 = vpop.f32.mrf.mxu0
      %v5907 = vadd.f32 0.0, %v5906
      %v5908 = vpop.f32.mrf.mxu0
      %v5909 = vadd.f32 0.0, %v5908
      %5910 = vmatmul.bf16.gmra.mxu0 %v5619
      %v5911 = vpop.f32.mrf.mxu0
      %v5912 = vadd.f32 0.0, %v5911
      %v5913 = vpop.f32.mrf.mxu0
      %5914 = vmatmul.bf16.gmra.mxu0 %v5622
      %v5915 = vpop.f32.mrf.mxu0
      %v5916 = vadd.f32 0.0, %v5915
      %v5917 = vpop.f32.mrf.mxu0
      %v5918 = vadd.f32 0.0, %v5917
      %5919 = vmatmul.bf16.gmra.mxu0 %v5625
      %v5920 = vpop.f32.mrf.mxu0
      %v5921 = vadd.f32 0.0, %v5920
      %v5922 = vpop.f32.mrf.mxu0
      %5923 = vmatmul.bf16.gmra.mxu0 %v5628
      %v5924 = vpop.f32.mrf.mxu0
      %v5925 = vadd.f32 0.0, %v5924
      %v5926 = vpop.f32.mrf.mxu0
      %v5927 = vadd.f32 0.0, %v5926
      %5928 = vmatmul.bf16.gmra.mxu0 %v5631
      %v5929 = vpop.f32.mrf.mxu0
      %v5930 = vadd.f32 0.0, %v5929
      %v5931 = vpop.f32.mrf.mxu0
      %5932 = vmatmul.bf16.gmra.mxu0 %v5634
      %v5933 = vpop.f32.mrf.mxu0
      %v5934 = vadd.f32 0.0, %v5933
      %v5935 = vpop.f32.mrf.mxu0
      %v5936 = vadd.f32 0.0, %v5935
      %5937 = vmatmul.bf16.gmra.mxu0 %v5637
      %v5938 = vpop.f32.mrf.mxu0
      %v5939 = vadd.f32 0.0, %v5938
      %v5940 = vpop.f32.mrf.mxu0
      %5941 = vmatmul.bf16.gmra.mxu0 %v5640
      %v5942 = vpop.f32.mrf.mxu0
      %v5943 = vadd.f32 0.0, %v5942
      %v5944 = vpop.f32.mrf.mxu0
      %v5945 = vadd.f32 0.0, %v5944
      %5946 = vmatmul.bf16.gmra.mxu0 %v5643
      %v5947 = vpop.f32.mrf.mxu0
      %v5948 = vadd.f32 0.0, %v5947
      %v5949 = vpop.f32.mrf.mxu0
      %5950 = vmatmul.bf16.gmra.mxu0 %v5646
      %v5951 = vpop.f32.mrf.mxu0
      %v5952 = vadd.f32 0.0, %v5951
      %v5953 = vpop.f32.mrf.mxu0
      %v5954 = vadd.f32 0.0, %v5953
      %5955 = vmatmul.bf16.gmra.mxu0 %v5649
      %v5956 = vpop.f32.mrf.mxu0
      %v5957 = vadd.f32 0.0, %v5956
      %v5958 = vpop.f32.mrf.mxu0
      %5959 = vmatmul.bf16.gmra.mxu0 %v5652
      %v5960 = vpop.f32.mrf.mxu0
      %v5961 = vadd.f32 0.0, %v5960
      %v5962 = vpop.f32.mrf.mxu0
      %v5963 = vadd.f32 0.0, %v5962
      %5964 = vmatmul.bf16.gmra.mxu0 %v5655
      %v5965 = vpop.f32.mrf.mxu0
      %v5966 = vadd.f32 0.0, %v5965
      %v5967 = vpop.f32.mrf.mxu0
      %5968 = vmatmul.bf16.gmra.mxu0 %v5658
      %v5969 = vpop.f32.mrf.mxu0
      %v5970 = vadd.f32 0.0, %v5969
      %v5971 = vpop.f32.mrf.mxu0
      %v5972 = vadd.f32 0.0, %v5971
      %5973 = vmatmul.bf16.gmra.mxu0 %v5661
      %v5974 = vpop.f32.mrf.mxu0
      %v5975 = vadd.f32 0.0, %v5974
      %v5976 = vpop.f32.mrf.mxu0
      %5977 = vmatmul.bf16.gmra.mxu0 %v5664
      %v5978 = vpop.f32.mrf.mxu0
      %v5979 = vadd.f32 0.0, %v5978
      %v5980 = vpop.f32.mrf.mxu0
      %v5981 = vadd.f32 0.0, %v5980
      %5982 = vmatmul.bf16.gmra.mxu0 %v5667
      %v5983 = vpop.f32.mrf.mxu0
      %v5984 = vadd.f32 0.0, %v5983
      %v5985 = vpop.f32.mrf.mxu0
      %5986 = vmatmul.bf16.gmra.mxu0 %v5670
      %v5987 = vpop.f32.mrf.mxu0
      %v5988 = vadd.f32 0.0, %v5987
      %v5989 = vpop.f32.mrf.mxu0
      %v5990 = vadd.f32 0.0, %v5989
      %5991 = vmatmul.bf16.gmra.mxu0 %v5673
      %v5992 = vpop.f32.mrf.mxu0
      %v5993 = vadd.f32 0.0, %v5992
      %v5994 = vpop.f32.mrf.mxu0
      %5995 = vmatmul.bf16.gmra.mxu0 %v5676
      %v5996 = vpop.f32.mrf.mxu0
      %v5997 = vadd.f32 0.0, %v5996
      %v5998 = vpop.f32.mrf.mxu0
      %v5999 = vadd.f32 0.0, %v5998
      %6000 = vmatmul.bf16.gmra.mxu0 %v5679
      %v6001 = vpop.f32.mrf.mxu0
      %v6002 = vadd.f32 0.0, %v6001
      %v6003 = vpop.f32.mrf.mxu0
      %6004 = vmatmul.bf16.gmra.mxu0 %v5682
      %v6005 = vpop.f32.mrf.mxu0
      %v6006 = vadd.f32 0.0, %v6005
      %v6007 = vpop.f32.mrf.mxu0
      %v6008 = vadd.f32 0.0, %v6007
      %6009 = vmatmul.bf16.gmra.mxu0 %v5685
      %v6010 = vpop.f32.mrf.mxu0
      %v6011 = vadd.f32 0.0, %v6010
      %v6012 = vpop.f32.mrf.mxu0
      %6013 = vmatmul.bf16.gmra.mxu0 %v5688
      %v6014 = vpop.f32.mrf.mxu0
      %v6015 = vadd.f32 0.0, %v6014
      %v6016 = vpop.f32.mrf.mxu0
      %v6017 = vadd.f32 0.0, %v6016
      %6018 = vmatmul.bf16.gmra.mxu0 %v5691
      %v6019 = vpop.f32.mrf.mxu0
      %v6020 = vadd.f32 0.0, %v6019
      %v6021 = vpop.f32.mrf.mxu0
      %6022 = vdwg.mxu0
      %v6023 = vadd.f32 %v4913, %v5880
      %v6024 = vadd.f32 %v4915, %v5882
      %v6025 = vadd.f32 %v4918, %v5885
      %v6026 = vadd.f32 %v4922, %v5889
      %v6027 = vadd.f32 %v4924, %v5891
      %v6028 = vadd.f32 %v4927, %v5894
      %v6029 = vadd.f32 %v4931, %v5898
      %v6030 = vadd.f32 %v4933, %v5900
      %v6031 = vadd.f32 %v4936, %v5903
      %v6032 = vadd.f32 %v4940, %v5907
      %v6033 = vadd.f32 %v4942, %v5909
      %v6034 = vadd.f32 %v4945, %v5912
      %v6035 = vadd.f32 %v4949, %v5916
      %v6036 = vadd.f32 %v4951, %v5918
      %v6037 = vadd.f32 %v4954, %v5921
      %v6038 = vadd.f32 %v4958, %v5925
      %v6039 = vadd.f32 %v4960, %v5927
      %v6040 = vadd.f32 %v4963, %v5930
      %v6041 = vadd.f32 %v4967, %v5934
      %v6042 = vadd.f32 %v4969, %v5936
      %v6043 = vadd.f32 %v4972, %v5939
      %v6044 = vadd.f32 %v4976, %v5943
      %v6045 = vadd.f32 %v4978, %v5945
      %v6046 = vadd.f32 %v4981, %v5948
      %v6047 = vadd.f32 %v4985, %v5952
      %v6048 = vadd.f32 %v4987, %v5954
      %v6049 = vadd.f32 %v4990, %v5957
      %v6050 = vadd.f32 %v4994, %v5961
      %v6051 = vadd.f32 %v4996, %v5963
      %v6052 = vadd.f32 %v4999, %v5966
      %v6053 = vadd.f32 %v5003, %v5970
      %v6054 = vadd.f32 %v5005, %v5972
      %v6055 = vadd.f32 %v5008, %v5975
      %v6056 = vadd.f32 %v5012, %v5979
      %v6057 = vadd.f32 %v5014, %v5981
      %v6058 = vadd.f32 %v5017, %v5984
      %v6059 = vadd.f32 %v5021, %v5988
      %v6060 = vadd.f32 %v5023, %v5990
      %v6061 = vadd.f32 %v5026, %v5993
      %v6062 = vadd.f32 %v5030, %v5997
      %v6063 = vadd.f32 %v5032, %v5999
      %v6064 = vadd.f32 %v5035, %v6002
      %v6065 = vadd.f32 %v5039, %v6006
      %v6066 = vadd.f32 %v5041, %v6008
      %v6067 = vadd.f32 %v5044, %v6011
      %v6068 = vadd.f32 %v5048, %v6015
      %v6069 = vadd.f32 %v5050, %v6017
      %v6070 = vadd.f32 %v5053, %v6020
      %s6071 = scalar_lea.vmem %s4, 32
      %v6072 = vld [vmem:[%s6071] sm:$0xf]
      %v6074 = vsel %vm673, %v6072, 0
      %6076 = vmatpush.bf16.msra.mxu0 0
      %6077 = vmatpush.bf16.msra.mxu0 0
      %6078 = vmatpush.bf16.msra.mxu0 0
      %6079 = vmatpush.bf16.msra.mxu0 0
      %6080 = vmatpush.bf16.msra.mxu0 0
      %6081 = vmatpush.bf16.msra.mxu0 0
      %6082 = vmatpush.bf16.msra.mxu0 0
      %6083 = vmatpush.bf16.msra.mxu0 %v6074
      %6084 = vmatmul.bf16.gmra.mxu0 %v5598
      %v6085 = vpop.f32.mrf.mxu0
      %v6086 = vadd.f32 0.0, %v6085
      %v6087 = vpop.f32.mrf.mxu0
      %v6088 = vadd.f32 0.0, %v6087
      %6089 = vmatmul.bf16.gmra.mxu0 %v5601
      %v6090 = vpop.f32.mrf.mxu0
      %v6091 = vadd.f32 0.0, %v6090
      %v6092 = vpop.f32.mrf.mxu0
      %6093 = vmatmul.bf16.gmra.mxu0 %v5604
      %v6094 = vpop.f32.mrf.mxu0
      %v6095 = vadd.f32 0.0, %v6094
      %v6096 = vpop.f32.mrf.mxu0
      %v6097 = vadd.f32 0.0, %v6096
      %6098 = vmatmul.bf16.gmra.mxu0 %v5607
      %v6099 = vpop.f32.mrf.mxu0
      %v6100 = vadd.f32 0.0, %v6099
      %v6101 = vpop.f32.mrf.mxu0
      %6102 = vmatmul.bf16.gmra.mxu0 %v5610
      %v6103 = vpop.f32.mrf.mxu0
      %v6104 = vadd.f32 0.0, %v6103
      %v6105 = vpop.f32.mrf.mxu0
      %v6106 = vadd.f32 0.0, %v6105
      %6107 = vmatmul.bf16.gmra.mxu0 %v5613
      %v6108 = vpop.f32.mrf.mxu0
      %v6109 = vadd.f32 0.0, %v6108
      %v6110 = vpop.f32.mrf.mxu0
      %6111 = vmatmul.bf16.gmra.mxu0 %v5616
      %v6112 = vpop.f32.mrf.mxu0
      %v6113 = vadd.f32 0.0, %v6112
      %v6114 = vpop.f32.mrf.mxu0
      %v6115 = vadd.f32 0.0, %v6114
      %6116 = vmatmul.bf16.gmra.mxu0 %v5619
      %v6117 = vpop.f32.mrf.mxu0
      %v6118 = vadd.f32 0.0, %v6117
      %v6119 = vpop.f32.mrf.mxu0
      %6120 = vmatmul.bf16.gmra.mxu0 %v5622
      %v6121 = vpop.f32.mrf.mxu0
      %v6122 = vadd.f32 0.0, %v6121
      %v6123 = vpop.f32.mrf.mxu0
      %v6124 = vadd.f32 0.0, %v6123
      %6125 = vmatmul.bf16.gmra.mxu0 %v5625
      %v6126 = vpop.f32.mrf.mxu0
      %v6127 = vadd.f32 0.0, %v6126
      %v6128 = vpop.f32.mrf.mxu0
      %6129 = vmatmul.bf16.gmra.mxu0 %v5628
      %v6130 = vpop.f32.mrf.mxu0
      %v6131 = vadd.f32 0.0, %v6130
      %v6132 = vpop.f32.mrf.mxu0
      %v6133 = vadd.f32 0.0, %v6132
      %6134 = vmatmul.bf16.gmra.mxu0 %v5631
      %v6135 = vpop.f32.mrf.mxu0
      %v6136 = vadd.f32 0.0, %v6135
      %v6137 = vpop.f32.mrf.mxu0
      %6138 = vmatmul.bf16.gmra.mxu0 %v5634
      %v6139 = vpop.f32.mrf.mxu0
      %v6140 = vadd.f32 0.0, %v6139
      %v6141 = vpop.f32.mrf.mxu0
      %v6142 = vadd.f32 0.0, %v6141
      %6143 = vmatmul.bf16.gmra.mxu0 %v5637
      %v6144 = vpop.f32.mrf.mxu0
      %v6145 = vadd.f32 0.0, %v6144
      %v6146 = vpop.f32.mrf.mxu0
      %6147 = vmatmul.bf16.gmra.mxu0 %v5640
      %v6148 = vpop.f32.mrf.mxu0
      %v6149 = vadd.f32 0.0, %v6148
      %v6150 = vpop.f32.mrf.mxu0
      %v6151 = vadd.f32 0.0, %v6150
      %6152 = vmatmul.bf16.gmra.mxu0 %v5643
      %v6153 = vpop.f32.mrf.mxu0
      %v6154 = vadd.f32 0.0, %v6153
      %v6155 = vpop.f32.mrf.mxu0
      %6156 = vmatmul.bf16.gmra.mxu0 %v5646
      %v6157 = vpop.f32.mrf.mxu0
      %v6158 = vadd.f32 0.0, %v6157
      %v6159 = vpop.f32.mrf.mxu0
      %v6160 = vadd.f32 0.0, %v6159
      %6161 = vmatmul.bf16.gmra.mxu0 %v5649
      %v6162 = vpop.f32.mrf.mxu0
      %v6163 = vadd.f32 0.0, %v6162
      %v6164 = vpop.f32.mrf.mxu0
      %6165 = vmatmul.bf16.gmra.mxu0 %v5652
      %v6166 = vpop.f32.mrf.mxu0
      %v6167 = vadd.f32 0.0, %v6166
      %v6168 = vpop.f32.mrf.mxu0
      %v6169 = vadd.f32 0.0, %v6168
      %6170 = vmatmul.bf16.gmra.mxu0 %v5655
      %v6171 = vpop.f32.mrf.mxu0
      %v6172 = vadd.f32 0.0, %v6171
      %v6173 = vpop.f32.mrf.mxu0
      %6174 = vmatmul.bf16.gmra.mxu0 %v5658
      %v6175 = vpop.f32.mrf.mxu0
      %v6176 = vadd.f32 0.0, %v6175
      %v6177 = vpop.f32.mrf.mxu0
      %v6178 = vadd.f32 0.0, %v6177
      %6179 = vmatmul.bf16.gmra.mxu0 %v5661
      %v6180 = vpop.f32.mrf.mxu0
      %v6181 = vadd.f32 0.0, %v6180
      %v6182 = vpop.f32.mrf.mxu0
      %6183 = vmatmul.bf16.gmra.mxu0 %v5664
      %v6184 = vpop.f32.mrf.mxu0
      %v6185 = vadd.f32 0.0, %v6184
      %v6186 = vpop.f32.mrf.mxu0
      %v6187 = vadd.f32 0.0, %v6186
      %6188 = vmatmul.bf16.gmra.mxu0 %v5667
      %v6189 = vpop.f32.mrf.mxu0
      %v6190 = vadd.f32 0.0, %v6189
      %v6191 = vpop.f32.mrf.mxu0
      %6192 = vmatmul.bf16.gmra.mxu0 %v5670
      %v6193 = vpop.f32.mrf.mxu0
      %v6194 = vadd.f32 0.0, %v6193
      %v6195 = vpop.f32.mrf.mxu0
      %v6196 = vadd.f32 0.0, %v6195
      %6197 = vmatmul.bf16.gmra.mxu0 %v5673
      %v6198 = vpop.f32.mrf.mxu0
      %v6199 = vadd.f32 0.0, %v6198
      %v6200 = vpop.f32.mrf.mxu0
      %6201 = vmatmul.bf16.gmra.mxu0 %v5676
      %v6202 = vpop.f32.mrf.mxu0
      %v6203 = vadd.f32 0.0, %v6202
      %v6204 = vpop.f32.mrf.mxu0
      %v6205 = vadd.f32 0.0, %v6204
      %6206 = vmatmul.bf16.gmra.mxu0 %v5679
      %v6207 = vpop.f32.mrf.mxu0
      %v6208 = vadd.f32 0.0, %v6207
      %v6209 = vpop.f32.mrf.mxu0
      %6210 = vmatmul.bf16.gmra.mxu0 %v5682
      %v6211 = vpop.f32.mrf.mxu0
      %v6212 = vadd.f32 0.0, %v6211
      %v6213 = vpop.f32.mrf.mxu0
      %v6214 = vadd.f32 0.0, %v6213
      %6215 = vmatmul.bf16.gmra.mxu0 %v5685
      %v6216 = vpop.f32.mrf.mxu0
      %v6217 = vadd.f32 0.0, %v6216
      %v6218 = vpop.f32.mrf.mxu0
      %6219 = vmatmul.bf16.gmra.mxu0 %v5688
      %v6220 = vpop.f32.mrf.mxu0
      %v6221 = vadd.f32 0.0, %v6220
      %v6222 = vpop.f32.mrf.mxu0
      %v6223 = vadd.f32 0.0, %v6222
      %6224 = vmatmul.bf16.gmra.mxu0 %v5691
      %v6225 = vpop.f32.mrf.mxu0
      %v6226 = vadd.f32 0.0, %v6225
      %v6227 = vpop.f32.mrf.mxu0
      %6228 = vdwg.mxu0
      %v6229 = vadd.f32 %v5227, %v6086
      %v6230 = vadd.f32 %v5229, %v6088
      %v6231 = vadd.f32 %v5232, %v6091
      %v6232 = vadd.f32 %v5236, %v6095
      %v6233 = vadd.f32 %v5238, %v6097
      %v6234 = vadd.f32 %v5241, %v6100
      %v6235 = vadd.f32 %v5245, %v6104
      %v6236 = vadd.f32 %v5247, %v6106
      %v6237 = vadd.f32 %v5250, %v6109
      %v6238 = vadd.f32 %v5254, %v6113
      %v6239 = vadd.f32 %v5256, %v6115
      %v6240 = vadd.f32 %v5259, %v6118
      %v6241 = vadd.f32 %v5263, %v6122
      %v6242 = vadd.f32 %v5265, %v6124
      %v6243 = vadd.f32 %v5268, %v6127
      %v6244 = vadd.f32 %v5272, %v6131
      %v6245 = vadd.f32 %v5274, %v6133
      %v6246 = vadd.f32 %v5277, %v6136
      %v6247 = vadd.f32 %v5281, %v6140
      %v6248 = vadd.f32 %v5283, %v6142
      %v6249 = vadd.f32 %v5286, %v6145
      %v6250 = vadd.f32 %v5290, %v6149
      %v6251 = vadd.f32 %v5292, %v6151
      %v6252 = vadd.f32 %v5295, %v6154
      %v6253 = vadd.f32 %v5299, %v6158
      %v6254 = vadd.f32 %v5301, %v6160
      %v6255 = vadd.f32 %v5304, %v6163
      %v6256 = vadd.f32 %v5308, %v6167
      %v6257 = vadd.f32 %v5310, %v6169
      %v6258 = vadd.f32 %v5313, %v6172
      %v6259 = vadd.f32 %v5317, %v6176
      %v6260 = vadd.f32 %v5319, %v6178
      %v6261 = vadd.f32 %v5322, %v6181
      %v6262 = vadd.f32 %v5326, %v6185
      %v6263 = vadd.f32 %v5328, %v6187
      %v6264 = vadd.f32 %v5331, %v6190
      %v6265 = vadd.f32 %v5335, %v6194
      %v6266 = vadd.f32 %v5337, %v6196
      %v6267 = vadd.f32 %v5340, %v6199
      %v6268 = vadd.f32 %v5344, %v6203
      %v6269 = vadd.f32 %v5346, %v6205
      %v6270 = vadd.f32 %v5349, %v6208
      %v6271 = vadd.f32 %v5353, %v6212
      %v6272 = vadd.f32 %v5355, %v6214
      %v6273 = vadd.f32 %v5358, %v6217
      %v6274 = vadd.f32 %v5362, %v6221
      %v6275 = vadd.f32 %v5364, %v6223
      %v6276 = vadd.f32 %v5367, %v6226
      %v6277 = vrot.slane %v6023, 1
      %v6278 = vrot.slane %v6026, 1
      %v6279 = vrot.slane %v6029, 1
      %v6280 = vrot.slane %v6032, 1
      %v6281 = vrot.slane %v6035, 1
      %v6282 = vrot.slane %v6038, 1
      %v6283 = vrot.slane %v6041, 1
      %v6284 = vrot.slane %v6044, 1
      %v6285 = vrot.slane %v6047, 1
      %v6286 = vrot.slane %v6050, 1
      %v6287 = vrot.slane %v6053, 1
      %v6288 = vrot.slane %v6056, 1
      %v6289 = vrot.slane %v6059, 1
      %v6290 = vrot.slane %v6062, 1
      %v6291 = vrot.slane %v6065, 1
      %v6292 = vrot.slane %v6068, 1
      %v6293 = vrot.slane %v6024, 1
      %v6294 = vrot.slane %v6027, 1
      %v6295 = vrot.slane %v6030, 1
      %v6296 = vrot.slane %v6033, 1
      %v6297 = vrot.slane %v6036, 1
      %v6298 = vrot.slane %v6039, 1
      %v6299 = vrot.slane %v6042, 1
      %v6300 = vrot.slane %v6045, 1
      %v6301 = vrot.slane %v6048, 1
      %v6302 = vrot.slane %v6051, 1
      %v6303 = vrot.slane %v6054, 1
      %v6304 = vrot.slane %v6057, 1
      %v6305 = vrot.slane %v6060, 1
      %v6306 = vrot.slane %v6063, 1
      %v6307 = vrot.slane %v6066, 1
      %v6308 = vrot.slane %v6069, 1
      %v6309 = vrot.slane %v6025, 1
      %v6310 = vrot.slane %v6028, 1
      %v6311 = vrot.slane %v6031, 1
      %v6312 = vrot.slane %v6034, 1
      %v6313 = vrot.slane %v6037, 1
      %v6314 = vrot.slane %v6040, 1
      %v6315 = vrot.slane %v6043, 1
      %v6316 = vrot.slane %v6046, 1
      %v6317 = vrot.slane %v6049, 1
      %v6318 = vrot.slane %v6052, 1
      %v6319 = vrot.slane %v6055, 1
      %v6320 = vrot.slane %v6058, 1
      %v6321 = vrot.slane %v6061, 1
      %v6322 = vrot.slane %v6064, 1
      %v6323 = vrot.slane %v6067, 1
      %v6324 = vrot.slane %v6070, 1
      %v6325 = vsel %vm3260, %v6293, %v6309
      %v6326 = vsel %vm3260, %v6294, %v6310
      %v6327 = vsel %vm3260, %v6295, %v6311
      %v6328 = vsel %vm3260, %v6296, %v6312
      %v6329 = vsel %vm3260, %v6297, %v6313
      %v6330 = vsel %vm3260, %v6298, %v6314
      %v6331 = vsel %vm3260, %v6299, %v6315
      %v6332 = vsel %vm3260, %v6300, %v6316
      %v6333 = vsel %vm3260, %v6301, %v6317
      %v6334 = vsel %vm3260, %v6302, %v6318
      %v6335 = vsel %vm3260, %v6303, %v6319
      %v6336 = vsel %vm3260, %v6304, %v6320
      %v6337 = vsel %vm3260, %v6305, %v6321
      %v6338 = vsel %vm3260, %v6306, %v6322
      %v6339 = vsel %vm3260, %v6307, %v6323
      %v6340 = vsel %vm3260, %v6308, %v6324
      %v6341 = vsel %vm3260, %v6277, %v6293
      %v6342 = vsel %vm3260, %v6278, %v6294
      %v6343 = vsel %vm3260, %v6279, %v6295
      %v6344 = vsel %vm3260, %v6280, %v6296
      %v6345 = vsel %vm3260, %v6281, %v6297
      %v6346 = vsel %vm3260, %v6282, %v6298
      %v6347 = vsel %vm3260, %v6283, %v6299
      %v6348 = vsel %vm3260, %v6284, %v6300
      %v6349 = vsel %vm3260, %v6285, %v6301
      %v6350 = vsel %vm3260, %v6286, %v6302
      %v6351 = vsel %vm3260, %v6287, %v6303
      %v6352 = vsel %vm3260, %v6288, %v6304
      %v6353 = vsel %vm3260, %v6289, %v6305
      %v6354 = vsel %vm3260, %v6290, %v6306
      %v6355 = vsel %vm3260, %v6291, %v6307
      %v6356 = vsel %vm3260, %v6292, %v6308
      %v6357 = vadd.f32 %v5833, %v6341
      %v6358 = vadd.f32 %v5834, %v6325
      %v6359 = vadd.f32 %v5835, %v6342
      %v6360 = vadd.f32 %v5836, %v6326
      %v6361 = vadd.f32 %v5837, %v6343
      %v6362 = vadd.f32 %v5838, %v6327
      %v6363 = vadd.f32 %v5839, %v6344
      %v6364 = vadd.f32 %v5840, %v6328
      %v6365 = vadd.f32 %v5841, %v6345
      %v6366 = vadd.f32 %v5842, %v6329
      %v6367 = vadd.f32 %v5843, %v6346
      %v6368 = vadd.f32 %v5844, %v6330
      %v6369 = vadd.f32 %v5845, %v6347
      %v6370 = vadd.f32 %v5846, %v6331
      %v6371 = vadd.f32 %v5847, %v6348
      %v6372 = vadd.f32 %v5848, %v6332
      %v6373 = vadd.f32 %v5849, %v6349
      %v6374 = vadd.f32 %v5850, %v6333
      %v6375 = vadd.f32 %v5851, %v6350
      %v6376 = vadd.f32 %v5852, %v6334
      %v6377 = vadd.f32 %v5853, %v6351
      %v6378 = vadd.f32 %v5854, %v6335
      %v6379 = vadd.f32 %v5855, %v6352
      %v6380 = vadd.f32 %v5856, %v6336
      %v6381 = vadd.f32 %v5857, %v6353
      %v6382 = vadd.f32 %v5858, %v6337
      %v6383 = vadd.f32 %v5859, %v6354
      %v6384 = vadd.f32 %v5860, %v6338
      %v6385 = vadd.f32 %v5861, %v6355
      %v6386 = vadd.f32 %v5862, %v6339
      %v6387 = vadd.f32 %v5863, %v6356
      %v6388 = vadd.f32 %v5864, %v6340
      %v6389 = vrot.slane %v6229, 2
      %v6390 = vrot.slane %v6232, 2
      %v6391 = vrot.slane %v6235, 2
      %v6392 = vrot.slane %v6238, 2
      %v6393 = vrot.slane %v6241, 2
      %v6394 = vrot.slane %v6244, 2
      %v6395 = vrot.slane %v6247, 2
      %v6396 = vrot.slane %v6250, 2
      %v6397 = vrot.slane %v6253, 2
      %v6398 = vrot.slane %v6256, 2
      %v6399 = vrot.slane %v6259, 2
      %v6400 = vrot.slane %v6262, 2
      %v6401 = vrot.slane %v6265, 2
      %v6402 = vrot.slane %v6268, 2
      %v6403 = vrot.slane %v6271, 2
      %v6404 = vrot.slane %v6274, 2
      %v6405 = vrot.slane %v6230, 2
      %v6406 = vrot.slane %v6233, 2
      %v6407 = vrot.slane %v6236, 2
      %v6408 = vrot.slane %v6239, 2
      %v6409 = vrot.slane %v6242, 2
      %v6410 = vrot.slane %v6245, 2
      %v6411 = vrot.slane %v6248, 2
      %v6412 = vrot.slane %v6251, 2
      %v6413 = vrot.slane %v6254, 2
      %v6414 = vrot.slane %v6257, 2
      %v6415 = vrot.slane %v6260, 2
      %v6416 = vrot.slane %v6263, 2
      %v6417 = vrot.slane %v6266, 2
      %v6418 = vrot.slane %v6269, 2
      %v6419 = vrot.slane %v6272, 2
      %v6420 = vrot.slane %v6275, 2
      %v6421 = vrot.slane %v6231, 2
      %v6422 = vrot.slane %v6234, 2
      %v6423 = vrot.slane %v6237, 2
      %v6424 = vrot.slane %v6240, 2
      %v6425 = vrot.slane %v6243, 2
      %v6426 = vrot.slane %v6246, 2
      %v6427 = vrot.slane %v6249, 2
      %v6428 = vrot.slane %v6252, 2
      %v6429 = vrot.slane %v6255, 2
      %v6430 = vrot.slane %v6258, 2
      %v6431 = vrot.slane %v6261, 2
      %v6432 = vrot.slane %v6264, 2
      %v6433 = vrot.slane %v6267, 2
      %v6434 = vrot.slane %v6270, 2
      %v6435 = vrot.slane %v6273, 2
      %v6436 = vrot.slane %v6276, 2
      %vm6437 = vcmp.lt.s32.totalorder %v3066, 6
      %v6438 = vsel %vm6437, %v6405, %v6421
      %v6439 = vsel %vm6437, %v6406, %v6422
      %v6440 = vsel %vm6437, %v6407, %v6423
      %v6441 = vsel %vm6437, %v6408, %v6424
      %v6442 = vsel %vm6437, %v6409, %v6425
      %v6443 = vsel %vm6437, %v6410, %v6426
      %v6444 = vsel %vm6437, %v6411, %v6427
      %v6445 = vsel %vm6437, %v6412, %v6428
      %v6446 = vsel %vm6437, %v6413, %v6429
      %v6447 = vsel %vm6437, %v6414, %v6430
      %v6448 = vsel %vm6437, %v6415, %v6431
      %v6449 = vsel %vm6437, %v6416, %v6432
      %v6450 = vsel %vm6437, %v6417, %v6433
      %v6451 = vsel %vm6437, %v6418, %v6434
      %v6452 = vsel %vm6437, %v6419, %v6435
      %v6453 = vsel %vm6437, %v6420, %v6436
      %v6454 = vsel %vm6437, %v6389, %v6405
      %v6455 = vsel %vm6437, %v6390, %v6406
      %v6456 = vsel %vm6437, %v6391, %v6407
      %v6457 = vsel %vm6437, %v6392, %v6408
      %v6458 = vsel %vm6437, %v6393, %v6409
      %v6459 = vsel %vm6437, %v6394, %v6410
      %v6460 = vsel %vm6437, %v6395, %v6411
      %v6461 = vsel %vm6437, %v6396, %v6412
      %v6462 = vsel %vm6437, %v6397, %v6413
      %v6463 = vsel %vm6437, %v6398, %v6414
      %v6464 = vsel %vm6437, %v6399, %v6415
      %v6465 = vsel %vm6437, %v6400, %v6416
      %v6466 = vsel %vm6437, %v6401, %v6417
      %v6467 = vsel %vm6437, %v6402, %v6418
      %v6468 = vsel %vm6437, %v6403, %v6419
      %v6469 = vsel %vm6437, %v6404, %v6420
      %v6470 = vadd.f32 %v6357, %v6454
      %v6471 = vadd.f32 %v6358, %v6438
      %v6472 = vadd.f32 %v6359, %v6455
      %v6473 = vadd.f32 %v6360, %v6439
      %v6474 = vadd.f32 %v6361, %v6456
      %v6475 = vadd.f32 %v6362, %v6440
      %v6476 = vadd.f32 %v6363, %v6457
      %v6477 = vadd.f32 %v6364, %v6441
      %v6478 = vadd.f32 %v6365, %v6458
      %v6479 = vadd.f32 %v6366, %v6442
      %v6480 = vadd.f32 %v6367, %v6459
      %v6481 = vadd.f32 %v6368, %v6443
      %v6482 = vadd.f32 %v6369, %v6460
      %v6483 = vadd.f32 %v6370, %v6444
      %v6484 = vadd.f32 %v6371, %v6461
      %v6485 = vadd.f32 %v6372, %v6445
      %v6486 = vadd.f32 %v6373, %v6462
      %v6487 = vadd.f32 %v6374, %v6446
      %v6488 = vadd.f32 %v6375, %v6463
      %v6489 = vadd.f32 %v6376, %v6447
      %v6490 = vadd.f32 %v6377, %v6464
      %v6491 = vadd.f32 %v6378, %v6448
      %v6492 = vadd.f32 %v6379, %v6465
      %v6493 = vadd.f32 %v6380, %v6449
      %v6494 = vadd.f32 %v6381, %v6466
      %v6495 = vadd.f32 %v6382, %v6450
      %v6496 = vadd.f32 %v6383, %v6467
      %v6497 = vadd.f32 %v6384, %v6451
      %v6498 = vadd.f32 %v6385, %v6468
      %v6499 = vadd.f32 %v6386, %v6452
      %v6500 = vadd.f32 %v6387, %v6469
      %v6501 = vadd.f32 %v6388, %v6453
      %v6502 = vld [vmem:[%s349] sm:$0xf]
      %v6503 = vld [vmem:[%s349 + $0x4] sm:$0xf]
      %v6504 = vld [vmem:[%s349 + $0x8] sm:$0xf]
      %v6505 = vld [vmem:[%s349 + $0x10] sm:$0xf]
      %v6506 = vld [vmem:[%s349 + $0x14] sm:$0xf]
      %v6507 = vld [vmem:[%s349 + $0x18] sm:$0xf]
      %v6508 = vld [vmem:[%s349 + $0x20] sm:$0xf]
      %v6509 = vld [vmem:[%s349 + $0x24] sm:$0xf]
      %v6510 = vld [vmem:[%s349 + $0x28] sm:$0xf]
      %v6511 = vld [vmem:[%s349 + $0x30] sm:$0xf]
      %v6512 = vld [vmem:[%s349 + $0x34] sm:$0xf]
      %v6513 = vld [vmem:[%s349 + $0x38] sm:$0xf]
      %v6514 = vld [vmem:[%s349 + $0x40] sm:$0xf]
      %v6515 = vld [vmem:[%s349 + $0x44] sm:$0xf]
      %v6516 = vld [vmem:[%s349 + $0x48] sm:$0xf]
      %v6517 = vld [vmem:[%s349 + $0x50] sm:$0xf]
      %v6518 = vld [vmem:[%s349 + $0x54] sm:$0xf]
      %v6519 = vld [vmem:[%s349 + $0x58] sm:$0xf]
      %v6520 = vld [vmem:[%s349 + $0x60] sm:$0xf]
      %v6521 = vld [vmem:[%s349 + $0x64] sm:$0xf]
      %v6522 = vld [vmem:[%s349 + $0x68] sm:$0xf]
      %v6523 = vld [vmem:[%s349 + $0x70] sm:$0xf]
      %v6524 = vld [vmem:[%s349 + $0x74] sm:$0xf]
      %v6525 = vld [vmem:[%s349 + $0x78] sm:$0xf]
      %v6526 = vld [vmem:[%s349 + $0x80] sm:$0xf]
      %v6527 = vld [vmem:[%s349 + $0x84] sm:$0xf]
      %v6528 = vld [vmem:[%s349 + $0x88] sm:$0xf]
      %v6529 = vld [vmem:[%s349 + $0x90] sm:$0xf]
      %v6530 = vld [vmem:[%s349 + $0x94] sm:$0xf]
      %v6531 = vld [vmem:[%s349 + $0x98] sm:$0xf]
      %v6532 = vld [vmem:[%s349 + $0xa0] sm:$0xf]
      %v6533 = vld [vmem:[%s349 + $0xa4] sm:$0xf]
      %v6534 = vld [vmem:[%s349 + $0xa8] sm:$0xf]
      %v6535 = vld [vmem:[%s349 + $0xb0] sm:$0xf]
      %v6536 = vld [vmem:[%s349 + $0xb4] sm:$0xf]
      %v6537 = vld [vmem:[%s349 + $0xb8] sm:$0xf]
      %v6538 = vld [vmem:[%s349 + $0xc0] sm:$0xf]
      %v6539 = vld [vmem:[%s349 + $0xc4] sm:$0xf]
      %v6540 = vld [vmem:[%s349 + $0xc8] sm:$0xf]
      %v6541 = vld [vmem:[%s349 + $0xd0] sm:$0xf]
      %v6542 = vld [vmem:[%s349 + $0xd4] sm:$0xf]
      %v6543 = vld [vmem:[%s349 + $0xd8] sm:$0xf]
      %v6544 = vld [vmem:[%s349 + $0xe0] sm:$0xf]
      %v6545 = vld [vmem:[%s349 + $0xe4] sm:$0xf]
      %v6546 = vld [vmem:[%s349 + $0xe8] sm:$0xf]
      %v6547 = vld [vmem:[%s349 + $0xf0] sm:$0xf]
      %v6548 = vld [vmem:[%s349 + $0xf4] sm:$0xf]
      %v6549 = vld [vmem:[%s349 + $0xf8] sm:$0xf]
      %v6550 = vunpack.c.l.bf16 %v6502
      %v6551 = vunpack.c.l.bf16 %v6503
      %v6552 = vunpack.c.l.bf16 %v6504
      %v6553 = vunpack.c.l.bf16 %v6505
      %v6554 = vunpack.c.l.bf16 %v6506
      %v6555 = vunpack.c.l.bf16 %v6507
      %v6556 = vunpack.c.l.bf16 %v6508
      %v6557 = vunpack.c.l.bf16 %v6509
      %v6558 = vunpack.c.l.bf16 %v6510
      %v6559 = vunpack.c.l.bf16 %v6511
      %v6560 = vunpack.c.l.bf16 %v6512
      %v6561 = vunpack.c.l.bf16 %v6513
      %v6562 = vunpack.c.l.bf16 %v6514
      %v6563 = vunpack.c.l.bf16 %v6515
      %v6564 = vunpack.c.l.bf16 %v6516
      %v6565 = vunpack.c.l.bf16 %v6517
      %v6566 = vunpack.c.l.bf16 %v6518
      %v6567 = vunpack.c.l.bf16 %v6519
      %v6568 = vunpack.c.l.bf16 %v6520
      %v6569 = vunpack.c.l.bf16 %v6521
      %v6570 = vunpack.c.l.bf16 %v6522
      %v6571 = vunpack.c.l.bf16 %v6523
      %v6572 = vunpack.c.l.bf16 %v6524
      %v6573 = vunpack.c.l.bf16 %v6525
      %v6574 = vunpack.c.l.bf16 %v6526
      %v6575 = vunpack.c.l.bf16 %v6527
      %v6576 = vunpack.c.l.bf16 %v6528
      %v6577 = vunpack.c.l.bf16 %v6529
      %v6578 = vunpack.c.l.bf16 %v6530
      %v6579 = vunpack.c.l.bf16 %v6531
      %v6580 = vunpack.c.l.bf16 %v6532
      %v6581 = vunpack.c.l.bf16 %v6533
      %v6582 = vunpack.c.l.bf16 %v6534
      %v6583 = vunpack.c.l.bf16 %v6535
      %v6584 = vunpack.c.l.bf16 %v6536
      %v6585 = vunpack.c.l.bf16 %v6537
      %v6586 = vunpack.c.l.bf16 %v6538
      %v6587 = vunpack.c.l.bf16 %v6539
      %v6588 = vunpack.c.l.bf16 %v6540
      %v6589 = vunpack.c.l.bf16 %v6541
      %v6590 = vunpack.c.l.bf16 %v6542
      %v6591 = vunpack.c.l.bf16 %v6543
      %v6592 = vunpack.c.l.bf16 %v6544
      %v6593 = vunpack.c.l.bf16 %v6545
      %v6594 = vunpack.c.l.bf16 %v6546
      %v6595 = vunpack.c.l.bf16 %v6547
      %v6596 = vunpack.c.l.bf16 %v6548
      %v6597 = vunpack.c.l.bf16 %v6549
      %v6598 = vrot.slane %v6550, 1
      %v6599 = vrot.slane %v6553, 1
      %v6600 = vrot.slane %v6556, 1
      %v6601 = vrot.slane %v6559, 1
      %v6602 = vrot.slane %v6562, 1
      %v6603 = vrot.slane %v6565, 1
      %v6604 = vrot.slane %v6568, 1
      %v6605 = vrot.slane %v6571, 1
      %v6606 = vrot.slane %v6574, 1
      %v6607 = vrot.slane %v6577, 1
      %v6608 = vrot.slane %v6580, 1
      %v6609 = vrot.slane %v6583, 1
      %v6610 = vrot.slane %v6586, 1
      %v6611 = vrot.slane %v6589, 1
      %v6612 = vrot.slane %v6592, 1
      %v6613 = vrot.slane %v6595, 1
      %v6614 = vrot.slane %v6551, 1
      %v6615 = vrot.slane %v6554, 1
      %v6616 = vrot.slane %v6557, 1
      %v6617 = vrot.slane %v6560, 1
      %v6618 = vrot.slane %v6563, 1
      %v6619 = vrot.slane %v6566, 1
      %v6620 = vrot.slane %v6569, 1
      %v6621 = vrot.slane %v6572, 1
      %v6622 = vrot.slane %v6575, 1
      %v6623 = vrot.slane %v6578, 1
      %v6624 = vrot.slane %v6581, 1
      %v6625 = vrot.slane %v6584, 1
      %v6626 = vrot.slane %v6587, 1
      %v6627 = vrot.slane %v6590, 1
      %v6628 = vrot.slane %v6593, 1
      %v6629 = vrot.slane %v6596, 1
      %v6630 = vrot.slane %v6552, 1
      %v6631 = vrot.slane %v6555, 1
      %v6632 = vrot.slane %v6558, 1
      %v6633 = vrot.slane %v6561, 1
      %v6634 = vrot.slane %v6564, 1
      %v6635 = vrot.slane %v6567, 1
      %v6636 = vrot.slane %v6570, 1
      %v6637 = vrot.slane %v6573, 1
      %v6638 = vrot.slane %v6576, 1
      %v6639 = vrot.slane %v6579, 1
      %v6640 = vrot.slane %v6582, 1
      %v6641 = vrot.slane %v6585, 1
      %v6642 = vrot.slane %v6588, 1
      %v6643 = vrot.slane %v6591, 1
      %v6644 = vrot.slane %v6594, 1
      %v6645 = vrot.slane %v6597, 1
      %v6646 = vsel %vm3260, %v6614, %v6630
      %v6647 = vsel %vm3260, %v6615, %v6631
      %v6648 = vsel %vm3260, %v6616, %v6632
      %v6649 = vsel %vm3260, %v6617, %v6633
      %v6650 = vsel %vm3260, %v6618, %v6634
      %v6651 = vsel %vm3260, %v6619, %v6635
      %v6652 = vsel %vm3260, %v6620, %v6636
      %v6653 = vsel %vm3260, %v6621, %v6637
      %v6654 = vsel %vm3260, %v6622, %v6638
      %v6655 = vsel %vm3260, %v6623, %v6639
      %v6656 = vsel %vm3260, %v6624, %v6640
      %v6657 = vsel %vm3260, %v6625, %v6641
      %v6658 = vsel %vm3260, %v6626, %v6642
      %v6659 = vsel %vm3260, %v6627, %v6643
      %v6660 = vsel %vm3260, %v6628, %v6644
      %v6661 = vsel %vm3260, %v6629, %v6645
      %v6662 = vsel %vm3260, %v6598, %v6614
      %v6663 = vsel %vm3260, %v6599, %v6615
      %v6664 = vsel %vm3260, %v6600, %v6616
      %v6665 = vsel %vm3260, %v6601, %v6617
      %v6666 = vsel %vm3260, %v6602, %v6618
      %v6667 = vsel %vm3260, %v6603, %v6619
      %v6668 = vsel %vm3260, %v6604, %v6620
      %v6669 = vsel %vm3260, %v6605, %v6621
      %v6670 = vsel %vm3260, %v6606, %v6622
      %v6671 = vsel %vm3260, %v6607, %v6623
      %v6672 = vsel %vm3260, %v6608, %v6624
      %v6673 = vsel %vm3260, %v6609, %v6625
      %v6674 = vsel %vm3260, %v6610, %v6626
      %v6675 = vsel %vm3260, %v6611, %v6627
      %v6676 = vsel %vm3260, %v6612, %v6628
      %v6677 = vsel %vm3260, %v6613, %v6629
      %v6678 = vld [vmem:[%s5] sm:$0x1]
      %v6680 = vperm.slane %v6678, 0
      %v6682 = vmul.f32 %v6470, %v6680
      %v6683 = vmul.f32 %v6471, %v6680
      %v6684 = vmul.f32 %v6472, %v6680
      %v6685 = vmul.f32 %v6473, %v6680
      %v6686 = vmul.f32 %v6474, %v6680
      %v6687 = vmul.f32 %v6475, %v6680
      %v6688 = vmul.f32 %v6476, %v6680
      %v6689 = vmul.f32 %v6477, %v6680
      %v6690 = vmul.f32 %v6478, %v6680
      %v6691 = vmul.f32 %v6479, %v6680
      %v6692 = vmul.f32 %v6480, %v6680
      %v6693 = vmul.f32 %v6481, %v6680
      %v6694 = vmul.f32 %v6482, %v6680
      %v6695 = vmul.f32 %v6483, %v6680
      %v6696 = vmul.f32 %v6484, %v6680
      %v6697 = vmul.f32 %v6485, %v6680
      %v6698 = vmul.f32 %v6486, %v6680
      %v6699 = vmul.f32 %v6487, %v6680
      %v6700 = vmul.f32 %v6488, %v6680
      %v6701 = vmul.f32 %v6489, %v6680
      %v6702 = vmul.f32 %v6490, %v6680
      %v6703 = vmul.f32 %v6491, %v6680
      %v6704 = vmul.f32 %v6492, %v6680
      %v6705 = vmul.f32 %v6493, %v6680
      %v6706 = vmul.f32 %v6494, %v6680
      %v6707 = vmul.f32 %v6495, %v6680
      %v6708 = vmul.f32 %v6496, %v6680
      %v6709 = vmul.f32 %v6497, %v6680
      %v6710 = vmul.f32 %v6498, %v6680
      %v6711 = vmul.f32 %v6499, %v6680
      %v6712 = vmul.f32 %v6500, %v6680
      %v6713 = vmul.f32 %v6501, %v6680
      %v6714 = vld [vmem:[%s6] sm:$0x1]
      %v6716 = vperm.slane %v6714, 0
      %v6718 = vadd.f32 %v6682, %v6716
      %v6719 = vadd.f32 %v6683, %v6716
      %v6720 = vadd.f32 %v6684, %v6716
      %v6721 = vadd.f32 %v6685, %v6716
      %v6722 = vadd.f32 %v6686, %v6716
      %v6723 = vadd.f32 %v6687, %v6716
      %v6724 = vadd.f32 %v6688, %v6716
      %v6725 = vadd.f32 %v6689, %v6716
      %v6726 = vadd.f32 %v6690, %v6716
      %v6727 = vadd.f32 %v6691, %v6716
      %v6728 = vadd.f32 %v6692, %v6716
      %v6729 = vadd.f32 %v6693, %v6716
      %v6730 = vadd.f32 %v6694, %v6716
      %v6731 = vadd.f32 %v6695, %v6716
      %v6732 = vadd.f32 %v6696, %v6716
      %v6733 = vadd.f32 %v6697, %v6716
      %v6734 = vadd.f32 %v6698, %v6716
      %v6735 = vadd.f32 %v6699, %v6716
      %v6736 = vadd.f32 %v6700, %v6716
      %v6737 = vadd.f32 %v6701, %v6716
      %v6738 = vadd.f32 %v6702, %v6716
      %v6739 = vadd.f32 %v6703, %v6716
      %v6740 = vadd.f32 %v6704, %v6716
      %v6741 = vadd.f32 %v6705, %v6716
      %v6742 = vadd.f32 %v6706, %v6716
      %v6743 = vadd.f32 %v6707, %v6716
      %v6744 = vadd.f32 %v6708, %v6716
      %v6745 = vadd.f32 %v6709, %v6716
      %v6746 = vadd.f32 %v6710, %v6716
      %v6747 = vadd.f32 %v6711, %v6716
      %v6748 = vadd.f32 %v6712, %v6716
      %v6749 = vadd.f32 %v6713, %v6716
      %v6750 = vadd.f32 %v6718, %v6662
      %v6751 = vadd.f32 %v6719, %v6646
      %v6752 = vadd.f32 %v6720, %v6663
      %v6753 = vadd.f32 %v6721, %v6647
      %v6754 = vadd.f32 %v6722, %v6664
      %v6755 = vadd.f32 %v6723, %v6648
      %v6756 = vadd.f32 %v6724, %v6665
      %v6757 = vadd.f32 %v6725, %v6649
      %v6758 = vadd.f32 %v6726, %v6666
      %v6759 = vadd.f32 %v6727, %v6650
      %v6760 = vadd.f32 %v6728, %v6667
      %v6761 = vadd.f32 %v6729, %v6651
      %v6762 = vadd.f32 %v6730, %v6668
      %v6763 = vadd.f32 %v6731, %v6652
      %v6764 = vadd.f32 %v6732, %v6669
      %v6765 = vadd.f32 %v6733, %v6653
      %v6766 = vadd.f32 %v6734, %v6670
      %v6767 = vadd.f32 %v6735, %v6654
      %v6768 = vadd.f32 %v6736, %v6671
      %v6769 = vadd.f32 %v6737, %v6655
      %v6770 = vadd.f32 %v6738, %v6672
      %v6771 = vadd.f32 %v6739, %v6656
      %v6772 = vadd.f32 %v6740, %v6673
      %v6773 = vadd.f32 %v6741, %v6657
      %v6774 = vadd.f32 %v6742, %v6674
      %v6775 = vadd.f32 %v6743, %v6658
      %v6776 = vadd.f32 %v6744, %v6675
      %v6777 = vadd.f32 %v6745, %v6659
      %v6778 = vadd.f32 %v6746, %v6676
      %v6779 = vadd.f32 %v6747, %v6660
      %v6780 = vadd.f32 %v6748, %v6677
      %v6781 = vadd.f32 %v6749, %v6661
      %v6782 = vpack.c.bf16 %v6750, %v6750
      %v6783 = vpack.c.bf16 %v6751, %v6751
      %v6784 = vpack.c.bf16 %v6752, %v6752
      %v6785 = vpack.c.bf16 %v6753, %v6753
      %v6786 = vpack.c.bf16 %v6754, %v6754
      %v6787 = vpack.c.bf16 %v6755, %v6755
      %v6788 = vpack.c.bf16 %v6756, %v6756
      %v6789 = vpack.c.bf16 %v6757, %v6757
      %v6790 = vpack.c.bf16 %v6758, %v6758
      %v6791 = vpack.c.bf16 %v6759, %v6759
      %v6792 = vpack.c.bf16 %v6760, %v6760
      %v6793 = vpack.c.bf16 %v6761, %v6761
      %v6794 = vpack.c.bf16 %v6762, %v6762
      %v6795 = vpack.c.bf16 %v6763, %v6763
      %v6796 = vpack.c.bf16 %v6764, %v6764
      %v6797 = vpack.c.bf16 %v6765, %v6765
      %v6798 = vpack.c.bf16 %v6766, %v6766
      %v6799 = vpack.c.bf16 %v6767, %v6767
      %v6800 = vpack.c.bf16 %v6768, %v6768
      %v6801 = vpack.c.bf16 %v6769, %v6769
      %v6802 = vpack.c.bf16 %v6770, %v6770
      %v6803 = vpack.c.bf16 %v6771, %v6771
      %v6804 = vpack.c.bf16 %v6772, %v6772
      %v6805 = vpack.c.bf16 %v6773, %v6773
      %v6806 = vpack.c.bf16 %v6774, %v6774
      %v6807 = vpack.c.bf16 %v6775, %v6775
      %v6808 = vpack.c.bf16 %v6776, %v6776
      %v6809 = vpack.c.bf16 %v6777, %v6777
      %v6810 = vpack.c.bf16 %v6778, %v6778
      %v6811 = vpack.c.bf16 %v6779, %v6779
      %v6812 = vpack.c.bf16 %v6780, %v6780
      %v6813 = vpack.c.bf16 %v6781, %v6781
      %6814 = vst.msk [vmem:[%s278] sm:$0xf] %vm3740, %v6782
      %6815 = vst.msk [vmem:[%s278 + $0x4] sm:$0xf] %vm3740, %v6783
      %6816 = vst.msk [vmem:[%s278 + $0x8] sm:$0xf] %vm3740, %v6784
      %6817 = vst.msk [vmem:[%s278 + $0xc] sm:$0xf] %vm3740, %v6785
      %6818 = vst.msk [vmem:[%s278 + $0x10] sm:$0xf] %vm3740, %v6786
      %6819 = vst.msk [vmem:[%s278 + $0x14] sm:$0xf] %vm3740, %v6787
      %6820 = vst.msk [vmem:[%s278 + $0x18] sm:$0xf] %vm3740, %v6788
      %6821 = vst.msk [vmem:[%s278 + $0x1c] sm:$0xf] %vm3740, %v6789
      %6822 = vst.msk [vmem:[%s278 + $0x20] sm:$0xf] %vm3740, %v6790
      %6823 = vst.msk [vmem:[%s278 + $0x24] sm:$0xf] %vm3740, %v6791
      %6824 = vst.msk [vmem:[%s278 + $0x28] sm:$0xf] %vm3740, %v6792
      %6825 = vst.msk [vmem:[%s278 + $0x2c] sm:$0xf] %vm3740, %v6793
      %6826 = vst.msk [vmem:[%s278 + $0x30] sm:$0xf] %vm3740, %v6794
      %6827 = vst.msk [vmem:[%s278 + $0x34] sm:$0xf] %vm3740, %v6795
      %6828 = vst.msk [vmem:[%s278 + $0x38] sm:$0xf] %vm3740, %v6796
      %6829 = vst.msk [vmem:[%s278 + $0x3c] sm:$0xf] %vm3740, %v6797
      %6830 = vst.msk [vmem:[%s278 + $0x40] sm:$0xf] %vm3740, %v6798
      %6831 = vst.msk [vmem:[%s278 + $0x44] sm:$0xf] %vm3740, %v6799
      %6832 = vst.msk [vmem:[%s278 + $0x48] sm:$0xf] %vm3740, %v6800
      %6833 = vst.msk [vmem:[%s278 + $0x4c] sm:$0xf] %vm3740, %v6801
      %6834 = vst.msk [vmem:[%s278 + $0x50] sm:$0xf] %vm3740, %v6802
      %6835 = vst.msk [vmem:[%s278 + $0x54] sm:$0xf] %vm3740, %v6803
      %6836 = vst.msk [vmem:[%s278 + $0x58] sm:$0xf] %vm3740, %v6804
      %6837 = vst.msk [vmem:[%s278 + $0x5c] sm:$0xf] %vm3740, %v6805
      %6838 = vst.msk [vmem:[%s278 + $0x60] sm:$0xf] %vm3740, %v6806
      %6839 = vst.msk [vmem:[%s278 + $0x64] sm:$0xf] %vm3740, %v6807
      %6840 = vst.msk [vmem:[%s278 + $0x68] sm:$0xf] %vm3740, %v6808
      %6841 = vst.msk [vmem:[%s278 + $0x6c] sm:$0xf] %vm3740, %v6809
      %6842 = vst.msk [vmem:[%s278 + $0x70] sm:$0xf] %vm3740, %v6810
      %6843 = vst.msk [vmem:[%s278 + $0x74] sm:$0xf] %vm3740, %v6811
      %6844 = vst.msk [vmem:[%s278 + $0x78] sm:$0xf] %vm3740, %v6812
      %6845 = vst.msk [vmem:[%s278 + $0x7c] sm:$0xf] %vm3740, %v6813
      %p6846 = scmp.lt.s32.totalorder %s18, 1
      %s6847 = scalar_select %p6846, %s18, 1
      %s6848 = smul.addr %s6847, 32
      %s6849 = smul.addr %s6848, 4
      %s6850 = scalar_lea.vmem %s7, %s6849
      // Predicated region
      $region49: #{tpu_custom_call.1} parent=47 // pred_check
        %p6851 = pneg %p188
      $region50: #{tpu_custom_call.1} parent=47 // pred_check_branch
        %6853 = sbr.rel (%p6851) target = $region52
      $region51: #{tpu_custom_call.1} parent=47 // pred_region
        _
      $region52: #{tpu_custom_call.1} parent=47 // pred_fallthru
        _
    $region48: #{tpu_custom_call.1} parent=5 // pred_fallthru
      _
    %p6854 = scmp.le.s32.totalorder 2, %s13
    // Predicated region
    $region53: #{tpu_custom_call.1} parent=5 // pred_check
      %p6855 = pneg %p6854
    $region54: #{tpu_custom_call.1} parent=5 // pred_check_branch
      %6857 = sbr.rel (%p6855) target = $region56
    $region55: #{tpu_custom_call.1} parent=5 // pred_region
      %s6858 = ssub.s32 %s13, 2
      // Predicated region
      $region57: #{tpu_custom_call.1} parent=55 // pred_check
        %p6859 = pneg %p194
      $region58: #{tpu_custom_call.1} parent=55 // pred_check_branch
        %6861 = sbr.rel (%p6859) target = $region60
      $region59: #{tpu_custom_call.1} parent=55 // pred_region
        %p6862 = scmp.lt.s32.totalorder %s19, 1
        %s6863 = scalar_select %p6862, %s19, 1
        %s6864 = smul.addr %s6863, 32
        %s6865 = smul.addr %s6864, 4
        %s6866 = scalar_lea.vmem %s7, %s6865
      $region60: #{tpu_custom_call.1} parent=55 // pred_fallthru
        _
    $region56: #{tpu_custom_call.1} parent=5 // pred_fallthru
      _
  $region6: #{tpu_custom_call.1} parent=0 // loop_footer
    %s17 = sadd.s32 1, %s13
  $region7: #{tpu_custom_call.1} parent=0 // loop_footer_branch
    %12 = sbr.rel target = $region3
  $region8: #{tpu_custom_call.1} parent=0 // loop_exit
    _

</llo_original>
